<compile_context>
chip_gen: v6e
topology: v6e:2x2x1
jax: 0.10.0
libtpu: 0.0.40
codegen_flags: <defaults>
</compile_context>

<pallas_src>
import jax
import jax.numpy as jnp
from jax.experimental import pallas as pl
from jax.experimental.pallas import tpu as pltpu

BN_EPS = 1e-5
LANE = 128


def _round_up(x, m):
    return (x + m - 1) // m * m


def _vmem_limit_bytes():
    """Per-generation scoped-VMEM limit (conservative default otherwise)."""
    kind = ""
    try:
        kind = jax.devices()[0].device_kind.lower()
    except Exception:
        pass
    if "v5" in kind or "v6" in kind:
        return 96 * 1024 * 1024
    if "v7" in kind:
        return 48 * 1024 * 1024
    return 32 * 1024 * 1024


# ----------------------------------------------------------------------------
# Kernel 1: layer-1 3x3 conv as 9 shifted bf16 MXU matmuls + BN partials.
# ----------------------------------------------------------------------------
def _make_conv_stats_kernel(H, W):
    W2 = W + 2              # padded row width
    HW2 = H * W2            # "inflated" output row count (2 junk cols per row)

    def kernel(x_ref, w_ref, mask_ref, conv_ref, psum_ref, psumsq_ref):
        # x_ref    : (1, P2e, cin_p)  f32 spatially padded, row-flattened image
        # w_ref    : (9, cin_p, Cp)   bf16 tap-major conv weights
        # mask_ref : (HW2, 1)         f32 valid-column mask (precomputed)
        # conv_ref : (1, HW2, Cp)     bf16 conv output (inflated-row layout)
        # psum/psumsq : (1, 1, Cp)    f32 per-image BN partials
        acc = jnp.dot(x_ref[0, 0:HW2, :].astype(jnp.bfloat16), w_ref[0],
                      preferred_element_type=jnp.float32)
        for tap in range(1, 9):
            kh, kw = tap // 3, tap % 3
            off = kh * W2 + kw                       # static shift per tap
            acc += jnp.dot(x_ref[0, off:off + HW2, :].astype(jnp.bfloat16),
                           w_ref[tap], preferred_element_type=jnp.float32)
        conv_ref[0] = acc.astype(conv_ref.dtype)

        mask = mask_ref[...]
        masked = acc * mask                          # drop junk columns
        psum_ref[0] = jnp.sum(masked, axis=0, keepdims=True)
        psumsq_ref[0] = jnp.sum(masked * acc, axis=0, keepdims=True)

    return kernel


def conv_and_stats(xf, w9, mask, H, W):
    N, P2e, cin_p = xf.shape
    cout_p = w9.shape[2]
    HW2 = H * (W + 2)
    return pl.pallas_call(
        _make_conv_stats_kernel(H, W),
        out_shape=(
            jax.ShapeDtypeStruct((N, HW2, cout_p), jnp.bfloat16),
            jax.ShapeDtypeStruct((N, 1, cout_p), jnp.float32),
            jax.ShapeDtypeStruct((N, 1, cout_p), jnp.float32),
        ),
        grid=(N,),
        in_specs=[
            pl.BlockSpec((1, P2e, cin_p), lambda n: (n, 0, 0)),
            pl.BlockSpec((9, cin_p, cout_p), lambda n: (0, 0, 0)),
            pl.BlockSpec((HW2, 1), lambda n: (0, 0)),
        ],
        out_specs=(
            pl.BlockSpec((1, HW2, cout_p), lambda n: (n, 0, 0)),
            pl.BlockSpec((1, 1, cout_p), lambda n: (n, 0, 0)),
            pl.BlockSpec((1, 1, cout_p), lambda n: (n, 0, 0)),
        ),
        compiler_params=pltpu.CompilerParams(
            dimension_semantics=("parallel",),
            vmem_limit_bytes=_vmem_limit_bytes()),
    )(xf, w9, mask)


# ----------------------------------------------------------------------------
# Kernel 2: fused [layer-1 BN-affine+ReLU epilogue] + [layer-2 3x3 conv] +
#           layer-2 BN partials.  The epilogue result never touches HBM: it is
#           written into a VMEM scratch already laid out as the spatially
#           padded, row-flattened layer-2 input.
# ----------------------------------------------------------------------------
def _make_fused_epi_conv_kernel(H, W, scr_rows, lead):
    W2 = W + 2
    HW2 = H * W2
    shift_off = lead - (W2 + 1)      # aligned placement offset for tap reads

    def kernel(c1_ref, scale_ref, shift_ref, w_ref, mask_ref,
               conv_ref, psum_ref, psumsq_ref, ypad_ref):
        mask = mask_ref[...]
        cp = ypad_ref.shape[1]

        # Layer-1 epilogue (f32 math): y1 = relu(conv1*scale + shift), with the
        # 2 junk columns masked to zero so they become the layer-2 border.
        y1 = jnp.maximum(c1_ref[0].astype(jnp.float32) * scale_ref[...]
                         + shift_ref[...], 0.0) * mask

        # Build the padded layer-2 input in VMEM: zero borders + interior.
        ypad_ref[0:lead, :] = jnp.zeros((lead, cp), ypad_ref.dtype)
        ypad_ref[lead + HW2:, :] = jnp.zeros((scr_rows - lead - HW2, cp),
                                             ypad_ref.dtype)
        ypad_ref[lead:lead + HW2, :] = y1          # 16-row-aligned bulk store

        # Layer-2 conv: 9 shifted bf16 matmuls from the scratch.
        acc = jnp.dot(ypad_ref[shift_off:shift_off + HW2, :].astype(jnp.bfloat16),
                      w_ref[0], preferred_element_type=jnp.float32)
        for tap in range(1, 9):
            kh, kw = tap // 3, tap % 3
            off = kh * W2 + kw + shift_off
            acc += jnp.dot(ypad_ref[off:off + HW2, :].astype(jnp.bfloat16),
                           w_ref[tap], preferred_element_type=jnp.float32)
        conv_ref[0] = acc.astype(conv_ref.dtype)

        masked = acc * mask
        psum_ref[0] = jnp.sum(masked, axis=0, keepdims=True)
        psumsq_ref[0] = jnp.sum(masked * acc, axis=0, keepdims=True)

    return kernel


def fused_epi_conv_stats(conv1, scale1, shift1, w9, mask, H, W):
    N, HW2, cout_p = conv1.shape
    W2 = W + 2
    lead = _round_up(W2 + 1, 16)                 # aligned interior start
    shift_off = lead - (W2 + 1)
    scr_rows = _round_up(HW2 + 2 * W2 + 2 + shift_off, 16)
    return pl.pallas_call(
        _make_fused_epi_conv_kernel(H, W, scr_rows, lead),
        out_shape=(
            jax.ShapeDtypeStruct((N, HW2, cout_p), jnp.bfloat16),
            jax.ShapeDtypeStruct((N, 1, cout_p), jnp.float32),
            jax.ShapeDtypeStruct((N, 1, cout_p), jnp.float32),
        ),
        grid=(N,),
        in_specs=[
            pl.BlockSpec((1, HW2, cout_p), lambda n: (n, 0, 0)),
            pl.BlockSpec((1, cout_p), lambda n: (0, 0)),
            pl.BlockSpec((1, cout_p), lambda n: (0, 0)),
            pl.BlockSpec((9, cout_p, cout_p), lambda n: (0, 0, 0)),
            pl.BlockSpec((HW2, 1), lambda n: (0, 0)),
        ],
        out_specs=(
            pl.BlockSpec((1, HW2, cout_p), lambda n: (n, 0, 0)),
            pl.BlockSpec((1, 1, cout_p), lambda n: (n, 0, 0)),
            pl.BlockSpec((1, 1, cout_p), lambda n: (n, 0, 0)),
        ),
        scratch_shapes=[pltpu.VMEM((scr_rows, cout_p), jnp.float32)],
        compiler_params=pltpu.CompilerParams(
            dimension_semantics=("parallel",),
            vmem_limit_bytes=_vmem_limit_bytes()),
    )(conv1, scale1, shift1, w9, mask)


# ----------------------------------------------------------------------------
# Kernel 3: final BN-affine + ReLU epilogue, row-tiled streaming FMA.
# ----------------------------------------------------------------------------
def _bn_relu_kernel(x_ref, scale_ref, shift_ref, o_ref):
    o_ref[0] = jnp.maximum(
        x_ref[0].astype(jnp.float32) * scale_ref[...] + shift_ref[...], 0.0)


def bn_relu_apply(conv_full, scale, shift):
    N, HW2, cp = conv_full.shape
    tr = HW2 if HW2 <= 1024 else 512             # row tile (lane-dense blocks)
    n_rt = pl.cdiv(HW2, tr)
    return pl.pallas_call(
        _bn_relu_kernel,
        out_shape=jax.ShapeDtypeStruct((N, HW2, cp), jnp.float32),
        grid=(N, n_rt),
        in_specs=[
            pl.BlockSpec((1, tr, cp), lambda n, r: (n, r, 0)),
            pl.BlockSpec((1, cp), lambda n, r: (0, 0)),
            pl.BlockSpec((1, cp), lambda n, r: (0, 0)),
        ],
        out_specs=pl.BlockSpec((1, tr, cp), lambda n, r: (n, r, 0)),
        compiler_params=pltpu.CompilerParams(
            dimension_semantics=("parallel", "parallel"),
            vmem_limit_bytes=_vmem_limit_bytes()),
    )(conv_full, scale, shift)


# ----------------------------------------------------------------------------
# Plain-JAX glue: layout plumbing + tiny O(N*Cp) BN fold only.
# ----------------------------------------------------------------------------
def _prep_input(x_nchw, cin_p):
    """NCHW -> spatially padded, row-flattened (N, P2e, cin_p) f32."""
    N, Cin, H, W = x_nchw.shape
    x = jnp.transpose(x_nchw, (0, 2, 3, 1))
    x = jnp.pad(x, ((0, 0), (1, 1), (1, 1), (0, cin_p - Cin)))
    P2 = (H + 2) * (W + 2)
    xf = x.reshape(N, P2, cin_p)
    P2e = _round_up(P2 + 2, 16)      # slack rows so the last tap stays in-bounds
    return jnp.pad(xf, ((0, 0), (0, P2e - P2), (0, 0)))


def _prep_weight(w_oihw, cin_p, cout_p):
    """(Cout,Cin,3,3) -> (9, cin_p, cout_p) bf16, tap-major (kh,kw)."""
    cout, cin, _, _ = w_oihw.shape
    w = jnp.transpose(w_oihw, (2, 3, 1, 0)).reshape(9, cin, cout)
    w = jnp.pad(w, ((0, 0), (0, cin_p - cin), (0, cout_p - cout)))
    return w.astype(jnp.bfloat16)


def _pad_vec(v, cp, fill):
    return jnp.pad(v, (0, cp - v.shape[0]), constant_values=fill)


def _fold_bn(psum, psumsq, gamma_p, beta_p, count):
    """Fold train-mode BN batch stats + affine into one (scale, shift) pair."""
    s = jnp.sum(psum, axis=0).reshape(-1)
    ss = jnp.sum(psumsq, axis=0).reshape(-1)
    mean = s / count
    var = jnp.maximum(ss / count - mean * mean, 0.0)   # biased var (BN train)
    scale = gamma_p * jax.lax.rsqrt(var + BN_EPS)
    shift = beta_p - mean * scale
    return scale.reshape(1, -1), shift.reshape(1, -1)


def double_conv(x_nchw, params):
    """Pallas implementation of DoubleConv.forward.  Input/output are NCHW."""
    N, Cin, H, W = x_nchw.shape
    Cout = params["w1"].shape[0]
    cin_p = _round_up(Cin, 16)       # no 128-lane padding of the tiny Cin
    cout_p = _round_up(Cout, LANE)   # lane-dense output channels
    W2 = W + 2
    HW2 = H * W2
    count = float(N * H * W)

    # Valid-column mask, computed once (cols w in {W, W+1} of the inflated-row
    # layout are wrap-around conv outputs: excluded from BN stats, zeroed
    # before feeding layer 2).
    col = jnp.arange(HW2, dtype=jnp.int32) % W2
    mask = (col < W).astype(jnp.float32).reshape(HW2, 1)

    # NOTE: conv bias (b1/b2) is dropped on purpose — a per-channel constant is
    # exactly cancelled by the train-mode BatchNorm mean subtraction.
    xf = _prep_input(x_nchw, cin_p)

    w9_1 = _prep_weight(params["w1"], cin_p, cout_p)
    conv1, ps1, pss1 = conv_and_stats(xf, w9_1, mask, H, W)
    scale1, shift1 = _fold_bn(ps1, pss1,
                              _pad_vec(params["g1"], cout_p, 1.0),
                              _pad_vec(params["be1"], cout_p, 0.0), count)

    w9_2 = _prep_weight(params["w2"], cout_p, cout_p)
    conv2, ps2, pss2 = fused_epi_conv_stats(conv1, scale1, shift1, w9_2,
                                            mask, H, W)
    scale2, shift2 = _fold_bn(ps2, pss2,
                              _pad_vec(params["g2"], cout_p, 1.0),
                              _pad_vec(params["be2"], cout_p, 0.0), count)

    y = bn_relu_apply(conv2, scale2, shift2)
    # Drop the 2 junk columns of the inflated-row layout, un-pad channels.
    y = y.reshape(N, H, W2, cout_p)[:, :, :W, :Cout]
    return jnp.transpose(y, (0, 3, 1, 2))            # NCHW


# ----------------------------------------------------------------------------
# Pure-JAX reference (f32 lax conv, with bias) to validate the Pallas kernels.
# ----------------------------------------------------------------------------
def ref_double_conv(x_nchw, params):
    def conv(x, w, b):
        y = jax.lax.conv_general_dilated(
            x, w, window_strides=(1, 1), padding="SAME",
            dimension_numbers=("NCHW", "OIHW", "NCHW"))
        return y + b[None, :, None, None]

    def bn_relu(y, g, be):
        mean = jnp.mean(y, axis=(0, 2, 3), keepdims=True)
        var = jnp.mean((y - mean) ** 2, axis=(0, 2, 3), keepdims=True)
        yn = (y - mean) * jax.lax.rsqrt(var + BN_EPS)
        return jnp.maximum(yn * g[None, :, None, None] + be[None, :, None, None], 0.0)

    y = bn_relu(conv(x_nchw, params["w1"], params["b1"]), params["g1"], params["be1"])
    y = bn_relu(conv(y, params["w2"], params["b2"]), params["g2"], params["be2"])
    return y


if __name__ == "__main__":
    # Small deterministic setup: batch=2, in_channel=4, out_channel=8, 16x16.
    N, Cin, Cout, H, W = 2, 4, 8, 16, 16

    key = jax.random.PRNGKey(0)
    kx, kw1, kb1, kw2, kb2 = jax.random.split(key, 5)

    x = jax.random.normal(kx, (N, Cin, H, W), jnp.float32)

    params = {
        "w1": jax.random.normal(kw1, (Cout, Cin, 3, 3), jnp.float32) * 0.1,
        "b1": jax.random.normal(kb1, (Cout,), jnp.float32) * 0.1,
        "g1": jnp.ones((Cout,), jnp.float32),    # BatchNorm2d default init
        "be1": jnp.zeros((Cout,), jnp.float32),
        "w2": jax.random.normal(kw2, (Cout, Cout, 3, 3), jnp.float32) * 0.1,
        "b2": jax.random.normal(kb2, (Cout,), jnp.float32) * 0.1,
        "g2": jnp.ones((Cout,), jnp.float32),
        "be2": jnp.zeros((Cout,), jnp.float32),
    }

    out = jax.block_until_ready(jax.jit(double_conv)(x, params))
    ref = jax.block_until_ready(ref_double_conv(x, params))

    assert out.shape == (N, Cout, H, W), out.shape
    err = float(jnp.max(jnp.abs(out - ref)))
    # Tolerance loosened vs. the f32-only version: matmuls and conv storage are
    # bf16 (stats / scale / shift / epilogue math remain f32).
    assert jnp.allclose(out, ref, atol=5e-2, rtol=5e-2), err

    print("KERNEL_OK")
</pallas_src>

<mosaic_0001>
module attributes {stable_mosaic.version = 11 : i64} {
  func.func @kernel(%arg0: i32, %arg1: memref<1x336x16xf32, #tpu.memory_space<vmem>>, %arg2: memref<9x16x128xbf16, #tpu.memory_space<vmem>>, %arg3: memref<288x1xf32, #tpu.memory_space<vmem>>, %arg4: memref<1x288x128xbf16, #tpu.memory_space<vmem>>, %arg5: memref<1x1x128xf32, #tpu.memory_space<vmem>>, %arg6: memref<1x1x128xf32, #tpu.memory_space<vmem>>) attributes {dimension_semantics = [#tpu.dimension_semantics<parallel>], iteration_bounds = array<i64: 2>, scalar_prefetch = 0 : i64, scratch_operands = 0 : i64, tpu.core_type = #tpu.core_type<tc>, window_params = [{transform_indices = @transform_0, window_bounds = array<i64: 1, 336, 16>}, {pipeline_mode = #tpu.pipeline_mode<synchronous>, transform_indices = @transform_1, window_bounds = array<i64: 9, 16, 128>}, {pipeline_mode = #tpu.pipeline_mode<synchronous>, transform_indices = @transform_2, window_bounds = array<i64: 288, 1>}, {transform_indices = @transform_3, window_bounds = array<i64: 1, 288, 128>}, {transform_indices = @transform_4, window_bounds = array<i64: 1, 1, 128>}, {transform_indices = @transform_5, window_bounds = array<i64: 1, 1, 128>}]} {
    %c0 = arith.constant 0 : index
    %c0_0 = arith.constant 0 : index
    %c0_1 = arith.constant 0 : index
    %0 = vector.load %arg1[%c0, %c0_0, %c0_1] : memref<1x336x16xf32, #tpu.memory_space<vmem>>, vector<1x288x16xf32>
    %1 = vector.shape_cast %0 : vector<1x288x16xf32> to vector<288x16xf32>
    %2 = arith.truncf %1 : vector<288x16xf32> to vector<288x16xbf16>
    %c0_2 = arith.constant 0 : index
    %c0_3 = arith.constant 0 : index
    %c0_4 = arith.constant 0 : index
    %3 = vector.load %arg2[%c0_2, %c0_3, %c0_4] : memref<9x16x128xbf16, #tpu.memory_space<vmem>>, vector<1x16x128xbf16>
    %4 = vector.shape_cast %3 : vector<1x16x128xbf16> to vector<16x128xbf16>
    %cst = arith.constant dense<0.000000e+00> : vector<288x128xf32>
    %5 = tpu.matmul %2, %4, %cst {dimension_numbers = #tpu.dot_dimension_numbers<[1], [0], [0], [1], [0, 0, 1, 1], [], []>} : vector<288x16xbf16>, vector<16x128xbf16>, vector<288x128xf32> -> vector<288x128xf32>
    %c0_5 = arith.constant 0 : index
    %c1 = arith.constant 1 : index
    %c0_6 = arith.constant 0 : index
    %6 = vector.load %arg1[%c0_5, %c1, %c0_6] : memref<1x336x16xf32, #tpu.memory_space<vmem>>, vector<1x288x16xf32>
    %7 = vector.shape_cast %6 : vector<1x288x16xf32> to vector<288x16xf32>
    %8 = arith.truncf %7 : vector<288x16xf32> to vector<288x16xbf16>
    %c1_7 = arith.constant 1 : index
    %c0_8 = arith.constant 0 : index
    %c0_9 = arith.constant 0 : index
    %9 = vector.load %arg2[%c1_7, %c0_8, %c0_9] : memref<9x16x128xbf16, #tpu.memory_space<vmem>>, vector<1x16x128xbf16>
    %10 = vector.shape_cast %9 : vector<1x16x128xbf16> to vector<16x128xbf16>
    %cst_10 = arith.constant dense<0.000000e+00> : vector<288x128xf32>
    %11 = tpu.matmul %8, %10, %cst_10 {dimension_numbers = #tpu.dot_dimension_numbers<[1], [0], [0], [1], [0, 0, 1, 1], [], []>} : vector<288x16xbf16>, vector<16x128xbf16>, vector<288x128xf32> -> vector<288x128xf32>
    %12 = arith.addf %5, %11 : vector<288x128xf32>
    %c0_11 = arith.constant 0 : index
    %c2 = arith.constant 2 : index
    %c0_12 = arith.constant 0 : index
    %13 = vector.load %arg1[%c0_11, %c2, %c0_12] : memref<1x336x16xf32, #tpu.memory_space<vmem>>, vector<1x288x16xf32>
    %14 = vector.shape_cast %13 : vector<1x288x16xf32> to vector<288x16xf32>
    %15 = arith.truncf %14 : vector<288x16xf32> to vector<288x16xbf16>
    %c2_13 = arith.constant 2 : index
    %c0_14 = arith.constant 0 : index
    %c0_15 = arith.constant 0 : index
    %16 = vector.load %arg2[%c2_13, %c0_14, %c0_15] : memref<9x16x128xbf16, #tpu.memory_space<vmem>>, vector<1x16x128xbf16>
    %17 = vector.shape_cast %16 : vector<1x16x128xbf16> to vector<16x128xbf16>
    %cst_16 = arith.constant dense<0.000000e+00> : vector<288x128xf32>
    %18 = tpu.matmul %15, %17, %cst_16 {dimension_numbers = #tpu.dot_dimension_numbers<[1], [0], [0], [1], [0, 0, 1, 1], [], []>} : vector<288x16xbf16>, vector<16x128xbf16>, vector<288x128xf32> -> vector<288x128xf32>
    %19 = arith.addf %12, %18 : vector<288x128xf32>
    %c0_17 = arith.constant 0 : index
    %c18 = arith.constant 18 : index
    %c0_18 = arith.constant 0 : index
    %20 = vector.load %arg1[%c0_17, %c18, %c0_18] : memref<1x336x16xf32, #tpu.memory_space<vmem>>, vector<1x288x16xf32>
    %21 = vector.shape_cast %20 : vector<1x288x16xf32> to vector<288x16xf32>
    %22 = arith.truncf %21 : vector<288x16xf32> to vector<288x16xbf16>
    %c3 = arith.constant 3 : index
    %c0_19 = arith.constant 0 : index
    %c0_20 = arith.constant 0 : index
    %23 = vector.load %arg2[%c3, %c0_19, %c0_20] : memref<9x16x128xbf16, #tpu.memory_space<vmem>>, vector<1x16x128xbf16>
    %24 = vector.shape_cast %23 : vector<1x16x128xbf16> to vector<16x128xbf16>
    %cst_21 = arith.constant dense<0.000000e+00> : vector<288x128xf32>
    %25 = tpu.matmul %22, %24, %cst_21 {dimension_numbers = #tpu.dot_dimension_numbers<[1], [0], [0], [1], [0, 0, 1, 1], [], []>} : vector<288x16xbf16>, vector<16x128xbf16>, vector<288x128xf32> -> vector<288x128xf32>
    %26 = arith.addf %19, %25 : vector<288x128xf32>
    %c0_22 = arith.constant 0 : index
    %c19 = arith.constant 19 : index
    %c0_23 = arith.constant 0 : index
    %27 = vector.load %arg1[%c0_22, %c19, %c0_23] : memref<1x336x16xf32, #tpu.memory_space<vmem>>, vector<1x288x16xf32>
    %28 = vector.shape_cast %27 : vector<1x288x16xf32> to vector<288x16xf32>
    %29 = arith.truncf %28 : vector<288x16xf32> to vector<288x16xbf16>
    %c4 = arith.constant 4 : index
    %c0_24 = arith.constant 0 : index
    %c0_25 = arith.constant 0 : index
    %30 = vector.load %arg2[%c4, %c0_24, %c0_25] : memref<9x16x128xbf16, #tpu.memory_space<vmem>>, vector<1x16x128xbf16>
    %31 = vector.shape_cast %30 : vector<1x16x128xbf16> to vector<16x128xbf16>
    %cst_26 = arith.constant dense<0.000000e+00> : vector<288x128xf32>
    %32 = tpu.matmul %29, %31, %cst_26 {dimension_numbers = #tpu.dot_dimension_numbers<[1], [0], [0], [1], [0, 0, 1, 1], [], []>} : vector<288x16xbf16>, vector<16x128xbf16>, vector<288x128xf32> -> vector<288x128xf32>
    %33 = arith.addf %26, %32 : vector<288x128xf32>
    %c0_27 = arith.constant 0 : index
    %c20 = arith.constant 20 : index
    %c0_28 = arith.constant 0 : index
    %34 = vector.load %arg1[%c0_27, %c20, %c0_28] : memref<1x336x16xf32, #tpu.memory_space<vmem>>, vector<1x288x16xf32>
    %35 = vector.shape_cast %34 : vector<1x288x16xf32> to vector<288x16xf32>
    %36 = arith.truncf %35 : vector<288x16xf32> to vector<288x16xbf16>
    %c5 = arith.constant 5 : index
    %c0_29 = arith.constant 0 : index
    %c0_30 = arith.constant 0 : index
    %37 = vector.load %arg2[%c5, %c0_29, %c0_30] : memref<9x16x128xbf16, #tpu.memory_space<vmem>>, vector<1x16x128xbf16>
    %38 = vector.shape_cast %37 : vector<1x16x128xbf16> to vector<16x128xbf16>
    %cst_31 = arith.constant dense<0.000000e+00> : vector<288x128xf32>
    %39 = tpu.matmul %36, %38, %cst_31 {dimension_numbers = #tpu.dot_dimension_numbers<[1], [0], [0], [1], [0, 0, 1, 1], [], []>} : vector<288x16xbf16>, vector<16x128xbf16>, vector<288x128xf32> -> vector<288x128xf32>
    %40 = arith.addf %33, %39 : vector<288x128xf32>
    %c0_32 = arith.constant 0 : index
    %c36 = arith.constant 36 : index
    %c0_33 = arith.constant 0 : index
    %41 = vector.load %arg1[%c0_32, %c36, %c0_33] : memref<1x336x16xf32, #tpu.memory_space<vmem>>, vector<1x288x16xf32>
    %42 = vector.shape_cast %41 : vector<1x288x16xf32> to vector<288x16xf32>
    %43 = arith.truncf %42 : vector<288x16xf32> to vector<288x16xbf16>
    %c6 = arith.constant 6 : index
    %c0_34 = arith.constant 0 : index
    %c0_35 = arith.constant 0 : index
    %44 = vector.load %arg2[%c6, %c0_34, %c0_35] : memref<9x16x128xbf16, #tpu.memory_space<vmem>>, vector<1x16x128xbf16>
    %45 = vector.shape_cast %44 : vector<1x16x128xbf16> to vector<16x128xbf16>
    %cst_36 = arith.constant dense<0.000000e+00> : vector<288x128xf32>
    %46 = tpu.matmul %43, %45, %cst_36 {dimension_numbers = #tpu.dot_dimension_numbers<[1], [0], [0], [1], [0, 0, 1, 1], [], []>} : vector<288x16xbf16>, vector<16x128xbf16>, vector<288x128xf32> -> vector<288x128xf32>
    %47 = arith.addf %40, %46 : vector<288x128xf32>
    %c0_37 = arith.constant 0 : index
    %c37 = arith.constant 37 : index
    %c0_38 = arith.constant 0 : index
    %48 = vector.load %arg1[%c0_37, %c37, %c0_38] : memref<1x336x16xf32, #tpu.memory_space<vmem>>, vector<1x288x16xf32>
    %49 = vector.shape_cast %48 : vector<1x288x16xf32> to vector<288x16xf32>
    %50 = arith.truncf %49 : vector<288x16xf32> to vector<288x16xbf16>
    %c7 = arith.constant 7 : index
    %c0_39 = arith.constant 0 : index
    %c0_40 = arith.constant 0 : index
    %51 = vector.load %arg2[%c7, %c0_39, %c0_40] : memref<9x16x128xbf16, #tpu.memory_space<vmem>>, vector<1x16x128xbf16>
    %52 = vector.shape_cast %51 : vector<1x16x128xbf16> to vector<16x128xbf16>
    %cst_41 = arith.constant dense<0.000000e+00> : vector<288x128xf32>
    %53 = tpu.matmul %50, %52, %cst_41 {dimension_numbers = #tpu.dot_dimension_numbers<[1], [0], [0], [1], [0, 0, 1, 1], [], []>} : vector<288x16xbf16>, vector<16x128xbf16>, vector<288x128xf32> -> vector<288x128xf32>
    %54 = arith.addf %47, %53 : vector<288x128xf32>
    %c0_42 = arith.constant 0 : index
    %c38 = arith.constant 38 : index
    %c0_43 = arith.constant 0 : index
    %55 = vector.load %arg1[%c0_42, %c38, %c0_43] : memref<1x336x16xf32, #tpu.memory_space<vmem>>, vector<1x288x16xf32>
    %56 = vector.shape_cast %55 : vector<1x288x16xf32> to vector<288x16xf32>
    %57 = arith.truncf %56 : vector<288x16xf32> to vector<288x16xbf16>
    %c8 = arith.constant 8 : index
    %c0_44 = arith.constant 0 : index
    %c0_45 = arith.constant 0 : index
    %58 = vector.load %arg2[%c8, %c0_44, %c0_45] : memref<9x16x128xbf16, #tpu.memory_space<vmem>>, vector<1x16x128xbf16>
    %59 = vector.shape_cast %58 : vector<1x16x128xbf16> to vector<16x128xbf16>
    %cst_46 = arith.constant dense<0.000000e+00> : vector<288x128xf32>
    %60 = tpu.matmul %57, %59, %cst_46 {dimension_numbers = #tpu.dot_dimension_numbers<[1], [0], [0], [1], [0, 0, 1, 1], [], []>} : vector<288x16xbf16>, vector<16x128xbf16>, vector<288x128xf32> -> vector<288x128xf32>
    %61 = arith.addf %54, %60 : vector<288x128xf32>
    %62 = arith.truncf %61 : vector<288x128xf32> to vector<288x128xbf16>
    %c0_47 = arith.constant 0 : index
    %c0_48 = arith.constant 0 : index
    %c0_49 = arith.constant 0 : index
    %63 = vector.load %arg4[%c0_47, %c0_48, %c0_49] : memref<1x288x128xbf16, #tpu.memory_space<vmem>>, vector<1x288x128xbf16>
    %64 = vector.shape_cast %63 : vector<1x288x128xbf16> to vector<288x128xbf16>
    %65 = vector.shape_cast %62 : vector<288x128xbf16> to vector<1x288x128xbf16>
    tpu.vector_store %arg4[%c0_47, %c0_48, %c0_49], %65 {strides = array<i32>} : memref<1x288x128xbf16, #tpu.memory_space<vmem>>, vector<1x288x128xbf16>,
    %c0_50 = arith.constant 0 : index
    %c0_51 = arith.constant 0 : index
    %66 = vector.load %arg3[%c0_50, %c0_51] : memref<288x1xf32, #tpu.memory_space<vmem>>, vector<288x1xf32>
    %67 = vector.broadcast %66 : vector<288x1xf32> to vector<288x128xf32>
    %68 = arith.mulf %61, %67 : vector<288x128xf32>
    %cst_52 = arith.constant dense<0.000000e+00> : vector<128xf32>
    %69 = vector.multi_reduction <add>, %68, %cst_52 [0] : vector<288x128xf32> to vector<128xf32>
    %70 = vector.shape_cast %69 : vector<128xf32> to vector<1x128xf32>
    %c0_53 = arith.constant 0 : index
    %c0_54 = arith.constant 0 : index
    %c0_55 = arith.constant 0 : index
    %71 = vector.load %arg5[%c0_53, %c0_54, %c0_55] : memref<1x1x128xf32, #tpu.memory_space<vmem>>, vector<1x1x128xf32>
    %72 = vector.shape_cast %71 : vector<1x1x128xf32> to vector<1x128xf32>
    %73 = vector.shape_cast %70 : vector<1x128xf32> to vector<1x1x128xf32>
    tpu.vector_store %arg5[%c0_53, %c0_54, %c0_55], %73 {strides = array<i32>} : memref<1x1x128xf32, #tpu.memory_space<vmem>>, vector<1x1x128xf32>,
    %74 = arith.mulf %68, %61 : vector<288x128xf32>
    %cst_56 = arith.constant dense<0.000000e+00> : vector<128xf32>
    %75 = vector.multi_reduction <add>, %74, %cst_56 [0] : vector<288x128xf32> to vector<128xf32>
    %76 = vector.shape_cast %75 : vector<128xf32> to vector<1x128xf32>
    %c0_57 = arith.constant 0 : index
    %c0_58 = arith.constant 0 : index
    %c0_59 = arith.constant 0 : index
    %77 = vector.load %arg6[%c0_57, %c0_58, %c0_59] : memref<1x1x128xf32, #tpu.memory_space<vmem>>, vector<1x1x128xf32>
    %78 = vector.shape_cast %77 : vector<1x1x128xf32> to vector<1x128xf32>
    %79 = vector.shape_cast %76 : vector<1x128xf32> to vector<1x1x128xf32>
    tpu.vector_store %arg6[%c0_57, %c0_58, %c0_59], %79 {strides = array<i32>} : memref<1x1x128xf32, #tpu.memory_space<vmem>>, vector<1x1x128xf32>,
    return
  }
  func.func @transform_0(%arg0: i32) -> (i32, i32, i32) {
    %c0_i32 = arith.constant 0 : i32
    %c0_i32_0 = arith.constant 0 : i32
    %c0_i32_1 = arith.constant 0 : i32
    return %arg0, %c0_i32, %c0_i32_0 : i32, i32, i32
  }
  func.func @transform_1(%arg0: i32) -> (i32, i32, i32) {
    %c0_i32 = arith.constant 0 : i32
    %c0_i32_0 = arith.constant 0 : i32
    %c0_i32_1 = arith.constant 0 : i32
    %c0_i32_2 = arith.constant 0 : i32
    return %c0_i32, %c0_i32_0, %c0_i32_1 : i32, i32, i32
  }
  func.func @transform_2(%arg0: i32) -> (i32, i32) {
    %c0_i32 = arith.constant 0 : i32
    %c0_i32_0 = arith.constant 0 : i32
    %c0_i32_1 = arith.constant 0 : i32
    return %c0_i32, %c0_i32_0 : i32, i32
  }
  func.func @transform_3(%arg0: i32) -> (i32, i32, i32) {
    %c0_i32 = arith.constant 0 : i32
    %c0_i32_0 = arith.constant 0 : i32
    %c0_i32_1 = arith.constant 0 : i32
    return %arg0, %c0_i32, %c0_i32_0 : i32, i32, i32
  }
  func.func @transform_4(%arg0: i32) -> (i32, i32, i32) {
    %c0_i32 = arith.constant 0 : i32
    %c0_i32_0 = arith.constant 0 : i32
    %c0_i32_1 = arith.constant 0 : i32
    return %arg0, %c0_i32, %c0_i32_0 : i32, i32, i32
  }
  func.func @transform_5(%arg0: i32) -> (i32, i32, i32) {
    %c0_i32 = arith.constant 0 : i32
    %c0_i32_0 = arith.constant 0 : i32
    %c0_i32_1 = arith.constant 0 : i32
    return %arg0, %c0_i32, %c0_i32_0 : i32, i32, i32
  }
}

module attributes {stable_mosaic.version = 11 : i64} {
  func.func @_bn_relu_kernel(%arg0: i32, %arg1: i32, %arg2: memref<1x288x128xbf16, #tpu.memory_space<vmem>>, %arg3: memref<1x128xf32, #tpu.memory_space<vmem>>, %arg4: memref<1x128xf32, #tpu.memory_space<vmem>>, %arg5: memref<1x288x128xf32, #tpu.memory_space<vmem>>) attributes {dimension_semantics = [#tpu.dimension_semantics<parallel>, #tpu.dimension_semantics<parallel>], iteration_bounds = array<i64: 2, 1>, scalar_prefetch = 0 : i64, scratch_operands = 0 : i64, tpu.core_type = #tpu.core_type<tc>, window_params = [{transform_indices = @transform_0, window_bounds = array<i64: 1, 288, 128>}, {pipeline_mode = #tpu.pipeline_mode<synchronous>, transform_indices = @transform_1, window_bounds = array<i64: 1, 128>}, {pipeline_mode = #tpu.pipeline_mode<synchronous>, transform_indices = @transform_2, window_bounds = array<i64: 1, 128>}, {transform_indices = @transform_3, window_bounds = array<i64: 1, 288, 128>}]} {
    %c0 = arith.constant 0 : index
    %c0_0 = arith.constant 0 : index
    %c0_1 = arith.constant 0 : index
    %0 = vector.load %arg2[%c0, %c0_0, %c0_1] : memref<1x288x128xbf16, #tpu.memory_space<vmem>>, vector<1x288x128xbf16>
    %1 = vector.shape_cast %0 : vector<1x288x128xbf16> to vector<288x128xbf16>
    %2 = arith.extf %1 : vector<288x128xbf16> to vector<288x128xf32>
    %c0_2 = arith.constant 0 : index
    %c0_3 = arith.constant 0 : index
    %3 = vector.load %arg3[%c0_2, %c0_3] : memref<1x128xf32, #tpu.memory_space<vmem>>, vector<1x128xf32>
    %4 = vector.broadcast %3 : vector<1x128xf32> to vector<288x128xf32>
    %5 = arith.mulf %2, %4 : vector<288x128xf32>
    %c0_4 = arith.constant 0 : index
    %c0_5 = arith.constant 0 : index
    %6 = vector.load %arg4[%c0_4, %c0_5] : memref<1x128xf32, #tpu.memory_space<vmem>>, vector<1x128xf32>
    %7 = vector.broadcast %6 : vector<1x128xf32> to vector<288x128xf32>
    %8 = arith.addf %5, %7 : vector<288x128xf32>
    %cst = arith.constant 0.000000e+00 : f32
    %9 = vector.broadcast %cst : f32 to vector<288x128xf32>
    %10 = arith.maximumf %8, %9 : vector<288x128xf32>
    %c0_6 = arith.constant 0 : index
    %c0_7 = arith.constant 0 : index
    %c0_8 = arith.constant 0 : index
    %11 = vector.load %arg5[%c0_6, %c0_7, %c0_8] : memref<1x288x128xf32, #tpu.memory_space<vmem>>, vector<1x288x128xf32>
    %12 = vector.shape_cast %11 : vector<1x288x128xf32> to vector<288x128xf32>
    %13 = vector.shape_cast %10 : vector<288x128xf32> to vector<1x288x128xf32>
    tpu.vector_store %arg5[%c0_6, %c0_7, %c0_8], %13 {strides = array<i32>} : memref<1x288x128xf32, #tpu.memory_space<vmem>>, vector<1x288x128xf32>,
    return
  }
  func.func @transform_0(%arg0: i32, %arg1: i32) -> (i32, i32, i32) {
    %c0_i32 = arith.constant 0 : i32
    %c0_i32_0 = arith.constant 0 : i32
    return %arg0, %arg1, %c0_i32 : i32, i32, i32
  }
  func.func @transform_1(%arg0: i32, %arg1: i32) -> (i32, i32) {
    %c0_i32 = arith.constant 0 : i32
    %c0_i32_0 = arith.constant 0 : i32
    %c0_i32_1 = arith.constant 0 : i32
    return %c0_i32, %c0_i32_0 : i32, i32
  }
  func.func @transform_2(%arg0: i32, %arg1: i32) -> (i32, i32) {
    %c0_i32 = arith.constant 0 : i32
    %c0_i32_0 = arith.constant 0 : i32
    %c0_i32_1 = arith.constant 0 : i32
    return %c0_i32, %c0_i32_0 : i32, i32
  }
  func.func @transform_3(%arg0: i32, %arg1: i32) -> (i32, i32, i32) {
    %c0_i32 = arith.constant 0 : i32
    %c0_i32_0 = arith.constant 0 : i32
    return %arg0, %arg1, %c0_i32 : i32, i32, i32
  }
}

module attributes {stable_mosaic.version = 11 : i64} {
  func.func @kernel(%arg0: i32, %arg1: memref<1x288x128xbf16, #tpu.memory_space<vmem>>, %arg2: memref<1x128xf32, #tpu.memory_space<vmem>>, %arg3: memref<1x128xf32, #tpu.memory_space<vmem>>, %arg4: memref<9x128x128xbf16, #tpu.memory_space<vmem>>, %arg5: memref<288x1xf32, #tpu.memory_space<vmem>>, %arg6: memref<1x288x128xbf16, #tpu.memory_space<vmem>>, %arg7: memref<1x1x128xf32, #tpu.memory_space<vmem>>, %arg8: memref<1x1x128xf32, #tpu.memory_space<vmem>>, %arg9: memref<352x128xf32, #tpu.memory_space<vmem>>) attributes {dimension_semantics = [#tpu.dimension_semantics<parallel>], iteration_bounds = array<i64: 2>, scalar_prefetch = 0 : i64, scratch_operands = 1 : i64, tpu.core_type = #tpu.core_type<tc>, window_params = [{transform_indices = @transform_0, window_bounds = array<i64: 1, 288, 128>}, {pipeline_mode = #tpu.pipeline_mode<synchronous>, transform_indices = @transform_1, window_bounds = array<i64: 1, 128>}, {pipeline_mode = #tpu.pipeline_mode<synchronous>, transform_indices = @transform_2, window_bounds = array<i64: 1, 128>}, {pipeline_mode = #tpu.pipeline_mode<synchronous>, transform_indices = @transform_3, window_bounds = array<i64: 9, 128, 128>}, {pipeline_mode = #tpu.pipeline_mode<synchronous>, transform_indices = @transform_4, window_bounds = array<i64: 288, 1>}, {transform_indices = @transform_5, window_bounds = array<i64: 1, 288, 128>}, {transform_indices = @transform_6, window_bounds = array<i64: 1, 1, 128>}, {transform_indices = @transform_7, window_bounds = array<i64: 1, 1, 128>}]} {
    %c0 = arith.constant 0 : index
    %c0_0 = arith.constant 0 : index
    %0 = vector.load %arg5[%c0, %c0_0] : memref<288x1xf32, #tpu.memory_space<vmem>>, vector<288x1xf32>
    %c0_1 = arith.constant 0 : index
    %c0_2 = arith.constant 0 : index
    %c0_3 = arith.constant 0 : index
    %1 = vector.load %arg1[%c0_1, %c0_2, %c0_3] : memref<1x288x128xbf16, #tpu.memory_space<vmem>>, vector<1x288x128xbf16>
    %2 = vector.shape_cast %1 : vector<1x288x128xbf16> to vector<288x128xbf16>
    %3 = arith.extf %2 : vector<288x128xbf16> to vector<288x128xf32>
    %c0_4 = arith.constant 0 : index
    %c0_5 = arith.constant 0 : index
    %4 = vector.load %arg2[%c0_4, %c0_5] : memref<1x128xf32, #tpu.memory_space<vmem>>, vector<1x128xf32>
    %5 = vector.broadcast %4 : vector<1x128xf32> to vector<288x128xf32>
    %6 = arith.mulf %3, %5 : vector<288x128xf32>
    %c0_6 = arith.constant 0 : index
    %c0_7 = arith.constant 0 : index
    %7 = vector.load %arg3[%c0_6, %c0_7] : memref<1x128xf32, #tpu.memory_space<vmem>>, vector<1x128xf32>
    %8 = vector.broadcast %7 : vector<1x128xf32> to vector<288x128xf32>
    %9 = arith.addf %6, %8 : vector<288x128xf32>
    %cst = arith.constant 0.000000e+00 : f32
    %10 = vector.broadcast %cst : f32 to vector<288x128xf32>
    %11 = arith.maximumf %9, %10 : vector<288x128xf32>
    %12 = vector.broadcast %0 : vector<288x1xf32> to vector<288x128xf32>
    %13 = arith.mulf %11, %12 : vector<288x128xf32>
    %cst_8 = arith.constant 0.000000e+00 : f32
    %14 = vector.broadcast %cst_8 : f32 to vector<32x128xf32>
    %c0_9 = arith.constant 0 : index
    %c0_10 = arith.constant 0 : index
    %15 = vector.load %arg9[%c0_9, %c0_10] : memref<352x128xf32, #tpu.memory_space<vmem>>, vector<32x128xf32>
    tpu.vector_store %arg9[%c0_9, %c0_10], %14 {strides = array<i32>} : memref<352x128xf32, #tpu.memory_space<vmem>>, vector<32x128xf32>,
    %cst_11 = arith.constant 0.000000e+00 : f32
    %16 = vector.broadcast %cst_11 : f32 to vector<32x128xf32>
    %c320 = arith.constant 320 : index
    %c0_12 = arith.constant 0 : index
    %17 = vector.load %arg9[%c320, %c0_12] : memref<352x128xf32, #tpu.memory_space<vmem>>, vector<32x128xf32>
    tpu.vector_store %arg9[%c320, %c0_12], %16 {strides = array<i32>} : memref<352x128xf32, #tpu.memory_space<vmem>>, vector<32x128xf32>,
    %c32 = arith.constant 32 : index
    %c0_13 = arith.constant 0 : index
    %18 = vector.load %arg9[%c32, %c0_13] : memref<352x128xf32, #tpu.memory_space<vmem>>, vector<288x128xf32>
    tpu.vector_store %arg9[%c32, %c0_13], %13 {strides = array<i32>} : memref<352x128xf32, #tpu.memory_space<vmem>>, vector<288x128xf32>,
    %c13 = arith.constant 13 : index
    %c0_14 = arith.constant 0 : index
    %19 = vector.load %arg9[%c13, %c0_14] : memref<352x128xf32, #tpu.memory_space<vmem>>, vector<288x128xf32>
    %20 = arith.truncf %19 : vector<288x128xf32> to vector<288x128xbf16>
    %c0_15 = arith.constant 0 : index
    %c0_16 = arith.constant 0 : index
    %c0_17 = arith.constant 0 : index
    %21 = vector.load %arg4[%c0_15, %c0_16, %c0_17] : memref<9x128x128xbf16, #tpu.memory_space<vmem>>, vector<1x128x128xbf16>
    %22 = vector.shape_cast %21 : vector<1x128x128xbf16> to vector<128x128xbf16>
    %cst_18 = arith.constant dense<0.000000e+00> : vector<288x128xf32>
    %23 = tpu.matmul %20, %22, %cst_18 {dimension_numbers = #tpu.dot_dimension_numbers<[1], [0], [0], [1], [0, 0, 1, 1], [], []>} : vector<288x128xbf16>, vector<128x128xbf16>, vector<288x128xf32> -> vector<288x128xf32>
    %c14 = arith.constant 14 : index
    %c0_19 = arith.constant 0 : index
    %24 = vector.load %arg9[%c14, %c0_19] : memref<352x128xf32, #tpu.memory_space<vmem>>, vector<288x128xf32>
    %25 = arith.truncf %24 : vector<288x128xf32> to vector<288x128xbf16>
    %c1 = arith.constant 1 : index
    %c0_20 = arith.constant 0 : index
    %c0_21 = arith.constant 0 : index
    %26 = vector.load %arg4[%c1, %c0_20, %c0_21] : memref<9x128x128xbf16, #tpu.memory_space<vmem>>, vector<1x128x128xbf16>
    %27 = vector.shape_cast %26 : vector<1x128x128xbf16> to vector<128x128xbf16>
    %cst_22 = arith.constant dense<0.000000e+00> : vector<288x128xf32>
    %28 = tpu.matmul %25, %27, %cst_22 {dimension_numbers = #tpu.dot_dimension_numbers<[1], [0], [0], [1], [0, 0, 1, 1], [], []>} : vector<288x128xbf16>, vector<128x128xbf16>, vector<288x128xf32> -> vector<288x128xf32>
    %29 = arith.addf %23, %28 : vector<288x128xf32>
    %c15 = arith.constant 15 : index
    %c0_23 = arith.constant 0 : index
    %30 = vector.load %arg9[%c15, %c0_23] : memref<352x128xf32, #tpu.memory_space<vmem>>, vector<288x128xf32>
    %31 = arith.truncf %30 : vector<288x128xf32> to vector<288x128xbf16>
    %c2 = arith.constant 2 : index
    %c0_24 = arith.constant 0 : index
    %c0_25 = arith.constant 0 : index
    %32 = vector.load %arg4[%c2, %c0_24, %c0_25] : memref<9x128x128xbf16, #tpu.memory_space<vmem>>, vector<1x128x128xbf16>
    %33 = vector.shape_cast %32 : vector<1x128x128xbf16> to vector<128x128xbf16>
    %cst_26 = arith.constant dense<0.000000e+00> : vector<288x128xf32>
    %34 = tpu.matmul %31, %33, %cst_26 {dimension_numbers = #tpu.dot_dimension_numbers<[1], [0], [0], [1], [0, 0, 1, 1], [], []>} : vector<288x128xbf16>, vector<128x128xbf16>, vector<288x128xf32> -> vector<288x128xf32>
    %35 = arith.addf %29, %34 : vector<288x128xf32>
    %c31 = arith.constant 31 : index
    %c0_27 = arith.constant 0 : index
    %36 = vector.load %arg9[%c31, %c0_27] : memref<352x128xf32, #tpu.memory_space<vmem>>, vector<288x128xf32>
    %37 = arith.truncf %36 : vector<288x128xf32> to vector<288x128xbf16>
    %c3 = arith.constant 3 : index
    %c0_28 = arith.constant 0 : index
    %c0_29 = arith.constant 0 : index
    %38 = vector.load %arg4[%c3, %c0_28, %c0_29] : memref<9x128x128xbf16, #tpu.memory_space<vmem>>, vector<1x128x128xbf16>
    %39 = vector.shape_cast %38 : vector<1x128x128xbf16> to vector<128x128xbf16>
    %cst_30 = arith.constant dense<0.000000e+00> : vector<288x128xf32>
    %40 = tpu.matmul %37, %39, %cst_30 {dimension_numbers = #tpu.dot_dimension_numbers<[1], [0], [0], [1], [0, 0, 1, 1], [], []>} : vector<288x128xbf16>, vector<128x128xbf16>, vector<288x128xf32> -> vector<288x128xf32>
    %41 = arith.addf %35, %40 : vector<288x128xf32>
    %c32_31 = arith.constant 32 : index
    %c0_32 = arith.constant 0 : index
    %42 = vector.load %arg9[%c32_31, %c0_32] : memref<352x128xf32, #tpu.memory_space<vmem>>, vector<288x128xf32>
    %43 = arith.truncf %42 : vector<288x128xf32> to vector<288x128xbf16>
    %c4 = arith.constant 4 : index
    %c0_33 = arith.constant 0 : index
    %c0_34 = arith.constant 0 : index
    %44 = vector.load %arg4[%c4, %c0_33, %c0_34] : memref<9x128x128xbf16, #tpu.memory_space<vmem>>, vector<1x128x128xbf16>
    %45 = vector.shape_cast %44 : vector<1x128x128xbf16> to vector<128x128xbf16>
    %cst_35 = arith.constant dense<0.000000e+00> : vector<288x128xf32>
    %46 = tpu.matmul %43, %45, %cst_35 {dimension_numbers = #tpu.dot_dimension_numbers<[1], [0], [0], [1], [0, 0, 1, 1], [], []>} : vector<288x128xbf16>, vector<128x128xbf16>, vector<288x128xf32> -> vector<288x128xf32>
    %47 = arith.addf %41, %46 : vector<288x128xf32>
    %c33 = arith.constant 33 : index
    %c0_36 = arith.constant 0 : index
    %48 = vector.load %arg9[%c33, %c0_36] : memref<352x128xf32, #tpu.memory_space<vmem>>, vector<288x128xf32>
    %49 = arith.truncf %48 : vector<288x128xf32> to vector<288x128xbf16>
    %c5 = arith.constant 5 : index
    %c0_37 = arith.constant 0 : index
    %c0_38 = arith.constant 0 : index
    %50 = vector.load %arg4[%c5, %c0_37, %c0_38] : memref<9x128x128xbf16, #tpu.memory_space<vmem>>, vector<1x128x128xbf16>
    %51 = vector.shape_cast %50 : vector<1x128x128xbf16> to vector<128x128xbf16>
    %cst_39 = arith.constant dense<0.000000e+00> : vector<288x128xf32>
    %52 = tpu.matmul %49, %51, %cst_39 {dimension_numbers = #tpu.dot_dimension_numbers<[1], [0], [0], [1], [0, 0, 1, 1], [], []>} : vector<288x128xbf16>, vector<128x128xbf16>, vector<288x128xf32> -> vector<288x128xf32>
    %53 = arith.addf %47, %52 : vector<288x128xf32>
    %c49 = arith.constant 49 : index
    %c0_40 = arith.constant 0 : index
    %54 = vector.load %arg9[%c49, %c0_40] : memref<352x128xf32, #tpu.memory_space<vmem>>, vector<288x128xf32>
    %55 = arith.truncf %54 : vector<288x128xf32> to vector<288x128xbf16>
    %c6 = arith.constant 6 : index
    %c0_41 = arith.constant 0 : index
    %c0_42 = arith.constant 0 : index
    %56 = vector.load %arg4[%c6, %c0_41, %c0_42] : memref<9x128x128xbf16, #tpu.memory_space<vmem>>, vector<1x128x128xbf16>
    %57 = vector.shape_cast %56 : vector<1x128x128xbf16> to vector<128x128xbf16>
    %cst_43 = arith.constant dense<0.000000e+00> : vector<288x128xf32>
    %58 = tpu.matmul %55, %57, %cst_43 {dimension_numbers = #tpu.dot_dimension_numbers<[1], [0], [0], [1], [0, 0, 1, 1], [], []>} : vector<288x128xbf16>, vector<128x128xbf16>, vector<288x128xf32> -> vector<288x128xf32>
    %59 = arith.addf %53, %58 : vector<288x128xf32>
    %c50 = arith.constant 50 : index
    %c0_44 = arith.constant 0 : index
    %60 = vector.load %arg9[%c50, %c0_44] : memref<352x128xf32, #tpu.memory_space<vmem>>, vector<288x128xf32>
    %61 = arith.truncf %60 : vector<288x128xf32> to vector<288x128xbf16>
    %c7 = arith.constant 7 : index
    %c0_45 = arith.constant 0 : index
    %c0_46 = arith.constant 0 : index
    %62 = vector.load %arg4[%c7, %c0_45, %c0_46] : memref<9x128x128xbf16, #tpu.memory_space<vmem>>, vector<1x128x128xbf16>
    %63 = vector.shape_cast %62 : vector<1x128x128xbf16> to vector<128x128xbf16>
    %cst_47 = arith.constant dense<0.000000e+00> : vector<288x128xf32>
    %64 = tpu.matmul %61, %63, %cst_47 {dimension_numbers = #tpu.dot_dimension_numbers<[1], [0], [0], [1], [0, 0, 1, 1], [], []>} : vector<288x128xbf16>, vector<128x128xbf16>, vector<288x128xf32> -> vector<288x128xf32>
    %65 = arith.addf %59, %64 : vector<288x128xf32>
    %c51 = arith.constant 51 : index
    %c0_48 = arith.constant 0 : index
    %66 = vector.load %arg9[%c51, %c0_48] : memref<352x128xf32, #tpu.memory_space<vmem>>, vector<288x128xf32>
    %67 = arith.truncf %66 : vector<288x128xf32> to vector<288x128xbf16>
    %c8 = arith.constant 8 : index
    %c0_49 = arith.constant 0 : index
    %c0_50 = arith.constant 0 : index
    %68 = vector.load %arg4[%c8, %c0_49, %c0_50] : memref<9x128x128xbf16, #tpu.memory_space<vmem>>, vector<1x128x128xbf16>
    %69 = vector.shape_cast %68 : vector<1x128x128xbf16> to vector<128x128xbf16>
    %cst_51 = arith.constant dense<0.000000e+00> : vector<288x128xf32>
    %70 = tpu.matmul %67, %69, %cst_51 {dimension_numbers = #tpu.dot_dimension_numbers<[1], [0], [0], [1], [0, 0, 1, 1], [], []>} : vector<288x128xbf16>, vector<128x128xbf16>, vector<288x128xf32> -> vector<288x128xf32>
    %71 = arith.addf %65, %70 : vector<288x128xf32>
    %72 = arith.truncf %71 : vector<288x128xf32> to vector<288x128xbf16>
    %c0_52 = arith.constant 0 : index
    %c0_53 = arith.constant 0 : index
    %c0_54 = arith.constant 0 : index
    %73 = vector.load %arg6[%c0_52, %c0_53, %c0_54] : memref<1x288x128xbf16, #tpu.memory_space<vmem>>, vector<1x288x128xbf16>
    %74 = vector.shape_cast %73 : vector<1x288x128xbf16> to vector<288x128xbf16>
    %75 = vector.shape_cast %72 : vector<288x128xbf16> to vector<1x288x128xbf16>
    tpu.vector_store %arg6[%c0_52, %c0_53, %c0_54], %75 {strides = array<i32>} : memref<1x288x128xbf16, #tpu.memory_space<vmem>>, vector<1x288x128xbf16>,
    %76 = vector.broadcast %0 : vector<288x1xf32> to vector<288x128xf32>
    %77 = arith.mulf %71, %76 : vector<288x128xf32>
    %cst_55 = arith.constant dense<0.000000e+00> : vector<128xf32>
    %78 = vector.multi_reduction <add>, %77, %cst_55 [0] : vector<288x128xf32> to vector<128xf32>
    %79 = vector.shape_cast %78 : vector<128xf32> to vector<1x128xf32>
    %c0_56 = arith.constant 0 : index
    %c0_57 = arith.constant 0 : index
    %c0_58 = arith.constant 0 : index
    %80 = vector.load %arg7[%c0_56, %c0_57, %c0_58] : memref<1x1x128xf32, #tpu.memory_space<vmem>>, vector<1x1x128xf32>
    %81 = vector.shape_cast %80 : vector<1x1x128xf32> to vector<1x128xf32>
    %82 = vector.shape_cast %79 : vector<1x128xf32> to vector<1x1x128xf32>
    tpu.vector_store %arg7[%c0_56, %c0_57, %c0_58], %82 {strides = array<i32>} : memref<1x1x128xf32, #tpu.memory_space<vmem>>, vector<1x1x128xf32>,
    %83 = arith.mulf %77, %71 : vector<288x128xf32>
    %cst_59 = arith.constant dense<0.000000e+00> : vector<128xf32>
    %84 = vector.multi_reduction <add>, %83, %cst_59 [0] : vector<288x128xf32> to vector<128xf32>
    %85 = vector.shape_cast %84 : vector<128xf32> to vector<1x128xf32>
    %c0_60 = arith.constant 0 : index
    %c0_61 = arith.constant 0 : index
    %c0_62 = arith.constant 0 : index
    %86 = vector.load %arg8[%c0_60, %c0_61, %c0_62] : memref<1x1x128xf32, #tpu.memory_space<vmem>>, vector<1x1x128xf32>
    %87 = vector.shape_cast %86 : vector<1x1x128xf32> to vector<1x128xf32>
    %88 = vector.shape_cast %85 : vector<1x128xf32> to vector<1x1x128xf32>
    tpu.vector_store %arg8[%c0_60, %c0_61, %c0_62], %88 {strides = array<i32>} : memref<1x1x128xf32, #tpu.memory_space<vmem>>, vector<1x1x128xf32>,
    return
  }
  func.func @transform_0(%arg0: i32) -> (i32, i32, i32) {
    %c0_i32 = arith.constant 0 : i32
    %c0_i32_0 = arith.constant 0 : i32
    %c0_i32_1 = arith.constant 0 : i32
    return %arg0, %c0_i32, %c0_i32_0 : i32, i32, i32
  }
  func.func @transform_1(%arg0: i32) -> (i32, i32) {
    %c0_i32 = arith.constant 0 : i32
    %c0_i32_0 = arith.constant 0 : i32
    %c0_i32_1 = arith.constant 0 : i32
    return %c0_i32, %c0_i32_0 : i32, i32
  }
  func.func @transform_2(%arg0: i32) -> (i32, i32) {
    %c0_i32 = arith.constant 0 : i32
    %c0_i32_0 = arith.constant 0 : i32
    %c0_i32_1 = arith.constant 0 : i32
    return %c0_i32, %c0_i32_0 : i32, i32
  }
  func.func @transform_3(%arg0: i32) -> (i32, i32, i32) {
    %c0_i32 = arith.constant 0 : i32
    %c0_i32_0 = arith.constant 0 : i32
    %c0_i32_1 = arith.constant 0 : i32
    %c0_i32_2 = arith.constant 0 : i32
    return %c0_i32, %c0_i32_0, %c0_i32_1 : i32, i32, i32
  }
  func.func @transform_4(%arg0: i32) -> (i32, i32) {
    %c0_i32 = arith.constant 0 : i32
    %c0_i32_0 = arith.constant 0 : i32
    %c0_i32_1 = arith.constant 0 : i32
    return %c0_i32, %c0_i32_0 : i32, i32
  }
  func.func @transform_5(%arg0: i32) -> (i32, i32, i32) {
    %c0_i32 = arith.constant 0 : i32
    %c0_i32_0 = arith.constant 0 : i32
    %c0_i32_1 = arith.constant 0 : i32
    return %arg0, %c0_i32, %c0_i32_0 : i32, i32, i32
  }
  func.func @transform_6(%arg0: i32) -> (i32, i32, i32) {
    %c0_i32 = arith.constant 0 : i32
    %c0_i32_0 = arith.constant 0 : i32
    %c0_i32_1 = arith.constant 0 : i32
    return %arg0, %c0_i32, %c0_i32_0 : i32, i32, i32
  }
  func.func @transform_7(%arg0: i32) -> (i32, i32, i32) {
    %c0_i32 = arith.constant 0 : i32
    %c0_i32_0 = arith.constant 0 : i32
    %c0_i32_1 = arith.constant 0 : i32
    return %arg0, %c0_i32, %c0_i32_0 : i32, i32, i32
  }
}

</mosaic_0001>

<llo_original>
// kernel: double_conv.5
$region0: #{double_conv.5}
  #allocation0 [shape = 'u32[]', space=smem, size = 0x4, offset = 0x4, fixed_abs, tag = 'smem constant byte address 0x4 - core index']
  #allocation1 [shape = 'u32[144,128]{1,0:T(1,128)}', space=vmem, size = 0x12000, scoped, tag = 'internal scratch']
  %s0 = inlined_call_operand.vmem [shape: bf16[2,288,128], index: 0, kind: input, shape index: {}]
  %s1 = inlined_call_operand.vmem [shape: f32[1,128], index: 1, kind: input, shape index: {}]
  %s2 = inlined_call_operand.vmem [shape: f32[1,128], index: 2, kind: input, shape index: {}]
  %s3 = inlined_call_operand.vmem [shape: f32[2,288,128], index: 3, kind: output, shape index: {}]
  %s4 = sld [smem:[#allocation0]]
  $region45: #{double_conv.5} parent=0
    _
  %s6 = ssub.s32 1, %s4
  %s7 = scalar_select 0, %s6, %s4
  loop: start=0, step=1, limit=4
  $region2: #{double_conv.5} parent=0 // loop_pre_header
    _
  $region3: #{double_conv.5} parent=0 // loop_header
    %s9 = sphi 0, %s13
    %p10 = scmp.ge.s32.totalorder %s9, 4
    %s16 = sphi 0, %s28
    %s17 = sphi 0, %s24
    %s18 = sphi 0, %s16
    %s19 = sphi 0, %s17
    %s20 = sphi 0, %s18
    %s21 = sphi 0, %s19
    %s33 = sphi 0, %s35
    %s36 = sphi 0, %s33
    %s37 = sphi 0, %s36
    %s53 = sphi 0, %s37
    %s57 = sphi 0, %s57
    %s59 = sphi 0, %s57
    %s60 = sphi 0, %s59
    %s74 = sphi 0, %s60
    %s78 = sphi 0, %s78
    %s80 = sphi 0, %s78
    %s81 = sphi 0, %s80
    %s95 = sphi 0, %s81
    %s103 = sphi 0, %s105
    %s106 = sphi 0, %s103
    %s107 = sphi 0, %s106
    %s123 = sphi 0, %s107
  $region4: #{double_conv.5} parent=0 // loop_header_branch
    %12 = sbr.rel (%p10) target = $region8
  $region5: #{double_conv.5} parent=0 // loop_body
    %s14 = ssub.s32 %s9, 1
    %s15 = ssub.s32 %s9, 2
    %s22 = sadd.s32 1, %s17
    %p23 = scmp.ge.s32.totalorder %s22, 1
    %s24 = scalar_select %p23, 0, %s22
    %s25 = sadd.s32 1, %s16
    %s26 = scalar_select %p23, %s25, %s16
    %p27 = scmp.ge.s32.totalorder %s26, 2
    %s28 = scalar_select %p27, 0, %s26
    %s29 = ssub.s32 %s16, %s28
    %s30 = ssub.s32 %s17, %s24
    %s31 = sor.u32 %s29, %s30
    %p32 = scmp.eq.s32.totalorder %s31, 0
    %s34 = sadd.s32 %s33, 1
    %s35 = scalar_select %p32, %s33, %s34
    %p38 = pneg %p32
    %p39 = scmp.eq.s32.totalorder %s9, 1
    %p40 = por %p38, %p39
    %p41 = scmp.ne.s32.totalorder %s33, %s36
    %p42 = scmp.eq.s32.totalorder %s9, 0
    %p43 = por %p41, %p42
    %p44 = scmp.ne.s32.totalorder %s33, %s36
    %p45 = scmp.eq.s32.totalorder %s14, 1
    %p46 = por %p44, %p45
    %p47 = scmp.ne.s32.totalorder %s36, %s37
    %p48 = scmp.eq.s32.totalorder %s14, 0
    %p49 = por %p47, %p48
    %p50 = scmp.ne.s32.totalorder %s36, %s37
    %p51 = scmp.eq.s32.totalorder %s15, 1
    %p52 = por %p50, %p51
    %p54 = scmp.ne.s32.totalorder %s37, %s53
    %p55 = scmp.eq.s32.totalorder %s15, 0
    %p56 = por %p54, %p55
    %s58 = sadd.s32 %s57, 1
    %p61 = scmp.eq.s32.totalorder %s9, 1
    %p62 = scmp.ne.s32.totalorder %s57, %s59
    %p63 = scmp.eq.s32.totalorder %s9, 0
    %p64 = por %p62, %p63
    %p65 = scmp.ne.s32.totalorder %s57, %s59
    %p66 = scmp.eq.s32.totalorder %s14, 1
    %p67 = por %p65, %p66
    %p68 = scmp.ne.s32.totalorder %s59, %s60
    %p69 = scmp.eq.s32.totalorder %s14, 0
    %p70 = por %p68, %p69
    %p71 = scmp.ne.s32.totalorder %s59, %s60
    %p72 = scmp.eq.s32.totalorder %s15, 1
    %p73 = por %p71, %p72
    %p75 = scmp.ne.s32.totalorder %s60, %s74
    %p76 = scmp.eq.s32.totalorder %s15, 0
    %p77 = por %p75, %p76
    %s79 = sadd.s32 %s78, 1
    %p82 = scmp.eq.s32.totalorder %s9, 1
    %p83 = scmp.ne.s32.totalorder %s78, %s80
    %p84 = scmp.eq.s32.totalorder %s9, 0
    %p85 = por %p83, %p84
    %p86 = scmp.ne.s32.totalorder %s78, %s80
    %p87 = scmp.eq.s32.totalorder %s14, 1
    %p88 = por %p86, %p87
    %p89 = scmp.ne.s32.totalorder %s80, %s81
    %p90 = scmp.eq.s32.totalorder %s14, 0
    %p91 = por %p89, %p90
    %p92 = scmp.ne.s32.totalorder %s80, %s81
    %p93 = scmp.eq.s32.totalorder %s15, 1
    %p94 = por %p92, %p93
    %p96 = scmp.ne.s32.totalorder %s81, %s95
    %p97 = scmp.eq.s32.totalorder %s15, 0
    %p98 = por %p96, %p97
    %s99 = ssub.s32 %s16, %s28
    %s100 = ssub.s32 %s17, %s24
    %s101 = sor.u32 %s99, %s100
    %p102 = scmp.eq.s32.totalorder %s101, 0
    %s104 = sadd.s32 %s103, 1
    %s105 = scalar_select %p102, %s103, %s104
    %p108 = pneg %p102
    %p109 = scmp.eq.s32.totalorder %s9, 1
    %p110 = por %p108, %p109
    %p111 = scmp.ne.s32.totalorder %s103, %s106
    %p112 = scmp.eq.s32.totalorder %s9, 0
    %p113 = por %p111, %p112
    %p114 = scmp.ne.s32.totalorder %s103, %s106
    %p115 = scmp.eq.s32.totalorder %s14, 1
    %p116 = por %p114, %p115
    %p117 = scmp.ne.s32.totalorder %s106, %s107
    %p118 = scmp.eq.s32.totalorder %s14, 0
    %p119 = por %p117, %p118
    %p120 = scmp.ne.s32.totalorder %s106, %s107
    %p121 = scmp.eq.s32.totalorder %s15, 1
    %p122 = por %p120, %p121
    %p124 = scmp.ne.s32.totalorder %s107, %s123
    %p125 = scmp.eq.s32.totalorder %s15, 0
    %p126 = por %p124, %p125
    %p127 = scmp.le.s32.totalorder 1, %s9
    %p128 = scmp.lt.s32.totalorder %s9, 3
    %p129 = pnand %p127, %p128
    %p130 = pneg %p129
    // Predicated region
    $region9: #{double_conv.5} parent=5 // pred_check
      _
    $region10: #{double_conv.5} parent=5 // pred_check_branch
      %132 = sbr.rel (%p129) target = $region12
    $region11: #{double_conv.5} parent=5 // pred_region
      %s133 = ssub.s32 %s9, 1
      // Predicated region
      $region13: #{double_conv.5} parent=11 // pred_check
        %p134 = pneg %p70
      $region14: #{double_conv.5} parent=11 // pred_check_branch
        %136 = sbr.rel (%p134) target = $region16
      $region15: #{double_conv.5} parent=11 // pred_region
        _
      $region16: #{double_conv.5} parent=11 // pred_fallthru
        _
      // Predicated region
      $region17: #{double_conv.5} parent=11 // pred_check
        %p137 = pneg %p91
      $region18: #{double_conv.5} parent=11 // pred_check_branch
        %139 = sbr.rel (%p137) target = $region20
      $region19: #{double_conv.5} parent=11 // pred_region
        _
      $region20: #{double_conv.5} parent=11 // pred_fallthru
        _
    $region12: #{double_conv.5} parent=5 // pred_fallthru
      _
    %p140 = scmp.lt.s32.totalorder %s9, 2
    // Predicated region
    $region21: #{double_conv.5} parent=5 // pred_check
      %p141 = pneg %p140
    $region22: #{double_conv.5} parent=5 // pred_check_branch
      %143 = sbr.rel (%p141) target = $region24
    $region23: #{double_conv.5} parent=5 // pred_region
      // Predicated region
      $region25: #{double_conv.5} parent=23 // pred_check
        %p144 = pneg %p43
      $region26: #{double_conv.5} parent=23 // pred_check_branch
        %146 = sbr.rel (%p144) target = $region28
      $region27: #{double_conv.5} parent=23 // pred_region
        %s147 = smul.u32 36, %s17
        %p148 = scmp.lt.s32.totalorder %s16, 1
        %s149 = scalar_select %p148, %s16, 1
        %p150 = scmp.lt.s32.totalorder %s147, 35
        %s151 = scalar_select %p150, %s147, 35
        %s152 = smul.addr %s149, 36
        %s153 = sadd.s32 %s151, %s152
        %s154 = smul.addr %s153, 4
        %s155 = scalar_lea.vmem %s0, %s154
        %s156 = smul.u32 36, %s17
      $region28: #{double_conv.5} parent=23 // pred_fallthru
        _
    $region24: #{double_conv.5} parent=5 // pred_fallthru
      _
    %p157 = scmp.le.s32.totalorder 1, %s9
    %p158 = scmp.lt.s32.totalorder %s9, 3
    %p159 = pnand %p157, %p158
    %p160 = pneg %p159
    // Predicated region
    $region29: #{double_conv.5} parent=5 // pred_check
      _
    $region30: #{double_conv.5} parent=5 // pred_check_branch
      %162 = sbr.rel (%p159) target = $region32
    $region31: #{double_conv.5} parent=5 // pred_region
      %s163 = ssub.s32 %s9, 1
      %s164 = smul.u32 36, %s19
      %p165 = scmp.lt.s32.totalorder %s18, 1
      %s166 = scalar_select %p165, %s18, 1
      %p167 = scmp.lt.s32.totalorder %s164, 35
      %s168 = scalar_select %p167, %s164, 35
      %s169 = smul.addr %s166, 36
      %s170 = sadd.s32 %s168, %s169
      %s171 = smul.addr %s170, 4
      %s172 = scalar_lea.vmem %s0, %s171
      %p173 = pneg %p49
      %p174 = pneg %p46
      %p175 = pneg %p70
      %p176 = pneg %p67
      %p177 = pneg %p91
      %p178 = pneg %p88
      %p179 = pneg %p119
      %p180 = pneg %p116
      %s181 = smul.u32 36, %s19
      %p182 = scmp.lt.s32.totalorder %s18, 1
      %s183 = scalar_select %p182, %s18, 1
      %p184 = scmp.lt.s32.totalorder %s181, 35
      %s185 = scalar_select %p184, %s181, 35
      %s186 = smul.addr %s183, 36
      %s187 = sadd.s32 %s185, %s186
      %s188 = smul.addr %s187, 8
      %s189 = scalar_lea.vmem %s3, %s188
      %s190 = smul.u32 36, %s19
      %p191 = scmp.lt.s32.totalorder %s18, 1
      %s192 = scalar_select %p191, %s18, 1
      %p193 = scmp.lt.s32.totalorder %s190, 35
      %s194 = scalar_select %p193, %s190, 35
      %s195 = smul.addr %s192, 36
      %s196 = sadd.s32 %s194, %s195
      %s197 = smul.addr %s196, 4
      %s198 = scalar_lea.vmem %s0, %s197
      %s199 = smul.u32 36, %s19
      %s200 = smul.u32 36, %s19
      %p201 = scmp.lt.s32.totalorder %s18, 1
      %s202 = scalar_select %p201, %s18, 1
      %p203 = scmp.lt.s32.totalorder %s200, 35
      %s204 = scalar_select %p203, %s200, 35
      %s205 = smul.addr %s202, 36
      %s206 = sadd.s32 %s204, %s205
      %s207 = smul.addr %s206, 8
      %s208 = scalar_lea.vmem %s3, %s207
      %s209 = smul.u32 36, %s19
      %v210 = vld [vmem:[%s198] sm:$0xf]
      %v211 = vld [vmem:[%s198 + $0x4] sm:$0xf]
      %v212 = vld [vmem:[%s198 + $0x8] sm:$0xf]
      %v213 = vld [vmem:[%s198 + $0xc] sm:$0xf]
      %v214 = vld [vmem:[%s198 + $0x10] sm:$0xf]
      %v215 = vld [vmem:[%s198 + $0x14] sm:$0xf]
      %v216 = vld [vmem:[%s198 + $0x18] sm:$0xf]
      %v217 = vld [vmem:[%s198 + $0x1c] sm:$0xf]
      %v218 = vld [vmem:[%s198 + $0x20] sm:$0xf]
      %v219 = vld [vmem:[%s198 + $0x24] sm:$0xf]
      %v220 = vld [vmem:[%s198 + $0x28] sm:$0xf]
      %v221 = vld [vmem:[%s198 + $0x2c] sm:$0xf]
      %v222 = vld [vmem:[%s198 + $0x30] sm:$0xf]
      %v223 = vld [vmem:[%s198 + $0x34] sm:$0xf]
      %v224 = vld [vmem:[%s198 + $0x38] sm:$0xf]
      %v225 = vld [vmem:[%s198 + $0x3c] sm:$0xf]
      %v226 = vld [vmem:[%s198 + $0x40] sm:$0xf]
      %v227 = vld [vmem:[%s198 + $0x44] sm:$0xf]
      %v228 = vld [vmem:[%s198 + $0x48] sm:$0xf]
      %v229 = vld [vmem:[%s198 + $0x4c] sm:$0xf]
      %v230 = vld [vmem:[%s198 + $0x50] sm:$0xf]
      %v231 = vld [vmem:[%s198 + $0x54] sm:$0xf]
      %v232 = vld [vmem:[%s198 + $0x58] sm:$0xf]
      %v233 = vld [vmem:[%s198 + $0x5c] sm:$0xf]
      %v234 = vld [vmem:[%s198 + $0x60] sm:$0xf]
      %v235 = vld [vmem:[%s198 + $0x64] sm:$0xf]
      %v236 = vld [vmem:[%s198 + $0x68] sm:$0xf]
      %v237 = vld [vmem:[%s198 + $0x6c] sm:$0xf]
      %v238 = vld [vmem:[%s198 + $0x70] sm:$0xf]
      %v239 = vld [vmem:[%s198 + $0x74] sm:$0xf]
      %v240 = vld [vmem:[%s198 + $0x78] sm:$0xf]
      %v241 = vld [vmem:[%s198 + $0x7c] sm:$0xf]
      %v242 = vld [vmem:[%s198 + $0x80] sm:$0xf]
      %v243 = vld [vmem:[%s198 + $0x84] sm:$0xf]
      %v244 = vld [vmem:[%s198 + $0x88] sm:$0xf]
      %v245 = vld [vmem:[%s198 + $0x8c] sm:$0xf]
      %v246 = vunpack.c.l.bf16 %v210
      %v247 = vunpack.c.l.bf16 %v211
      %v248 = vunpack.c.l.bf16 %v212
      %v249 = vunpack.c.l.bf16 %v213
      %v250 = vunpack.c.l.bf16 %v214
      %v251 = vunpack.c.l.bf16 %v215
      %v252 = vunpack.c.l.bf16 %v216
      %v253 = vunpack.c.l.bf16 %v217
      %v254 = vunpack.c.l.bf16 %v218
      %v255 = vunpack.c.l.bf16 %v219
      %v256 = vunpack.c.l.bf16 %v220
      %v257 = vunpack.c.l.bf16 %v221
      %v258 = vunpack.c.l.bf16 %v222
      %v259 = vunpack.c.l.bf16 %v223
      %v260 = vunpack.c.l.bf16 %v224
      %v261 = vunpack.c.l.bf16 %v225
      %v262 = vunpack.c.l.bf16 %v226
      %v263 = vunpack.c.l.bf16 %v227
      %v264 = vunpack.c.l.bf16 %v228
      %v265 = vunpack.c.l.bf16 %v229
      %v266 = vunpack.c.l.bf16 %v230
      %v267 = vunpack.c.l.bf16 %v231
      %v268 = vunpack.c.l.bf16 %v232
      %v269 = vunpack.c.l.bf16 %v233
      %v270 = vunpack.c.l.bf16 %v234
      %v271 = vunpack.c.l.bf16 %v235
      %v272 = vunpack.c.l.bf16 %v236
      %v273 = vunpack.c.l.bf16 %v237
      %v274 = vunpack.c.l.bf16 %v238
      %v275 = vunpack.c.l.bf16 %v239
      %v276 = vunpack.c.l.bf16 %v240
      %v277 = vunpack.c.l.bf16 %v241
      %v278 = vunpack.c.l.bf16 %v242
      %v279 = vunpack.c.l.bf16 %v243
      %v280 = vunpack.c.l.bf16 %v244
      %v281 = vunpack.c.l.bf16 %v245
      %v282 = vld [vmem:[%s1] sm:$0x1]
      %v284 = vlaneseq
      %v285 = vshrl.u32 %v284, 7
      %v286 = vsub.s32 0, %v285
      %v287 = vrot.slane %v282, %v286
      %v289 = vmul.f32 %v246, %v287
      %v290 = vmul.f32 %v247, %v287
      %v291 = vmul.f32 %v248, %v287
      %v292 = vmul.f32 %v249, %v287
      %v293 = vmul.f32 %v250, %v287
      %v294 = vmul.f32 %v251, %v287
      %v295 = vmul.f32 %v252, %v287
      %v296 = vmul.f32 %v253, %v287
      %v297 = vmul.f32 %v254, %v287
      %v298 = vmul.f32 %v255, %v287
      %v299 = vmul.f32 %v256, %v287
      %v300 = vmul.f32 %v257, %v287
      %v301 = vmul.f32 %v258, %v287
      %v302 = vmul.f32 %v259, %v287
      %v303 = vmul.f32 %v260, %v287
      %v304 = vmul.f32 %v261, %v287
      %v305 = vmul.f32 %v262, %v287
      %v306 = vmul.f32 %v263, %v287
      %v307 = vmul.f32 %v264, %v287
      %v308 = vmul.f32 %v265, %v287
      %v309 = vmul.f32 %v266, %v287
      %v310 = vmul.f32 %v267, %v287
      %v311 = vmul.f32 %v268, %v287
      %v312 = vmul.f32 %v269, %v287
      %v313 = vmul.f32 %v270, %v287
      %v314 = vmul.f32 %v271, %v287
      %v315 = vmul.f32 %v272, %v287
      %v316 = vmul.f32 %v273, %v287
      %v317 = vmul.f32 %v274, %v287
      %v318 = vmul.f32 %v275, %v287
      %v319 = vmul.f32 %v276, %v287
      %v320 = vmul.f32 %v277, %v287
      %v321 = vmul.f32 %v278, %v287
      %v322 = vmul.f32 %v279, %v287
      %v323 = vmul.f32 %v280, %v287
      %v324 = vmul.f32 %v281, %v287
      %v325 = vld [vmem:[%s2] sm:$0x1]
      %v327 = vlaneseq
      %v328 = vshrl.u32 %v327, 7
      %v329 = vsub.s32 0, %v328
      %v330 = vrot.slane %v325, %v329
      %v332 = vadd.f32 %v289, %v330
      %v333 = vadd.f32 %v290, %v330
      %v334 = vadd.f32 %v291, %v330
      %v335 = vadd.f32 %v292, %v330
      %v336 = vadd.f32 %v293, %v330
      %v337 = vadd.f32 %v294, %v330
      %v338 = vadd.f32 %v295, %v330
      %v339 = vadd.f32 %v296, %v330
      %v340 = vadd.f32 %v297, %v330
      %v341 = vadd.f32 %v298, %v330
      %v342 = vadd.f32 %v299, %v330
      %v343 = vadd.f32 %v300, %v330
      %v344 = vadd.f32 %v301, %v330
      %v345 = vadd.f32 %v302, %v330
      %v346 = vadd.f32 %v303, %v330
      %v347 = vadd.f32 %v304, %v330
      %v348 = vadd.f32 %v305, %v330
      %v349 = vadd.f32 %v306, %v330
      %v350 = vadd.f32 %v307, %v330
      %v351 = vadd.f32 %v308, %v330
      %v352 = vadd.f32 %v309, %v330
      %v353 = vadd.f32 %v310, %v330
      %v354 = vadd.f32 %v311, %v330
      %v355 = vadd.f32 %v312, %v330
      %v356 = vadd.f32 %v313, %v330
      %v357 = vadd.f32 %v314, %v330
      %v358 = vadd.f32 %v315, %v330
      %v359 = vadd.f32 %v316, %v330
      %v360 = vadd.f32 %v317, %v330
      %v361 = vadd.f32 %v318, %v330
      %v362 = vadd.f32 %v319, %v330
      %v363 = vadd.f32 %v320, %v330
      %v364 = vadd.f32 %v321, %v330
      %v365 = vadd.f32 %v322, %v330
      %v366 = vadd.f32 %v323, %v330
      %v367 = vadd.f32 %v324, %v330
      %v368 = vmax.f32 %v332, 0.0
      %v369 = vmax.f32 %v333, 0.0
      %v370 = vmax.f32 %v334, 0.0
      %v371 = vmax.f32 %v335, 0.0
      %v372 = vmax.f32 %v336, 0.0
      %v373 = vmax.f32 %v337, 0.0
      %v374 = vmax.f32 %v338, 0.0
      %v375 = vmax.f32 %v339, 0.0
      %v376 = vmax.f32 %v340, 0.0
      %v377 = vmax.f32 %v341, 0.0
      %v378 = vmax.f32 %v342, 0.0
      %v379 = vmax.f32 %v343, 0.0
      %v380 = vmax.f32 %v344, 0.0
      %v381 = vmax.f32 %v345, 0.0
      %v382 = vmax.f32 %v346, 0.0
      %v383 = vmax.f32 %v347, 0.0
      %v384 = vmax.f32 %v348, 0.0
      %v385 = vmax.f32 %v349, 0.0
      %v386 = vmax.f32 %v350, 0.0
      %v387 = vmax.f32 %v351, 0.0
      %v388 = vmax.f32 %v352, 0.0
      %v389 = vmax.f32 %v353, 0.0
      %v390 = vmax.f32 %v354, 0.0
      %v391 = vmax.f32 %v355, 0.0
      %v392 = vmax.f32 %v356, 0.0
      %v393 = vmax.f32 %v357, 0.0
      %v394 = vmax.f32 %v358, 0.0
      %v395 = vmax.f32 %v359, 0.0
      %v396 = vmax.f32 %v360, 0.0
      %v397 = vmax.f32 %v361, 0.0
      %v398 = vmax.f32 %v362, 0.0
      %v399 = vmax.f32 %v363, 0.0
      %v400 = vmax.f32 %v364, 0.0
      %v401 = vmax.f32 %v365, 0.0
      %v402 = vmax.f32 %v366, 0.0
      %v403 = vmax.f32 %v367, 0.0
      %404 = vst [vmem:[%s208] sm:$0xff] %v368
      %405 = vst [vmem:[%s208 + $0x8] sm:$0xff] %v369
      %406 = vst [vmem:[%s208 + $0x10] sm:$0xff] %v370
      %407 = vst [vmem:[%s208 + $0x18] sm:$0xff] %v371
      %408 = vst [vmem:[%s208 + $0x20] sm:$0xff] %v372
      %409 = vst [vmem:[%s208 + $0x28] sm:$0xff] %v373
      %410 = vst [vmem:[%s208 + $0x30] sm:$0xff] %v374
      %411 = vst [vmem:[%s208 + $0x38] sm:$0xff] %v375
      %412 = vst [vmem:[%s208 + $0x40] sm:$0xff] %v376
      %413 = vst [vmem:[%s208 + $0x48] sm:$0xff] %v377
      %414 = vst [vmem:[%s208 + $0x50] sm:$0xff] %v378
      %415 = vst [vmem:[%s208 + $0x58] sm:$0xff] %v379
      %416 = vst [vmem:[%s208 + $0x60] sm:$0xff] %v380
      %417 = vst [vmem:[%s208 + $0x68] sm:$0xff] %v381
      %418 = vst [vmem:[%s208 + $0x70] sm:$0xff] %v382
      %419 = vst [vmem:[%s208 + $0x78] sm:$0xff] %v383
      %420 = vst [vmem:[%s208 + $0x80] sm:$0xff] %v384
      %421 = vst [vmem:[%s208 + $0x88] sm:$0xff] %v385
      %422 = vst [vmem:[%s208 + $0x90] sm:$0xff] %v386
      %423 = vst [vmem:[%s208 + $0x98] sm:$0xff] %v387
      %424 = vst [vmem:[%s208 + $0xa0] sm:$0xff] %v388
      %425 = vst [vmem:[%s208 + $0xa8] sm:$0xff] %v389
      %426 = vst [vmem:[%s208 + $0xb0] sm:$0xff] %v390
      %427 = vst [vmem:[%s208 + $0xb8] sm:$0xff] %v391
      %428 = vst [vmem:[%s208 + $0xc0] sm:$0xff] %v392
      %429 = vst [vmem:[%s208 + $0xc8] sm:$0xff] %v393
      %430 = vst [vmem:[%s208 + $0xd0] sm:$0xff] %v394
      %431 = vst [vmem:[%s208 + $0xd8] sm:$0xff] %v395
      %432 = vst [vmem:[%s208 + $0xe0] sm:$0xff] %v396
      %433 = vst [vmem:[%s208 + $0xe8] sm:$0xff] %v397
      %434 = vst [vmem:[%s208 + $0xf0] sm:$0xff] %v398
      %435 = vst [vmem:[%s208 + $0xf8] sm:$0xff] %v399
      %436 = vst [vmem:[%s208 + $0x100] sm:$0xff] %v400
      %437 = vst [vmem:[%s208 + $0x108] sm:$0xff] %v401
      %438 = vst [vmem:[%s208 + $0x110] sm:$0xff] %v402
      %439 = vst [vmem:[%s208 + $0x118] sm:$0xff] %v403
      %s440 = smul.u32 36, %s19
      %p441 = scmp.lt.s32.totalorder %s18, 1
      %s442 = scalar_select %p441, %s18, 1
      %p443 = scmp.lt.s32.totalorder %s440, 35
      %s444 = scalar_select %p443, %s440, 35
      %s445 = smul.addr %s442, 36
      %s446 = sadd.s32 %s444, %s445
      %s447 = smul.addr %s446, 8
      %s448 = scalar_lea.vmem %s3, %s447
      // Predicated region
      $region33: #{double_conv.5} parent=31 // pred_check
        %p449 = pneg %p116
      $region34: #{double_conv.5} parent=31 // pred_check_branch
        %451 = sbr.rel (%p449) target = $region36
      $region35: #{double_conv.5} parent=31 // pred_region
        %s452 = smul.u32 36, %s19
      $region36: #{double_conv.5} parent=31 // pred_fallthru
        _
    $region32: #{double_conv.5} parent=5 // pred_fallthru
      _
    %p453 = scmp.le.s32.totalorder 2, %s9
    // Predicated region
    $region37: #{double_conv.5} parent=5 // pred_check
      %p454 = pneg %p453
    $region38: #{double_conv.5} parent=5 // pred_check_branch
      %456 = sbr.rel (%p454) target = $region40
    $region39: #{double_conv.5} parent=5 // pred_region
      %s457 = ssub.s32 %s9, 2
      // Predicated region
      $region41: #{double_conv.5} parent=39 // pred_check
        %p458 = pneg %p122
      $region42: #{double_conv.5} parent=39 // pred_check_branch
        %460 = sbr.rel (%p458) target = $region44
      $region43: #{double_conv.5} parent=39 // pred_region
        %s461 = smul.u32 36, %s21
        %p462 = scmp.lt.s32.totalorder %s20, 1
        %s463 = scalar_select %p462, %s20, 1
        %p464 = scmp.lt.s32.totalorder %s461, 35
        %s465 = scalar_select %p464, %s461, 35
        %s466 = smul.addr %s463, 36
        %s467 = sadd.s32 %s465, %s466
        %s468 = smul.addr %s467, 8
        %s469 = scalar_lea.vmem %s3, %s468
      $region44: #{double_conv.5} parent=39 // pred_fallthru
        _
    $region40: #{double_conv.5} parent=5 // pred_fallthru
      _
  $region6: #{double_conv.5} parent=0 // loop_footer
    %s13 = sadd.s32 1, %s9
  $region7: #{double_conv.5} parent=0 // loop_footer_branch
    %8 = sbr.rel target = $region3
  $region8: #{double_conv.5} parent=0 // loop_exit
    _

// kernel: double_conv.3
$region0: #{double_conv.3}
  #allocation0 [shape = 'u32[]', space=smem, size = 0x4, offset = 0x4, fixed_abs, tag = 'smem constant byte address 0x4 - core index']
  #allocation1 [shape = 'u32[144,128]{1,0:T(1,128)}', space=vmem, size = 0x12000, scoped, tag = 'internal scratch']
  %s0 = inlined_call_operand.vmem [shape: f32[2,336,16], index: 0, kind: input, shape index: {}]
  %s1 = inlined_call_operand.vmem [shape: bf16[9,16,128], index: 1, kind: input, shape index: {}]
  %s2 = inlined_call_operand.vmem [shape: f32[288,1], index: 2, kind: input, shape index: {}]
  %s3 = inlined_call_operand.vmem [shape: bf16[2,288,128], index: 3, kind: output, shape index: {0}]
  %s4 = inlined_call_operand.vmem [shape: f32[2,1,128], index: 4, kind: output, shape index: {1}]
  %s5 = inlined_call_operand.vmem [shape: f32[2,1,128], index: 5, kind: output, shape index: {2}]
  %6 = xla_tuple %s3, %s4, %s5
  %s7 = sld [smem:[#allocation0]]
  $region61: #{double_conv.3} parent=0
    _
  %s9 = ssub.s32 1, %s7
  %s10 = scalar_select 0, %s9, %s7
  loop: start=0, step=1, limit=4
  $region2: #{double_conv.3} parent=0 // loop_pre_header
    _
  $region3: #{double_conv.3} parent=0 // loop_header
    %s12 = sphi 0, %s16
    %p13 = scmp.ge.s32.totalorder %s12, 4
    %s22 = sphi 0, %s24
    %s25 = sphi 0, %s22
    %s26 = sphi 0, %s25
    %s42 = sphi 0, %s26
    %s46 = sphi 0, %s46
    %s48 = sphi 0, %s46
    %s49 = sphi 0, %s48
    %s63 = sphi 0, %s49
    %s67 = sphi 0, %s67
    %s69 = sphi 0, %s67
    %s70 = sphi 0, %s69
    %s84 = sphi 0, %s70
    %s90 = sphi 0, %s92
    %s93 = sphi 0, %s90
    %s94 = sphi 0, %s93
    %s110 = sphi 0, %s94
    %s116 = sphi 0, %s118
    %s119 = sphi 0, %s116
    %s120 = sphi 0, %s119
    %s136 = sphi 0, %s120
    %s142 = sphi 0, %s144
    %s145 = sphi 0, %s142
    %s146 = sphi 0, %s145
    %s162 = sphi 0, %s146
  $region4: #{double_conv.3} parent=0 // loop_header_branch
    %15 = sbr.rel (%p13) target = $region8
  $region5: #{double_conv.3} parent=0 // loop_body
    %s17 = ssub.s32 %s12, 1
    %s18 = ssub.s32 %s12, 2
    %s19 = sadd.s32 %s12, 1
    %s20 = ssub.s32 %s12, %s19
    %p21 = scmp.eq.s32.totalorder %s20, 0
    %s23 = sadd.s32 %s22, 1
    %s24 = scalar_select %p21, %s22, %s23
    %p27 = pneg %p21
    %p28 = scmp.eq.s32.totalorder %s12, 1
    %p29 = por %p27, %p28
    %p30 = scmp.ne.s32.totalorder %s22, %s25
    %p31 = scmp.eq.s32.totalorder %s12, 0
    %p32 = por %p30, %p31
    %p33 = scmp.ne.s32.totalorder %s22, %s25
    %p34 = scmp.eq.s32.totalorder %s17, 1
    %p35 = por %p33, %p34
    %p36 = scmp.ne.s32.totalorder %s25, %s26
    %p37 = scmp.eq.s32.totalorder %s17, 0
    %p38 = por %p36, %p37
    %p39 = scmp.ne.s32.totalorder %s25, %s26
    %p40 = scmp.eq.s32.totalorder %s18, 1
    %p41 = por %p39, %p40
    %p43 = scmp.ne.s32.totalorder %s26, %s42
    %p44 = scmp.eq.s32.totalorder %s18, 0
    %p45 = por %p43, %p44
    %s47 = sadd.s32 %s46, 1
    %p50 = scmp.eq.s32.totalorder %s12, 1
    %p51 = scmp.ne.s32.totalorder %s46, %s48
    %p52 = scmp.eq.s32.totalorder %s12, 0
    %p53 = por %p51, %p52
    %p54 = scmp.ne.s32.totalorder %s46, %s48
    %p55 = scmp.eq.s32.totalorder %s17, 1
    %p56 = por %p54, %p55
    %p57 = scmp.ne.s32.totalorder %s48, %s49
    %p58 = scmp.eq.s32.totalorder %s17, 0
    %p59 = por %p57, %p58
    %p60 = scmp.ne.s32.totalorder %s48, %s49
    %p61 = scmp.eq.s32.totalorder %s18, 1
    %p62 = por %p60, %p61
    %p64 = scmp.ne.s32.totalorder %s49, %s63
    %p65 = scmp.eq.s32.totalorder %s18, 0
    %p66 = por %p64, %p65
    %s68 = sadd.s32 %s67, 1
    %p71 = scmp.eq.s32.totalorder %s12, 1
    %p72 = scmp.ne.s32.totalorder %s67, %s69
    %p73 = scmp.eq.s32.totalorder %s12, 0
    %p74 = por %p72, %p73
    %p75 = scmp.ne.s32.totalorder %s67, %s69
    %p76 = scmp.eq.s32.totalorder %s17, 1
    %p77 = por %p75, %p76
    %p78 = scmp.ne.s32.totalorder %s69, %s70
    %p79 = scmp.eq.s32.totalorder %s17, 0
    %p80 = por %p78, %p79
    %p81 = scmp.ne.s32.totalorder %s69, %s70
    %p82 = scmp.eq.s32.totalorder %s18, 1
    %p83 = por %p81, %p82
    %p85 = scmp.ne.s32.totalorder %s70, %s84
    %p86 = scmp.eq.s32.totalorder %s18, 0
    %p87 = por %p85, %p86
    %s88 = ssub.s32 %s12, %s19
    %p89 = scmp.eq.s32.totalorder %s88, 0
    %s91 = sadd.s32 %s90, 1
    %s92 = scalar_select %p89, %s90, %s91
    %p95 = pneg %p89
    %p96 = scmp.eq.s32.totalorder %s12, 1
    %p97 = por %p95, %p96
    %p98 = scmp.ne.s32.totalorder %s90, %s93
    %p99 = scmp.eq.s32.totalorder %s12, 0
    %p100 = por %p98, %p99
    %p101 = scmp.ne.s32.totalorder %s90, %s93
    %p102 = scmp.eq.s32.totalorder %s17, 1
    %p103 = por %p101, %p102
    %p104 = scmp.ne.s32.totalorder %s93, %s94
    %p105 = scmp.eq.s32.totalorder %s17, 0
    %p106 = por %p104, %p105
    %p107 = scmp.ne.s32.totalorder %s93, %s94
    %p108 = scmp.eq.s32.totalorder %s18, 1
    %p109 = por %p107, %p108
    %p111 = scmp.ne.s32.totalorder %s94, %s110
    %p112 = scmp.eq.s32.totalorder %s18, 0
    %p113 = por %p111, %p112
    %s114 = ssub.s32 %s12, %s19
    %p115 = scmp.eq.s32.totalorder %s114, 0
    %s117 = sadd.s32 %s116, 1
    %s118 = scalar_select %p115, %s116, %s117
    %p121 = pneg %p115
    %p122 = scmp.eq.s32.totalorder %s12, 1
    %p123 = por %p121, %p122
    %p124 = scmp.ne.s32.totalorder %s116, %s119
    %p125 = scmp.eq.s32.totalorder %s12, 0
    %p126 = por %p124, %p125
    %p127 = scmp.ne.s32.totalorder %s116, %s119
    %p128 = scmp.eq.s32.totalorder %s17, 1
    %p129 = por %p127, %p128
    %p130 = scmp.ne.s32.totalorder %s119, %s120
    %p131 = scmp.eq.s32.totalorder %s17, 0
    %p132 = por %p130, %p131
    %p133 = scmp.ne.s32.totalorder %s119, %s120
    %p134 = scmp.eq.s32.totalorder %s18, 1
    %p135 = por %p133, %p134
    %p137 = scmp.ne.s32.totalorder %s120, %s136
    %p138 = scmp.eq.s32.totalorder %s18, 0
    %p139 = por %p137, %p138
    %s140 = ssub.s32 %s12, %s19
    %p141 = scmp.eq.s32.totalorder %s140, 0
    %s143 = sadd.s32 %s142, 1
    %s144 = scalar_select %p141, %s142, %s143
    %p147 = pneg %p141
    %p148 = scmp.eq.s32.totalorder %s12, 1
    %p149 = por %p147, %p148
    %p150 = scmp.ne.s32.totalorder %s142, %s145
    %p151 = scmp.eq.s32.totalorder %s12, 0
    %p152 = por %p150, %p151
    %p153 = scmp.ne.s32.totalorder %s142, %s145
    %p154 = scmp.eq.s32.totalorder %s17, 1
    %p155 = por %p153, %p154
    %p156 = scmp.ne.s32.totalorder %s145, %s146
    %p157 = scmp.eq.s32.totalorder %s17, 0
    %p158 = por %p156, %p157
    %p159 = scmp.ne.s32.totalorder %s145, %s146
    %p160 = scmp.eq.s32.totalorder %s18, 1
    %p161 = por %p159, %p160
    %p163 = scmp.ne.s32.totalorder %s146, %s162
    %p164 = scmp.eq.s32.totalorder %s18, 0
    %p165 = por %p163, %p164
    %p166 = scmp.le.s32.totalorder 1, %s12
    %p167 = scmp.lt.s32.totalorder %s12, 3
    %p168 = pnand %p166, %p167
    %p169 = pneg %p168
    // Predicated region
    $region9: #{double_conv.3} parent=5 // pred_check
      _
    $region10: #{double_conv.3} parent=5 // pred_check_branch
      %171 = sbr.rel (%p168) target = $region12
    $region11: #{double_conv.3} parent=5 // pred_region
      %s172 = ssub.s32 %s12, 1
      // Predicated region
      $region13: #{double_conv.3} parent=11 // pred_check
        %p173 = pneg %p59
      $region14: #{double_conv.3} parent=11 // pred_check_branch
        %175 = sbr.rel (%p173) target = $region16
      $region15: #{double_conv.3} parent=11 // pred_region
        _
      $region16: #{double_conv.3} parent=11 // pred_fallthru
        _
      // Predicated region
      $region17: #{double_conv.3} parent=11 // pred_check
        %p176 = pneg %p80
      $region18: #{double_conv.3} parent=11 // pred_check_branch
        %178 = sbr.rel (%p176) target = $region20
      $region19: #{double_conv.3} parent=11 // pred_region
        _
      $region20: #{double_conv.3} parent=11 // pred_fallthru
        _
    $region12: #{double_conv.3} parent=5 // pred_fallthru
      _
    %p179 = scmp.lt.s32.totalorder %s12, 2
    // Predicated region
    $region21: #{double_conv.3} parent=5 // pred_check
      %p180 = pneg %p179
    $region22: #{double_conv.3} parent=5 // pred_check_branch
      %182 = sbr.rel (%p180) target = $region24
    $region23: #{double_conv.3} parent=5 // pred_region
      // Predicated region
      $region25: #{double_conv.3} parent=23 // pred_check
        %p183 = pneg %p32
      $region26: #{double_conv.3} parent=23 // pred_check_branch
        %185 = sbr.rel (%p183) target = $region28
      $region27: #{double_conv.3} parent=23 // pred_region
        %p186 = scmp.lt.s32.totalorder %s12, 1
        %s187 = scalar_select %p186, %s12, 1
        %s188 = smul.addr %s187, 42
        %s189 = smul.addr %s188, 8
        %s190 = scalar_lea.vmem %s0, %s189
      $region28: #{double_conv.3} parent=23 // pred_fallthru
        _
    $region24: #{double_conv.3} parent=5 // pred_fallthru
      _
    %p191 = scmp.le.s32.totalorder 1, %s12
    %p192 = scmp.lt.s32.totalorder %s12, 3
    %p193 = pnand %p191, %p192
    %p194 = pneg %p193
    // Predicated region
    $region29: #{double_conv.3} parent=5 // pred_check
      _
    $region30: #{double_conv.3} parent=5 // pred_check_branch
      %196 = sbr.rel (%p193) target = $region32
    $region31: #{double_conv.3} parent=5 // pred_region
      %s197 = ssub.s32 %s12, 1
      %p198 = scmp.lt.s32.totalorder %s17, 1
      %s199 = scalar_select %p198, %s17, 1
      %s200 = smul.addr %s199, 42
      %s201 = smul.addr %s200, 8
      %s202 = scalar_lea.vmem %s0, %s201
      %p203 = pneg %p38
      %p204 = pneg %p35
      %p205 = pneg %p59
      %p206 = pneg %p56
      %p207 = pneg %p80
      %p208 = pneg %p77
      %p209 = pneg %p106
      %p210 = pneg %p103
      %p211 = scmp.lt.s32.totalorder %s17, 1
      %s212 = scalar_select %p211, %s17, 1
      %s213 = smul.addr %s212, 36
      %s214 = smul.addr %s213, 4
      %s215 = scalar_lea.vmem %s3, %s214
      %p216 = pneg %p132
      %p217 = pneg %p129
      %p218 = scmp.lt.s32.totalorder %s17, 1
      %s219 = scalar_select %p218, %s17, 1
      %s220 = scalar_lea.vmem %s4, %s219
      %p221 = pneg %p158
      %p222 = pneg %p155
      %p223 = scmp.lt.s32.totalorder %s17, 1
      %s224 = scalar_select %p223, %s17, 1
      %s225 = scalar_lea.vmem %s5, %s224
      %p226 = scmp.lt.s32.totalorder %s17, 1
      %s227 = scalar_select %p226, %s17, 1
      %s228 = smul.addr %s227, 42
      %s229 = smul.addr %s228, 8
      %s230 = scalar_lea.vmem %s0, %s229
      %p231 = scmp.lt.s32.totalorder %s17, 1
      %s232 = scalar_select %p231, %s17, 1
      %s233 = smul.addr %s232, 36
      %s234 = smul.addr %s233, 4
      %s235 = scalar_lea.vmem %s3, %s234
      %p236 = scmp.lt.s32.totalorder %s17, 1
      %s237 = scalar_select %p236, %s17, 1
      %s238 = scalar_lea.vmem %s4, %s237
      %p239 = scmp.lt.s32.totalorder %s17, 1
      %s240 = scalar_select %p239, %s17, 1
      %s241 = scalar_lea.vmem %s5, %s240
      %v243 = vld [vmem:[%s230] sm:$0xff]
      %v244 = vld [vmem:[%s230 + $0x8] sm:$0xff]
      %v245 = vld [vmem:[%s230 + $0x10] sm:$0xff]
      %v246 = vld [vmem:[%s230 + $0x18] sm:$0xff]
      %v247 = vld [vmem:[%s230 + $0x20] sm:$0xff]
      %v248 = vld [vmem:[%s230 + $0x28] sm:$0xff]
      %v249 = vld [vmem:[%s230 + $0x30] sm:$0xff]
      %v250 = vld [vmem:[%s230 + $0x38] sm:$0xff]
      %v251 = vld [vmem:[%s230 + $0x40] sm:$0xff]
      %v252 = vld [vmem:[%s230 + $0x48] sm:$0xff]
      %v253 = vld [vmem:[%s230 + $0x50] sm:$0xff]
      %v254 = vld [vmem:[%s230 + $0x58] sm:$0xff]
      %v255 = vld [vmem:[%s230 + $0x60] sm:$0xff]
      %v256 = vld [vmem:[%s230 + $0x68] sm:$0xff]
      %v257 = vld [vmem:[%s230 + $0x70] sm:$0xff]
      %v258 = vld [vmem:[%s230 + $0x78] sm:$0xff]
      %v259 = vld [vmem:[%s230 + $0x80] sm:$0xff]
      %v260 = vld [vmem:[%s230 + $0x88] sm:$0xff]
      %v261 = vld [vmem:[%s230 + $0x90] sm:$0xff]
      %v262 = vld [vmem:[%s230 + $0x98] sm:$0xff]
      %v263 = vld [vmem:[%s230 + $0xa0] sm:$0xff]
      %v264 = vld [vmem:[%s230 + $0xa8] sm:$0xff]
      %v265 = vld [vmem:[%s230 + $0xb0] sm:$0xff]
      %v266 = vld [vmem:[%s230 + $0xb8] sm:$0xff]
      %v267 = vld [vmem:[%s230 + $0xc0] sm:$0xff]
      %v268 = vld [vmem:[%s230 + $0xc8] sm:$0xff]
      %v269 = vld [vmem:[%s230 + $0xd0] sm:$0xff]
      %v270 = vld [vmem:[%s230 + $0xd8] sm:$0xff]
      %v271 = vld [vmem:[%s230 + $0xe0] sm:$0xff]
      %v272 = vld [vmem:[%s230 + $0xe8] sm:$0xff]
      %v273 = vld [vmem:[%s230 + $0xf0] sm:$0xff]
      %v274 = vld [vmem:[%s230 + $0xf8] sm:$0xff]
      %v275 = vld [vmem:[%s230 + $0x100] sm:$0xff]
      %v276 = vld [vmem:[%s230 + $0x108] sm:$0xff]
      %v277 = vld [vmem:[%s230 + $0x110] sm:$0xff]
      %v278 = vld [vmem:[%s230 + $0x118] sm:$0xff]
      %v279 = vpack.c.bf16 %v244, %v243
      %v280 = vpack.c.bf16 %v246, %v245
      %v281 = vpack.c.bf16 %v248, %v247
      %v282 = vpack.c.bf16 %v250, %v249
      %v283 = vpack.c.bf16 %v252, %v251
      %v284 = vpack.c.bf16 %v254, %v253
      %v285 = vpack.c.bf16 %v256, %v255
      %v286 = vpack.c.bf16 %v258, %v257
      %v287 = vpack.c.bf16 %v260, %v259
      %v288 = vpack.c.bf16 %v262, %v261
      %v289 = vpack.c.bf16 %v264, %v263
      %v290 = vpack.c.bf16 %v266, %v265
      %v291 = vpack.c.bf16 %v268, %v267
      %v292 = vpack.c.bf16 %v270, %v269
      %v293 = vpack.c.bf16 %v272, %v271
      %v294 = vpack.c.bf16 %v274, %v273
      %v295 = vpack.c.bf16 %v276, %v275
      %v296 = vpack.c.bf16 %v278, %v277
      %v297 = vld [vmem:[%s1] sm:$0xf]
      %v298 = vld [vmem:[%s1 + $0x4] sm:$0xf]
      %v299 = vld [vmem:[%s230 + $0x1] sm:$0xff]
      %v300 = vld [vmem:[%s230 + $0x9] sm:$0xff]
      %v301 = vld [vmem:[%s230 + $0x11] sm:$0xff]
      %v302 = vld [vmem:[%s230 + $0x19] sm:$0xff]
      %v303 = vld [vmem:[%s230 + $0x21] sm:$0xff]
      %v304 = vld [vmem:[%s230 + $0x29] sm:$0xff]
      %v305 = vld [vmem:[%s230 + $0x31] sm:$0xff]
      %v306 = vld [vmem:[%s230 + $0x39] sm:$0xff]
      %v307 = vld [vmem:[%s230 + $0x41] sm:$0xff]
      %v308 = vld [vmem:[%s230 + $0x49] sm:$0xff]
      %v309 = vld [vmem:[%s230 + $0x51] sm:$0xff]
      %v310 = vld [vmem:[%s230 + $0x59] sm:$0xff]
      %v311 = vld [vmem:[%s230 + $0x61] sm:$0xff]
      %v312 = vld [vmem:[%s230 + $0x69] sm:$0xff]
      %v313 = vld [vmem:[%s230 + $0x71] sm:$0xff]
      %v314 = vld [vmem:[%s230 + $0x79] sm:$0xff]
      %v315 = vld [vmem:[%s230 + $0x81] sm:$0xff]
      %v316 = vld [vmem:[%s230 + $0x89] sm:$0xff]
      %v317 = vld [vmem:[%s230 + $0x91] sm:$0xff]
      %v318 = vld [vmem:[%s230 + $0x99] sm:$0xff]
      %v319 = vld [vmem:[%s230 + $0xa1] sm:$0xff]
      %v320 = vld [vmem:[%s230 + $0xa9] sm:$0xff]
      %v321 = vld [vmem:[%s230 + $0xb1] sm:$0xff]
      %v322 = vld [vmem:[%s230 + $0xb9] sm:$0xff]
      %v323 = vld [vmem:[%s230 + $0xc1] sm:$0xff]
      %v324 = vld [vmem:[%s230 + $0xc9] sm:$0xff]
      %v325 = vld [vmem:[%s230 + $0xd1] sm:$0xff]
      %v326 = vld [vmem:[%s230 + $0xd9] sm:$0xff]
      %v327 = vld [vmem:[%s230 + $0xe1] sm:$0xff]
      %v328 = vld [vmem:[%s230 + $0xe9] sm:$0xff]
      %v329 = vld [vmem:[%s230 + $0xf1] sm:$0xff]
      %v330 = vld [vmem:[%s230 + $0xf9] sm:$0xff]
      %v331 = vld [vmem:[%s230 + $0x101] sm:$0xff]
      %v332 = vld [vmem:[%s230 + $0x109] sm:$0xff]
      %v333 = vld [vmem:[%s230 + $0x111] sm:$0xff]
      %v334 = vld [vmem:[%s230 + $0x119] sm:$0xff]
      %v335 = vpack.c.bf16 %v300, %v299
      %v336 = vpack.c.bf16 %v302, %v301
      %v337 = vpack.c.bf16 %v304, %v303
      %v338 = vpack.c.bf16 %v306, %v305
      %v339 = vpack.c.bf16 %v308, %v307
      %v340 = vpack.c.bf16 %v310, %v309
      %v341 = vpack.c.bf16 %v312, %v311
      %v342 = vpack.c.bf16 %v314, %v313
      %v343 = vpack.c.bf16 %v316, %v315
      %v344 = vpack.c.bf16 %v318, %v317
      %v345 = vpack.c.bf16 %v320, %v319
      %v346 = vpack.c.bf16 %v322, %v321
      %v347 = vpack.c.bf16 %v324, %v323
      %v348 = vpack.c.bf16 %v326, %v325
      %v349 = vpack.c.bf16 %v328, %v327
      %v350 = vpack.c.bf16 %v330, %v329
      %v351 = vpack.c.bf16 %v332, %v331
      %v352 = vpack.c.bf16 %v334, %v333
      %s353 = scalar_lea.vmem %s1, 8
      %v354 = vld [vmem:[%s353] sm:$0xf]
      %v355 = vld [vmem:[%s353 + $0x4] sm:$0xf]
      %v358 = vunpack.c.l.b16 %v354
      %v359 = vunpack.c.l.b16 %v355
      %v360 = vpack.c.b16 %v359, %v358
      %vm362 = vcmask 130048
      %v364 = vsel %vm362, %v335, 0
      %v367 = vsel %vm362, %v336, 0
      %v370 = vsel %vm362, %v337, 0
      %v373 = vsel %vm362, %v338, 0
      %v376 = vsel %vm362, %v339, 0
      %v379 = vsel %vm362, %v340, 0
      %v382 = vsel %vm362, %v341, 0
      %v385 = vsel %vm362, %v342, 0
      %v388 = vsel %vm362, %v343, 0
      %v391 = vsel %vm362, %v344, 0
      %v394 = vsel %vm362, %v345, 0
      %v397 = vsel %vm362, %v346, 0
      %v400 = vsel %vm362, %v347, 0
      %v403 = vsel %vm362, %v348, 0
      %v406 = vsel %vm362, %v349, 0
      %v409 = vsel %vm362, %v350, 0
      %v412 = vsel %vm362, %v351, 0
      %v415 = vsel %vm362, %v352, 0
      %417 = vmatprep.subr.bf16.mxu0 0
      %418 = vmatpush1.bf16.msra.mxu0 0
      %419 = vmatprep.subr.bf16.mxu0 0
      %420 = vmatpush1.bf16.msra.mxu0 0
      %421 = vmatprep.subr.bf16.mxu0 0
      %422 = vmatpush1.bf16.msra.mxu0 0
      %423 = vmatprep.subr.bf16.mxu0 0
      %424 = vmatpush1.bf16.msra.mxu0 0
      %425 = vmatprep.subr.bf16.mxu0 0
      %426 = vmatpush1.bf16.msra.mxu0 0
      %427 = vmatprep.subr.bf16.mxu0 0
      %428 = vmatpush1.bf16.msra.mxu0 0
      %429 = vmatprep.subr.bf16.mxu0 0
      %430 = vmatpush1.bf16.msra.mxu0 0
      %431 = vmatprep.subr.bf16.mxu0 0
      %432 = vmatpush1.bf16.msra.mxu0 %v360
      %433 = vmatprep.subr.bf16.mxu0 0
      %434 = vmatpush2.bf16.msra.mxu0 0
      %435 = vmatprep.subr.bf16.mxu0 0
      %436 = vmatpush2.bf16.msra.mxu0 0
      %437 = vmatprep.subr.bf16.mxu0 0
      %438 = vmatpush2.bf16.msra.mxu0 0
      %439 = vmatprep.subr.bf16.mxu0 0
      %440 = vmatpush2.bf16.msra.mxu0 0
      %441 = vmatprep.subr.bf16.mxu0 0
      %442 = vmatpush2.bf16.msra.mxu0 0
      %443 = vmatprep.subr.bf16.mxu0 0
      %444 = vmatpush2.bf16.msra.mxu0 0
      %445 = vmatprep.subr.bf16.mxu0 0
      %446 = vmatpush2.bf16.msra.mxu0 0
      %447 = vmatprep.subr.bf16.mxu0 0
      %448 = vmatpush2.bf16.msra.mxu0 0
      %449 = vmatprep.mubr.bf16.mxu0 0
      %450 = vmatmul.mubr.bf16.gmra.mxu0 %v364
      %v451 = vpop.f32.mrf.mxu0
      %v452 = vadd.f32 0.0, %v451
      %v453 = vpop.f32.mrf.mxu0
      %v454 = vpop.f32.mrf.mxu0
      %v455 = vadd.f32 0.0, %v454
      %v456 = vpop.f32.mrf.mxu0
      %457 = vmatprep.mubr.bf16.mxu0 0
      %458 = vmatmul.mubr.bf16.gmra.mxu0 %v367
      %v459 = vpop.f32.mrf.mxu0
      %v460 = vadd.f32 0.0, %v459
      %v461 = vpop.f32.mrf.mxu0
      %v462 = vpop.f32.mrf.mxu0
      %v463 = vadd.f32 0.0, %v462
      %v464 = vpop.f32.mrf.mxu0
      %465 = vmatprep.mubr.bf16.mxu0 0
      %466 = vmatmul.mubr.bf16.gmra.mxu0 %v370
      %v467 = vpop.f32.mrf.mxu0
      %v468 = vadd.f32 0.0, %v467
      %v469 = vpop.f32.mrf.mxu0
      %v470 = vpop.f32.mrf.mxu0
      %v471 = vadd.f32 0.0, %v470
      %v472 = vpop.f32.mrf.mxu0
      %473 = vmatprep.mubr.bf16.mxu0 0
      %474 = vmatmul.mubr.bf16.gmra.mxu0 %v373
      %v475 = vpop.f32.mrf.mxu0
      %v476 = vadd.f32 0.0, %v475
      %v477 = vpop.f32.mrf.mxu0
      %v478 = vpop.f32.mrf.mxu0
      %v479 = vadd.f32 0.0, %v478
      %v480 = vpop.f32.mrf.mxu0
      %481 = vmatprep.mubr.bf16.mxu0 0
      %482 = vmatmul.mubr.bf16.gmra.mxu0 %v376
      %v483 = vpop.f32.mrf.mxu0
      %v484 = vadd.f32 0.0, %v483
      %v485 = vpop.f32.mrf.mxu0
      %v486 = vpop.f32.mrf.mxu0
      %v487 = vadd.f32 0.0, %v486
      %v488 = vpop.f32.mrf.mxu0
      %489 = vmatprep.mubr.bf16.mxu0 0
      %490 = vmatmul.mubr.bf16.gmra.mxu0 %v379
      %v491 = vpop.f32.mrf.mxu0
      %v492 = vadd.f32 0.0, %v491
      %v493 = vpop.f32.mrf.mxu0
      %v494 = vpop.f32.mrf.mxu0
      %v495 = vadd.f32 0.0, %v494
      %v496 = vpop.f32.mrf.mxu0
      %497 = vmatprep.mubr.bf16.mxu0 0
      %498 = vmatmul.mubr.bf16.gmra.mxu0 %v382
      %v499 = vpop.f32.mrf.mxu0
      %v500 = vadd.f32 0.0, %v499
      %v501 = vpop.f32.mrf.mxu0
      %v502 = vpop.f32.mrf.mxu0
      %v503 = vadd.f32 0.0, %v502
      %v504 = vpop.f32.mrf.mxu0
      %505 = vmatprep.mubr.bf16.mxu0 0
      %506 = vmatmul.mubr.bf16.gmra.mxu0 %v385
      %v507 = vpop.f32.mrf.mxu0
      %v508 = vadd.f32 0.0, %v507
      %v509 = vpop.f32.mrf.mxu0
      %v510 = vpop.f32.mrf.mxu0
      %v511 = vadd.f32 0.0, %v510
      %v512 = vpop.f32.mrf.mxu0
      %513 = vmatprep.mubr.bf16.mxu0 0
      %514 = vmatmul.mubr.bf16.gmra.mxu0 %v388
      %v515 = vpop.f32.mrf.mxu0
      %v516 = vadd.f32 0.0, %v515
      %v517 = vpop.f32.mrf.mxu0
      %v518 = vpop.f32.mrf.mxu0
      %v519 = vadd.f32 0.0, %v518
      %v520 = vpop.f32.mrf.mxu0
      %521 = vmatprep.mubr.bf16.mxu0 0
      %522 = vmatmul.mubr.bf16.gmra.mxu0 %v391
      %v523 = vpop.f32.mrf.mxu0
      %v524 = vadd.f32 0.0, %v523
      %v525 = vpop.f32.mrf.mxu0
      %v526 = vpop.f32.mrf.mxu0
      %v527 = vadd.f32 0.0, %v526
      %v528 = vpop.f32.mrf.mxu0
      %529 = vmatprep.mubr.bf16.mxu0 0
      %530 = vmatmul.mubr.bf16.gmra.mxu0 %v394
      %v531 = vpop.f32.mrf.mxu0
      %v532 = vadd.f32 0.0, %v531
      %v533 = vpop.f32.mrf.mxu0
      %v534 = vpop.f32.mrf.mxu0
      %v535 = vadd.f32 0.0, %v534
      %v536 = vpop.f32.mrf.mxu0
      %537 = vmatprep.mubr.bf16.mxu0 0
      %538 = vmatmul.mubr.bf16.gmra.mxu0 %v397
      %v539 = vpop.f32.mrf.mxu0
      %v540 = vadd.f32 0.0, %v539
      %v541 = vpop.f32.mrf.mxu0
      %v542 = vpop.f32.mrf.mxu0
      %v543 = vadd.f32 0.0, %v542
      %v544 = vpop.f32.mrf.mxu0
      %545 = vmatprep.mubr.bf16.mxu0 0
      %546 = vmatmul.mubr.bf16.gmra.mxu0 %v400
      %v547 = vpop.f32.mrf.mxu0
      %v548 = vadd.f32 0.0, %v547
      %v549 = vpop.f32.mrf.mxu0
      %v550 = vpop.f32.mrf.mxu0
      %v551 = vadd.f32 0.0, %v550
      %v552 = vpop.f32.mrf.mxu0
      %553 = vmatprep.mubr.bf16.mxu0 0
      %554 = vmatmul.mubr.bf16.gmra.mxu0 %v403
      %v555 = vpop.f32.mrf.mxu0
      %v556 = vadd.f32 0.0, %v555
      %v557 = vpop.f32.mrf.mxu0
      %v558 = vpop.f32.mrf.mxu0
      %v559 = vadd.f32 0.0, %v558
      %v560 = vpop.f32.mrf.mxu0
      %561 = vmatprep.mubr.bf16.mxu0 0
      %562 = vmatmul.mubr.bf16.gmra.mxu0 %v406
      %v563 = vpop.f32.mrf.mxu0
      %v564 = vadd.f32 0.0, %v563
      %v565 = vpop.f32.mrf.mxu0
      %v566 = vpop.f32.mrf.mxu0
      %v567 = vadd.f32 0.0, %v566
      %v568 = vpop.f32.mrf.mxu0
      %569 = vmatprep.mubr.bf16.mxu0 0
      %570 = vmatmul.mubr.bf16.gmra.mxu0 %v409
      %v571 = vpop.f32.mrf.mxu0
      %v572 = vadd.f32 0.0, %v571
      %v573 = vpop.f32.mrf.mxu0
      %v574 = vpop.f32.mrf.mxu0
      %v575 = vadd.f32 0.0, %v574
      %v576 = vpop.f32.mrf.mxu0
      %577 = vmatprep.mubr.bf16.mxu0 0
      %578 = vmatmul.mubr.bf16.gmra.mxu0 %v412
      %v579 = vpop.f32.mrf.mxu0
      %v580 = vadd.f32 0.0, %v579
      %v581 = vpop.f32.mrf.mxu0
      %v582 = vpop.f32.mrf.mxu0
      %v583 = vadd.f32 0.0, %v582
      %v584 = vpop.f32.mrf.mxu0
      %585 = vmatprep.mubr.bf16.mxu0 0
      %586 = vmatmul.mubr.bf16.gmra.mxu0 %v415
      %v587 = vpop.f32.mrf.mxu0
      %v588 = vadd.f32 0.0, %v587
      %v589 = vpop.f32.mrf.mxu0
      %v590 = vpop.f32.mrf.mxu0
      %v591 = vadd.f32 0.0, %v590
      %v592 = vpop.f32.mrf.mxu0
      %593 = vdwg.mxu0
      %v596 = vunpack.c.l.b16 %v297
      %v597 = vunpack.c.l.b16 %v298
      %v598 = vpack.c.b16 %v597, %v596
      %v601 = vsel %vm362, %v279, 0
      %v604 = vsel %vm362, %v280, 0
      %v607 = vsel %vm362, %v281, 0
      %v610 = vsel %vm362, %v282, 0
      %v613 = vsel %vm362, %v283, 0
      %v616 = vsel %vm362, %v284, 0
      %v619 = vsel %vm362, %v285, 0
      %v622 = vsel %vm362, %v286, 0
      %v625 = vsel %vm362, %v287, 0
      %v628 = vsel %vm362, %v288, 0
      %v631 = vsel %vm362, %v289, 0
      %v634 = vsel %vm362, %v290, 0
      %v637 = vsel %vm362, %v291, 0
      %v640 = vsel %vm362, %v292, 0
      %v643 = vsel %vm362, %v293, 0
      %v646 = vsel %vm362, %v294, 0
      %v649 = vsel %vm362, %v295, 0
      %v652 = vsel %vm362, %v296, 0
      %654 = vmatprep.subr.bf16.mxu0 0
      %655 = vmatpush1.bf16.msra.mxu0 0
      %656 = vmatprep.subr.bf16.mxu0 0
      %657 = vmatpush1.bf16.msra.mxu0 0
      %658 = vmatprep.subr.bf16.mxu0 0
      %659 = vmatpush1.bf16.msra.mxu0 0
      %660 = vmatprep.subr.bf16.mxu0 0
      %661 = vmatpush1.bf16.msra.mxu0 0
      %662 = vmatprep.subr.bf16.mxu0 0
      %663 = vmatpush1.bf16.msra.mxu0 0
      %664 = vmatprep.subr.bf16.mxu0 0
      %665 = vmatpush1.bf16.msra.mxu0 0
      %666 = vmatprep.subr.bf16.mxu0 0
      %667 = vmatpush1.bf16.msra.mxu0 0
      %668 = vmatprep.subr.bf16.mxu0 0
      %669 = vmatpush1.bf16.msra.mxu0 %v598
      %670 = vmatprep.subr.bf16.mxu0 0
      %671 = vmatpush2.bf16.msra.mxu0 0
      %672 = vmatprep.subr.bf16.mxu0 0
      %673 = vmatpush2.bf16.msra.mxu0 0
      %674 = vmatprep.subr.bf16.mxu0 0
      %675 = vmatpush2.bf16.msra.mxu0 0
      %676 = vmatprep.subr.bf16.mxu0 0
      %677 = vmatpush2.bf16.msra.mxu0 0
      %678 = vmatprep.subr.bf16.mxu0 0
      %679 = vmatpush2.bf16.msra.mxu0 0
      %680 = vmatprep.subr.bf16.mxu0 0
      %681 = vmatpush2.bf16.msra.mxu0 0
      %682 = vmatprep.subr.bf16.mxu0 0
      %683 = vmatpush2.bf16.msra.mxu0 0
      %684 = vmatprep.subr.bf16.mxu0 0
      %685 = vmatpush2.bf16.msra.mxu0 0
      %686 = vmatprep.mubr.bf16.mxu0 0
      %687 = vmatmul.mubr.bf16.gmra.mxu0 %v601
      %v688 = vpop.f32.mrf.mxu0
      %v689 = vadd.f32 %v452, %v688
      %v690 = vpop.f32.mrf.mxu0
      %v691 = vpop.f32.mrf.mxu0
      %v692 = vadd.f32 %v455, %v691
      %v693 = vpop.f32.mrf.mxu0
      %694 = vmatprep.mubr.bf16.mxu0 0
      %695 = vmatmul.mubr.bf16.gmra.mxu0 %v604
      %v696 = vpop.f32.mrf.mxu0
      %v697 = vadd.f32 %v460, %v696
      %v698 = vpop.f32.mrf.mxu0
      %v699 = vpop.f32.mrf.mxu0
      %v700 = vadd.f32 %v463, %v699
      %v701 = vpop.f32.mrf.mxu0
      %702 = vmatprep.mubr.bf16.mxu0 0
      %703 = vmatmul.mubr.bf16.gmra.mxu0 %v607
      %v704 = vpop.f32.mrf.mxu0
      %v705 = vadd.f32 %v468, %v704
      %v706 = vpop.f32.mrf.mxu0
      %v707 = vpop.f32.mrf.mxu0
      %v708 = vadd.f32 %v471, %v707
      %v709 = vpop.f32.mrf.mxu0
      %710 = vmatprep.mubr.bf16.mxu0 0
      %711 = vmatmul.mubr.bf16.gmra.mxu0 %v610
      %v712 = vpop.f32.mrf.mxu0
      %v713 = vadd.f32 %v476, %v712
      %v714 = vpop.f32.mrf.mxu0
      %v715 = vpop.f32.mrf.mxu0
      %v716 = vadd.f32 %v479, %v715
      %v717 = vpop.f32.mrf.mxu0
      %718 = vmatprep.mubr.bf16.mxu0 0
      %719 = vmatmul.mubr.bf16.gmra.mxu0 %v613
      %v720 = vpop.f32.mrf.mxu0
      %v721 = vadd.f32 %v484, %v720
      %v722 = vpop.f32.mrf.mxu0
      %v723 = vpop.f32.mrf.mxu0
      %v724 = vadd.f32 %v487, %v723
      %v725 = vpop.f32.mrf.mxu0
      %726 = vmatprep.mubr.bf16.mxu0 0
      %727 = vmatmul.mubr.bf16.gmra.mxu0 %v616
      %v728 = vpop.f32.mrf.mxu0
      %v729 = vadd.f32 %v492, %v728
      %v730 = vpop.f32.mrf.mxu0
      %v731 = vpop.f32.mrf.mxu0
      %v732 = vadd.f32 %v495, %v731
      %v733 = vpop.f32.mrf.mxu0
      %734 = vmatprep.mubr.bf16.mxu0 0
      %735 = vmatmul.mubr.bf16.gmra.mxu0 %v619
      %v736 = vpop.f32.mrf.mxu0
      %v737 = vadd.f32 %v500, %v736
      %v738 = vpop.f32.mrf.mxu0
      %v739 = vpop.f32.mrf.mxu0
      %v740 = vadd.f32 %v503, %v739
      %v741 = vpop.f32.mrf.mxu0
      %742 = vmatprep.mubr.bf16.mxu0 0
      %743 = vmatmul.mubr.bf16.gmra.mxu0 %v622
      %v744 = vpop.f32.mrf.mxu0
      %v745 = vadd.f32 %v508, %v744
      %v746 = vpop.f32.mrf.mxu0
      %v747 = vpop.f32.mrf.mxu0
      %v748 = vadd.f32 %v511, %v747
      %v749 = vpop.f32.mrf.mxu0
      %750 = vmatprep.mubr.bf16.mxu0 0
      %751 = vmatmul.mubr.bf16.gmra.mxu0 %v625
      %v752 = vpop.f32.mrf.mxu0
      %v753 = vadd.f32 %v516, %v752
      %v754 = vpop.f32.mrf.mxu0
      %v755 = vpop.f32.mrf.mxu0
      %v756 = vadd.f32 %v519, %v755
      %v757 = vpop.f32.mrf.mxu0
      %758 = vmatprep.mubr.bf16.mxu0 0
      %759 = vmatmul.mubr.bf16.gmra.mxu0 %v628
      %v760 = vpop.f32.mrf.mxu0
      %v761 = vadd.f32 %v524, %v760
      %v762 = vpop.f32.mrf.mxu0
      %v763 = vpop.f32.mrf.mxu0
      %v764 = vadd.f32 %v527, %v763
      %v765 = vpop.f32.mrf.mxu0
      %766 = vmatprep.mubr.bf16.mxu0 0
      %767 = vmatmul.mubr.bf16.gmra.mxu0 %v631
      %v768 = vpop.f32.mrf.mxu0
      %v769 = vadd.f32 %v532, %v768
      %v770 = vpop.f32.mrf.mxu0
      %v771 = vpop.f32.mrf.mxu0
      %v772 = vadd.f32 %v535, %v771
      %v773 = vpop.f32.mrf.mxu0
      %774 = vmatprep.mubr.bf16.mxu0 0
      %775 = vmatmul.mubr.bf16.gmra.mxu0 %v634
      %v776 = vpop.f32.mrf.mxu0
      %v777 = vadd.f32 %v540, %v776
      %v778 = vpop.f32.mrf.mxu0
      %v779 = vpop.f32.mrf.mxu0
      %v780 = vadd.f32 %v543, %v779
      %v781 = vpop.f32.mrf.mxu0
      %782 = vmatprep.mubr.bf16.mxu0 0
      %783 = vmatmul.mubr.bf16.gmra.mxu0 %v637
      %v784 = vpop.f32.mrf.mxu0
      %v785 = vadd.f32 %v548, %v784
      %v786 = vpop.f32.mrf.mxu0
      %v787 = vpop.f32.mrf.mxu0
      %v788 = vadd.f32 %v551, %v787
      %v789 = vpop.f32.mrf.mxu0
      %790 = vmatprep.mubr.bf16.mxu0 0
      %791 = vmatmul.mubr.bf16.gmra.mxu0 %v640
      %v792 = vpop.f32.mrf.mxu0
      %v793 = vadd.f32 %v556, %v792
      %v794 = vpop.f32.mrf.mxu0
      %v795 = vpop.f32.mrf.mxu0
      %v796 = vadd.f32 %v559, %v795
      %v797 = vpop.f32.mrf.mxu0
      %798 = vmatprep.mubr.bf16.mxu0 0
      %799 = vmatmul.mubr.bf16.gmra.mxu0 %v643
      %v800 = vpop.f32.mrf.mxu0
      %v801 = vadd.f32 %v564, %v800
      %v802 = vpop.f32.mrf.mxu0
      %v803 = vpop.f32.mrf.mxu0
      %v804 = vadd.f32 %v567, %v803
      %v805 = vpop.f32.mrf.mxu0
      %806 = vmatprep.mubr.bf16.mxu0 0
      %807 = vmatmul.mubr.bf16.gmra.mxu0 %v646
      %v808 = vpop.f32.mrf.mxu0
      %v809 = vadd.f32 %v572, %v808
      %v810 = vpop.f32.mrf.mxu0
      %v811 = vpop.f32.mrf.mxu0
      %v812 = vadd.f32 %v575, %v811
      %v813 = vpop.f32.mrf.mxu0
      %814 = vmatprep.mubr.bf16.mxu0 0
      %815 = vmatmul.mubr.bf16.gmra.mxu0 %v649
      %v816 = vpop.f32.mrf.mxu0
      %v817 = vadd.f32 %v580, %v816
      %v818 = vpop.f32.mrf.mxu0
      %v819 = vpop.f32.mrf.mxu0
      %v820 = vadd.f32 %v583, %v819
      %v821 = vpop.f32.mrf.mxu0
      %822 = vmatprep.mubr.bf16.mxu0 0
      %823 = vmatmul.mubr.bf16.gmra.mxu0 %v652
      %v824 = vpop.f32.mrf.mxu0
      %v825 = vadd.f32 %v588, %v824
      %v826 = vpop.f32.mrf.mxu0
      %v827 = vpop.f32.mrf.mxu0
      %v828 = vadd.f32 %v591, %v827
      %v829 = vpop.f32.mrf.mxu0
      %830 = vdwg.mxu0
      %v831 = vld [vmem:[%s230 + $0x2] sm:$0xff]
      %v832 = vld [vmem:[%s230 + $0xa] sm:$0xff]
      %v833 = vld [vmem:[%s230 + $0x12] sm:$0xff]
      %v834 = vld [vmem:[%s230 + $0x1a] sm:$0xff]
      %v835 = vld [vmem:[%s230 + $0x22] sm:$0xff]
      %v836 = vld [vmem:[%s230 + $0x2a] sm:$0xff]
      %v837 = vld [vmem:[%s230 + $0x32] sm:$0xff]
      %v838 = vld [vmem:[%s230 + $0x3a] sm:$0xff]
      %v839 = vld [vmem:[%s230 + $0x42] sm:$0xff]
      %v840 = vld [vmem:[%s230 + $0x4a] sm:$0xff]
      %v841 = vld [vmem:[%s230 + $0x52] sm:$0xff]
      %v842 = vld [vmem:[%s230 + $0x5a] sm:$0xff]
      %v843 = vld [vmem:[%s230 + $0x62] sm:$0xff]
      %v844 = vld [vmem:[%s230 + $0x6a] sm:$0xff]
      %v845 = vld [vmem:[%s230 + $0x72] sm:$0xff]
      %v846 = vld [vmem:[%s230 + $0x7a] sm:$0xff]
      %v847 = vld [vmem:[%s230 + $0x82] sm:$0xff]
      %v848 = vld [vmem:[%s230 + $0x8a] sm:$0xff]
      %v849 = vld [vmem:[%s230 + $0x92] sm:$0xff]
      %v850 = vld [vmem:[%s230 + $0x9a] sm:$0xff]
      %v851 = vld [vmem:[%s230 + $0xa2] sm:$0xff]
      %v852 = vld [vmem:[%s230 + $0xaa] sm:$0xff]
      %v853 = vld [vmem:[%s230 + $0xb2] sm:$0xff]
      %v854 = vld [vmem:[%s230 + $0xba] sm:$0xff]
      %v855 = vld [vmem:[%s230 + $0xc2] sm:$0xff]
      %v856 = vld [vmem:[%s230 + $0xca] sm:$0xff]
      %v857 = vld [vmem:[%s230 + $0xd2] sm:$0xff]
      %v858 = vld [vmem:[%s230 + $0xda] sm:$0xff]
      %v859 = vld [vmem:[%s230 + $0xe2] sm:$0xff]
      %v860 = vld [vmem:[%s230 + $0xea] sm:$0xff]
      %v861 = vld [vmem:[%s230 + $0xf2] sm:$0xff]
      %v862 = vld [vmem:[%s230 + $0xfa] sm:$0xff]
      %v863 = vld [vmem:[%s230 + $0x102] sm:$0xff]
      %v864 = vld [vmem:[%s230 + $0x10a] sm:$0xff]
      %v865 = vld [vmem:[%s230 + $0x112] sm:$0xff]
      %v866 = vld [vmem:[%s230 + $0x11a] sm:$0xff]
      %v867 = vpack.c.bf16 %v832, %v831
      %v868 = vpack.c.bf16 %v834, %v833
      %v869 = vpack.c.bf16 %v836, %v835
      %v870 = vpack.c.bf16 %v838, %v837
      %v871 = vpack.c.bf16 %v840, %v839
      %v872 = vpack.c.bf16 %v842, %v841
      %v873 = vpack.c.bf16 %v844, %v843
      %v874 = vpack.c.bf16 %v846, %v845
      %v875 = vpack.c.bf16 %v848, %v847
      %v876 = vpack.c.bf16 %v850, %v849
      %v877 = vpack.c.bf16 %v852, %v851
      %v878 = vpack.c.bf16 %v854, %v853
      %v879 = vpack.c.bf16 %v856, %v855
      %v880 = vpack.c.bf16 %v858, %v857
      %v881 = vpack.c.bf16 %v860, %v859
      %v882 = vpack.c.bf16 %v862, %v861
      %v883 = vpack.c.bf16 %v864, %v863
      %v884 = vpack.c.bf16 %v866, %v865
      %s885 = scalar_lea.vmem %s1, 16
      %v886 = vld [vmem:[%s885] sm:$0xf]
      %v887 = vld [vmem:[%s885 + $0x4] sm:$0xf]
      %v890 = vunpack.c.l.b16 %v886
      %v891 = vunpack.c.l.b16 %v887
      %v892 = vpack.c.b16 %v891, %v890
      %v895 = vsel %vm362, %v867, 0
      %v898 = vsel %vm362, %v868, 0
      %v901 = vsel %vm362, %v869, 0
      %v904 = vsel %vm362, %v870, 0
      %v907 = vsel %vm362, %v871, 0
      %v910 = vsel %vm362, %v872, 0
      %v913 = vsel %vm362, %v873, 0
      %v916 = vsel %vm362, %v874, 0
      %v919 = vsel %vm362, %v875, 0
      %v922 = vsel %vm362, %v876, 0
      %v925 = vsel %vm362, %v877, 0
      %v928 = vsel %vm362, %v878, 0
      %v931 = vsel %vm362, %v879, 0
      %v934 = vsel %vm362, %v880, 0
      %v937 = vsel %vm362, %v881, 0
      %v940 = vsel %vm362, %v882, 0
      %v943 = vsel %vm362, %v883, 0
      %v946 = vsel %vm362, %v884, 0
      %948 = vmatprep.subr.bf16.mxu0 0
      %949 = vmatpush1.bf16.msra.mxu0 0
      %950 = vmatprep.subr.bf16.mxu0 0
      %951 = vmatpush1.bf16.msra.mxu0 0
      %952 = vmatprep.subr.bf16.mxu0 0
      %953 = vmatpush1.bf16.msra.mxu0 0
      %954 = vmatprep.subr.bf16.mxu0 0
      %955 = vmatpush1.bf16.msra.mxu0 0
      %956 = vmatprep.subr.bf16.mxu0 0
      %957 = vmatpush1.bf16.msra.mxu0 0
      %958 = vmatprep.subr.bf16.mxu0 0
      %959 = vmatpush1.bf16.msra.mxu0 0
      %960 = vmatprep.subr.bf16.mxu0 0
      %961 = vmatpush1.bf16.msra.mxu0 0
      %962 = vmatprep.subr.bf16.mxu0 0
      %963 = vmatpush1.bf16.msra.mxu0 %v892
      %964 = vmatprep.subr.bf16.mxu0 0
      %965 = vmatpush2.bf16.msra.mxu0 0
      %966 = vmatprep.subr.bf16.mxu0 0
      %967 = vmatpush2.bf16.msra.mxu0 0
      %968 = vmatprep.subr.bf16.mxu0 0
      %969 = vmatpush2.bf16.msra.mxu0 0
      %970 = vmatprep.subr.bf16.mxu0 0
      %971 = vmatpush2.bf16.msra.mxu0 0
      %972 = vmatprep.subr.bf16.mxu0 0
      %973 = vmatpush2.bf16.msra.mxu0 0
      %974 = vmatprep.subr.bf16.mxu0 0
      %975 = vmatpush2.bf16.msra.mxu0 0
      %976 = vmatprep.subr.bf16.mxu0 0
      %977 = vmatpush2.bf16.msra.mxu0 0
      %978 = vmatprep.subr.bf16.mxu0 0
      %979 = vmatpush2.bf16.msra.mxu0 0
      %980 = vmatprep.mubr.bf16.mxu0 0
      %981 = vmatmul.mubr.bf16.gmra.mxu0 %v895
      %v982 = vpop.f32.mrf.mxu0
      %v983 = vadd.f32 0.0, %v982
      %v984 = vpop.f32.mrf.mxu0
      %v985 = vpop.f32.mrf.mxu0
      %v986 = vadd.f32 0.0, %v985
      %v987 = vpop.f32.mrf.mxu0
      %988 = vmatprep.mubr.bf16.mxu0 0
      %989 = vmatmul.mubr.bf16.gmra.mxu0 %v898
      %v990 = vpop.f32.mrf.mxu0
      %v991 = vadd.f32 0.0, %v990
      %v992 = vpop.f32.mrf.mxu0
      %v993 = vpop.f32.mrf.mxu0
      %v994 = vadd.f32 0.0, %v993
      %v995 = vpop.f32.mrf.mxu0
      %996 = vmatprep.mubr.bf16.mxu0 0
      %997 = vmatmul.mubr.bf16.gmra.mxu0 %v901
      %v998 = vpop.f32.mrf.mxu0
      %v999 = vadd.f32 0.0, %v998
      %v1000 = vpop.f32.mrf.mxu0
      %v1001 = vpop.f32.mrf.mxu0
      %v1002 = vadd.f32 0.0, %v1001
      %v1003 = vpop.f32.mrf.mxu0
      %1004 = vmatprep.mubr.bf16.mxu0 0
      %1005 = vmatmul.mubr.bf16.gmra.mxu0 %v904
      %v1006 = vpop.f32.mrf.mxu0
      %v1007 = vadd.f32 0.0, %v1006
      %v1008 = vpop.f32.mrf.mxu0
      %v1009 = vpop.f32.mrf.mxu0
      %v1010 = vadd.f32 0.0, %v1009
      %v1011 = vpop.f32.mrf.mxu0
      %1012 = vmatprep.mubr.bf16.mxu0 0
      %1013 = vmatmul.mubr.bf16.gmra.mxu0 %v907
      %v1014 = vpop.f32.mrf.mxu0
      %v1015 = vadd.f32 0.0, %v1014
      %v1016 = vpop.f32.mrf.mxu0
      %v1017 = vpop.f32.mrf.mxu0
      %v1018 = vadd.f32 0.0, %v1017
      %v1019 = vpop.f32.mrf.mxu0
      %1020 = vmatprep.mubr.bf16.mxu0 0
      %1021 = vmatmul.mubr.bf16.gmra.mxu0 %v910
      %v1022 = vpop.f32.mrf.mxu0
      %v1023 = vadd.f32 0.0, %v1022
      %v1024 = vpop.f32.mrf.mxu0
      %v1025 = vpop.f32.mrf.mxu0
      %v1026 = vadd.f32 0.0, %v1025
      %v1027 = vpop.f32.mrf.mxu0
      %1028 = vmatprep.mubr.bf16.mxu0 0
      %1029 = vmatmul.mubr.bf16.gmra.mxu0 %v913
      %v1030 = vpop.f32.mrf.mxu0
      %v1031 = vadd.f32 0.0, %v1030
      %v1032 = vpop.f32.mrf.mxu0
      %v1033 = vpop.f32.mrf.mxu0
      %v1034 = vadd.f32 0.0, %v1033
      %v1035 = vpop.f32.mrf.mxu0
      %1036 = vmatprep.mubr.bf16.mxu0 0
      %1037 = vmatmul.mubr.bf16.gmra.mxu0 %v916
      %v1038 = vpop.f32.mrf.mxu0
      %v1039 = vadd.f32 0.0, %v1038
      %v1040 = vpop.f32.mrf.mxu0
      %v1041 = vpop.f32.mrf.mxu0
      %v1042 = vadd.f32 0.0, %v1041
      %v1043 = vpop.f32.mrf.mxu0
      %1044 = vmatprep.mubr.bf16.mxu0 0
      %1045 = vmatmul.mubr.bf16.gmra.mxu0 %v919
      %v1046 = vpop.f32.mrf.mxu0
      %v1047 = vadd.f32 0.0, %v1046
      %v1048 = vpop.f32.mrf.mxu0
      %v1049 = vpop.f32.mrf.mxu0
      %v1050 = vadd.f32 0.0, %v1049
      %v1051 = vpop.f32.mrf.mxu0
      %1052 = vmatprep.mubr.bf16.mxu0 0
      %1053 = vmatmul.mubr.bf16.gmra.mxu0 %v922
      %v1054 = vpop.f32.mrf.mxu0
      %v1055 = vadd.f32 0.0, %v1054
      %v1056 = vpop.f32.mrf.mxu0
      %v1057 = vpop.f32.mrf.mxu0
      %v1058 = vadd.f32 0.0, %v1057
      %v1059 = vpop.f32.mrf.mxu0
      %1060 = vmatprep.mubr.bf16.mxu0 0
      %1061 = vmatmul.mubr.bf16.gmra.mxu0 %v925
      %v1062 = vpop.f32.mrf.mxu0
      %v1063 = vadd.f32 0.0, %v1062
      %v1064 = vpop.f32.mrf.mxu0
      %v1065 = vpop.f32.mrf.mxu0
      %v1066 = vadd.f32 0.0, %v1065
      %v1067 = vpop.f32.mrf.mxu0
      %1068 = vmatprep.mubr.bf16.mxu0 0
      %1069 = vmatmul.mubr.bf16.gmra.mxu0 %v928
      %v1070 = vpop.f32.mrf.mxu0
      %v1071 = vadd.f32 0.0, %v1070
      %v1072 = vpop.f32.mrf.mxu0
      %v1073 = vpop.f32.mrf.mxu0
      %v1074 = vadd.f32 0.0, %v1073
      %v1075 = vpop.f32.mrf.mxu0
      %1076 = vmatprep.mubr.bf16.mxu0 0
      %1077 = vmatmul.mubr.bf16.gmra.mxu0 %v931
      %v1078 = vpop.f32.mrf.mxu0
      %v1079 = vadd.f32 0.0, %v1078
      %v1080 = vpop.f32.mrf.mxu0
      %v1081 = vpop.f32.mrf.mxu0
      %v1082 = vadd.f32 0.0, %v1081
      %v1083 = vpop.f32.mrf.mxu0
      %1084 = vmatprep.mubr.bf16.mxu0 0
      %1085 = vmatmul.mubr.bf16.gmra.mxu0 %v934
      %v1086 = vpop.f32.mrf.mxu0
      %v1087 = vadd.f32 0.0, %v1086
      %v1088 = vpop.f32.mrf.mxu0
      %v1089 = vpop.f32.mrf.mxu0
      %v1090 = vadd.f32 0.0, %v1089
      %v1091 = vpop.f32.mrf.mxu0
      %1092 = vmatprep.mubr.bf16.mxu0 0
      %1093 = vmatmul.mubr.bf16.gmra.mxu0 %v937
      %v1094 = vpop.f32.mrf.mxu0
      %v1095 = vadd.f32 0.0, %v1094
      %v1096 = vpop.f32.mrf.mxu0
      %v1097 = vpop.f32.mrf.mxu0
      %v1098 = vadd.f32 0.0, %v1097
      %v1099 = vpop.f32.mrf.mxu0
      %1100 = vmatprep.mubr.bf16.mxu0 0
      %1101 = vmatmul.mubr.bf16.gmra.mxu0 %v940
      %v1102 = vpop.f32.mrf.mxu0
      %v1103 = vadd.f32 0.0, %v1102
      %v1104 = vpop.f32.mrf.mxu0
      %v1105 = vpop.f32.mrf.mxu0
      %v1106 = vadd.f32 0.0, %v1105
      %v1107 = vpop.f32.mrf.mxu0
      %1108 = vmatprep.mubr.bf16.mxu0 0
      %1109 = vmatmul.mubr.bf16.gmra.mxu0 %v943
      %v1110 = vpop.f32.mrf.mxu0
      %v1111 = vadd.f32 0.0, %v1110
      %v1112 = vpop.f32.mrf.mxu0
      %v1113 = vpop.f32.mrf.mxu0
      %v1114 = vadd.f32 0.0, %v1113
      %v1115 = vpop.f32.mrf.mxu0
      %1116 = vmatprep.mubr.bf16.mxu0 0
      %1117 = vmatmul.mubr.bf16.gmra.mxu0 %v946
      %v1118 = vpop.f32.mrf.mxu0
      %v1119 = vadd.f32 0.0, %v1118
      %v1120 = vpop.f32.mrf.mxu0
      %v1121 = vpop.f32.mrf.mxu0
      %v1122 = vadd.f32 0.0, %v1121
      %v1123 = vpop.f32.mrf.mxu0
      %1124 = vdwg.mxu0
      %v1125 = vadd.f32 %v689, %v983
      %v1126 = vadd.f32 %v692, %v986
      %v1127 = vadd.f32 %v697, %v991
      %v1128 = vadd.f32 %v700, %v994
      %v1129 = vadd.f32 %v705, %v999
      %v1130 = vadd.f32 %v708, %v1002
      %v1131 = vadd.f32 %v713, %v1007
      %v1132 = vadd.f32 %v716, %v1010
      %v1133 = vadd.f32 %v721, %v1015
      %v1134 = vadd.f32 %v724, %v1018
      %v1135 = vadd.f32 %v729, %v1023
      %v1136 = vadd.f32 %v732, %v1026
      %v1137 = vadd.f32 %v737, %v1031
      %v1138 = vadd.f32 %v740, %v1034
      %v1139 = vadd.f32 %v745, %v1039
      %v1140 = vadd.f32 %v748, %v1042
      %v1141 = vadd.f32 %v753, %v1047
      %v1142 = vadd.f32 %v756, %v1050
      %v1143 = vadd.f32 %v761, %v1055
      %v1144 = vadd.f32 %v764, %v1058
      %v1145 = vadd.f32 %v769, %v1063
      %v1146 = vadd.f32 %v772, %v1066
      %v1147 = vadd.f32 %v777, %v1071
      %v1148 = vadd.f32 %v780, %v1074
      %v1149 = vadd.f32 %v785, %v1079
      %v1150 = vadd.f32 %v788, %v1082
      %v1151 = vadd.f32 %v793, %v1087
      %v1152 = vadd.f32 %v796, %v1090
      %v1153 = vadd.f32 %v801, %v1095
      %v1154 = vadd.f32 %v804, %v1098
      %v1155 = vadd.f32 %v809, %v1103
      %v1156 = vadd.f32 %v812, %v1106
      %v1157 = vadd.f32 %v817, %v1111
      %v1158 = vadd.f32 %v820, %v1114
      %v1159 = vadd.f32 %v825, %v1119
      %v1160 = vadd.f32 %v828, %v1122
      %v1161 = vld [vmem:[%s230 + $0x12] sm:$0xff]
      %v1162 = vld [vmem:[%s230 + $0x1a] sm:$0xff]
      %v1163 = vld [vmem:[%s230 + $0x22] sm:$0xff]
      %v1164 = vld [vmem:[%s230 + $0x2a] sm:$0xff]
      %v1165 = vld [vmem:[%s230 + $0x32] sm:$0xff]
      %v1166 = vld [vmem:[%s230 + $0x3a] sm:$0xff]
      %v1167 = vld [vmem:[%s230 + $0x42] sm:$0xff]
      %v1168 = vld [vmem:[%s230 + $0x4a] sm:$0xff]
      %v1169 = vld [vmem:[%s230 + $0x52] sm:$0xff]
      %v1170 = vld [vmem:[%s230 + $0x5a] sm:$0xff]
      %v1171 = vld [vmem:[%s230 + $0x62] sm:$0xff]
      %v1172 = vld [vmem:[%s230 + $0x6a] sm:$0xff]
      %v1173 = vld [vmem:[%s230 + $0x72] sm:$0xff]
      %v1174 = vld [vmem:[%s230 + $0x7a] sm:$0xff]
      %v1175 = vld [vmem:[%s230 + $0x82] sm:$0xff]
      %v1176 = vld [vmem:[%s230 + $0x8a] sm:$0xff]
      %v1177 = vld [vmem:[%s230 + $0x92] sm:$0xff]
      %v1178 = vld [vmem:[%s230 + $0x9a] sm:$0xff]
      %v1179 = vld [vmem:[%s230 + $0xa2] sm:$0xff]
      %v1180 = vld [vmem:[%s230 + $0xaa] sm:$0xff]
      %v1181 = vld [vmem:[%s230 + $0xb2] sm:$0xff]
      %v1182 = vld [vmem:[%s230 + $0xba] sm:$0xff]
      %v1183 = vld [vmem:[%s230 + $0xc2] sm:$0xff]
      %v1184 = vld [vmem:[%s230 + $0xca] sm:$0xff]
      %v1185 = vld [vmem:[%s230 + $0xd2] sm:$0xff]
      %v1186 = vld [vmem:[%s230 + $0xda] sm:$0xff]
      %v1187 = vld [vmem:[%s230 + $0xe2] sm:$0xff]
      %v1188 = vld [vmem:[%s230 + $0xea] sm:$0xff]
      %v1189 = vld [vmem:[%s230 + $0xf2] sm:$0xff]
      %v1190 = vld [vmem:[%s230 + $0xfa] sm:$0xff]
      %v1191 = vld [vmem:[%s230 + $0x102] sm:$0xff]
      %v1192 = vld [vmem:[%s230 + $0x10a] sm:$0xff]
      %v1193 = vld [vmem:[%s230 + $0x112] sm:$0xff]
      %v1194 = vld [vmem:[%s230 + $0x11a] sm:$0xff]
      %v1195 = vld [vmem:[%s230 + $0x122] sm:$0xff]
      %v1196 = vld [vmem:[%s230 + $0x12a] sm:$0xff]
      %v1197 = vpack.c.bf16 %v1162, %v1161
      %v1198 = vpack.c.bf16 %v1164, %v1163
      %v1199 = vpack.c.bf16 %v1166, %v1165
      %v1200 = vpack.c.bf16 %v1168, %v1167
      %v1201 = vpack.c.bf16 %v1170, %v1169
      %v1202 = vpack.c.bf16 %v1172, %v1171
      %v1203 = vpack.c.bf16 %v1174, %v1173
      %v1204 = vpack.c.bf16 %v1176, %v1175
      %v1205 = vpack.c.bf16 %v1178, %v1177
      %v1206 = vpack.c.bf16 %v1180, %v1179
      %v1207 = vpack.c.bf16 %v1182, %v1181
      %v1208 = vpack.c.bf16 %v1184, %v1183
      %v1209 = vpack.c.bf16 %v1186, %v1185
      %v1210 = vpack.c.bf16 %v1188, %v1187
      %v1211 = vpack.c.bf16 %v1190, %v1189
      %v1212 = vpack.c.bf16 %v1192, %v1191
      %v1213 = vpack.c.bf16 %v1194, %v1193
      %v1214 = vpack.c.bf16 %v1196, %v1195
      %s1215 = scalar_lea.vmem %s1, 24
      %v1216 = vld [vmem:[%s1215] sm:$0xf]
      %v1217 = vld [vmem:[%s1215 + $0x4] sm:$0xf]
      %v1220 = vunpack.c.l.b16 %v1216
      %v1221 = vunpack.c.l.b16 %v1217
      %v1222 = vpack.c.b16 %v1221, %v1220
      %v1225 = vsel %vm362, %v1197, 0
      %v1228 = vsel %vm362, %v1198, 0
      %v1231 = vsel %vm362, %v1199, 0
      %v1234 = vsel %vm362, %v1200, 0
      %v1237 = vsel %vm362, %v1201, 0
      %v1240 = vsel %vm362, %v1202, 0
      %v1243 = vsel %vm362, %v1203, 0
      %v1246 = vsel %vm362, %v1204, 0
      %v1249 = vsel %vm362, %v1205, 0
      %v1252 = vsel %vm362, %v1206, 0
      %v1255 = vsel %vm362, %v1207, 0
      %v1258 = vsel %vm362, %v1208, 0
      %v1261 = vsel %vm362, %v1209, 0
      %v1264 = vsel %vm362, %v1210, 0
      %v1267 = vsel %vm362, %v1211, 0
      %v1270 = vsel %vm362, %v1212, 0
      %v1273 = vsel %vm362, %v1213, 0
      %v1276 = vsel %vm362, %v1214, 0
      %1278 = vmatprep.subr.bf16.mxu0 0
      %1279 = vmatpush1.bf16.msra.mxu0 0
      %1280 = vmatprep.subr.bf16.mxu0 0
      %1281 = vmatpush1.bf16.msra.mxu0 0
      %1282 = vmatprep.subr.bf16.mxu0 0
      %1283 = vmatpush1.bf16.msra.mxu0 0
      %1284 = vmatprep.subr.bf16.mxu0 0
      %1285 = vmatpush1.bf16.msra.mxu0 0
      %1286 = vmatprep.subr.bf16.mxu0 0
      %1287 = vmatpush1.bf16.msra.mxu0 0
      %1288 = vmatprep.subr.bf16.mxu0 0
      %1289 = vmatpush1.bf16.msra.mxu0 0
      %1290 = vmatprep.subr.bf16.mxu0 0
      %1291 = vmatpush1.bf16.msra.mxu0 0
      %1292 = vmatprep.subr.bf16.mxu0 0
      %1293 = vmatpush1.bf16.msra.mxu0 %v1222
      %1294 = vmatprep.subr.bf16.mxu0 0
      %1295 = vmatpush2.bf16.msra.mxu0 0
      %1296 = vmatprep.subr.bf16.mxu0 0
      %1297 = vmatpush2.bf16.msra.mxu0 0
      %1298 = vmatprep.subr.bf16.mxu0 0
      %1299 = vmatpush2.bf16.msra.mxu0 0
      %1300 = vmatprep.subr.bf16.mxu0 0
      %1301 = vmatpush2.bf16.msra.mxu0 0
      %1302 = vmatprep.subr.bf16.mxu0 0
      %1303 = vmatpush2.bf16.msra.mxu0 0
      %1304 = vmatprep.subr.bf16.mxu0 0
      %1305 = vmatpush2.bf16.msra.mxu0 0
      %1306 = vmatprep.subr.bf16.mxu0 0
      %1307 = vmatpush2.bf16.msra.mxu0 0
      %1308 = vmatprep.subr.bf16.mxu0 0
      %1309 = vmatpush2.bf16.msra.mxu0 0
      %1310 = vmatprep.mubr.bf16.mxu0 0
      %1311 = vmatmul.mubr.bf16.gmra.mxu0 %v1225
      %v1312 = vpop.f32.mrf.mxu0
      %v1313 = vadd.f32 0.0, %v1312
      %v1314 = vpop.f32.mrf.mxu0
      %v1315 = vpop.f32.mrf.mxu0
      %v1316 = vadd.f32 0.0, %v1315
      %v1317 = vpop.f32.mrf.mxu0
      %1318 = vmatprep.mubr.bf16.mxu0 0
      %1319 = vmatmul.mubr.bf16.gmra.mxu0 %v1228
      %v1320 = vpop.f32.mrf.mxu0
      %v1321 = vadd.f32 0.0, %v1320
      %v1322 = vpop.f32.mrf.mxu0
      %v1323 = vpop.f32.mrf.mxu0
      %v1324 = vadd.f32 0.0, %v1323
      %v1325 = vpop.f32.mrf.mxu0
      %1326 = vmatprep.mubr.bf16.mxu0 0
      %1327 = vmatmul.mubr.bf16.gmra.mxu0 %v1231
      %v1328 = vpop.f32.mrf.mxu0
      %v1329 = vadd.f32 0.0, %v1328
      %v1330 = vpop.f32.mrf.mxu0
      %v1331 = vpop.f32.mrf.mxu0
      %v1332 = vadd.f32 0.0, %v1331
      %v1333 = vpop.f32.mrf.mxu0
      %1334 = vmatprep.mubr.bf16.mxu0 0
      %1335 = vmatmul.mubr.bf16.gmra.mxu0 %v1234
      %v1336 = vpop.f32.mrf.mxu0
      %v1337 = vadd.f32 0.0, %v1336
      %v1338 = vpop.f32.mrf.mxu0
      %v1339 = vpop.f32.mrf.mxu0
      %v1340 = vadd.f32 0.0, %v1339
      %v1341 = vpop.f32.mrf.mxu0
      %1342 = vmatprep.mubr.bf16.mxu0 0
      %1343 = vmatmul.mubr.bf16.gmra.mxu0 %v1237
      %v1344 = vpop.f32.mrf.mxu0
      %v1345 = vadd.f32 0.0, %v1344
      %v1346 = vpop.f32.mrf.mxu0
      %v1347 = vpop.f32.mrf.mxu0
      %v1348 = vadd.f32 0.0, %v1347
      %v1349 = vpop.f32.mrf.mxu0
      %1350 = vmatprep.mubr.bf16.mxu0 0
      %1351 = vmatmul.mubr.bf16.gmra.mxu0 %v1240
      %v1352 = vpop.f32.mrf.mxu0
      %v1353 = vadd.f32 0.0, %v1352
      %v1354 = vpop.f32.mrf.mxu0
      %v1355 = vpop.f32.mrf.mxu0
      %v1356 = vadd.f32 0.0, %v1355
      %v1357 = vpop.f32.mrf.mxu0
      %1358 = vmatprep.mubr.bf16.mxu0 0
      %1359 = vmatmul.mubr.bf16.gmra.mxu0 %v1243
      %v1360 = vpop.f32.mrf.mxu0
      %v1361 = vadd.f32 0.0, %v1360
      %v1362 = vpop.f32.mrf.mxu0
      %v1363 = vpop.f32.mrf.mxu0
      %v1364 = vadd.f32 0.0, %v1363
      %v1365 = vpop.f32.mrf.mxu0
      %1366 = vmatprep.mubr.bf16.mxu0 0
      %1367 = vmatmul.mubr.bf16.gmra.mxu0 %v1246
      %v1368 = vpop.f32.mrf.mxu0
      %v1369 = vadd.f32 0.0, %v1368
      %v1370 = vpop.f32.mrf.mxu0
      %v1371 = vpop.f32.mrf.mxu0
      %v1372 = vadd.f32 0.0, %v1371
      %v1373 = vpop.f32.mrf.mxu0
      %1374 = vmatprep.mubr.bf16.mxu0 0
      %1375 = vmatmul.mubr.bf16.gmra.mxu0 %v1249
      %v1376 = vpop.f32.mrf.mxu0
      %v1377 = vadd.f32 0.0, %v1376
      %v1378 = vpop.f32.mrf.mxu0
      %v1379 = vpop.f32.mrf.mxu0
      %v1380 = vadd.f32 0.0, %v1379
      %v1381 = vpop.f32.mrf.mxu0
      %1382 = vmatprep.mubr.bf16.mxu0 0
      %1383 = vmatmul.mubr.bf16.gmra.mxu0 %v1252
      %v1384 = vpop.f32.mrf.mxu0
      %v1385 = vadd.f32 0.0, %v1384
      %v1386 = vpop.f32.mrf.mxu0
      %v1387 = vpop.f32.mrf.mxu0
      %v1388 = vadd.f32 0.0, %v1387
      %v1389 = vpop.f32.mrf.mxu0
      %1390 = vmatprep.mubr.bf16.mxu0 0
      %1391 = vmatmul.mubr.bf16.gmra.mxu0 %v1255
      %v1392 = vpop.f32.mrf.mxu0
      %v1393 = vadd.f32 0.0, %v1392
      %v1394 = vpop.f32.mrf.mxu0
      %v1395 = vpop.f32.mrf.mxu0
      %v1396 = vadd.f32 0.0, %v1395
      %v1397 = vpop.f32.mrf.mxu0
      %1398 = vmatprep.mubr.bf16.mxu0 0
      %1399 = vmatmul.mubr.bf16.gmra.mxu0 %v1258
      %v1400 = vpop.f32.mrf.mxu0
      %v1401 = vadd.f32 0.0, %v1400
      %v1402 = vpop.f32.mrf.mxu0
      %v1403 = vpop.f32.mrf.mxu0
      %v1404 = vadd.f32 0.0, %v1403
      %v1405 = vpop.f32.mrf.mxu0
      %1406 = vmatprep.mubr.bf16.mxu0 0
      %1407 = vmatmul.mubr.bf16.gmra.mxu0 %v1261
      %v1408 = vpop.f32.mrf.mxu0
      %v1409 = vadd.f32 0.0, %v1408
      %v1410 = vpop.f32.mrf.mxu0
      %v1411 = vpop.f32.mrf.mxu0
      %v1412 = vadd.f32 0.0, %v1411
      %v1413 = vpop.f32.mrf.mxu0
      %1414 = vmatprep.mubr.bf16.mxu0 0
      %1415 = vmatmul.mubr.bf16.gmra.mxu0 %v1264
      %v1416 = vpop.f32.mrf.mxu0
      %v1417 = vadd.f32 0.0, %v1416
      %v1418 = vpop.f32.mrf.mxu0
      %v1419 = vpop.f32.mrf.mxu0
      %v1420 = vadd.f32 0.0, %v1419
      %v1421 = vpop.f32.mrf.mxu0
      %1422 = vmatprep.mubr.bf16.mxu0 0
      %1423 = vmatmul.mubr.bf16.gmra.mxu0 %v1267
      %v1424 = vpop.f32.mrf.mxu0
      %v1425 = vadd.f32 0.0, %v1424
      %v1426 = vpop.f32.mrf.mxu0
      %v1427 = vpop.f32.mrf.mxu0
      %v1428 = vadd.f32 0.0, %v1427
      %v1429 = vpop.f32.mrf.mxu0
      %1430 = vmatprep.mubr.bf16.mxu0 0
      %1431 = vmatmul.mubr.bf16.gmra.mxu0 %v1270
      %v1432 = vpop.f32.mrf.mxu0
      %v1433 = vadd.f32 0.0, %v1432
      %v1434 = vpop.f32.mrf.mxu0
      %v1435 = vpop.f32.mrf.mxu0
      %v1436 = vadd.f32 0.0, %v1435
      %v1437 = vpop.f32.mrf.mxu0
      %1438 = vmatprep.mubr.bf16.mxu0 0
      %1439 = vmatmul.mubr.bf16.gmra.mxu0 %v1273
      %v1440 = vpop.f32.mrf.mxu0
      %v1441 = vadd.f32 0.0, %v1440
      %v1442 = vpop.f32.mrf.mxu0
      %v1443 = vpop.f32.mrf.mxu0
      %v1444 = vadd.f32 0.0, %v1443
      %v1445 = vpop.f32.mrf.mxu0
      %1446 = vmatprep.mubr.bf16.mxu0 0
      %1447 = vmatmul.mubr.bf16.gmra.mxu0 %v1276
      %v1448 = vpop.f32.mrf.mxu0
      %v1449 = vadd.f32 0.0, %v1448
      %v1450 = vpop.f32.mrf.mxu0
      %v1451 = vpop.f32.mrf.mxu0
      %v1452 = vadd.f32 0.0, %v1451
      %v1453 = vpop.f32.mrf.mxu0
      %1454 = vdwg.mxu0
      %v1455 = vadd.f32 %v1125, %v1313
      %v1456 = vadd.f32 %v1126, %v1316
      %v1457 = vadd.f32 %v1127, %v1321
      %v1458 = vadd.f32 %v1128, %v1324
      %v1459 = vadd.f32 %v1129, %v1329
      %v1460 = vadd.f32 %v1130, %v1332
      %v1461 = vadd.f32 %v1131, %v1337
      %v1462 = vadd.f32 %v1132, %v1340
      %v1463 = vadd.f32 %v1133, %v1345
      %v1464 = vadd.f32 %v1134, %v1348
      %v1465 = vadd.f32 %v1135, %v1353
      %v1466 = vadd.f32 %v1136, %v1356
      %v1467 = vadd.f32 %v1137, %v1361
      %v1468 = vadd.f32 %v1138, %v1364
      %v1469 = vadd.f32 %v1139, %v1369
      %v1470 = vadd.f32 %v1140, %v1372
      %v1471 = vadd.f32 %v1141, %v1377
      %v1472 = vadd.f32 %v1142, %v1380
      %v1473 = vadd.f32 %v1143, %v1385
      %v1474 = vadd.f32 %v1144, %v1388
      %v1475 = vadd.f32 %v1145, %v1393
      %v1476 = vadd.f32 %v1146, %v1396
      %v1477 = vadd.f32 %v1147, %v1401
      %v1478 = vadd.f32 %v1148, %v1404
      %v1479 = vadd.f32 %v1149, %v1409
      %v1480 = vadd.f32 %v1150, %v1412
      %v1481 = vadd.f32 %v1151, %v1417
      %v1482 = vadd.f32 %v1152, %v1420
      %v1483 = vadd.f32 %v1153, %v1425
      %v1484 = vadd.f32 %v1154, %v1428
      %v1485 = vadd.f32 %v1155, %v1433
      %v1486 = vadd.f32 %v1156, %v1436
      %v1487 = vadd.f32 %v1157, %v1441
      %v1488 = vadd.f32 %v1158, %v1444
      %v1489 = vadd.f32 %v1159, %v1449
      %v1490 = vadd.f32 %v1160, %v1452
      %v1491 = vld [vmem:[%s230 + $0x13] sm:$0xff]
      %v1492 = vld [vmem:[%s230 + $0x1b] sm:$0xff]
      %v1493 = vld [vmem:[%s230 + $0x23] sm:$0xff]
      %v1494 = vld [vmem:[%s230 + $0x2b] sm:$0xff]
      %v1495 = vld [vmem:[%s230 + $0x33] sm:$0xff]
      %v1496 = vld [vmem:[%s230 + $0x3b] sm:$0xff]
      %v1497 = vld [vmem:[%s230 + $0x43] sm:$0xff]
      %v1498 = vld [vmem:[%s230 + $0x4b] sm:$0xff]
      %v1499 = vld [vmem:[%s230 + $0x53] sm:$0xff]
      %v1500 = vld [vmem:[%s230 + $0x5b] sm:$0xff]
      %v1501 = vld [vmem:[%s230 + $0x63] sm:$0xff]
      %v1502 = vld [vmem:[%s230 + $0x6b] sm:$0xff]
      %v1503 = vld [vmem:[%s230 + $0x73] sm:$0xff]
      %v1504 = vld [vmem:[%s230 + $0x7b] sm:$0xff]
      %v1505 = vld [vmem:[%s230 + $0x83] sm:$0xff]
      %v1506 = vld [vmem:[%s230 + $0x8b] sm:$0xff]
      %v1507 = vld [vmem:[%s230 + $0x93] sm:$0xff]
      %v1508 = vld [vmem:[%s230 + $0x9b] sm:$0xff]
      %v1509 = vld [vmem:[%s230 + $0xa3] sm:$0xff]
      %v1510 = vld [vmem:[%s230 + $0xab] sm:$0xff]
      %v1511 = vld [vmem:[%s230 + $0xb3] sm:$0xff]
      %v1512 = vld [vmem:[%s230 + $0xbb] sm:$0xff]
      %v1513 = vld [vmem:[%s230 + $0xc3] sm:$0xff]
      %v1514 = vld [vmem:[%s230 + $0xcb] sm:$0xff]
      %v1515 = vld [vmem:[%s230 + $0xd3] sm:$0xff]
      %v1516 = vld [vmem:[%s230 + $0xdb] sm:$0xff]
      %v1517 = vld [vmem:[%s230 + $0xe3] sm:$0xff]
      %v1518 = vld [vmem:[%s230 + $0xeb] sm:$0xff]
      %v1519 = vld [vmem:[%s230 + $0xf3] sm:$0xff]
      %v1520 = vld [vmem:[%s230 + $0xfb] sm:$0xff]
      %v1521 = vld [vmem:[%s230 + $0x103] sm:$0xff]
      %v1522 = vld [vmem:[%s230 + $0x10b] sm:$0xff]
      %v1523 = vld [vmem:[%s230 + $0x113] sm:$0xff]
      %v1524 = vld [vmem:[%s230 + $0x11b] sm:$0xff]
      %v1525 = vld [vmem:[%s230 + $0x123] sm:$0xff]
      %v1526 = vld [vmem:[%s230 + $0x12b] sm:$0xff]
      %v1527 = vpack.c.bf16 %v1492, %v1491
      %v1528 = vpack.c.bf16 %v1494, %v1493
      %v1529 = vpack.c.bf16 %v1496, %v1495
      %v1530 = vpack.c.bf16 %v1498, %v1497
      %v1531 = vpack.c.bf16 %v1500, %v1499
      %v1532 = vpack.c.bf16 %v1502, %v1501
      %v1533 = vpack.c.bf16 %v1504, %v1503
      %v1534 = vpack.c.bf16 %v1506, %v1505
      %v1535 = vpack.c.bf16 %v1508, %v1507
      %v1536 = vpack.c.bf16 %v1510, %v1509
      %v1537 = vpack.c.bf16 %v1512, %v1511
      %v1538 = vpack.c.bf16 %v1514, %v1513
      %v1539 = vpack.c.bf16 %v1516, %v1515
      %v1540 = vpack.c.bf16 %v1518, %v1517
      %v1541 = vpack.c.bf16 %v1520, %v1519
      %v1542 = vpack.c.bf16 %v1522, %v1521
      %v1543 = vpack.c.bf16 %v1524, %v1523
      %v1544 = vpack.c.bf16 %v1526, %v1525
      %s1545 = scalar_lea.vmem %s1, 32
      %v1546 = vld [vmem:[%s1545] sm:$0xf]
      %v1547 = vld [vmem:[%s1545 + $0x4] sm:$0xf]
      %v1550 = vunpack.c.l.b16 %v1546
      %v1551 = vunpack.c.l.b16 %v1547
      %v1552 = vpack.c.b16 %v1551, %v1550
      %v1555 = vsel %vm362, %v1527, 0
      %v1558 = vsel %vm362, %v1528, 0
      %v1561 = vsel %vm362, %v1529, 0
      %v1564 = vsel %vm362, %v1530, 0
      %v1567 = vsel %vm362, %v1531, 0
      %v1570 = vsel %vm362, %v1532, 0
      %v1573 = vsel %vm362, %v1533, 0
      %v1576 = vsel %vm362, %v1534, 0
      %v1579 = vsel %vm362, %v1535, 0
      %v1582 = vsel %vm362, %v1536, 0
      %v1585 = vsel %vm362, %v1537, 0
      %v1588 = vsel %vm362, %v1538, 0
      %v1591 = vsel %vm362, %v1539, 0
      %v1594 = vsel %vm362, %v1540, 0
      %v1597 = vsel %vm362, %v1541, 0
      %v1600 = vsel %vm362, %v1542, 0
      %v1603 = vsel %vm362, %v1543, 0
      %v1606 = vsel %vm362, %v1544, 0
      %1608 = vmatprep.subr.bf16.mxu0 0
      %1609 = vmatpush1.bf16.msra.mxu0 0
      %1610 = vmatprep.subr.bf16.mxu0 0
      %1611 = vmatpush1.bf16.msra.mxu0 0
      %1612 = vmatprep.subr.bf16.mxu0 0
      %1613 = vmatpush1.bf16.msra.mxu0 0
      %1614 = vmatprep.subr.bf16.mxu0 0
      %1615 = vmatpush1.bf16.msra.mxu0 0
      %1616 = vmatprep.subr.bf16.mxu0 0
      %1617 = vmatpush1.bf16.msra.mxu0 0
      %1618 = vmatprep.subr.bf16.mxu0 0
      %1619 = vmatpush1.bf16.msra.mxu0 0
      %1620 = vmatprep.subr.bf16.mxu0 0
      %1621 = vmatpush1.bf16.msra.mxu0 0
      %1622 = vmatprep.subr.bf16.mxu0 0
      %1623 = vmatpush1.bf16.msra.mxu0 %v1552
      %1624 = vmatprep.subr.bf16.mxu0 0
      %1625 = vmatpush2.bf16.msra.mxu0 0
      %1626 = vmatprep.subr.bf16.mxu0 0
      %1627 = vmatpush2.bf16.msra.mxu0 0
      %1628 = vmatprep.subr.bf16.mxu0 0
      %1629 = vmatpush2.bf16.msra.mxu0 0
      %1630 = vmatprep.subr.bf16.mxu0 0
      %1631 = vmatpush2.bf16.msra.mxu0 0
      %1632 = vmatprep.subr.bf16.mxu0 0
      %1633 = vmatpush2.bf16.msra.mxu0 0
      %1634 = vmatprep.subr.bf16.mxu0 0
      %1635 = vmatpush2.bf16.msra.mxu0 0
      %1636 = vmatprep.subr.bf16.mxu0 0
      %1637 = vmatpush2.bf16.msra.mxu0 0
      %1638 = vmatprep.subr.bf16.mxu0 0
      %1639 = vmatpush2.bf16.msra.mxu0 0
      %1640 = vmatprep.mubr.bf16.mxu0 0
      %1641 = vmatmul.mubr.bf16.gmra.mxu0 %v1555
      %v1642 = vpop.f32.mrf.mxu0
      %v1643 = vadd.f32 0.0, %v1642
      %v1644 = vpop.f32.mrf.mxu0
      %v1645 = vpop.f32.mrf.mxu0
      %v1646 = vadd.f32 0.0, %v1645
      %v1647 = vpop.f32.mrf.mxu0
      %1648 = vmatprep.mubr.bf16.mxu0 0
      %1649 = vmatmul.mubr.bf16.gmra.mxu0 %v1558
      %v1650 = vpop.f32.mrf.mxu0
      %v1651 = vadd.f32 0.0, %v1650
      %v1652 = vpop.f32.mrf.mxu0
      %v1653 = vpop.f32.mrf.mxu0
      %v1654 = vadd.f32 0.0, %v1653
      %v1655 = vpop.f32.mrf.mxu0
      %1656 = vmatprep.mubr.bf16.mxu0 0
      %1657 = vmatmul.mubr.bf16.gmra.mxu0 %v1561
      %v1658 = vpop.f32.mrf.mxu0
      %v1659 = vadd.f32 0.0, %v1658
      %v1660 = vpop.f32.mrf.mxu0
      %v1661 = vpop.f32.mrf.mxu0
      %v1662 = vadd.f32 0.0, %v1661
      %v1663 = vpop.f32.mrf.mxu0
      %1664 = vmatprep.mubr.bf16.mxu0 0
      %1665 = vmatmul.mubr.bf16.gmra.mxu0 %v1564
      %v1666 = vpop.f32.mrf.mxu0
      %v1667 = vadd.f32 0.0, %v1666
      %v1668 = vpop.f32.mrf.mxu0
      %v1669 = vpop.f32.mrf.mxu0
      %v1670 = vadd.f32 0.0, %v1669
      %v1671 = vpop.f32.mrf.mxu0
      %1672 = vmatprep.mubr.bf16.mxu0 0
      %1673 = vmatmul.mubr.bf16.gmra.mxu0 %v1567
      %v1674 = vpop.f32.mrf.mxu0
      %v1675 = vadd.f32 0.0, %v1674
      %v1676 = vpop.f32.mrf.mxu0
      %v1677 = vpop.f32.mrf.mxu0
      %v1678 = vadd.f32 0.0, %v1677
      %v1679 = vpop.f32.mrf.mxu0
      %1680 = vmatprep.mubr.bf16.mxu0 0
      %1681 = vmatmul.mubr.bf16.gmra.mxu0 %v1570
      %v1682 = vpop.f32.mrf.mxu0
      %v1683 = vadd.f32 0.0, %v1682
      %v1684 = vpop.f32.mrf.mxu0
      %v1685 = vpop.f32.mrf.mxu0
      %v1686 = vadd.f32 0.0, %v1685
      %v1687 = vpop.f32.mrf.mxu0
      %1688 = vmatprep.mubr.bf16.mxu0 0
      %1689 = vmatmul.mubr.bf16.gmra.mxu0 %v1573
      %v1690 = vpop.f32.mrf.mxu0
      %v1691 = vadd.f32 0.0, %v1690
      %v1692 = vpop.f32.mrf.mxu0
      %v1693 = vpop.f32.mrf.mxu0
      %v1694 = vadd.f32 0.0, %v1693
      %v1695 = vpop.f32.mrf.mxu0
      %1696 = vmatprep.mubr.bf16.mxu0 0
      %1697 = vmatmul.mubr.bf16.gmra.mxu0 %v1576
      %v1698 = vpop.f32.mrf.mxu0
      %v1699 = vadd.f32 0.0, %v1698
      %v1700 = vpop.f32.mrf.mxu0
      %v1701 = vpop.f32.mrf.mxu0
      %v1702 = vadd.f32 0.0, %v1701
      %v1703 = vpop.f32.mrf.mxu0
      %1704 = vmatprep.mubr.bf16.mxu0 0
      %1705 = vmatmul.mubr.bf16.gmra.mxu0 %v1579
      %v1706 = vpop.f32.mrf.mxu0
      %v1707 = vadd.f32 0.0, %v1706
      %v1708 = vpop.f32.mrf.mxu0
      %v1709 = vpop.f32.mrf.mxu0
      %v1710 = vadd.f32 0.0, %v1709
      %v1711 = vpop.f32.mrf.mxu0
      %1712 = vmatprep.mubr.bf16.mxu0 0
      %1713 = vmatmul.mubr.bf16.gmra.mxu0 %v1582
      %v1714 = vpop.f32.mrf.mxu0
      %v1715 = vadd.f32 0.0, %v1714
      %v1716 = vpop.f32.mrf.mxu0
      %v1717 = vpop.f32.mrf.mxu0
      %v1718 = vadd.f32 0.0, %v1717
      %v1719 = vpop.f32.mrf.mxu0
      %1720 = vmatprep.mubr.bf16.mxu0 0
      %1721 = vmatmul.mubr.bf16.gmra.mxu0 %v1585
      %v1722 = vpop.f32.mrf.mxu0
      %v1723 = vadd.f32 0.0, %v1722
      %v1724 = vpop.f32.mrf.mxu0
      %v1725 = vpop.f32.mrf.mxu0
      %v1726 = vadd.f32 0.0, %v1725
      %v1727 = vpop.f32.mrf.mxu0
      %1728 = vmatprep.mubr.bf16.mxu0 0
      %1729 = vmatmul.mubr.bf16.gmra.mxu0 %v1588
      %v1730 = vpop.f32.mrf.mxu0
      %v1731 = vadd.f32 0.0, %v1730
      %v1732 = vpop.f32.mrf.mxu0
      %v1733 = vpop.f32.mrf.mxu0
      %v1734 = vadd.f32 0.0, %v1733
      %v1735 = vpop.f32.mrf.mxu0
      %1736 = vmatprep.mubr.bf16.mxu0 0
      %1737 = vmatmul.mubr.bf16.gmra.mxu0 %v1591
      %v1738 = vpop.f32.mrf.mxu0
      %v1739 = vadd.f32 0.0, %v1738
      %v1740 = vpop.f32.mrf.mxu0
      %v1741 = vpop.f32.mrf.mxu0
      %v1742 = vadd.f32 0.0, %v1741
      %v1743 = vpop.f32.mrf.mxu0
      %1744 = vmatprep.mubr.bf16.mxu0 0
      %1745 = vmatmul.mubr.bf16.gmra.mxu0 %v1594
      %v1746 = vpop.f32.mrf.mxu0
      %v1747 = vadd.f32 0.0, %v1746
      %v1748 = vpop.f32.mrf.mxu0
      %v1749 = vpop.f32.mrf.mxu0
      %v1750 = vadd.f32 0.0, %v1749
      %v1751 = vpop.f32.mrf.mxu0
      %1752 = vmatprep.mubr.bf16.mxu0 0
      %1753 = vmatmul.mubr.bf16.gmra.mxu0 %v1597
      %v1754 = vpop.f32.mrf.mxu0
      %v1755 = vadd.f32 0.0, %v1754
      %v1756 = vpop.f32.mrf.mxu0
      %v1757 = vpop.f32.mrf.mxu0
      %v1758 = vadd.f32 0.0, %v1757
      %v1759 = vpop.f32.mrf.mxu0
      %1760 = vmatprep.mubr.bf16.mxu0 0
      %1761 = vmatmul.mubr.bf16.gmra.mxu0 %v1600
      %v1762 = vpop.f32.mrf.mxu0
      %v1763 = vadd.f32 0.0, %v1762
      %v1764 = vpop.f32.mrf.mxu0
      %v1765 = vpop.f32.mrf.mxu0
      %v1766 = vadd.f32 0.0, %v1765
      %v1767 = vpop.f32.mrf.mxu0
      %1768 = vmatprep.mubr.bf16.mxu0 0
      %1769 = vmatmul.mubr.bf16.gmra.mxu0 %v1603
      %v1770 = vpop.f32.mrf.mxu0
      %v1771 = vadd.f32 0.0, %v1770
      %v1772 = vpop.f32.mrf.mxu0
      %v1773 = vpop.f32.mrf.mxu0
      %v1774 = vadd.f32 0.0, %v1773
      %v1775 = vpop.f32.mrf.mxu0
      %1776 = vmatprep.mubr.bf16.mxu0 0
      %1777 = vmatmul.mubr.bf16.gmra.mxu0 %v1606
      %v1778 = vpop.f32.mrf.mxu0
      %v1779 = vadd.f32 0.0, %v1778
      %v1780 = vpop.f32.mrf.mxu0
      %v1781 = vpop.f32.mrf.mxu0
      %v1782 = vadd.f32 0.0, %v1781
      %v1783 = vpop.f32.mrf.mxu0
      %1784 = vdwg.mxu0
      %v1785 = vadd.f32 %v1455, %v1643
      %v1786 = vadd.f32 %v1456, %v1646
      %v1787 = vadd.f32 %v1457, %v1651
      %v1788 = vadd.f32 %v1458, %v1654
      %v1789 = vadd.f32 %v1459, %v1659
      %v1790 = vadd.f32 %v1460, %v1662
      %v1791 = vadd.f32 %v1461, %v1667
      %v1792 = vadd.f32 %v1462, %v1670
      %v1793 = vadd.f32 %v1463, %v1675
      %v1794 = vadd.f32 %v1464, %v1678
      %v1795 = vadd.f32 %v1465, %v1683
      %v1796 = vadd.f32 %v1466, %v1686
      %v1797 = vadd.f32 %v1467, %v1691
      %v1798 = vadd.f32 %v1468, %v1694
      %v1799 = vadd.f32 %v1469, %v1699
      %v1800 = vadd.f32 %v1470, %v1702
      %v1801 = vadd.f32 %v1471, %v1707
      %v1802 = vadd.f32 %v1472, %v1710
      %v1803 = vadd.f32 %v1473, %v1715
      %v1804 = vadd.f32 %v1474, %v1718
      %v1805 = vadd.f32 %v1475, %v1723
      %v1806 = vadd.f32 %v1476, %v1726
      %v1807 = vadd.f32 %v1477, %v1731
      %v1808 = vadd.f32 %v1478, %v1734
      %v1809 = vadd.f32 %v1479, %v1739
      %v1810 = vadd.f32 %v1480, %v1742
      %v1811 = vadd.f32 %v1481, %v1747
      %v1812 = vadd.f32 %v1482, %v1750
      %v1813 = vadd.f32 %v1483, %v1755
      %v1814 = vadd.f32 %v1484, %v1758
      %v1815 = vadd.f32 %v1485, %v1763
      %v1816 = vadd.f32 %v1486, %v1766
      %v1817 = vadd.f32 %v1487, %v1771
      %v1818 = vadd.f32 %v1488, %v1774
      %v1819 = vadd.f32 %v1489, %v1779
      %v1820 = vadd.f32 %v1490, %v1782
      %v1821 = vld [vmem:[%s230 + $0x14] sm:$0xff]
      %v1822 = vld [vmem:[%s230 + $0x1c] sm:$0xff]
      %v1823 = vld [vmem:[%s230 + $0x24] sm:$0xff]
      %v1824 = vld [vmem:[%s230 + $0x2c] sm:$0xff]
      %v1825 = vld [vmem:[%s230 + $0x34] sm:$0xff]
      %v1826 = vld [vmem:[%s230 + $0x3c] sm:$0xff]
      %v1827 = vld [vmem:[%s230 + $0x44] sm:$0xff]
      %v1828 = vld [vmem:[%s230 + $0x4c] sm:$0xff]
      %v1829 = vld [vmem:[%s230 + $0x54] sm:$0xff]
      %v1830 = vld [vmem:[%s230 + $0x5c] sm:$0xff]
      %v1831 = vld [vmem:[%s230 + $0x64] sm:$0xff]
      %v1832 = vld [vmem:[%s230 + $0x6c] sm:$0xff]
      %v1833 = vld [vmem:[%s230 + $0x74] sm:$0xff]
      %v1834 = vld [vmem:[%s230 + $0x7c] sm:$0xff]
      %v1835 = vld [vmem:[%s230 + $0x84] sm:$0xff]
      %v1836 = vld [vmem:[%s230 + $0x8c] sm:$0xff]
      %v1837 = vld [vmem:[%s230 + $0x94] sm:$0xff]
      %v1838 = vld [vmem:[%s230 + $0x9c] sm:$0xff]
      %v1839 = vld [vmem:[%s230 + $0xa4] sm:$0xff]
      %v1840 = vld [vmem:[%s230 + $0xac] sm:$0xff]
      %v1841 = vld [vmem:[%s230 + $0xb4] sm:$0xff]
      %v1842 = vld [vmem:[%s230 + $0xbc] sm:$0xff]
      %v1843 = vld [vmem:[%s230 + $0xc4] sm:$0xff]
      %v1844 = vld [vmem:[%s230 + $0xcc] sm:$0xff]
      %v1845 = vld [vmem:[%s230 + $0xd4] sm:$0xff]
      %v1846 = vld [vmem:[%s230 + $0xdc] sm:$0xff]
      %v1847 = vld [vmem:[%s230 + $0xe4] sm:$0xff]
      %v1848 = vld [vmem:[%s230 + $0xec] sm:$0xff]
      %v1849 = vld [vmem:[%s230 + $0xf4] sm:$0xff]
      %v1850 = vld [vmem:[%s230 + $0xfc] sm:$0xff]
      %v1851 = vld [vmem:[%s230 + $0x104] sm:$0xff]
      %v1852 = vld [vmem:[%s230 + $0x10c] sm:$0xff]
      %v1853 = vld [vmem:[%s230 + $0x114] sm:$0xff]
      %v1854 = vld [vmem:[%s230 + $0x11c] sm:$0xff]
      %v1855 = vld [vmem:[%s230 + $0x124] sm:$0xff]
      %v1856 = vld [vmem:[%s230 + $0x12c] sm:$0xff]
      %v1857 = vpack.c.bf16 %v1822, %v1821
      %v1858 = vpack.c.bf16 %v1824, %v1823
      %v1859 = vpack.c.bf16 %v1826, %v1825
      %v1860 = vpack.c.bf16 %v1828, %v1827
      %v1861 = vpack.c.bf16 %v1830, %v1829
      %v1862 = vpack.c.bf16 %v1832, %v1831
      %v1863 = vpack.c.bf16 %v1834, %v1833
      %v1864 = vpack.c.bf16 %v1836, %v1835
      %v1865 = vpack.c.bf16 %v1838, %v1837
      %v1866 = vpack.c.bf16 %v1840, %v1839
      %v1867 = vpack.c.bf16 %v1842, %v1841
      %v1868 = vpack.c.bf16 %v1844, %v1843
      %v1869 = vpack.c.bf16 %v1846, %v1845
      %v1870 = vpack.c.bf16 %v1848, %v1847
      %v1871 = vpack.c.bf16 %v1850, %v1849
      %v1872 = vpack.c.bf16 %v1852, %v1851
      %v1873 = vpack.c.bf16 %v1854, %v1853
      %v1874 = vpack.c.bf16 %v1856, %v1855
      %s1875 = scalar_lea.vmem %s1, 40
      %v1876 = vld [vmem:[%s1875] sm:$0xf]
      %v1877 = vld [vmem:[%s1875 + $0x4] sm:$0xf]
      %v1880 = vunpack.c.l.b16 %v1876
      %v1881 = vunpack.c.l.b16 %v1877
      %v1882 = vpack.c.b16 %v1881, %v1880
      %v1885 = vsel %vm362, %v1857, 0
      %v1888 = vsel %vm362, %v1858, 0
      %v1891 = vsel %vm362, %v1859, 0
      %v1894 = vsel %vm362, %v1860, 0
      %v1897 = vsel %vm362, %v1861, 0
      %v1900 = vsel %vm362, %v1862, 0
      %v1903 = vsel %vm362, %v1863, 0
      %v1906 = vsel %vm362, %v1864, 0
      %v1909 = vsel %vm362, %v1865, 0
      %v1912 = vsel %vm362, %v1866, 0
      %v1915 = vsel %vm362, %v1867, 0
      %v1918 = vsel %vm362, %v1868, 0
      %v1921 = vsel %vm362, %v1869, 0
      %v1924 = vsel %vm362, %v1870, 0
      %v1927 = vsel %vm362, %v1871, 0
      %v1930 = vsel %vm362, %v1872, 0
      %v1933 = vsel %vm362, %v1873, 0
      %v1936 = vsel %vm362, %v1874, 0
      %1938 = vmatprep.subr.bf16.mxu0 0
      %1939 = vmatpush1.bf16.msra.mxu0 0
      %1940 = vmatprep.subr.bf16.mxu0 0
      %1941 = vmatpush1.bf16.msra.mxu0 0
      %1942 = vmatprep.subr.bf16.mxu0 0
      %1943 = vmatpush1.bf16.msra.mxu0 0
      %1944 = vmatprep.subr.bf16.mxu0 0
      %1945 = vmatpush1.bf16.msra.mxu0 0
      %1946 = vmatprep.subr.bf16.mxu0 0
      %1947 = vmatpush1.bf16.msra.mxu0 0
      %1948 = vmatprep.subr.bf16.mxu0 0
      %1949 = vmatpush1.bf16.msra.mxu0 0
      %1950 = vmatprep.subr.bf16.mxu0 0
      %1951 = vmatpush1.bf16.msra.mxu0 0
      %1952 = vmatprep.subr.bf16.mxu0 0
      %1953 = vmatpush1.bf16.msra.mxu0 %v1882
      %1954 = vmatprep.subr.bf16.mxu0 0
      %1955 = vmatpush2.bf16.msra.mxu0 0
      %1956 = vmatprep.subr.bf16.mxu0 0
      %1957 = vmatpush2.bf16.msra.mxu0 0
      %1958 = vmatprep.subr.bf16.mxu0 0
      %1959 = vmatpush2.bf16.msra.mxu0 0
      %1960 = vmatprep.subr.bf16.mxu0 0
      %1961 = vmatpush2.bf16.msra.mxu0 0
      %1962 = vmatprep.subr.bf16.mxu0 0
      %1963 = vmatpush2.bf16.msra.mxu0 0
      %1964 = vmatprep.subr.bf16.mxu0 0
      %1965 = vmatpush2.bf16.msra.mxu0 0
      %1966 = vmatprep.subr.bf16.mxu0 0
      %1967 = vmatpush2.bf16.msra.mxu0 0
      %1968 = vmatprep.subr.bf16.mxu0 0
      %1969 = vmatpush2.bf16.msra.mxu0 0
      %1970 = vmatprep.mubr.bf16.mxu0 0
      %1971 = vmatmul.mubr.bf16.gmra.mxu0 %v1885
      %v1972 = vpop.f32.mrf.mxu0
      %v1973 = vadd.f32 0.0, %v1972
      %v1974 = vpop.f32.mrf.mxu0
      %v1975 = vpop.f32.mrf.mxu0
      %v1976 = vadd.f32 0.0, %v1975
      %v1977 = vpop.f32.mrf.mxu0
      %1978 = vmatprep.mubr.bf16.mxu0 0
      %1979 = vmatmul.mubr.bf16.gmra.mxu0 %v1888
      %v1980 = vpop.f32.mrf.mxu0
      %v1981 = vadd.f32 0.0, %v1980
      %v1982 = vpop.f32.mrf.mxu0
      %v1983 = vpop.f32.mrf.mxu0
      %v1984 = vadd.f32 0.0, %v1983
      %v1985 = vpop.f32.mrf.mxu0
      %1986 = vmatprep.mubr.bf16.mxu0 0
      %1987 = vmatmul.mubr.bf16.gmra.mxu0 %v1891
      %v1988 = vpop.f32.mrf.mxu0
      %v1989 = vadd.f32 0.0, %v1988
      %v1990 = vpop.f32.mrf.mxu0
      %v1991 = vpop.f32.mrf.mxu0
      %v1992 = vadd.f32 0.0, %v1991
      %v1993 = vpop.f32.mrf.mxu0
      %1994 = vmatprep.mubr.bf16.mxu0 0
      %1995 = vmatmul.mubr.bf16.gmra.mxu0 %v1894
      %v1996 = vpop.f32.mrf.mxu0
      %v1997 = vadd.f32 0.0, %v1996
      %v1998 = vpop.f32.mrf.mxu0
      %v1999 = vpop.f32.mrf.mxu0
      %v2000 = vadd.f32 0.0, %v1999
      %v2001 = vpop.f32.mrf.mxu0
      %2002 = vmatprep.mubr.bf16.mxu0 0
      %2003 = vmatmul.mubr.bf16.gmra.mxu0 %v1897
      %v2004 = vpop.f32.mrf.mxu0
      %v2005 = vadd.f32 0.0, %v2004
      %v2006 = vpop.f32.mrf.mxu0
      %v2007 = vpop.f32.mrf.mxu0
      %v2008 = vadd.f32 0.0, %v2007
      %v2009 = vpop.f32.mrf.mxu0
      %2010 = vmatprep.mubr.bf16.mxu0 0
      %2011 = vmatmul.mubr.bf16.gmra.mxu0 %v1900
      %v2012 = vpop.f32.mrf.mxu0
      %v2013 = vadd.f32 0.0, %v2012
      %v2014 = vpop.f32.mrf.mxu0
      %v2015 = vpop.f32.mrf.mxu0
      %v2016 = vadd.f32 0.0, %v2015
      %v2017 = vpop.f32.mrf.mxu0
      %2018 = vmatprep.mubr.bf16.mxu0 0
      %2019 = vmatmul.mubr.bf16.gmra.mxu0 %v1903
      %v2020 = vpop.f32.mrf.mxu0
      %v2021 = vadd.f32 0.0, %v2020
      %v2022 = vpop.f32.mrf.mxu0
      %v2023 = vpop.f32.mrf.mxu0
      %v2024 = vadd.f32 0.0, %v2023
      %v2025 = vpop.f32.mrf.mxu0
      %2026 = vmatprep.mubr.bf16.mxu0 0
      %2027 = vmatmul.mubr.bf16.gmra.mxu0 %v1906
      %v2028 = vpop.f32.mrf.mxu0
      %v2029 = vadd.f32 0.0, %v2028
      %v2030 = vpop.f32.mrf.mxu0
      %v2031 = vpop.f32.mrf.mxu0
      %v2032 = vadd.f32 0.0, %v2031
      %v2033 = vpop.f32.mrf.mxu0
      %2034 = vmatprep.mubr.bf16.mxu0 0
      %2035 = vmatmul.mubr.bf16.gmra.mxu0 %v1909
      %v2036 = vpop.f32.mrf.mxu0
      %v2037 = vadd.f32 0.0, %v2036
      %v2038 = vpop.f32.mrf.mxu0
      %v2039 = vpop.f32.mrf.mxu0
      %v2040 = vadd.f32 0.0, %v2039
      %v2041 = vpop.f32.mrf.mxu0
      %2042 = vmatprep.mubr.bf16.mxu0 0
      %2043 = vmatmul.mubr.bf16.gmra.mxu0 %v1912
      %v2044 = vpop.f32.mrf.mxu0
      %v2045 = vadd.f32 0.0, %v2044
      %v2046 = vpop.f32.mrf.mxu0
      %v2047 = vpop.f32.mrf.mxu0
      %v2048 = vadd.f32 0.0, %v2047
      %v2049 = vpop.f32.mrf.mxu0
      %2050 = vmatprep.mubr.bf16.mxu0 0
      %2051 = vmatmul.mubr.bf16.gmra.mxu0 %v1915
      %v2052 = vpop.f32.mrf.mxu0
      %v2053 = vadd.f32 0.0, %v2052
      %v2054 = vpop.f32.mrf.mxu0
      %v2055 = vpop.f32.mrf.mxu0
      %v2056 = vadd.f32 0.0, %v2055
      %v2057 = vpop.f32.mrf.mxu0
      %2058 = vmatprep.mubr.bf16.mxu0 0
      %2059 = vmatmul.mubr.bf16.gmra.mxu0 %v1918
      %v2060 = vpop.f32.mrf.mxu0
      %v2061 = vadd.f32 0.0, %v2060
      %v2062 = vpop.f32.mrf.mxu0
      %v2063 = vpop.f32.mrf.mxu0
      %v2064 = vadd.f32 0.0, %v2063
      %v2065 = vpop.f32.mrf.mxu0
      %2066 = vmatprep.mubr.bf16.mxu0 0
      %2067 = vmatmul.mubr.bf16.gmra.mxu0 %v1921
      %v2068 = vpop.f32.mrf.mxu0
      %v2069 = vadd.f32 0.0, %v2068
      %v2070 = vpop.f32.mrf.mxu0
      %v2071 = vpop.f32.mrf.mxu0
      %v2072 = vadd.f32 0.0, %v2071
      %v2073 = vpop.f32.mrf.mxu0
      %2074 = vmatprep.mubr.bf16.mxu0 0
      %2075 = vmatmul.mubr.bf16.gmra.mxu0 %v1924
      %v2076 = vpop.f32.mrf.mxu0
      %v2077 = vadd.f32 0.0, %v2076
      %v2078 = vpop.f32.mrf.mxu0
      %v2079 = vpop.f32.mrf.mxu0
      %v2080 = vadd.f32 0.0, %v2079
      %v2081 = vpop.f32.mrf.mxu0
      %2082 = vmatprep.mubr.bf16.mxu0 0
      %2083 = vmatmul.mubr.bf16.gmra.mxu0 %v1927
      %v2084 = vpop.f32.mrf.mxu0
      %v2085 = vadd.f32 0.0, %v2084
      %v2086 = vpop.f32.mrf.mxu0
      %v2087 = vpop.f32.mrf.mxu0
      %v2088 = vadd.f32 0.0, %v2087
      %v2089 = vpop.f32.mrf.mxu0
      %2090 = vmatprep.mubr.bf16.mxu0 0
      %2091 = vmatmul.mubr.bf16.gmra.mxu0 %v1930
      %v2092 = vpop.f32.mrf.mxu0
      %v2093 = vadd.f32 0.0, %v2092
      %v2094 = vpop.f32.mrf.mxu0
      %v2095 = vpop.f32.mrf.mxu0
      %v2096 = vadd.f32 0.0, %v2095
      %v2097 = vpop.f32.mrf.mxu0
      %2098 = vmatprep.mubr.bf16.mxu0 0
      %2099 = vmatmul.mubr.bf16.gmra.mxu0 %v1933
      %v2100 = vpop.f32.mrf.mxu0
      %v2101 = vadd.f32 0.0, %v2100
      %v2102 = vpop.f32.mrf.mxu0
      %v2103 = vpop.f32.mrf.mxu0
      %v2104 = vadd.f32 0.0, %v2103
      %v2105 = vpop.f32.mrf.mxu0
      %2106 = vmatprep.mubr.bf16.mxu0 0
      %2107 = vmatmul.mubr.bf16.gmra.mxu0 %v1936
      %v2108 = vpop.f32.mrf.mxu0
      %v2109 = vadd.f32 0.0, %v2108
      %v2110 = vpop.f32.mrf.mxu0
      %v2111 = vpop.f32.mrf.mxu0
      %v2112 = vadd.f32 0.0, %v2111
      %v2113 = vpop.f32.mrf.mxu0
      %2114 = vdwg.mxu0
      %v2115 = vadd.f32 %v1785, %v1973
      %v2116 = vadd.f32 %v1786, %v1976
      %v2117 = vadd.f32 %v1787, %v1981
      %v2118 = vadd.f32 %v1788, %v1984
      %v2119 = vadd.f32 %v1789, %v1989
      %v2120 = vadd.f32 %v1790, %v1992
      %v2121 = vadd.f32 %v1791, %v1997
      %v2122 = vadd.f32 %v1792, %v2000
      %v2123 = vadd.f32 %v1793, %v2005
      %v2124 = vadd.f32 %v1794, %v2008
      %v2125 = vadd.f32 %v1795, %v2013
      %v2126 = vadd.f32 %v1796, %v2016
      %v2127 = vadd.f32 %v1797, %v2021
      %v2128 = vadd.f32 %v1798, %v2024
      %v2129 = vadd.f32 %v1799, %v2029
      %v2130 = vadd.f32 %v1800, %v2032
      %v2131 = vadd.f32 %v1801, %v2037
      %v2132 = vadd.f32 %v1802, %v2040
      %v2133 = vadd.f32 %v1803, %v2045
      %v2134 = vadd.f32 %v1804, %v2048
      %v2135 = vadd.f32 %v1805, %v2053
      %v2136 = vadd.f32 %v1806, %v2056
      %v2137 = vadd.f32 %v1807, %v2061
      %v2138 = vadd.f32 %v1808, %v2064
      %v2139 = vadd.f32 %v1809, %v2069
      %v2140 = vadd.f32 %v1810, %v2072
      %v2141 = vadd.f32 %v1811, %v2077
      %v2142 = vadd.f32 %v1812, %v2080
      %v2143 = vadd.f32 %v1813, %v2085
      %v2144 = vadd.f32 %v1814, %v2088
      %v2145 = vadd.f32 %v1815, %v2093
      %v2146 = vadd.f32 %v1816, %v2096
      %v2147 = vadd.f32 %v1817, %v2101
      %v2148 = vadd.f32 %v1818, %v2104
      %v2149 = vadd.f32 %v1819, %v2109
      %v2150 = vadd.f32 %v1820, %v2112
      %v2151 = vld [vmem:[%s230 + $0x24] sm:$0xff]
      %v2152 = vld [vmem:[%s230 + $0x2c] sm:$0xff]
      %v2153 = vld [vmem:[%s230 + $0x34] sm:$0xff]
      %v2154 = vld [vmem:[%s230 + $0x3c] sm:$0xff]
      %v2155 = vld [vmem:[%s230 + $0x44] sm:$0xff]
      %v2156 = vld [vmem:[%s230 + $0x4c] sm:$0xff]
      %v2157 = vld [vmem:[%s230 + $0x54] sm:$0xff]
      %v2158 = vld [vmem:[%s230 + $0x5c] sm:$0xff]
      %v2159 = vld [vmem:[%s230 + $0x64] sm:$0xff]
      %v2160 = vld [vmem:[%s230 + $0x6c] sm:$0xff]
      %v2161 = vld [vmem:[%s230 + $0x74] sm:$0xff]
      %v2162 = vld [vmem:[%s230 + $0x7c] sm:$0xff]
      %v2163 = vld [vmem:[%s230 + $0x84] sm:$0xff]
      %v2164 = vld [vmem:[%s230 + $0x8c] sm:$0xff]
      %v2165 = vld [vmem:[%s230 + $0x94] sm:$0xff]
      %v2166 = vld [vmem:[%s230 + $0x9c] sm:$0xff]
      %v2167 = vld [vmem:[%s230 + $0xa4] sm:$0xff]
      %v2168 = vld [vmem:[%s230 + $0xac] sm:$0xff]
      %v2169 = vld [vmem:[%s230 + $0xb4] sm:$0xff]
      %v2170 = vld [vmem:[%s230 + $0xbc] sm:$0xff]
      %v2171 = vld [vmem:[%s230 + $0xc4] sm:$0xff]
      %v2172 = vld [vmem:[%s230 + $0xcc] sm:$0xff]
      %v2173 = vld [vmem:[%s230 + $0xd4] sm:$0xff]
      %v2174 = vld [vmem:[%s230 + $0xdc] sm:$0xff]
      %v2175 = vld [vmem:[%s230 + $0xe4] sm:$0xff]
      %v2176 = vld [vmem:[%s230 + $0xec] sm:$0xff]
      %v2177 = vld [vmem:[%s230 + $0xf4] sm:$0xff]
      %v2178 = vld [vmem:[%s230 + $0xfc] sm:$0xff]
      %v2179 = vld [vmem:[%s230 + $0x104] sm:$0xff]
      %v2180 = vld [vmem:[%s230 + $0x10c] sm:$0xff]
      %v2181 = vld [vmem:[%s230 + $0x114] sm:$0xff]
      %v2182 = vld [vmem:[%s230 + $0x11c] sm:$0xff]
      %v2183 = vld [vmem:[%s230 + $0x124] sm:$0xff]
      %v2184 = vld [vmem:[%s230 + $0x12c] sm:$0xff]
      %v2185 = vld [vmem:[%s230 + $0x134] sm:$0xff]
      %v2186 = vld [vmem:[%s230 + $0x13c] sm:$0xff]
      %v2187 = vpack.c.bf16 %v2152, %v2151
      %v2188 = vpack.c.bf16 %v2154, %v2153
      %v2189 = vpack.c.bf16 %v2156, %v2155
      %v2190 = vpack.c.bf16 %v2158, %v2157
      %v2191 = vpack.c.bf16 %v2160, %v2159
      %v2192 = vpack.c.bf16 %v2162, %v2161
      %v2193 = vpack.c.bf16 %v2164, %v2163
      %v2194 = vpack.c.bf16 %v2166, %v2165
      %v2195 = vpack.c.bf16 %v2168, %v2167
      %v2196 = vpack.c.bf16 %v2170, %v2169
      %v2197 = vpack.c.bf16 %v2172, %v2171
      %v2198 = vpack.c.bf16 %v2174, %v2173
      %v2199 = vpack.c.bf16 %v2176, %v2175
      %v2200 = vpack.c.bf16 %v2178, %v2177
      %v2201 = vpack.c.bf16 %v2180, %v2179
      %v2202 = vpack.c.bf16 %v2182, %v2181
      %v2203 = vpack.c.bf16 %v2184, %v2183
      %v2204 = vpack.c.bf16 %v2186, %v2185
      %s2205 = scalar_lea.vmem %s1, 48
      %v2206 = vld [vmem:[%s2205] sm:$0xf]
      %v2207 = vld [vmem:[%s2205 + $0x4] sm:$0xf]
      %v2210 = vunpack.c.l.b16 %v2206
      %v2211 = vunpack.c.l.b16 %v2207
      %v2212 = vpack.c.b16 %v2211, %v2210
      %v2215 = vsel %vm362, %v2187, 0
      %v2218 = vsel %vm362, %v2188, 0
      %v2221 = vsel %vm362, %v2189, 0
      %v2224 = vsel %vm362, %v2190, 0
      %v2227 = vsel %vm362, %v2191, 0
      %v2230 = vsel %vm362, %v2192, 0
      %v2233 = vsel %vm362, %v2193, 0
      %v2236 = vsel %vm362, %v2194, 0
      %v2239 = vsel %vm362, %v2195, 0
      %v2242 = vsel %vm362, %v2196, 0
      %v2245 = vsel %vm362, %v2197, 0
      %v2248 = vsel %vm362, %v2198, 0
      %v2251 = vsel %vm362, %v2199, 0
      %v2254 = vsel %vm362, %v2200, 0
      %v2257 = vsel %vm362, %v2201, 0
      %v2260 = vsel %vm362, %v2202, 0
      %v2263 = vsel %vm362, %v2203, 0
      %v2266 = vsel %vm362, %v2204, 0
      %2268 = vmatprep.subr.bf16.mxu0 0
      %2269 = vmatpush1.bf16.msra.mxu0 0
      %2270 = vmatprep.subr.bf16.mxu0 0
      %2271 = vmatpush1.bf16.msra.mxu0 0
      %2272 = vmatprep.subr.bf16.mxu0 0
      %2273 = vmatpush1.bf16.msra.mxu0 0
      %2274 = vmatprep.subr.bf16.mxu0 0
      %2275 = vmatpush1.bf16.msra.mxu0 0
      %2276 = vmatprep.subr.bf16.mxu0 0
      %2277 = vmatpush1.bf16.msra.mxu0 0
      %2278 = vmatprep.subr.bf16.mxu0 0
      %2279 = vmatpush1.bf16.msra.mxu0 0
      %2280 = vmatprep.subr.bf16.mxu0 0
      %2281 = vmatpush1.bf16.msra.mxu0 0
      %2282 = vmatprep.subr.bf16.mxu0 0
      %2283 = vmatpush1.bf16.msra.mxu0 %v2212
      %2284 = vmatprep.subr.bf16.mxu0 0
      %2285 = vmatpush2.bf16.msra.mxu0 0
      %2286 = vmatprep.subr.bf16.mxu0 0
      %2287 = vmatpush2.bf16.msra.mxu0 0
      %2288 = vmatprep.subr.bf16.mxu0 0
      %2289 = vmatpush2.bf16.msra.mxu0 0
      %2290 = vmatprep.subr.bf16.mxu0 0
      %2291 = vmatpush2.bf16.msra.mxu0 0
      %2292 = vmatprep.subr.bf16.mxu0 0
      %2293 = vmatpush2.bf16.msra.mxu0 0
      %2294 = vmatprep.subr.bf16.mxu0 0
      %2295 = vmatpush2.bf16.msra.mxu0 0
      %2296 = vmatprep.subr.bf16.mxu0 0
      %2297 = vmatpush2.bf16.msra.mxu0 0
      %2298 = vmatprep.subr.bf16.mxu0 0
      %2299 = vmatpush2.bf16.msra.mxu0 0
      %2300 = vmatprep.mubr.bf16.mxu0 0
      %2301 = vmatmul.mubr.bf16.gmra.mxu0 %v2215
      %v2302 = vpop.f32.mrf.mxu0
      %v2303 = vadd.f32 0.0, %v2302
      %v2304 = vpop.f32.mrf.mxu0
      %v2305 = vpop.f32.mrf.mxu0
      %v2306 = vadd.f32 0.0, %v2305
      %v2307 = vpop.f32.mrf.mxu0
      %2308 = vmatprep.mubr.bf16.mxu0 0
      %2309 = vmatmul.mubr.bf16.gmra.mxu0 %v2218
      %v2310 = vpop.f32.mrf.mxu0
      %v2311 = vadd.f32 0.0, %v2310
      %v2312 = vpop.f32.mrf.mxu0
      %v2313 = vpop.f32.mrf.mxu0
      %v2314 = vadd.f32 0.0, %v2313
      %v2315 = vpop.f32.mrf.mxu0
      %2316 = vmatprep.mubr.bf16.mxu0 0
      %2317 = vmatmul.mubr.bf16.gmra.mxu0 %v2221
      %v2318 = vpop.f32.mrf.mxu0
      %v2319 = vadd.f32 0.0, %v2318
      %v2320 = vpop.f32.mrf.mxu0
      %v2321 = vpop.f32.mrf.mxu0
      %v2322 = vadd.f32 0.0, %v2321
      %v2323 = vpop.f32.mrf.mxu0
      %2324 = vmatprep.mubr.bf16.mxu0 0
      %2325 = vmatmul.mubr.bf16.gmra.mxu0 %v2224
      %v2326 = vpop.f32.mrf.mxu0
      %v2327 = vadd.f32 0.0, %v2326
      %v2328 = vpop.f32.mrf.mxu0
      %v2329 = vpop.f32.mrf.mxu0
      %v2330 = vadd.f32 0.0, %v2329
      %v2331 = vpop.f32.mrf.mxu0
      %2332 = vmatprep.mubr.bf16.mxu0 0
      %2333 = vmatmul.mubr.bf16.gmra.mxu0 %v2227
      %v2334 = vpop.f32.mrf.mxu0
      %v2335 = vadd.f32 0.0, %v2334
      %v2336 = vpop.f32.mrf.mxu0
      %v2337 = vpop.f32.mrf.mxu0
      %v2338 = vadd.f32 0.0, %v2337
      %v2339 = vpop.f32.mrf.mxu0
      %2340 = vmatprep.mubr.bf16.mxu0 0
      %2341 = vmatmul.mubr.bf16.gmra.mxu0 %v2230
      %v2342 = vpop.f32.mrf.mxu0
      %v2343 = vadd.f32 0.0, %v2342
      %v2344 = vpop.f32.mrf.mxu0
      %v2345 = vpop.f32.mrf.mxu0
      %v2346 = vadd.f32 0.0, %v2345
      %v2347 = vpop.f32.mrf.mxu0
      %2348 = vmatprep.mubr.bf16.mxu0 0
      %2349 = vmatmul.mubr.bf16.gmra.mxu0 %v2233
      %v2350 = vpop.f32.mrf.mxu0
      %v2351 = vadd.f32 0.0, %v2350
      %v2352 = vpop.f32.mrf.mxu0
      %v2353 = vpop.f32.mrf.mxu0
      %v2354 = vadd.f32 0.0, %v2353
      %v2355 = vpop.f32.mrf.mxu0
      %2356 = vmatprep.mubr.bf16.mxu0 0
      %2357 = vmatmul.mubr.bf16.gmra.mxu0 %v2236
      %v2358 = vpop.f32.mrf.mxu0
      %v2359 = vadd.f32 0.0, %v2358
      %v2360 = vpop.f32.mrf.mxu0
      %v2361 = vpop.f32.mrf.mxu0
      %v2362 = vadd.f32 0.0, %v2361
      %v2363 = vpop.f32.mrf.mxu0
      %2364 = vmatprep.mubr.bf16.mxu0 0
      %2365 = vmatmul.mubr.bf16.gmra.mxu0 %v2239
      %v2366 = vpop.f32.mrf.mxu0
      %v2367 = vadd.f32 0.0, %v2366
      %v2368 = vpop.f32.mrf.mxu0
      %v2369 = vpop.f32.mrf.mxu0
      %v2370 = vadd.f32 0.0, %v2369
      %v2371 = vpop.f32.mrf.mxu0
      %2372 = vmatprep.mubr.bf16.mxu0 0
      %2373 = vmatmul.mubr.bf16.gmra.mxu0 %v2242
      %v2374 = vpop.f32.mrf.mxu0
      %v2375 = vadd.f32 0.0, %v2374
      %v2376 = vpop.f32.mrf.mxu0
      %v2377 = vpop.f32.mrf.mxu0
      %v2378 = vadd.f32 0.0, %v2377
      %v2379 = vpop.f32.mrf.mxu0
      %2380 = vmatprep.mubr.bf16.mxu0 0
      %2381 = vmatmul.mubr.bf16.gmra.mxu0 %v2245
      %v2382 = vpop.f32.mrf.mxu0
      %v2383 = vadd.f32 0.0, %v2382
      %v2384 = vpop.f32.mrf.mxu0
      %v2385 = vpop.f32.mrf.mxu0
      %v2386 = vadd.f32 0.0, %v2385
      %v2387 = vpop.f32.mrf.mxu0
      %2388 = vmatprep.mubr.bf16.mxu0 0
      %2389 = vmatmul.mubr.bf16.gmra.mxu0 %v2248
      %v2390 = vpop.f32.mrf.mxu0
      %v2391 = vadd.f32 0.0, %v2390
      %v2392 = vpop.f32.mrf.mxu0
      %v2393 = vpop.f32.mrf.mxu0
      %v2394 = vadd.f32 0.0, %v2393
      %v2395 = vpop.f32.mrf.mxu0
      %2396 = vmatprep.mubr.bf16.mxu0 0
      %2397 = vmatmul.mubr.bf16.gmra.mxu0 %v2251
      %v2398 = vpop.f32.mrf.mxu0
      %v2399 = vadd.f32 0.0, %v2398
      %v2400 = vpop.f32.mrf.mxu0
      %v2401 = vpop.f32.mrf.mxu0
      %v2402 = vadd.f32 0.0, %v2401
      %v2403 = vpop.f32.mrf.mxu0
      %2404 = vmatprep.mubr.bf16.mxu0 0
      %2405 = vmatmul.mubr.bf16.gmra.mxu0 %v2254
      %v2406 = vpop.f32.mrf.mxu0
      %v2407 = vadd.f32 0.0, %v2406
      %v2408 = vpop.f32.mrf.mxu0
      %v2409 = vpop.f32.mrf.mxu0
      %v2410 = vadd.f32 0.0, %v2409
      %v2411 = vpop.f32.mrf.mxu0
      %2412 = vmatprep.mubr.bf16.mxu0 0
      %2413 = vmatmul.mubr.bf16.gmra.mxu0 %v2257
      %v2414 = vpop.f32.mrf.mxu0
      %v2415 = vadd.f32 0.0, %v2414
      %v2416 = vpop.f32.mrf.mxu0
      %v2417 = vpop.f32.mrf.mxu0
      %v2418 = vadd.f32 0.0, %v2417
      %v2419 = vpop.f32.mrf.mxu0
      %2420 = vmatprep.mubr.bf16.mxu0 0
      %2421 = vmatmul.mubr.bf16.gmra.mxu0 %v2260
      %v2422 = vpop.f32.mrf.mxu0
      %v2423 = vadd.f32 0.0, %v2422
      %v2424 = vpop.f32.mrf.mxu0
      %v2425 = vpop.f32.mrf.mxu0
      %v2426 = vadd.f32 0.0, %v2425
      %v2427 = vpop.f32.mrf.mxu0
      %2428 = vmatprep.mubr.bf16.mxu0 0
      %2429 = vmatmul.mubr.bf16.gmra.mxu0 %v2263
      %v2430 = vpop.f32.mrf.mxu0
      %v2431 = vadd.f32 0.0, %v2430
      %v2432 = vpop.f32.mrf.mxu0
      %v2433 = vpop.f32.mrf.mxu0
      %v2434 = vadd.f32 0.0, %v2433
      %v2435 = vpop.f32.mrf.mxu0
      %2436 = vmatprep.mubr.bf16.mxu0 0
      %2437 = vmatmul.mubr.bf16.gmra.mxu0 %v2266
      %v2438 = vpop.f32.mrf.mxu0
      %v2439 = vadd.f32 0.0, %v2438
      %v2440 = vpop.f32.mrf.mxu0
      %v2441 = vpop.f32.mrf.mxu0
      %v2442 = vadd.f32 0.0, %v2441
      %v2443 = vpop.f32.mrf.mxu0
      %2444 = vdwg.mxu0
      %v2445 = vadd.f32 %v2115, %v2303
      %v2446 = vadd.f32 %v2116, %v2306
      %v2447 = vadd.f32 %v2117, %v2311
      %v2448 = vadd.f32 %v2118, %v2314
      %v2449 = vadd.f32 %v2119, %v2319
      %v2450 = vadd.f32 %v2120, %v2322
      %v2451 = vadd.f32 %v2121, %v2327
      %v2452 = vadd.f32 %v2122, %v2330
      %v2453 = vadd.f32 %v2123, %v2335
      %v2454 = vadd.f32 %v2124, %v2338
      %v2455 = vadd.f32 %v2125, %v2343
      %v2456 = vadd.f32 %v2126, %v2346
      %v2457 = vadd.f32 %v2127, %v2351
      %v2458 = vadd.f32 %v2128, %v2354
      %v2459 = vadd.f32 %v2129, %v2359
      %v2460 = vadd.f32 %v2130, %v2362
      %v2461 = vadd.f32 %v2131, %v2367
      %v2462 = vadd.f32 %v2132, %v2370
      %v2463 = vadd.f32 %v2133, %v2375
      %v2464 = vadd.f32 %v2134, %v2378
      %v2465 = vadd.f32 %v2135, %v2383
      %v2466 = vadd.f32 %v2136, %v2386
      %v2467 = vadd.f32 %v2137, %v2391
      %v2468 = vadd.f32 %v2138, %v2394
      %v2469 = vadd.f32 %v2139, %v2399
      %v2470 = vadd.f32 %v2140, %v2402
      %v2471 = vadd.f32 %v2141, %v2407
      %v2472 = vadd.f32 %v2142, %v2410
      %v2473 = vadd.f32 %v2143, %v2415
      %v2474 = vadd.f32 %v2144, %v2418
      %v2475 = vadd.f32 %v2145, %v2423
      %v2476 = vadd.f32 %v2146, %v2426
      %v2477 = vadd.f32 %v2147, %v2431
      %v2478 = vadd.f32 %v2148, %v2434
      %v2479 = vadd.f32 %v2149, %v2439
      %v2480 = vadd.f32 %v2150, %v2442
      %v2481 = vld [vmem:[%s230 + $0x25] sm:$0xff]
      %v2482 = vld [vmem:[%s230 + $0x2d] sm:$0xff]
      %v2483 = vld [vmem:[%s230 + $0x35] sm:$0xff]
      %v2484 = vld [vmem:[%s230 + $0x3d] sm:$0xff]
      %v2485 = vld [vmem:[%s230 + $0x45] sm:$0xff]
      %v2486 = vld [vmem:[%s230 + $0x4d] sm:$0xff]
      %v2487 = vld [vmem:[%s230 + $0x55] sm:$0xff]
      %v2488 = vld [vmem:[%s230 + $0x5d] sm:$0xff]
      %v2489 = vld [vmem:[%s230 + $0x65] sm:$0xff]
      %v2490 = vld [vmem:[%s230 + $0x6d] sm:$0xff]
      %v2491 = vld [vmem:[%s230 + $0x75] sm:$0xff]
      %v2492 = vld [vmem:[%s230 + $0x7d] sm:$0xff]
      %v2493 = vld [vmem:[%s230 + $0x85] sm:$0xff]
      %v2494 = vld [vmem:[%s230 + $0x8d] sm:$0xff]
      %v2495 = vld [vmem:[%s230 + $0x95] sm:$0xff]
      %v2496 = vld [vmem:[%s230 + $0x9d] sm:$0xff]
      %v2497 = vld [vmem:[%s230 + $0xa5] sm:$0xff]
      %v2498 = vld [vmem:[%s230 + $0xad] sm:$0xff]
      %v2499 = vld [vmem:[%s230 + $0xb5] sm:$0xff]
      %v2500 = vld [vmem:[%s230 + $0xbd] sm:$0xff]
      %v2501 = vld [vmem:[%s230 + $0xc5] sm:$0xff]
      %v2502 = vld [vmem:[%s230 + $0xcd] sm:$0xff]
      %v2503 = vld [vmem:[%s230 + $0xd5] sm:$0xff]
      %v2504 = vld [vmem:[%s230 + $0xdd] sm:$0xff]
      %v2505 = vld [vmem:[%s230 + $0xe5] sm:$0xff]
      %v2506 = vld [vmem:[%s230 + $0xed] sm:$0xff]
      %v2507 = vld [vmem:[%s230 + $0xf5] sm:$0xff]
      %v2508 = vld [vmem:[%s230 + $0xfd] sm:$0xff]
      %v2509 = vld [vmem:[%s230 + $0x105] sm:$0xff]
      %v2510 = vld [vmem:[%s230 + $0x10d] sm:$0xff]
      %v2511 = vld [vmem:[%s230 + $0x115] sm:$0xff]
      %v2512 = vld [vmem:[%s230 + $0x11d] sm:$0xff]
      %v2513 = vld [vmem:[%s230 + $0x125] sm:$0xff]
      %v2514 = vld [vmem:[%s230 + $0x12d] sm:$0xff]
      %v2515 = vld [vmem:[%s230 + $0x135] sm:$0xff]
      %v2516 = vld [vmem:[%s230 + $0x13d] sm:$0xff]
      %v2517 = vpack.c.bf16 %v2482, %v2481
      %v2518 = vpack.c.bf16 %v2484, %v2483
      %v2519 = vpack.c.bf16 %v2486, %v2485
      %v2520 = vpack.c.bf16 %v2488, %v2487
      %v2521 = vpack.c.bf16 %v2490, %v2489
      %v2522 = vpack.c.bf16 %v2492, %v2491
      %v2523 = vpack.c.bf16 %v2494, %v2493
      %v2524 = vpack.c.bf16 %v2496, %v2495
      %v2525 = vpack.c.bf16 %v2498, %v2497
      %v2526 = vpack.c.bf16 %v2500, %v2499
      %v2527 = vpack.c.bf16 %v2502, %v2501
      %v2528 = vpack.c.bf16 %v2504, %v2503
      %v2529 = vpack.c.bf16 %v2506, %v2505
      %v2530 = vpack.c.bf16 %v2508, %v2507
      %v2531 = vpack.c.bf16 %v2510, %v2509
      %v2532 = vpack.c.bf16 %v2512, %v2511
      %v2533 = vpack.c.bf16 %v2514, %v2513
      %v2534 = vpack.c.bf16 %v2516, %v2515
      %s2535 = scalar_lea.vmem %s1, 56
      %v2536 = vld [vmem:[%s2535] sm:$0xf]
      %v2537 = vld [vmem:[%s2535 + $0x4] sm:$0xf]
      %v2540 = vunpack.c.l.b16 %v2536
      %v2541 = vunpack.c.l.b16 %v2537
      %v2542 = vpack.c.b16 %v2541, %v2540
      %v2545 = vsel %vm362, %v2517, 0
      %v2548 = vsel %vm362, %v2518, 0
      %v2551 = vsel %vm362, %v2519, 0
      %v2554 = vsel %vm362, %v2520, 0
      %v2557 = vsel %vm362, %v2521, 0
      %v2560 = vsel %vm362, %v2522, 0
      %v2563 = vsel %vm362, %v2523, 0
      %v2566 = vsel %vm362, %v2524, 0
      %v2569 = vsel %vm362, %v2525, 0
      %v2572 = vsel %vm362, %v2526, 0
      %v2575 = vsel %vm362, %v2527, 0
      %v2578 = vsel %vm362, %v2528, 0
      %v2581 = vsel %vm362, %v2529, 0
      %v2584 = vsel %vm362, %v2530, 0
      %v2587 = vsel %vm362, %v2531, 0
      %v2590 = vsel %vm362, %v2532, 0
      %v2593 = vsel %vm362, %v2533, 0
      %v2596 = vsel %vm362, %v2534, 0
      %2598 = vmatprep.subr.bf16.mxu0 0
      %2599 = vmatpush1.bf16.msra.mxu0 0
      %2600 = vmatprep.subr.bf16.mxu0 0
      %2601 = vmatpush1.bf16.msra.mxu0 0
      %2602 = vmatprep.subr.bf16.mxu0 0
      %2603 = vmatpush1.bf16.msra.mxu0 0
      %2604 = vmatprep.subr.bf16.mxu0 0
      %2605 = vmatpush1.bf16.msra.mxu0 0
      %2606 = vmatprep.subr.bf16.mxu0 0
      %2607 = vmatpush1.bf16.msra.mxu0 0
      %2608 = vmatprep.subr.bf16.mxu0 0
      %2609 = vmatpush1.bf16.msra.mxu0 0
      %2610 = vmatprep.subr.bf16.mxu0 0
      %2611 = vmatpush1.bf16.msra.mxu0 0
      %2612 = vmatprep.subr.bf16.mxu0 0
      %2613 = vmatpush1.bf16.msra.mxu0 %v2542
      %2614 = vmatprep.subr.bf16.mxu0 0
      %2615 = vmatpush2.bf16.msra.mxu0 0
      %2616 = vmatprep.subr.bf16.mxu0 0
      %2617 = vmatpush2.bf16.msra.mxu0 0
      %2618 = vmatprep.subr.bf16.mxu0 0
      %2619 = vmatpush2.bf16.msra.mxu0 0
      %2620 = vmatprep.subr.bf16.mxu0 0
      %2621 = vmatpush2.bf16.msra.mxu0 0
      %2622 = vmatprep.subr.bf16.mxu0 0
      %2623 = vmatpush2.bf16.msra.mxu0 0
      %2624 = vmatprep.subr.bf16.mxu0 0
      %2625 = vmatpush2.bf16.msra.mxu0 0
      %2626 = vmatprep.subr.bf16.mxu0 0
      %2627 = vmatpush2.bf16.msra.mxu0 0
      %2628 = vmatprep.subr.bf16.mxu0 0
      %2629 = vmatpush2.bf16.msra.mxu0 0
      %2630 = vmatprep.mubr.bf16.mxu0 0
      %2631 = vmatmul.mubr.bf16.gmra.mxu0 %v2545
      %v2632 = vpop.f32.mrf.mxu0
      %v2633 = vadd.f32 0.0, %v2632
      %v2634 = vpop.f32.mrf.mxu0
      %v2635 = vpop.f32.mrf.mxu0
      %v2636 = vadd.f32 0.0, %v2635
      %v2637 = vpop.f32.mrf.mxu0
      %2638 = vmatprep.mubr.bf16.mxu0 0
      %2639 = vmatmul.mubr.bf16.gmra.mxu0 %v2548
      %v2640 = vpop.f32.mrf.mxu0
      %v2641 = vadd.f32 0.0, %v2640
      %v2642 = vpop.f32.mrf.mxu0
      %v2643 = vpop.f32.mrf.mxu0
      %v2644 = vadd.f32 0.0, %v2643
      %v2645 = vpop.f32.mrf.mxu0
      %2646 = vmatprep.mubr.bf16.mxu0 0
      %2647 = vmatmul.mubr.bf16.gmra.mxu0 %v2551
      %v2648 = vpop.f32.mrf.mxu0
      %v2649 = vadd.f32 0.0, %v2648
      %v2650 = vpop.f32.mrf.mxu0
      %v2651 = vpop.f32.mrf.mxu0
      %v2652 = vadd.f32 0.0, %v2651
      %v2653 = vpop.f32.mrf.mxu0
      %2654 = vmatprep.mubr.bf16.mxu0 0
      %2655 = vmatmul.mubr.bf16.gmra.mxu0 %v2554
      %v2656 = vpop.f32.mrf.mxu0
      %v2657 = vadd.f32 0.0, %v2656
      %v2658 = vpop.f32.mrf.mxu0
      %v2659 = vpop.f32.mrf.mxu0
      %v2660 = vadd.f32 0.0, %v2659
      %v2661 = vpop.f32.mrf.mxu0
      %2662 = vmatprep.mubr.bf16.mxu0 0
      %2663 = vmatmul.mubr.bf16.gmra.mxu0 %v2557
      %v2664 = vpop.f32.mrf.mxu0
      %v2665 = vadd.f32 0.0, %v2664
      %v2666 = vpop.f32.mrf.mxu0
      %v2667 = vpop.f32.mrf.mxu0
      %v2668 = vadd.f32 0.0, %v2667
      %v2669 = vpop.f32.mrf.mxu0
      %2670 = vmatprep.mubr.bf16.mxu0 0
      %2671 = vmatmul.mubr.bf16.gmra.mxu0 %v2560
      %v2672 = vpop.f32.mrf.mxu0
      %v2673 = vadd.f32 0.0, %v2672
      %v2674 = vpop.f32.mrf.mxu0
      %v2675 = vpop.f32.mrf.mxu0
      %v2676 = vadd.f32 0.0, %v2675
      %v2677 = vpop.f32.mrf.mxu0
      %2678 = vmatprep.mubr.bf16.mxu0 0
      %2679 = vmatmul.mubr.bf16.gmra.mxu0 %v2563
      %v2680 = vpop.f32.mrf.mxu0
      %v2681 = vadd.f32 0.0, %v2680
      %v2682 = vpop.f32.mrf.mxu0
      %v2683 = vpop.f32.mrf.mxu0
      %v2684 = vadd.f32 0.0, %v2683
      %v2685 = vpop.f32.mrf.mxu0
      %2686 = vmatprep.mubr.bf16.mxu0 0
      %2687 = vmatmul.mubr.bf16.gmra.mxu0 %v2566
      %v2688 = vpop.f32.mrf.mxu0
      %v2689 = vadd.f32 0.0, %v2688
      %v2690 = vpop.f32.mrf.mxu0
      %v2691 = vpop.f32.mrf.mxu0
      %v2692 = vadd.f32 0.0, %v2691
      %v2693 = vpop.f32.mrf.mxu0
      %2694 = vmatprep.mubr.bf16.mxu0 0
      %2695 = vmatmul.mubr.bf16.gmra.mxu0 %v2569
      %v2696 = vpop.f32.mrf.mxu0
      %v2697 = vadd.f32 0.0, %v2696
      %v2698 = vpop.f32.mrf.mxu0
      %v2699 = vpop.f32.mrf.mxu0
      %v2700 = vadd.f32 0.0, %v2699
      %v2701 = vpop.f32.mrf.mxu0
      %2702 = vmatprep.mubr.bf16.mxu0 0
      %2703 = vmatmul.mubr.bf16.gmra.mxu0 %v2572
      %v2704 = vpop.f32.mrf.mxu0
      %v2705 = vadd.f32 0.0, %v2704
      %v2706 = vpop.f32.mrf.mxu0
      %v2707 = vpop.f32.mrf.mxu0
      %v2708 = vadd.f32 0.0, %v2707
      %v2709 = vpop.f32.mrf.mxu0
      %2710 = vmatprep.mubr.bf16.mxu0 0
      %2711 = vmatmul.mubr.bf16.gmra.mxu0 %v2575
      %v2712 = vpop.f32.mrf.mxu0
      %v2713 = vadd.f32 0.0, %v2712
      %v2714 = vpop.f32.mrf.mxu0
      %v2715 = vpop.f32.mrf.mxu0
      %v2716 = vadd.f32 0.0, %v2715
      %v2717 = vpop.f32.mrf.mxu0
      %2718 = vmatprep.mubr.bf16.mxu0 0
      %2719 = vmatmul.mubr.bf16.gmra.mxu0 %v2578
      %v2720 = vpop.f32.mrf.mxu0
      %v2721 = vadd.f32 0.0, %v2720
      %v2722 = vpop.f32.mrf.mxu0
      %v2723 = vpop.f32.mrf.mxu0
      %v2724 = vadd.f32 0.0, %v2723
      %v2725 = vpop.f32.mrf.mxu0
      %2726 = vmatprep.mubr.bf16.mxu0 0
      %2727 = vmatmul.mubr.bf16.gmra.mxu0 %v2581
      %v2728 = vpop.f32.mrf.mxu0
      %v2729 = vadd.f32 0.0, %v2728
      %v2730 = vpop.f32.mrf.mxu0
      %v2731 = vpop.f32.mrf.mxu0
      %v2732 = vadd.f32 0.0, %v2731
      %v2733 = vpop.f32.mrf.mxu0
      %2734 = vmatprep.mubr.bf16.mxu0 0
      %2735 = vmatmul.mubr.bf16.gmra.mxu0 %v2584
      %v2736 = vpop.f32.mrf.mxu0
      %v2737 = vadd.f32 0.0, %v2736
      %v2738 = vpop.f32.mrf.mxu0
      %v2739 = vpop.f32.mrf.mxu0
      %v2740 = vadd.f32 0.0, %v2739
      %v2741 = vpop.f32.mrf.mxu0
      %2742 = vmatprep.mubr.bf16.mxu0 0
      %2743 = vmatmul.mubr.bf16.gmra.mxu0 %v2587
      %v2744 = vpop.f32.mrf.mxu0
      %v2745 = vadd.f32 0.0, %v2744
      %v2746 = vpop.f32.mrf.mxu0
      %v2747 = vpop.f32.mrf.mxu0
      %v2748 = vadd.f32 0.0, %v2747
      %v2749 = vpop.f32.mrf.mxu0
      %2750 = vmatprep.mubr.bf16.mxu0 0
      %2751 = vmatmul.mubr.bf16.gmra.mxu0 %v2590
      %v2752 = vpop.f32.mrf.mxu0
      %v2753 = vadd.f32 0.0, %v2752
      %v2754 = vpop.f32.mrf.mxu0
      %v2755 = vpop.f32.mrf.mxu0
      %v2756 = vadd.f32 0.0, %v2755
      %v2757 = vpop.f32.mrf.mxu0
      %2758 = vmatprep.mubr.bf16.mxu0 0
      %2759 = vmatmul.mubr.bf16.gmra.mxu0 %v2593
      %v2760 = vpop.f32.mrf.mxu0
      %v2761 = vadd.f32 0.0, %v2760
      %v2762 = vpop.f32.mrf.mxu0
      %v2763 = vpop.f32.mrf.mxu0
      %v2764 = vadd.f32 0.0, %v2763
      %v2765 = vpop.f32.mrf.mxu0
      %2766 = vmatprep.mubr.bf16.mxu0 0
      %2767 = vmatmul.mubr.bf16.gmra.mxu0 %v2596
      %v2768 = vpop.f32.mrf.mxu0
      %v2769 = vadd.f32 0.0, %v2768
      %v2770 = vpop.f32.mrf.mxu0
      %v2771 = vpop.f32.mrf.mxu0
      %v2772 = vadd.f32 0.0, %v2771
      %v2773 = vpop.f32.mrf.mxu0
      %2774 = vdwg.mxu0
      %v2775 = vadd.f32 %v2445, %v2633
      %v2776 = vadd.f32 %v2446, %v2636
      %v2777 = vadd.f32 %v2447, %v2641
      %v2778 = vadd.f32 %v2448, %v2644
      %v2779 = vadd.f32 %v2449, %v2649
      %v2780 = vadd.f32 %v2450, %v2652
      %v2781 = vadd.f32 %v2451, %v2657
      %v2782 = vadd.f32 %v2452, %v2660
      %v2783 = vadd.f32 %v2453, %v2665
      %v2784 = vadd.f32 %v2454, %v2668
      %v2785 = vadd.f32 %v2455, %v2673
      %v2786 = vadd.f32 %v2456, %v2676
      %v2787 = vadd.f32 %v2457, %v2681
      %v2788 = vadd.f32 %v2458, %v2684
      %v2789 = vadd.f32 %v2459, %v2689
      %v2790 = vadd.f32 %v2460, %v2692
      %v2791 = vadd.f32 %v2461, %v2697
      %v2792 = vadd.f32 %v2462, %v2700
      %v2793 = vadd.f32 %v2463, %v2705
      %v2794 = vadd.f32 %v2464, %v2708
      %v2795 = vadd.f32 %v2465, %v2713
      %v2796 = vadd.f32 %v2466, %v2716
      %v2797 = vadd.f32 %v2467, %v2721
      %v2798 = vadd.f32 %v2468, %v2724
      %v2799 = vadd.f32 %v2469, %v2729
      %v2800 = vadd.f32 %v2470, %v2732
      %v2801 = vadd.f32 %v2471, %v2737
      %v2802 = vadd.f32 %v2472, %v2740
      %v2803 = vadd.f32 %v2473, %v2745
      %v2804 = vadd.f32 %v2474, %v2748
      %v2805 = vadd.f32 %v2475, %v2753
      %v2806 = vadd.f32 %v2476, %v2756
      %v2807 = vadd.f32 %v2477, %v2761
      %v2808 = vadd.f32 %v2478, %v2764
      %v2809 = vadd.f32 %v2479, %v2769
      %v2810 = vadd.f32 %v2480, %v2772
      %v2811 = vld [vmem:[%s230 + $0x26] sm:$0xff]
      %v2812 = vld [vmem:[%s230 + $0x2e] sm:$0xff]
      %v2813 = vld [vmem:[%s230 + $0x36] sm:$0xff]
      %v2814 = vld [vmem:[%s230 + $0x3e] sm:$0xff]
      %v2815 = vld [vmem:[%s230 + $0x46] sm:$0xff]
      %v2816 = vld [vmem:[%s230 + $0x4e] sm:$0xff]
      %v2817 = vld [vmem:[%s230 + $0x56] sm:$0xff]
      %v2818 = vld [vmem:[%s230 + $0x5e] sm:$0xff]
      %v2819 = vld [vmem:[%s230 + $0x66] sm:$0xff]
      %v2820 = vld [vmem:[%s230 + $0x6e] sm:$0xff]
      %v2821 = vld [vmem:[%s230 + $0x76] sm:$0xff]
      %v2822 = vld [vmem:[%s230 + $0x7e] sm:$0xff]
      %v2823 = vld [vmem:[%s230 + $0x86] sm:$0xff]
      %v2824 = vld [vmem:[%s230 + $0x8e] sm:$0xff]
      %v2825 = vld [vmem:[%s230 + $0x96] sm:$0xff]
      %v2826 = vld [vmem:[%s230 + $0x9e] sm:$0xff]
      %v2827 = vld [vmem:[%s230 + $0xa6] sm:$0xff]
      %v2828 = vld [vmem:[%s230 + $0xae] sm:$0xff]
      %v2829 = vld [vmem:[%s230 + $0xb6] sm:$0xff]
      %v2830 = vld [vmem:[%s230 + $0xbe] sm:$0xff]
      %v2831 = vld [vmem:[%s230 + $0xc6] sm:$0xff]
      %v2832 = vld [vmem:[%s230 + $0xce] sm:$0xff]
      %v2833 = vld [vmem:[%s230 + $0xd6] sm:$0xff]
      %v2834 = vld [vmem:[%s230 + $0xde] sm:$0xff]
      %v2835 = vld [vmem:[%s230 + $0xe6] sm:$0xff]
      %v2836 = vld [vmem:[%s230 + $0xee] sm:$0xff]
      %v2837 = vld [vmem:[%s230 + $0xf6] sm:$0xff]
      %v2838 = vld [vmem:[%s230 + $0xfe] sm:$0xff]
      %v2839 = vld [vmem:[%s230 + $0x106] sm:$0xff]
      %v2840 = vld [vmem:[%s230 + $0x10e] sm:$0xff]
      %v2841 = vld [vmem:[%s230 + $0x116] sm:$0xff]
      %v2842 = vld [vmem:[%s230 + $0x11e] sm:$0xff]
      %v2843 = vld [vmem:[%s230 + $0x126] sm:$0xff]
      %v2844 = vld [vmem:[%s230 + $0x12e] sm:$0xff]
      %v2845 = vld [vmem:[%s230 + $0x136] sm:$0xff]
      %v2846 = vld [vmem:[%s230 + $0x13e] sm:$0xff]
      %v2847 = vpack.c.bf16 %v2812, %v2811
      %v2848 = vpack.c.bf16 %v2814, %v2813
      %v2849 = vpack.c.bf16 %v2816, %v2815
      %v2850 = vpack.c.bf16 %v2818, %v2817
      %v2851 = vpack.c.bf16 %v2820, %v2819
      %v2852 = vpack.c.bf16 %v2822, %v2821
      %v2853 = vpack.c.bf16 %v2824, %v2823
      %v2854 = vpack.c.bf16 %v2826, %v2825
      %v2855 = vpack.c.bf16 %v2828, %v2827
      %v2856 = vpack.c.bf16 %v2830, %v2829
      %v2857 = vpack.c.bf16 %v2832, %v2831
      %v2858 = vpack.c.bf16 %v2834, %v2833
      %v2859 = vpack.c.bf16 %v2836, %v2835
      %v2860 = vpack.c.bf16 %v2838, %v2837
      %v2861 = vpack.c.bf16 %v2840, %v2839
      %v2862 = vpack.c.bf16 %v2842, %v2841
      %v2863 = vpack.c.bf16 %v2844, %v2843
      %v2864 = vpack.c.bf16 %v2846, %v2845
      %s2865 = scalar_lea.vmem %s1, 64
      %v2866 = vld [vmem:[%s2865] sm:$0xf]
      %v2867 = vld [vmem:[%s2865 + $0x4] sm:$0xf]
      %v2870 = vunpack.c.l.b16 %v2866
      %v2871 = vunpack.c.l.b16 %v2867
      %v2872 = vpack.c.b16 %v2871, %v2870
      %v2875 = vsel %vm362, %v2847, 0
      %v2878 = vsel %vm362, %v2848, 0
      %v2881 = vsel %vm362, %v2849, 0
      %v2884 = vsel %vm362, %v2850, 0
      %v2887 = vsel %vm362, %v2851, 0
      %v2890 = vsel %vm362, %v2852, 0
      %v2893 = vsel %vm362, %v2853, 0
      %v2896 = vsel %vm362, %v2854, 0
      %v2899 = vsel %vm362, %v2855, 0
      %v2902 = vsel %vm362, %v2856, 0
      %v2905 = vsel %vm362, %v2857, 0
      %v2908 = vsel %vm362, %v2858, 0
      %v2911 = vsel %vm362, %v2859, 0
      %v2914 = vsel %vm362, %v2860, 0
      %v2917 = vsel %vm362, %v2861, 0
      %v2920 = vsel %vm362, %v2862, 0
      %v2923 = vsel %vm362, %v2863, 0
      %v2926 = vsel %vm362, %v2864, 0
      %2928 = vmatprep.subr.bf16.mxu0 0
      %2929 = vmatpush1.bf16.msra.mxu0 0
      %2930 = vmatprep.subr.bf16.mxu0 0
      %2931 = vmatpush1.bf16.msra.mxu0 0
      %2932 = vmatprep.subr.bf16.mxu0 0
      %2933 = vmatpush1.bf16.msra.mxu0 0
      %2934 = vmatprep.subr.bf16.mxu0 0
      %2935 = vmatpush1.bf16.msra.mxu0 0
      %2936 = vmatprep.subr.bf16.mxu0 0
      %2937 = vmatpush1.bf16.msra.mxu0 0
      %2938 = vmatprep.subr.bf16.mxu0 0
      %2939 = vmatpush1.bf16.msra.mxu0 0
      %2940 = vmatprep.subr.bf16.mxu0 0
      %2941 = vmatpush1.bf16.msra.mxu0 0
      %2942 = vmatprep.subr.bf16.mxu0 0
      %2943 = vmatpush1.bf16.msra.mxu0 %v2872
      %2944 = vmatprep.subr.bf16.mxu0 0
      %2945 = vmatpush2.bf16.msra.mxu0 0
      %2946 = vmatprep.subr.bf16.mxu0 0
      %2947 = vmatpush2.bf16.msra.mxu0 0
      %2948 = vmatprep.subr.bf16.mxu0 0
      %2949 = vmatpush2.bf16.msra.mxu0 0
      %2950 = vmatprep.subr.bf16.mxu0 0
      %2951 = vmatpush2.bf16.msra.mxu0 0
      %2952 = vmatprep.subr.bf16.mxu0 0
      %2953 = vmatpush2.bf16.msra.mxu0 0
      %2954 = vmatprep.subr.bf16.mxu0 0
      %2955 = vmatpush2.bf16.msra.mxu0 0
      %2956 = vmatprep.subr.bf16.mxu0 0
      %2957 = vmatpush2.bf16.msra.mxu0 0
      %2958 = vmatprep.subr.bf16.mxu0 0
      %2959 = vmatpush2.bf16.msra.mxu0 0
      %2960 = vmatprep.mubr.bf16.mxu0 0
      %2961 = vmatmul.mubr.bf16.gmra.mxu0 %v2875
      %v2962 = vpop.f32.mrf.mxu0
      %v2963 = vadd.f32 0.0, %v2962
      %v2964 = vpop.f32.mrf.mxu0
      %v2965 = vpop.f32.mrf.mxu0
      %v2966 = vadd.f32 0.0, %v2965
      %v2967 = vpop.f32.mrf.mxu0
      %2968 = vmatprep.mubr.bf16.mxu0 0
      %2969 = vmatmul.mubr.bf16.gmra.mxu0 %v2878
      %v2970 = vpop.f32.mrf.mxu0
      %v2971 = vadd.f32 0.0, %v2970
      %v2972 = vpop.f32.mrf.mxu0
      %v2973 = vpop.f32.mrf.mxu0
      %v2974 = vadd.f32 0.0, %v2973
      %v2975 = vpop.f32.mrf.mxu0
      %2976 = vmatprep.mubr.bf16.mxu0 0
      %2977 = vmatmul.mubr.bf16.gmra.mxu0 %v2881
      %v2978 = vpop.f32.mrf.mxu0
      %v2979 = vadd.f32 0.0, %v2978
      %v2980 = vpop.f32.mrf.mxu0
      %v2981 = vpop.f32.mrf.mxu0
      %v2982 = vadd.f32 0.0, %v2981
      %v2983 = vpop.f32.mrf.mxu0
      %2984 = vmatprep.mubr.bf16.mxu0 0
      %2985 = vmatmul.mubr.bf16.gmra.mxu0 %v2884
      %v2986 = vpop.f32.mrf.mxu0
      %v2987 = vadd.f32 0.0, %v2986
      %v2988 = vpop.f32.mrf.mxu0
      %v2989 = vpop.f32.mrf.mxu0
      %v2990 = vadd.f32 0.0, %v2989
      %v2991 = vpop.f32.mrf.mxu0
      %2992 = vmatprep.mubr.bf16.mxu0 0
      %2993 = vmatmul.mubr.bf16.gmra.mxu0 %v2887
      %v2994 = vpop.f32.mrf.mxu0
      %v2995 = vadd.f32 0.0, %v2994
      %v2996 = vpop.f32.mrf.mxu0
      %v2997 = vpop.f32.mrf.mxu0
      %v2998 = vadd.f32 0.0, %v2997
      %v2999 = vpop.f32.mrf.mxu0
      %3000 = vmatprep.mubr.bf16.mxu0 0
      %3001 = vmatmul.mubr.bf16.gmra.mxu0 %v2890
      %v3002 = vpop.f32.mrf.mxu0
      %v3003 = vadd.f32 0.0, %v3002
      %v3004 = vpop.f32.mrf.mxu0
      %v3005 = vpop.f32.mrf.mxu0
      %v3006 = vadd.f32 0.0, %v3005
      %v3007 = vpop.f32.mrf.mxu0
      %3008 = vmatprep.mubr.bf16.mxu0 0
      %3009 = vmatmul.mubr.bf16.gmra.mxu0 %v2893
      %v3010 = vpop.f32.mrf.mxu0
      %v3011 = vadd.f32 0.0, %v3010
      %v3012 = vpop.f32.mrf.mxu0
      %v3013 = vpop.f32.mrf.mxu0
      %v3014 = vadd.f32 0.0, %v3013
      %v3015 = vpop.f32.mrf.mxu0
      %3016 = vmatprep.mubr.bf16.mxu0 0
      %3017 = vmatmul.mubr.bf16.gmra.mxu0 %v2896
      %v3018 = vpop.f32.mrf.mxu0
      %v3019 = vadd.f32 0.0, %v3018
      %v3020 = vpop.f32.mrf.mxu0
      %v3021 = vpop.f32.mrf.mxu0
      %v3022 = vadd.f32 0.0, %v3021
      %v3023 = vpop.f32.mrf.mxu0
      %3024 = vmatprep.mubr.bf16.mxu0 0
      %3025 = vmatmul.mubr.bf16.gmra.mxu0 %v2899
      %v3026 = vpop.f32.mrf.mxu0
      %v3027 = vadd.f32 0.0, %v3026
      %v3028 = vpop.f32.mrf.mxu0
      %v3029 = vpop.f32.mrf.mxu0
      %v3030 = vadd.f32 0.0, %v3029
      %v3031 = vpop.f32.mrf.mxu0
      %3032 = vmatprep.mubr.bf16.mxu0 0
      %3033 = vmatmul.mubr.bf16.gmra.mxu0 %v2902
      %v3034 = vpop.f32.mrf.mxu0
      %v3035 = vadd.f32 0.0, %v3034
      %v3036 = vpop.f32.mrf.mxu0
      %v3037 = vpop.f32.mrf.mxu0
      %v3038 = vadd.f32 0.0, %v3037
      %v3039 = vpop.f32.mrf.mxu0
      %3040 = vmatprep.mubr.bf16.mxu0 0
      %3041 = vmatmul.mubr.bf16.gmra.mxu0 %v2905
      %v3042 = vpop.f32.mrf.mxu0
      %v3043 = vadd.f32 0.0, %v3042
      %v3044 = vpop.f32.mrf.mxu0
      %v3045 = vpop.f32.mrf.mxu0
      %v3046 = vadd.f32 0.0, %v3045
      %v3047 = vpop.f32.mrf.mxu0
      %3048 = vmatprep.mubr.bf16.mxu0 0
      %3049 = vmatmul.mubr.bf16.gmra.mxu0 %v2908
      %v3050 = vpop.f32.mrf.mxu0
      %v3051 = vadd.f32 0.0, %v3050
      %v3052 = vpop.f32.mrf.mxu0
      %v3053 = vpop.f32.mrf.mxu0
      %v3054 = vadd.f32 0.0, %v3053
      %v3055 = vpop.f32.mrf.mxu0
      %3056 = vmatprep.mubr.bf16.mxu0 0
      %3057 = vmatmul.mubr.bf16.gmra.mxu0 %v2911
      %v3058 = vpop.f32.mrf.mxu0
      %v3059 = vadd.f32 0.0, %v3058
      %v3060 = vpop.f32.mrf.mxu0
      %v3061 = vpop.f32.mrf.mxu0
      %v3062 = vadd.f32 0.0, %v3061
      %v3063 = vpop.f32.mrf.mxu0
      %3064 = vmatprep.mubr.bf16.mxu0 0
      %3065 = vmatmul.mubr.bf16.gmra.mxu0 %v2914
      %v3066 = vpop.f32.mrf.mxu0
      %v3067 = vadd.f32 0.0, %v3066
      %v3068 = vpop.f32.mrf.mxu0
      %v3069 = vpop.f32.mrf.mxu0
      %v3070 = vadd.f32 0.0, %v3069
      %v3071 = vpop.f32.mrf.mxu0
      %3072 = vmatprep.mubr.bf16.mxu0 0
      %3073 = vmatmul.mubr.bf16.gmra.mxu0 %v2917
      %v3074 = vpop.f32.mrf.mxu0
      %v3075 = vadd.f32 0.0, %v3074
      %v3076 = vpop.f32.mrf.mxu0
      %v3077 = vpop.f32.mrf.mxu0
      %v3078 = vadd.f32 0.0, %v3077
      %v3079 = vpop.f32.mrf.mxu0
      %3080 = vmatprep.mubr.bf16.mxu0 0
      %3081 = vmatmul.mubr.bf16.gmra.mxu0 %v2920
      %v3082 = vpop.f32.mrf.mxu0
      %v3083 = vadd.f32 0.0, %v3082
      %v3084 = vpop.f32.mrf.mxu0
      %v3085 = vpop.f32.mrf.mxu0
      %v3086 = vadd.f32 0.0, %v3085
      %v3087 = vpop.f32.mrf.mxu0
      %3088 = vmatprep.mubr.bf16.mxu0 0
      %3089 = vmatmul.mubr.bf16.gmra.mxu0 %v2923
      %v3090 = vpop.f32.mrf.mxu0
      %v3091 = vadd.f32 0.0, %v3090
      %v3092 = vpop.f32.mrf.mxu0
      %v3093 = vpop.f32.mrf.mxu0
      %v3094 = vadd.f32 0.0, %v3093
      %v3095 = vpop.f32.mrf.mxu0
      %3096 = vmatprep.mubr.bf16.mxu0 0
      %3097 = vmatmul.mubr.bf16.gmra.mxu0 %v2926
      %v3098 = vpop.f32.mrf.mxu0
      %v3099 = vadd.f32 0.0, %v3098
      %v3100 = vpop.f32.mrf.mxu0
      %v3101 = vpop.f32.mrf.mxu0
      %v3102 = vadd.f32 0.0, %v3101
      %v3103 = vpop.f32.mrf.mxu0
      %3104 = vdwg.mxu0
      %v3105 = vadd.f32 %v2775, %v2963
      %v3106 = vadd.f32 %v2776, %v2966
      %v3107 = vadd.f32 %v2777, %v2971
      %v3108 = vadd.f32 %v2778, %v2974
      %v3109 = vadd.f32 %v2779, %v2979
      %v3110 = vadd.f32 %v2780, %v2982
      %v3111 = vadd.f32 %v2781, %v2987
      %v3112 = vadd.f32 %v2782, %v2990
      %v3113 = vadd.f32 %v2783, %v2995
      %v3114 = vadd.f32 %v2784, %v2998
      %v3115 = vadd.f32 %v2785, %v3003
      %v3116 = vadd.f32 %v2786, %v3006
      %v3117 = vadd.f32 %v2787, %v3011
      %v3118 = vadd.f32 %v2788, %v3014
      %v3119 = vadd.f32 %v2789, %v3019
      %v3120 = vadd.f32 %v2790, %v3022
      %v3121 = vadd.f32 %v2791, %v3027
      %v3122 = vadd.f32 %v2792, %v3030
      %v3123 = vadd.f32 %v2793, %v3035
      %v3124 = vadd.f32 %v2794, %v3038
      %v3125 = vadd.f32 %v2795, %v3043
      %v3126 = vadd.f32 %v2796, %v3046
      %v3127 = vadd.f32 %v2797, %v3051
      %v3128 = vadd.f32 %v2798, %v3054
      %v3129 = vadd.f32 %v2799, %v3059
      %v3130 = vadd.f32 %v2800, %v3062
      %v3131 = vadd.f32 %v2801, %v3067
      %v3132 = vadd.f32 %v2802, %v3070
      %v3133 = vadd.f32 %v2803, %v3075
      %v3134 = vadd.f32 %v2804, %v3078
      %v3135 = vadd.f32 %v2805, %v3083
      %v3136 = vadd.f32 %v2806, %v3086
      %v3137 = vadd.f32 %v2807, %v3091
      %v3138 = vadd.f32 %v2808, %v3094
      %v3139 = vadd.f32 %v2809, %v3099
      %v3140 = vadd.f32 %v2810, %v3102
      %v3141 = vpack.c.bf16 %v3106, %v3105
      %v3142 = vpack.c.bf16 %v3108, %v3107
      %v3143 = vpack.c.bf16 %v3110, %v3109
      %v3144 = vpack.c.bf16 %v3112, %v3111
      %v3145 = vpack.c.bf16 %v3114, %v3113
      %v3146 = vpack.c.bf16 %v3116, %v3115
      %v3147 = vpack.c.bf16 %v3118, %v3117
      %v3148 = vpack.c.bf16 %v3120, %v3119
      %v3149 = vpack.c.bf16 %v3122, %v3121
      %v3150 = vpack.c.bf16 %v3124, %v3123
      %v3151 = vpack.c.bf16 %v3126, %v3125
      %v3152 = vpack.c.bf16 %v3128, %v3127
      %v3153 = vpack.c.bf16 %v3130, %v3129
      %v3154 = vpack.c.bf16 %v3132, %v3131
      %v3155 = vpack.c.bf16 %v3134, %v3133
      %v3156 = vpack.c.bf16 %v3136, %v3135
      %v3157 = vpack.c.bf16 %v3138, %v3137
      %v3158 = vpack.c.bf16 %v3140, %v3139
      %v3177 = vunpack.c.l.b16 %v3141
      %v3178 = vunpack.c.h.b16 %v3141
      %v3179 = vunpack.c.l.b16 %v3142
      %v3180 = vunpack.c.h.b16 %v3142
      %v3181 = vunpack.c.l.b16 %v3143
      %v3182 = vunpack.c.h.b16 %v3143
      %v3183 = vunpack.c.l.b16 %v3144
      %v3184 = vunpack.c.h.b16 %v3144
      %v3185 = vunpack.c.l.b16 %v3145
      %v3186 = vunpack.c.h.b16 %v3145
      %v3187 = vunpack.c.l.b16 %v3146
      %v3188 = vunpack.c.h.b16 %v3146
      %v3189 = vunpack.c.l.b16 %v3147
      %v3190 = vunpack.c.h.b16 %v3147
      %v3191 = vunpack.c.l.b16 %v3148
      %v3192 = vunpack.c.h.b16 %v3148
      %v3193 = vunpack.c.l.b16 %v3149
      %v3194 = vunpack.c.h.b16 %v3149
      %v3195 = vunpack.c.l.b16 %v3150
      %v3196 = vunpack.c.h.b16 %v3150
      %v3197 = vunpack.c.l.b16 %v3151
      %v3198 = vunpack.c.h.b16 %v3151
      %v3199 = vunpack.c.l.b16 %v3152
      %v3200 = vunpack.c.h.b16 %v3152
      %v3201 = vunpack.c.l.b16 %v3153
      %v3202 = vunpack.c.h.b16 %v3153
      %v3203 = vunpack.c.l.b16 %v3154
      %v3204 = vunpack.c.h.b16 %v3154
      %v3205 = vunpack.c.l.b16 %v3155
      %v3206 = vunpack.c.h.b16 %v3155
      %v3207 = vunpack.c.l.b16 %v3156
      %v3208 = vunpack.c.h.b16 %v3156
      %v3209 = vunpack.c.l.b16 %v3157
      %v3210 = vunpack.c.h.b16 %v3157
      %v3211 = vunpack.c.l.b16 %v3158
      %v3212 = vunpack.c.h.b16 %v3158
      %v3213 = vpack.c.b16 %v3177, %v3177
      %v3214 = vpack.c.b16 %v3178, %v3178
      %v3215 = vpack.c.b16 %v3179, %v3179
      %v3216 = vpack.c.b16 %v3180, %v3180
      %v3217 = vpack.c.b16 %v3181, %v3181
      %v3218 = vpack.c.b16 %v3182, %v3182
      %v3219 = vpack.c.b16 %v3183, %v3183
      %v3220 = vpack.c.b16 %v3184, %v3184
      %v3221 = vpack.c.b16 %v3185, %v3185
      %v3222 = vpack.c.b16 %v3186, %v3186
      %v3223 = vpack.c.b16 %v3187, %v3187
      %v3224 = vpack.c.b16 %v3188, %v3188
      %v3225 = vpack.c.b16 %v3189, %v3189
      %v3226 = vpack.c.b16 %v3190, %v3190
      %v3227 = vpack.c.b16 %v3191, %v3191
      %v3228 = vpack.c.b16 %v3192, %v3192
      %v3229 = vpack.c.b16 %v3193, %v3193
      %v3230 = vpack.c.b16 %v3194, %v3194
      %v3231 = vpack.c.b16 %v3195, %v3195
      %v3232 = vpack.c.b16 %v3196, %v3196
      %v3233 = vpack.c.b16 %v3197, %v3197
      %v3234 = vpack.c.b16 %v3198, %v3198
      %v3235 = vpack.c.b16 %v3199, %v3199
      %v3236 = vpack.c.b16 %v3200, %v3200
      %v3237 = vpack.c.b16 %v3201, %v3201
      %v3238 = vpack.c.b16 %v3202, %v3202
      %v3239 = vpack.c.b16 %v3203, %v3203
      %v3240 = vpack.c.b16 %v3204, %v3204
      %v3241 = vpack.c.b16 %v3205, %v3205
      %v3242 = vpack.c.b16 %v3206, %v3206
      %v3243 = vpack.c.b16 %v3207, %v3207
      %v3244 = vpack.c.b16 %v3208, %v3208
      %v3245 = vpack.c.b16 %v3209, %v3209
      %v3246 = vpack.c.b16 %v3210, %v3210
      %v3247 = vpack.c.b16 %v3211, %v3211
      %v3248 = vpack.c.b16 %v3212, %v3212
      %3285 = vst [vmem:[%s235] sm:$0xf] %v3213
      %3286 = vst [vmem:[%s235 + $0x4] sm:$0xf] %v3214
      %3287 = vst [vmem:[%s235 + $0x8] sm:$0xf] %v3215
      %3288 = vst [vmem:[%s235 + $0xc] sm:$0xf] %v3216
      %3289 = vst [vmem:[%s235 + $0x10] sm:$0xf] %v3217
      %3290 = vst [vmem:[%s235 + $0x14] sm:$0xf] %v3218
      %3291 = vst [vmem:[%s235 + $0x18] sm:$0xf] %v3219
      %3292 = vst [vmem:[%s235 + $0x1c] sm:$0xf] %v3220
      %3293 = vst [vmem:[%s235 + $0x20] sm:$0xf] %v3221
      %3294 = vst [vmem:[%s235 + $0x24] sm:$0xf] %v3222
      %3295 = vst [vmem:[%s235 + $0x28] sm:$0xf] %v3223
      %3296 = vst [vmem:[%s235 + $0x2c] sm:$0xf] %v3224
      %3297 = vst [vmem:[%s235 + $0x30] sm:$0xf] %v3225
      %3298 = vst [vmem:[%s235 + $0x34] sm:$0xf] %v3226
      %3299 = vst [vmem:[%s235 + $0x38] sm:$0xf] %v3227
      %3300 = vst [vmem:[%s235 + $0x3c] sm:$0xf] %v3228
      %3301 = vst [vmem:[%s235 + $0x40] sm:$0xf] %v3229
      %3302 = vst [vmem:[%s235 + $0x44] sm:$0xf] %v3230
      %3303 = vst [vmem:[%s235 + $0x48] sm:$0xf] %v3231
      %3304 = vst [vmem:[%s235 + $0x4c] sm:$0xf] %v3232
      %3305 = vst [vmem:[%s235 + $0x50] sm:$0xf] %v3233
      %3306 = vst [vmem:[%s235 + $0x54] sm:$0xf] %v3234
      %3307 = vst [vmem:[%s235 + $0x58] sm:$0xf] %v3235
      %3308 = vst [vmem:[%s235 + $0x5c] sm:$0xf] %v3236
      %3309 = vst [vmem:[%s235 + $0x60] sm:$0xf] %v3237
      %3310 = vst [vmem:[%s235 + $0x64] sm:$0xf] %v3238
      %3311 = vst [vmem:[%s235 + $0x68] sm:$0xf] %v3239
      %3312 = vst [vmem:[%s235 + $0x6c] sm:$0xf] %v3240
      %3313 = vst [vmem:[%s235 + $0x70] sm:$0xf] %v3241
      %3314 = vst [vmem:[%s235 + $0x74] sm:$0xf] %v3242
      %3315 = vst [vmem:[%s235 + $0x78] sm:$0xf] %v3243
      %3316 = vst [vmem:[%s235 + $0x7c] sm:$0xf] %v3244
      %3317 = vst [vmem:[%s235 + $0x80] sm:$0xf] %v3245
      %3318 = vst [vmem:[%s235 + $0x84] sm:$0xf] %v3246
      %3319 = vst [vmem:[%s235 + $0x88] sm:$0xf] %v3247
      %3320 = vst [vmem:[%s235 + $0x8c] sm:$0xf] %v3248
      %v3321 = vld [vmem:[%s2] sm:$0xff]
      %v3322 = vld [vmem:[%s2 + $0x8] sm:$0xff]
      %v3323 = vld [vmem:[%s2 + $0x10] sm:$0xff]
      %v3324 = vld [vmem:[%s2 + $0x18] sm:$0xff]
      %v3325 = vld [vmem:[%s2 + $0x20] sm:$0xff]
      %v3326 = vld [vmem:[%s2 + $0x28] sm:$0xff]
      %v3327 = vld [vmem:[%s2 + $0x30] sm:$0xff]
      %v3328 = vld [vmem:[%s2 + $0x38] sm:$0xff]
      %v3329 = vld [vmem:[%s2 + $0x40] sm:$0xff]
      %v3330 = vld [vmem:[%s2 + $0x48] sm:$0xff]
      %v3331 = vld [vmem:[%s2 + $0x50] sm:$0xff]
      %v3332 = vld [vmem:[%s2 + $0x58] sm:$0xff]
      %v3333 = vld [vmem:[%s2 + $0x60] sm:$0xff]
      %v3334 = vld [vmem:[%s2 + $0x68] sm:$0xff]
      %v3335 = vld [vmem:[%s2 + $0x70] sm:$0xff]
      %v3336 = vld [vmem:[%s2 + $0x78] sm:$0xff]
      %v3337 = vld [vmem:[%s2 + $0x80] sm:$0xff]
      %v3338 = vld [vmem:[%s2 + $0x88] sm:$0xff]
      %v3339 = vld [vmem:[%s2 + $0x90] sm:$0xff]
      %v3340 = vld [vmem:[%s2 + $0x98] sm:$0xff]
      %v3341 = vld [vmem:[%s2 + $0xa0] sm:$0xff]
      %v3342 = vld [vmem:[%s2 + $0xa8] sm:$0xff]
      %v3343 = vld [vmem:[%s2 + $0xb0] sm:$0xff]
      %v3344 = vld [vmem:[%s2 + $0xb8] sm:$0xff]
      %v3345 = vld [vmem:[%s2 + $0xc0] sm:$0xff]
      %v3346 = vld [vmem:[%s2 + $0xc8] sm:$0xff]
      %v3347 = vld [vmem:[%s2 + $0xd0] sm:$0xff]
      %v3348 = vld [vmem:[%s2 + $0xd8] sm:$0xff]
      %v3349 = vld [vmem:[%s2 + $0xe0] sm:$0xff]
      %v3350 = vld [vmem:[%s2 + $0xe8] sm:$0xff]
      %v3351 = vld [vmem:[%s2 + $0xf0] sm:$0xff]
      %v3352 = vld [vmem:[%s2 + $0xf8] sm:$0xff]
      %v3353 = vld [vmem:[%s2 + $0x100] sm:$0xff]
      %v3354 = vld [vmem:[%s2 + $0x108] sm:$0xff]
      %v3355 = vld [vmem:[%s2 + $0x110] sm:$0xff]
      %v3356 = vld [vmem:[%s2 + $0x118] sm:$0xff]
      %3358 = vset.pattern.permute.xlu0 0
      %3359 = vperm.xlu0 %3358, %v3321
      %v3360 = vpop.permute.xlu0 %3359
      %3363 = vset.pattern.permute.xlu0 0
      %3364 = vperm.xlu0 %3363, %v3322
      %v3365 = vpop.permute.xlu0 %3364
      %3368 = vset.pattern.permute.xlu0 0
      %3369 = vperm.xlu0 %3368, %v3323
      %v3370 = vpop.permute.xlu0 %3369
      %3373 = vset.pattern.permute.xlu0 0
      %3374 = vperm.xlu0 %3373, %v3324
      %v3375 = vpop.permute.xlu0 %3374
      %3378 = vset.pattern.permute.xlu0 0
      %3379 = vperm.xlu0 %3378, %v3325
      %v3380 = vpop.permute.xlu0 %3379
      %3383 = vset.pattern.permute.xlu0 0
      %3384 = vperm.xlu0 %3383, %v3326
      %v3385 = vpop.permute.xlu0 %3384
      %3388 = vset.pattern.permute.xlu0 0
      %3389 = vperm.xlu0 %3388, %v3327
      %v3390 = vpop.permute.xlu0 %3389
      %3393 = vset.pattern.permute.xlu0 0
      %3394 = vperm.xlu0 %3393, %v3328
      %v3395 = vpop.permute.xlu0 %3394
      %3398 = vset.pattern.permute.xlu0 0
      %3399 = vperm.xlu0 %3398, %v3329
      %v3400 = vpop.permute.xlu0 %3399
      %3403 = vset.pattern.permute.xlu0 0
      %3404 = vperm.xlu0 %3403, %v3330
      %v3405 = vpop.permute.xlu0 %3404
      %3408 = vset.pattern.permute.xlu0 0
      %3409 = vperm.xlu0 %3408, %v3331
      %v3410 = vpop.permute.xlu0 %3409
      %3413 = vset.pattern.permute.xlu0 0
      %3414 = vperm.xlu0 %3413, %v3332
      %v3415 = vpop.permute.xlu0 %3414
      %3418 = vset.pattern.permute.xlu0 0
      %3419 = vperm.xlu0 %3418, %v3333
      %v3420 = vpop.permute.xlu0 %3419
      %3423 = vset.pattern.permute.xlu0 0
      %3424 = vperm.xlu0 %3423, %v3334
      %v3425 = vpop.permute.xlu0 %3424
      %3428 = vset.pattern.permute.xlu0 0
      %3429 = vperm.xlu0 %3428, %v3335
      %v3430 = vpop.permute.xlu0 %3429
      %3433 = vset.pattern.permute.xlu0 0
      %3434 = vperm.xlu0 %3433, %v3336
      %v3435 = vpop.permute.xlu0 %3434
      %3438 = vset.pattern.permute.xlu0 0
      %3439 = vperm.xlu0 %3438, %v3337
      %v3440 = vpop.permute.xlu0 %3439
      %3443 = vset.pattern.permute.xlu0 0
      %3444 = vperm.xlu0 %3443, %v3338
      %v3445 = vpop.permute.xlu0 %3444
      %3448 = vset.pattern.permute.xlu0 0
      %3449 = vperm.xlu0 %3448, %v3339
      %v3450 = vpop.permute.xlu0 %3449
      %3453 = vset.pattern.permute.xlu0 0
      %3454 = vperm.xlu0 %3453, %v3340
      %v3455 = vpop.permute.xlu0 %3454
      %3458 = vset.pattern.permute.xlu0 0
      %3459 = vperm.xlu0 %3458, %v3341
      %v3460 = vpop.permute.xlu0 %3459
      %3463 = vset.pattern.permute.xlu0 0
      %3464 = vperm.xlu0 %3463, %v3342
      %v3465 = vpop.permute.xlu0 %3464
      %3468 = vset.pattern.permute.xlu0 0
      %3469 = vperm.xlu0 %3468, %v3343
      %v3470 = vpop.permute.xlu0 %3469
      %3473 = vset.pattern.permute.xlu0 0
      %3474 = vperm.xlu0 %3473, %v3344
      %v3475 = vpop.permute.xlu0 %3474
      %3478 = vset.pattern.permute.xlu0 0
      %3479 = vperm.xlu0 %3478, %v3345
      %v3480 = vpop.permute.xlu0 %3479
      %3483 = vset.pattern.permute.xlu0 0
      %3484 = vperm.xlu0 %3483, %v3346
      %v3485 = vpop.permute.xlu0 %3484
      %3488 = vset.pattern.permute.xlu0 0
      %3489 = vperm.xlu0 %3488, %v3347
      %v3490 = vpop.permute.xlu0 %3489
      %3493 = vset.pattern.permute.xlu0 0
      %3494 = vperm.xlu0 %3493, %v3348
      %v3495 = vpop.permute.xlu0 %3494
      %3498 = vset.pattern.permute.xlu0 0
      %3499 = vperm.xlu0 %3498, %v3349
      %v3500 = vpop.permute.xlu0 %3499
      %3503 = vset.pattern.permute.xlu0 0
      %3504 = vperm.xlu0 %3503, %v3350
      %v3505 = vpop.permute.xlu0 %3504
      %3508 = vset.pattern.permute.xlu0 0
      %3509 = vperm.xlu0 %3508, %v3351
      %v3510 = vpop.permute.xlu0 %3509
      %3513 = vset.pattern.permute.xlu0 0
      %3514 = vperm.xlu0 %3513, %v3352
      %v3515 = vpop.permute.xlu0 %3514
      %3518 = vset.pattern.permute.xlu0 0
      %3519 = vperm.xlu0 %3518, %v3353
      %v3520 = vpop.permute.xlu0 %3519
      %3523 = vset.pattern.permute.xlu0 0
      %3524 = vperm.xlu0 %3523, %v3354
      %v3525 = vpop.permute.xlu0 %3524
      %3528 = vset.pattern.permute.xlu0 0
      %3529 = vperm.xlu0 %3528, %v3355
      %v3530 = vpop.permute.xlu0 %3529
      %3533 = vset.pattern.permute.xlu0 0
      %3534 = vperm.xlu0 %3533, %v3356
      %v3535 = vpop.permute.xlu0 %3534
      %v3537 = vmul.f32 %v3105, %v3360
      %v3538 = vmul.f32 %v3106, %v3365
      %v3539 = vmul.f32 %v3107, %v3370
      %v3540 = vmul.f32 %v3108, %v3375
      %v3541 = vmul.f32 %v3109, %v3380
      %v3542 = vmul.f32 %v3110, %v3385
      %v3543 = vmul.f32 %v3111, %v3390
      %v3544 = vmul.f32 %v3112, %v3395
      %v3545 = vmul.f32 %v3113, %v3400
      %v3546 = vmul.f32 %v3114, %v3405
      %v3547 = vmul.f32 %v3115, %v3410
      %v3548 = vmul.f32 %v3116, %v3415
      %v3549 = vmul.f32 %v3117, %v3420
      %v3550 = vmul.f32 %v3118, %v3425
      %v3551 = vmul.f32 %v3119, %v3430
      %v3552 = vmul.f32 %v3120, %v3435
      %v3553 = vmul.f32 %v3121, %v3440
      %v3554 = vmul.f32 %v3122, %v3445
      %v3555 = vmul.f32 %v3123, %v3450
      %v3556 = vmul.f32 %v3124, %v3455
      %v3557 = vmul.f32 %v3125, %v3460
      %v3558 = vmul.f32 %v3126, %v3465
      %v3559 = vmul.f32 %v3127, %v3470
      %v3560 = vmul.f32 %v3128, %v3475
      %v3561 = vmul.f32 %v3129, %v3480
      %v3562 = vmul.f32 %v3130, %v3485
      %v3563 = vmul.f32 %v3131, %v3490
      %v3564 = vmul.f32 %v3132, %v3495
      %v3565 = vmul.f32 %v3133, %v3500
      %v3566 = vmul.f32 %v3134, %v3505
      %v3567 = vmul.f32 %v3135, %v3510
      %v3568 = vmul.f32 %v3136, %v3515
      %v3569 = vmul.f32 %v3137, %v3520
      %v3570 = vmul.f32 %v3138, %v3525
      %v3571 = vmul.f32 %v3139, %v3530
      %v3572 = vmul.f32 %v3140, %v3535
      %v3573 = vadd.f32 %v3537, %v3538
      %v3574 = vadd.f32 %v3573, %v3539
      %v3575 = vadd.f32 %v3574, %v3540
      %v3576 = vadd.f32 %v3575, %v3541
      %v3577 = vadd.f32 %v3576, %v3542
      %v3578 = vadd.f32 %v3577, %v3543
      %v3579 = vadd.f32 %v3578, %v3544
      %v3580 = vadd.f32 %v3579, %v3545
      %v3581 = vadd.f32 %v3580, %v3546
      %v3582 = vadd.f32 %v3581, %v3547
      %v3583 = vadd.f32 %v3582, %v3548
      %v3584 = vadd.f32 %v3583, %v3549
      %v3585 = vadd.f32 %v3584, %v3550
      %v3586 = vadd.f32 %v3585, %v3551
      %v3587 = vadd.f32 %v3586, %v3552
      %v3588 = vadd.f32 %v3587, %v3553
      %v3589 = vadd.f32 %v3588, %v3554
      %v3590 = vadd.f32 %v3589, %v3555
      %v3591 = vadd.f32 %v3590, %v3556
      %v3592 = vadd.f32 %v3591, %v3557
      %v3593 = vadd.f32 %v3592, %v3558
      %v3594 = vadd.f32 %v3593, %v3559
      %v3595 = vadd.f32 %v3594, %v3560
      %v3596 = vadd.f32 %v3595, %v3561
      %v3597 = vadd.f32 %v3596, %v3562
      %v3598 = vadd.f32 %v3597, %v3563
      %v3599 = vadd.f32 %v3598, %v3564
      %v3600 = vadd.f32 %v3599, %v3565
      %v3601 = vadd.f32 %v3600, %v3566
      %v3602 = vadd.f32 %v3601, %v3567
      %v3603 = vadd.f32 %v3602, %v3568
      %v3604 = vadd.f32 %v3603, %v3569
      %v3605 = vadd.f32 %v3604, %v3570
      %v3606 = vadd.f32 %v3605, %v3571
      %v3607 = vadd.f32 %v3606, %v3572
      %v3608 = vrot.slane %v3607, 4
      %v3609 = vadd.f32 %v3607, %v3608
      %v3610 = vrot.slane %v3609, 2
      %v3611 = vadd.f32 %v3609, %v3610
      %v3612 = vrot.slane %v3611, 1
      %v3613 = vadd.f32 %v3611, %v3612
      %3614 = vst [vmem:[%s238] sm:$0x1] %v3613
      %v3615 = vmul.f32 %v3537, %v3105
      %v3616 = vmul.f32 %v3538, %v3106
      %v3617 = vmul.f32 %v3539, %v3107
      %v3618 = vmul.f32 %v3540, %v3108
      %v3619 = vmul.f32 %v3541, %v3109
      %v3620 = vmul.f32 %v3542, %v3110
      %v3621 = vmul.f32 %v3543, %v3111
      %v3622 = vmul.f32 %v3544, %v3112
      %v3623 = vmul.f32 %v3545, %v3113
      %v3624 = vmul.f32 %v3546, %v3114
      %v3625 = vmul.f32 %v3547, %v3115
      %v3626 = vmul.f32 %v3548, %v3116
      %v3627 = vmul.f32 %v3549, %v3117
      %v3628 = vmul.f32 %v3550, %v3118
      %v3629 = vmul.f32 %v3551, %v3119
      %v3630 = vmul.f32 %v3552, %v3120
      %v3631 = vmul.f32 %v3553, %v3121
      %v3632 = vmul.f32 %v3554, %v3122
      %v3633 = vmul.f32 %v3555, %v3123
      %v3634 = vmul.f32 %v3556, %v3124
      %v3635 = vmul.f32 %v3557, %v3125
      %v3636 = vmul.f32 %v3558, %v3126
      %v3637 = vmul.f32 %v3559, %v3127
      %v3638 = vmul.f32 %v3560, %v3128
      %v3639 = vmul.f32 %v3561, %v3129
      %v3640 = vmul.f32 %v3562, %v3130
      %v3641 = vmul.f32 %v3563, %v3131
      %v3642 = vmul.f32 %v3564, %v3132
      %v3643 = vmul.f32 %v3565, %v3133
      %v3644 = vmul.f32 %v3566, %v3134
      %v3645 = vmul.f32 %v3567, %v3135
      %v3646 = vmul.f32 %v3568, %v3136
      %v3647 = vmul.f32 %v3569, %v3137
      %v3648 = vmul.f32 %v3570, %v3138
      %v3649 = vmul.f32 %v3571, %v3139
      %v3650 = vmul.f32 %v3572, %v3140
      %v3651 = vadd.f32 %v3615, %v3616
      %v3652 = vadd.f32 %v3651, %v3617
      %v3653 = vadd.f32 %v3652, %v3618
      %v3654 = vadd.f32 %v3653, %v3619
      %v3655 = vadd.f32 %v3654, %v3620
      %v3656 = vadd.f32 %v3655, %v3621
      %v3657 = vadd.f32 %v3656, %v3622
      %v3658 = vadd.f32 %v3657, %v3623
      %v3659 = vadd.f32 %v3658, %v3624
      %v3660 = vadd.f32 %v3659, %v3625
      %v3661 = vadd.f32 %v3660, %v3626
      %v3662 = vadd.f32 %v3661, %v3627
      %v3663 = vadd.f32 %v3662, %v3628
      %v3664 = vadd.f32 %v3663, %v3629
      %v3665 = vadd.f32 %v3664, %v3630
      %v3666 = vadd.f32 %v3665, %v3631
      %v3667 = vadd.f32 %v3666, %v3632
      %v3668 = vadd.f32 %v3667, %v3633
      %v3669 = vadd.f32 %v3668, %v3634
      %v3670 = vadd.f32 %v3669, %v3635
      %v3671 = vadd.f32 %v3670, %v3636
      %v3672 = vadd.f32 %v3671, %v3637
      %v3673 = vadd.f32 %v3672, %v3638
      %v3674 = vadd.f32 %v3673, %v3639
      %v3675 = vadd.f32 %v3674, %v3640
      %v3676 = vadd.f32 %v3675, %v3641
      %v3677 = vadd.f32 %v3676, %v3642
      %v3678 = vadd.f32 %v3677, %v3643
      %v3679 = vadd.f32 %v3678, %v3644
      %v3680 = vadd.f32 %v3679, %v3645
      %v3681 = vadd.f32 %v3680, %v3646
      %v3682 = vadd.f32 %v3681, %v3647
      %v3683 = vadd.f32 %v3682, %v3648
      %v3684 = vadd.f32 %v3683, %v3649
      %v3685 = vadd.f32 %v3684, %v3650
      %v3686 = vrot.slane %v3685, 4
      %v3687 = vadd.f32 %v3685, %v3686
      %v3688 = vrot.slane %v3687, 2
      %v3689 = vadd.f32 %v3687, %v3688
      %v3690 = vrot.slane %v3689, 1
      %v3691 = vadd.f32 %v3689, %v3690
      %3692 = vst [vmem:[%s241] sm:$0x1] %v3691
      %p3693 = scmp.lt.s32.totalorder %s17, 1
      %s3694 = scalar_select %p3693, %s17, 1
      %s3695 = smul.addr %s3694, 36
      %s3696 = smul.addr %s3695, 4
      %s3697 = scalar_lea.vmem %s3, %s3696
      %p3698 = scmp.lt.s32.totalorder %s17, 1
      %s3699 = scalar_select %p3698, %s17, 1
      %s3700 = scalar_lea.vmem %s4, %s3699
      %p3701 = scmp.lt.s32.totalorder %s17, 1
      %s3702 = scalar_select %p3701, %s17, 1
      %s3703 = scalar_lea.vmem %s5, %s3702
      // Predicated region
      $region33: #{double_conv.3} parent=31 // pred_check
        %p3704 = pneg %p103
      $region34: #{double_conv.3} parent=31 // pred_check_branch
        %3706 = sbr.rel (%p3704) target = $region36
      $region35: #{double_conv.3} parent=31 // pred_region
        _
      $region36: #{double_conv.3} parent=31 // pred_fallthru
        _
      // Predicated region
      $region37: #{double_conv.3} parent=31 // pred_check
        %p3707 = pneg %p129
      $region38: #{double_conv.3} parent=31 // pred_check_branch
        %3709 = sbr.rel (%p3707) target = $region40
      $region39: #{double_conv.3} parent=31 // pred_region
        _
      $region40: #{double_conv.3} parent=31 // pred_fallthru
        _
      // Predicated region
      $region41: #{double_conv.3} parent=31 // pred_check
        %p3710 = pneg %p155
      $region42: #{double_conv.3} parent=31 // pred_check_branch
        %3712 = sbr.rel (%p3710) target = $region44
      $region43: #{double_conv.3} parent=31 // pred_region
        _
      $region44: #{double_conv.3} parent=31 // pred_fallthru
        _
    $region32: #{double_conv.3} parent=5 // pred_fallthru
      _
    %p3713 = scmp.le.s32.totalorder 2, %s12
    // Predicated region
    $region45: #{double_conv.3} parent=5 // pred_check
      %p3714 = pneg %p3713
    $region46: #{double_conv.3} parent=5 // pred_check_branch
      %3716 = sbr.rel (%p3714) target = $region48
    $region47: #{double_conv.3} parent=5 // pred_region
      %s3717 = ssub.s32 %s12, 2
      // Predicated region
      $region49: #{double_conv.3} parent=47 // pred_check
        %p3718 = pneg %p109
      $region50: #{double_conv.3} parent=47 // pred_check_branch
        %3720 = sbr.rel (%p3718) target = $region52
      $region51: #{double_conv.3} parent=47 // pred_region
        %p3721 = scmp.lt.s32.totalorder %s18, 1
        %s3722 = scalar_select %p3721, %s18, 1
        %s3723 = smul.addr %s3722, 36
        %s3724 = smul.addr %s3723, 4
        %s3725 = scalar_lea.vmem %s3, %s3724
      $region52: #{double_conv.3} parent=47 // pred_fallthru
        _
      // Predicated region
      $region53: #{double_conv.3} parent=47 // pred_check
        %p3726 = pneg %p135
      $region54: #{double_conv.3} parent=47 // pred_check_branch
        %3728 = sbr.rel (%p3726) target = $region56
      $region55: #{double_conv.3} parent=47 // pred_region
        %p3729 = scmp.lt.s32.totalorder %s18, 1
        %s3730 = scalar_select %p3729, %s18, 1
        %s3731 = scalar_lea.vmem %s4, %s3730
      $region56: #{double_conv.3} parent=47 // pred_fallthru
        _
      // Predicated region
      $region57: #{double_conv.3} parent=47 // pred_check
        %p3732 = pneg %p161
      $region58: #{double_conv.3} parent=47 // pred_check_branch
        %3734 = sbr.rel (%p3732) target = $region60
      $region59: #{double_conv.3} parent=47 // pred_region
        %p3735 = scmp.lt.s32.totalorder %s18, 1
        %s3736 = scalar_select %p3735, %s18, 1
        %s3737 = scalar_lea.vmem %s5, %s3736
      $region60: #{double_conv.3} parent=47 // pred_fallthru
        _
    $region48: #{double_conv.3} parent=5 // pred_fallthru
      _
  $region6: #{double_conv.3} parent=0 // loop_footer
    %s16 = sadd.s32 1, %s12
  $region7: #{double_conv.3} parent=0 // loop_footer_branch
    %11 = sbr.rel target = $region3
  $region8: #{double_conv.3} parent=0 // loop_exit
    _

// kernel: double_conv.4
$region0: #{double_conv.4}
  #allocation0 [shape = 'u32[]', space=smem, size = 0x4, offset = 0x4, fixed_abs, tag = 'smem constant byte address 0x4 - core index']
  #allocation1 [shape = 'u32[144,128]{1,0:T(1,128)}', space=vmem, size = 0x12000, scoped, tag = 'internal scratch']
  #allocation2 [shape = 'f32[352,128]{1,0:T(8,128)}', space=vmem, size = 0x2c000, scoped, tag = 'scratch operand']
  %s0 = inlined_call_operand.vmem [shape: bf16[2,288,128], index: 0, kind: input, shape index: {}]
  %s1 = inlined_call_operand.vmem [shape: f32[1,128], index: 1, kind: input, shape index: {}]
  %s2 = inlined_call_operand.vmem [shape: f32[1,128], index: 2, kind: input, shape index: {}]
  %s3 = inlined_call_operand.vmem [shape: bf16[9,128,128], index: 3, kind: input, shape index: {}]
  %s4 = inlined_call_operand.vmem [shape: f32[288,1], index: 4, kind: input, shape index: {}]
  %s5 = inlined_call_operand.vmem [shape: bf16[2,288,128], index: 5, kind: output, shape index: {0}]
  %s6 = inlined_call_operand.vmem [shape: f32[2,1,128], index: 6, kind: output, shape index: {1}]
  %s7 = inlined_call_operand.vmem [shape: f32[2,1,128], index: 7, kind: output, shape index: {2}]
  %8 = xla_tuple %s5, %s6, %s7
  %s9 = sld [smem:[#allocation0]]
  $region69: #{double_conv.4} parent=0
    _
  %s11 = ssub.s32 1, %s9
  %s12 = scalar_select 0, %s11, %s9
  loop: start=0, step=1, limit=4
  $region2: #{double_conv.4} parent=0 // loop_pre_header
    _
  $region3: #{double_conv.4} parent=0 // loop_header
    %s14 = sphi 0, %s18
    %p15 = scmp.ge.s32.totalorder %s14, 4
    %s24 = sphi 0, %s26
    %s27 = sphi 0, %s24
    %s28 = sphi 0, %s27
    %s44 = sphi 0, %s28
    %s48 = sphi 0, %s48
    %s50 = sphi 0, %s48
    %s51 = sphi 0, %s50
    %s65 = sphi 0, %s51
    %s69 = sphi 0, %s69
    %s71 = sphi 0, %s69
    %s72 = sphi 0, %s71
    %s86 = sphi 0, %s72
    %s90 = sphi 0, %s90
    %s92 = sphi 0, %s90
    %s93 = sphi 0, %s92
    %s107 = sphi 0, %s93
    %s111 = sphi 0, %s111
    %s113 = sphi 0, %s111
    %s114 = sphi 0, %s113
    %s128 = sphi 0, %s114
    %s134 = sphi 0, %s136
    %s137 = sphi 0, %s134
    %s138 = sphi 0, %s137
    %s154 = sphi 0, %s138
    %s160 = sphi 0, %s162
    %s163 = sphi 0, %s160
    %s164 = sphi 0, %s163
    %s180 = sphi 0, %s164
    %s186 = sphi 0, %s188
    %s189 = sphi 0, %s186
    %s190 = sphi 0, %s189
    %s206 = sphi 0, %s190
  $region4: #{double_conv.4} parent=0 // loop_header_branch
    %17 = sbr.rel (%p15) target = $region8
  $region5: #{double_conv.4} parent=0 // loop_body
    %s19 = ssub.s32 %s14, 1
    %s20 = ssub.s32 %s14, 2
    %s21 = sadd.s32 %s14, 1
    %s22 = ssub.s32 %s14, %s21
    %p23 = scmp.eq.s32.totalorder %s22, 0
    %s25 = sadd.s32 %s24, 1
    %s26 = scalar_select %p23, %s24, %s25
    %p29 = pneg %p23
    %p30 = scmp.eq.s32.totalorder %s14, 1
    %p31 = por %p29, %p30
    %p32 = scmp.ne.s32.totalorder %s24, %s27
    %p33 = scmp.eq.s32.totalorder %s14, 0
    %p34 = por %p32, %p33
    %p35 = scmp.ne.s32.totalorder %s24, %s27
    %p36 = scmp.eq.s32.totalorder %s19, 1
    %p37 = por %p35, %p36
    %p38 = scmp.ne.s32.totalorder %s27, %s28
    %p39 = scmp.eq.s32.totalorder %s19, 0
    %p40 = por %p38, %p39
    %p41 = scmp.ne.s32.totalorder %s27, %s28
    %p42 = scmp.eq.s32.totalorder %s20, 1
    %p43 = por %p41, %p42
    %p45 = scmp.ne.s32.totalorder %s28, %s44
    %p46 = scmp.eq.s32.totalorder %s20, 0
    %p47 = por %p45, %p46
    %s49 = sadd.s32 %s48, 1
    %p52 = scmp.eq.s32.totalorder %s14, 1
    %p53 = scmp.ne.s32.totalorder %s48, %s50
    %p54 = scmp.eq.s32.totalorder %s14, 0
    %p55 = por %p53, %p54
    %p56 = scmp.ne.s32.totalorder %s48, %s50
    %p57 = scmp.eq.s32.totalorder %s19, 1
    %p58 = por %p56, %p57
    %p59 = scmp.ne.s32.totalorder %s50, %s51
    %p60 = scmp.eq.s32.totalorder %s19, 0
    %p61 = por %p59, %p60
    %p62 = scmp.ne.s32.totalorder %s50, %s51
    %p63 = scmp.eq.s32.totalorder %s20, 1
    %p64 = por %p62, %p63
    %p66 = scmp.ne.s32.totalorder %s51, %s65
    %p67 = scmp.eq.s32.totalorder %s20, 0
    %p68 = por %p66, %p67
    %s70 = sadd.s32 %s69, 1
    %p73 = scmp.eq.s32.totalorder %s14, 1
    %p74 = scmp.ne.s32.totalorder %s69, %s71
    %p75 = scmp.eq.s32.totalorder %s14, 0
    %p76 = por %p74, %p75
    %p77 = scmp.ne.s32.totalorder %s69, %s71
    %p78 = scmp.eq.s32.totalorder %s19, 1
    %p79 = por %p77, %p78
    %p80 = scmp.ne.s32.totalorder %s71, %s72
    %p81 = scmp.eq.s32.totalorder %s19, 0
    %p82 = por %p80, %p81
    %p83 = scmp.ne.s32.totalorder %s71, %s72
    %p84 = scmp.eq.s32.totalorder %s20, 1
    %p85 = por %p83, %p84
    %p87 = scmp.ne.s32.totalorder %s72, %s86
    %p88 = scmp.eq.s32.totalorder %s20, 0
    %p89 = por %p87, %p88
    %s91 = sadd.s32 %s90, 1
    %p94 = scmp.eq.s32.totalorder %s14, 1
    %p95 = scmp.ne.s32.totalorder %s90, %s92
    %p96 = scmp.eq.s32.totalorder %s14, 0
    %p97 = por %p95, %p96
    %p98 = scmp.ne.s32.totalorder %s90, %s92
    %p99 = scmp.eq.s32.totalorder %s19, 1
    %p100 = por %p98, %p99
    %p101 = scmp.ne.s32.totalorder %s92, %s93
    %p102 = scmp.eq.s32.totalorder %s19, 0
    %p103 = por %p101, %p102
    %p104 = scmp.ne.s32.totalorder %s92, %s93
    %p105 = scmp.eq.s32.totalorder %s20, 1
    %p106 = por %p104, %p105
    %p108 = scmp.ne.s32.totalorder %s93, %s107
    %p109 = scmp.eq.s32.totalorder %s20, 0
    %p110 = por %p108, %p109
    %s112 = sadd.s32 %s111, 1
    %p115 = scmp.eq.s32.totalorder %s14, 1
    %p116 = scmp.ne.s32.totalorder %s111, %s113
    %p117 = scmp.eq.s32.totalorder %s14, 0
    %p118 = por %p116, %p117
    %p119 = scmp.ne.s32.totalorder %s111, %s113
    %p120 = scmp.eq.s32.totalorder %s19, 1
    %p121 = por %p119, %p120
    %p122 = scmp.ne.s32.totalorder %s113, %s114
    %p123 = scmp.eq.s32.totalorder %s19, 0
    %p124 = por %p122, %p123
    %p125 = scmp.ne.s32.totalorder %s113, %s114
    %p126 = scmp.eq.s32.totalorder %s20, 1
    %p127 = por %p125, %p126
    %p129 = scmp.ne.s32.totalorder %s114, %s128
    %p130 = scmp.eq.s32.totalorder %s20, 0
    %p131 = por %p129, %p130
    %s132 = ssub.s32 %s14, %s21
    %p133 = scmp.eq.s32.totalorder %s132, 0
    %s135 = sadd.s32 %s134, 1
    %s136 = scalar_select %p133, %s134, %s135
    %p139 = pneg %p133
    %p140 = scmp.eq.s32.totalorder %s14, 1
    %p141 = por %p139, %p140
    %p142 = scmp.ne.s32.totalorder %s134, %s137
    %p143 = scmp.eq.s32.totalorder %s14, 0
    %p144 = por %p142, %p143
    %p145 = scmp.ne.s32.totalorder %s134, %s137
    %p146 = scmp.eq.s32.totalorder %s19, 1
    %p147 = por %p145, %p146
    %p148 = scmp.ne.s32.totalorder %s137, %s138
    %p149 = scmp.eq.s32.totalorder %s19, 0
    %p150 = por %p148, %p149
    %p151 = scmp.ne.s32.totalorder %s137, %s138
    %p152 = scmp.eq.s32.totalorder %s20, 1
    %p153 = por %p151, %p152
    %p155 = scmp.ne.s32.totalorder %s138, %s154
    %p156 = scmp.eq.s32.totalorder %s20, 0
    %p157 = por %p155, %p156
    %s158 = ssub.s32 %s14, %s21
    %p159 = scmp.eq.s32.totalorder %s158, 0
    %s161 = sadd.s32 %s160, 1
    %s162 = scalar_select %p159, %s160, %s161
    %p165 = pneg %p159
    %p166 = scmp.eq.s32.totalorder %s14, 1
    %p167 = por %p165, %p166
    %p168 = scmp.ne.s32.totalorder %s160, %s163
    %p169 = scmp.eq.s32.totalorder %s14, 0
    %p170 = por %p168, %p169
    %p171 = scmp.ne.s32.totalorder %s160, %s163
    %p172 = scmp.eq.s32.totalorder %s19, 1
    %p173 = por %p171, %p172
    %p174 = scmp.ne.s32.totalorder %s163, %s164
    %p175 = scmp.eq.s32.totalorder %s19, 0
    %p176 = por %p174, %p175
    %p177 = scmp.ne.s32.totalorder %s163, %s164
    %p178 = scmp.eq.s32.totalorder %s20, 1
    %p179 = por %p177, %p178
    %p181 = scmp.ne.s32.totalorder %s164, %s180
    %p182 = scmp.eq.s32.totalorder %s20, 0
    %p183 = por %p181, %p182
    %s184 = ssub.s32 %s14, %s21
    %p185 = scmp.eq.s32.totalorder %s184, 0
    %s187 = sadd.s32 %s186, 1
    %s188 = scalar_select %p185, %s186, %s187
    %p191 = pneg %p185
    %p192 = scmp.eq.s32.totalorder %s14, 1
    %p193 = por %p191, %p192
    %p194 = scmp.ne.s32.totalorder %s186, %s189
    %p195 = scmp.eq.s32.totalorder %s14, 0
    %p196 = por %p194, %p195
    %p197 = scmp.ne.s32.totalorder %s186, %s189
    %p198 = scmp.eq.s32.totalorder %s19, 1
    %p199 = por %p197, %p198
    %p200 = scmp.ne.s32.totalorder %s189, %s190
    %p201 = scmp.eq.s32.totalorder %s19, 0
    %p202 = por %p200, %p201
    %p203 = scmp.ne.s32.totalorder %s189, %s190
    %p204 = scmp.eq.s32.totalorder %s20, 1
    %p205 = por %p203, %p204
    %p207 = scmp.ne.s32.totalorder %s190, %s206
    %p208 = scmp.eq.s32.totalorder %s20, 0
    %p209 = por %p207, %p208
    %p210 = scmp.le.s32.totalorder 1, %s14
    %p211 = scmp.lt.s32.totalorder %s14, 3
    %p212 = pnand %p210, %p211
    %p213 = pneg %p212
    // Predicated region
    $region9: #{double_conv.4} parent=5 // pred_check
      _
    $region10: #{double_conv.4} parent=5 // pred_check_branch
      %215 = sbr.rel (%p212) target = $region12
    $region11: #{double_conv.4} parent=5 // pred_region
      %s216 = ssub.s32 %s14, 1
      // Predicated region
      $region13: #{double_conv.4} parent=11 // pred_check
        %p217 = pneg %p61
      $region14: #{double_conv.4} parent=11 // pred_check_branch
        %219 = sbr.rel (%p217) target = $region16
      $region15: #{double_conv.4} parent=11 // pred_region
        _
      $region16: #{double_conv.4} parent=11 // pred_fallthru
        _
      // Predicated region
      $region17: #{double_conv.4} parent=11 // pred_check
        %p220 = pneg %p82
      $region18: #{double_conv.4} parent=11 // pred_check_branch
        %222 = sbr.rel (%p220) target = $region20
      $region19: #{double_conv.4} parent=11 // pred_region
        _
      $region20: #{double_conv.4} parent=11 // pred_fallthru
        _
      // Predicated region
      $region21: #{double_conv.4} parent=11 // pred_check
        %p223 = pneg %p103
      $region22: #{double_conv.4} parent=11 // pred_check_branch
        %225 = sbr.rel (%p223) target = $region24
      $region23: #{double_conv.4} parent=11 // pred_region
        _
      $region24: #{double_conv.4} parent=11 // pred_fallthru
        _
      // Predicated region
      $region25: #{double_conv.4} parent=11 // pred_check
        %p226 = pneg %p124
      $region26: #{double_conv.4} parent=11 // pred_check_branch
        %228 = sbr.rel (%p226) target = $region28
      $region27: #{double_conv.4} parent=11 // pred_region
        _
      $region28: #{double_conv.4} parent=11 // pred_fallthru
        _
    $region12: #{double_conv.4} parent=5 // pred_fallthru
      _
    %p229 = scmp.lt.s32.totalorder %s14, 2
    // Predicated region
    $region29: #{double_conv.4} parent=5 // pred_check
      %p230 = pneg %p229
    $region30: #{double_conv.4} parent=5 // pred_check_branch
      %232 = sbr.rel (%p230) target = $region32
    $region31: #{double_conv.4} parent=5 // pred_region
      // Predicated region
      $region33: #{double_conv.4} parent=31 // pred_check
        %p233 = pneg %p34
      $region34: #{double_conv.4} parent=31 // pred_check_branch
        %235 = sbr.rel (%p233) target = $region36
      $region35: #{double_conv.4} parent=31 // pred_region
        %p236 = scmp.lt.s32.totalorder %s14, 1
        %s237 = scalar_select %p236, %s14, 1
        %s238 = smul.addr %s237, 36
        %s239 = smul.addr %s238, 4
        %s240 = scalar_lea.vmem %s0, %s239
      $region36: #{double_conv.4} parent=31 // pred_fallthru
        _
    $region32: #{double_conv.4} parent=5 // pred_fallthru
      _
    %p241 = scmp.le.s32.totalorder 1, %s14
    %p242 = scmp.lt.s32.totalorder %s14, 3
    %p243 = pnand %p241, %p242
    %p244 = pneg %p243
    // Predicated region
    $region37: #{double_conv.4} parent=5 // pred_check
      _
    $region38: #{double_conv.4} parent=5 // pred_check_branch
      %246 = sbr.rel (%p243) target = $region40
    $region39: #{double_conv.4} parent=5 // pred_region
      %s247 = ssub.s32 %s14, 1
      %p248 = scmp.lt.s32.totalorder %s19, 1
      %s249 = scalar_select %p248, %s19, 1
      %s250 = smul.addr %s249, 36
      %s251 = smul.addr %s250, 4
      %s252 = scalar_lea.vmem %s0, %s251
      %p253 = pneg %p40
      %p254 = pneg %p37
      %p255 = pneg %p61
      %p256 = pneg %p58
      %p257 = pneg %p82
      %p258 = pneg %p79
      %p259 = pneg %p103
      %p260 = pneg %p100
      %p261 = pneg %p124
      %p262 = pneg %p121
      %p263 = pneg %p150
      %p264 = pneg %p147
      %p265 = scmp.lt.s32.totalorder %s19, 1
      %s266 = scalar_select %p265, %s19, 1
      %s267 = smul.addr %s266, 36
      %s268 = smul.addr %s267, 4
      %s269 = scalar_lea.vmem %s5, %s268
      %p270 = pneg %p176
      %p271 = pneg %p173
      %p272 = scmp.lt.s32.totalorder %s19, 1
      %s273 = scalar_select %p272, %s19, 1
      %s274 = scalar_lea.vmem %s6, %s273
      %p275 = pneg %p202
      %p276 = pneg %p199
      %p277 = scmp.lt.s32.totalorder %s19, 1
      %s278 = scalar_select %p277, %s19, 1
      %s279 = scalar_lea.vmem %s7, %s278
      %p280 = scmp.lt.s32.totalorder %s19, 1
      %s281 = scalar_select %p280, %s19, 1
      %s282 = smul.addr %s281, 36
      %s283 = smul.addr %s282, 4
      %s284 = scalar_lea.vmem %s0, %s283
      %p285 = scmp.lt.s32.totalorder %s19, 1
      %s286 = scalar_select %p285, %s19, 1
      %s287 = smul.addr %s286, 36
      %s288 = smul.addr %s287, 4
      %s289 = scalar_lea.vmem %s5, %s288
      %p290 = scmp.lt.s32.totalorder %s19, 1
      %s291 = scalar_select %p290, %s19, 1
      %s292 = scalar_lea.vmem %s6, %s291
      %p293 = scmp.lt.s32.totalorder %s19, 1
      %s294 = scalar_select %p293, %s19, 1
      %s295 = scalar_lea.vmem %s7, %s294
      %v297 = vld [vmem:[%s4] sm:$0xff]
      %v298 = vld [vmem:[%s4 + $0x8] sm:$0xff]
      %v299 = vld [vmem:[%s4 + $0x10] sm:$0xff]
      %v300 = vld [vmem:[%s4 + $0x18] sm:$0xff]
      %v301 = vld [vmem:[%s4 + $0x20] sm:$0xff]
      %v302 = vld [vmem:[%s4 + $0x28] sm:$0xff]
      %v303 = vld [vmem:[%s4 + $0x30] sm:$0xff]
      %v304 = vld [vmem:[%s4 + $0x38] sm:$0xff]
      %v305 = vld [vmem:[%s4 + $0x40] sm:$0xff]
      %v306 = vld [vmem:[%s4 + $0x48] sm:$0xff]
      %v307 = vld [vmem:[%s4 + $0x50] sm:$0xff]
      %v308 = vld [vmem:[%s4 + $0x58] sm:$0xff]
      %v309 = vld [vmem:[%s4 + $0x60] sm:$0xff]
      %v310 = vld [vmem:[%s4 + $0x68] sm:$0xff]
      %v311 = vld [vmem:[%s4 + $0x70] sm:$0xff]
      %v312 = vld [vmem:[%s4 + $0x78] sm:$0xff]
      %v313 = vld [vmem:[%s4 + $0x80] sm:$0xff]
      %v314 = vld [vmem:[%s4 + $0x88] sm:$0xff]
      %v315 = vld [vmem:[%s4 + $0x90] sm:$0xff]
      %v316 = vld [vmem:[%s4 + $0x98] sm:$0xff]
      %v317 = vld [vmem:[%s4 + $0xa0] sm:$0xff]
      %v318 = vld [vmem:[%s4 + $0xa8] sm:$0xff]
      %v319 = vld [vmem:[%s4 + $0xb0] sm:$0xff]
      %v320 = vld [vmem:[%s4 + $0xb8] sm:$0xff]
      %v321 = vld [vmem:[%s4 + $0xc0] sm:$0xff]
      %v322 = vld [vmem:[%s4 + $0xc8] sm:$0xff]
      %v323 = vld [vmem:[%s4 + $0xd0] sm:$0xff]
      %v324 = vld [vmem:[%s4 + $0xd8] sm:$0xff]
      %v325 = vld [vmem:[%s4 + $0xe0] sm:$0xff]
      %v326 = vld [vmem:[%s4 + $0xe8] sm:$0xff]
      %v327 = vld [vmem:[%s4 + $0xf0] sm:$0xff]
      %v328 = vld [vmem:[%s4 + $0xf8] sm:$0xff]
      %v329 = vld [vmem:[%s4 + $0x100] sm:$0xff]
      %v330 = vld [vmem:[%s4 + $0x108] sm:$0xff]
      %v331 = vld [vmem:[%s4 + $0x110] sm:$0xff]
      %v332 = vld [vmem:[%s4 + $0x118] sm:$0xff]
      %v333 = vld [vmem:[%s284] sm:$0xf]
      %v334 = vld [vmem:[%s284 + $0x4] sm:$0xf]
      %v335 = vld [vmem:[%s284 + $0x8] sm:$0xf]
      %v336 = vld [vmem:[%s284 + $0xc] sm:$0xf]
      %v337 = vld [vmem:[%s284 + $0x10] sm:$0xf]
      %v338 = vld [vmem:[%s284 + $0x14] sm:$0xf]
      %v339 = vld [vmem:[%s284 + $0x18] sm:$0xf]
      %v340 = vld [vmem:[%s284 + $0x1c] sm:$0xf]
      %v341 = vld [vmem:[%s284 + $0x20] sm:$0xf]
      %v342 = vld [vmem:[%s284 + $0x24] sm:$0xf]
      %v343 = vld [vmem:[%s284 + $0x28] sm:$0xf]
      %v344 = vld [vmem:[%s284 + $0x2c] sm:$0xf]
      %v345 = vld [vmem:[%s284 + $0x30] sm:$0xf]
      %v346 = vld [vmem:[%s284 + $0x34] sm:$0xf]
      %v347 = vld [vmem:[%s284 + $0x38] sm:$0xf]
      %v348 = vld [vmem:[%s284 + $0x3c] sm:$0xf]
      %v349 = vld [vmem:[%s284 + $0x40] sm:$0xf]
      %v350 = vld [vmem:[%s284 + $0x44] sm:$0xf]
      %v351 = vld [vmem:[%s284 + $0x48] sm:$0xf]
      %v352 = vld [vmem:[%s284 + $0x4c] sm:$0xf]
      %v353 = vld [vmem:[%s284 + $0x50] sm:$0xf]
      %v354 = vld [vmem:[%s284 + $0x54] sm:$0xf]
      %v355 = vld [vmem:[%s284 + $0x58] sm:$0xf]
      %v356 = vld [vmem:[%s284 + $0x5c] sm:$0xf]
      %v357 = vld [vmem:[%s284 + $0x60] sm:$0xf]
      %v358 = vld [vmem:[%s284 + $0x64] sm:$0xf]
      %v359 = vld [vmem:[%s284 + $0x68] sm:$0xf]
      %v360 = vld [vmem:[%s284 + $0x6c] sm:$0xf]
      %v361 = vld [vmem:[%s284 + $0x70] sm:$0xf]
      %v362 = vld [vmem:[%s284 + $0x74] sm:$0xf]
      %v363 = vld [vmem:[%s284 + $0x78] sm:$0xf]
      %v364 = vld [vmem:[%s284 + $0x7c] sm:$0xf]
      %v365 = vld [vmem:[%s284 + $0x80] sm:$0xf]
      %v366 = vld [vmem:[%s284 + $0x84] sm:$0xf]
      %v367 = vld [vmem:[%s284 + $0x88] sm:$0xf]
      %v368 = vld [vmem:[%s284 + $0x8c] sm:$0xf]
      %v369 = vunpack.c.l.bf16 %v333
      %v370 = vunpack.c.l.bf16 %v334
      %v371 = vunpack.c.l.bf16 %v335
      %v372 = vunpack.c.l.bf16 %v336
      %v373 = vunpack.c.l.bf16 %v337
      %v374 = vunpack.c.l.bf16 %v338
      %v375 = vunpack.c.l.bf16 %v339
      %v376 = vunpack.c.l.bf16 %v340
      %v377 = vunpack.c.l.bf16 %v341
      %v378 = vunpack.c.l.bf16 %v342
      %v379 = vunpack.c.l.bf16 %v343
      %v380 = vunpack.c.l.bf16 %v344
      %v381 = vunpack.c.l.bf16 %v345
      %v382 = vunpack.c.l.bf16 %v346
      %v383 = vunpack.c.l.bf16 %v347
      %v384 = vunpack.c.l.bf16 %v348
      %v385 = vunpack.c.l.bf16 %v349
      %v386 = vunpack.c.l.bf16 %v350
      %v387 = vunpack.c.l.bf16 %v351
      %v388 = vunpack.c.l.bf16 %v352
      %v389 = vunpack.c.l.bf16 %v353
      %v390 = vunpack.c.l.bf16 %v354
      %v391 = vunpack.c.l.bf16 %v355
      %v392 = vunpack.c.l.bf16 %v356
      %v393 = vunpack.c.l.bf16 %v357
      %v394 = vunpack.c.l.bf16 %v358
      %v395 = vunpack.c.l.bf16 %v359
      %v396 = vunpack.c.l.bf16 %v360
      %v397 = vunpack.c.l.bf16 %v361
      %v398 = vunpack.c.l.bf16 %v362
      %v399 = vunpack.c.l.bf16 %v363
      %v400 = vunpack.c.l.bf16 %v364
      %v401 = vunpack.c.l.bf16 %v365
      %v402 = vunpack.c.l.bf16 %v366
      %v403 = vunpack.c.l.bf16 %v367
      %v404 = vunpack.c.l.bf16 %v368
      %v405 = vld [vmem:[%s1] sm:$0x1]
      %v407 = vlaneseq
      %v408 = vshrl.u32 %v407, 7
      %v409 = vsub.s32 0, %v408
      %v410 = vrot.slane %v405, %v409
      %v412 = vmul.f32 %v369, %v410
      %v413 = vmul.f32 %v370, %v410
      %v414 = vmul.f32 %v371, %v410
      %v415 = vmul.f32 %v372, %v410
      %v416 = vmul.f32 %v373, %v410
      %v417 = vmul.f32 %v374, %v410
      %v418 = vmul.f32 %v375, %v410
      %v419 = vmul.f32 %v376, %v410
      %v420 = vmul.f32 %v377, %v410
      %v421 = vmul.f32 %v378, %v410
      %v422 = vmul.f32 %v379, %v410
      %v423 = vmul.f32 %v380, %v410
      %v424 = vmul.f32 %v381, %v410
      %v425 = vmul.f32 %v382, %v410
      %v426 = vmul.f32 %v383, %v410
      %v427 = vmul.f32 %v384, %v410
      %v428 = vmul.f32 %v385, %v410
      %v429 = vmul.f32 %v386, %v410
      %v430 = vmul.f32 %v387, %v410
      %v431 = vmul.f32 %v388, %v410
      %v432 = vmul.f32 %v389, %v410
      %v433 = vmul.f32 %v390, %v410
      %v434 = vmul.f32 %v391, %v410
      %v435 = vmul.f32 %v392, %v410
      %v436 = vmul.f32 %v393, %v410
      %v437 = vmul.f32 %v394, %v410
      %v438 = vmul.f32 %v395, %v410
      %v439 = vmul.f32 %v396, %v410
      %v440 = vmul.f32 %v397, %v410
      %v441 = vmul.f32 %v398, %v410
      %v442 = vmul.f32 %v399, %v410
      %v443 = vmul.f32 %v400, %v410
      %v444 = vmul.f32 %v401, %v410
      %v445 = vmul.f32 %v402, %v410
      %v446 = vmul.f32 %v403, %v410
      %v447 = vmul.f32 %v404, %v410
      %v448 = vld [vmem:[%s2] sm:$0x1]
      %v450 = vlaneseq
      %v451 = vshrl.u32 %v450, 7
      %v452 = vsub.s32 0, %v451
      %v453 = vrot.slane %v448, %v452
      %v455 = vadd.f32 %v412, %v453
      %v456 = vadd.f32 %v413, %v453
      %v457 = vadd.f32 %v414, %v453
      %v458 = vadd.f32 %v415, %v453
      %v459 = vadd.f32 %v416, %v453
      %v460 = vadd.f32 %v417, %v453
      %v461 = vadd.f32 %v418, %v453
      %v462 = vadd.f32 %v419, %v453
      %v463 = vadd.f32 %v420, %v453
      %v464 = vadd.f32 %v421, %v453
      %v465 = vadd.f32 %v422, %v453
      %v466 = vadd.f32 %v423, %v453
      %v467 = vadd.f32 %v424, %v453
      %v468 = vadd.f32 %v425, %v453
      %v469 = vadd.f32 %v426, %v453
      %v470 = vadd.f32 %v427, %v453
      %v471 = vadd.f32 %v428, %v453
      %v472 = vadd.f32 %v429, %v453
      %v473 = vadd.f32 %v430, %v453
      %v474 = vadd.f32 %v431, %v453
      %v475 = vadd.f32 %v432, %v453
      %v476 = vadd.f32 %v433, %v453
      %v477 = vadd.f32 %v434, %v453
      %v478 = vadd.f32 %v435, %v453
      %v479 = vadd.f32 %v436, %v453
      %v480 = vadd.f32 %v437, %v453
      %v481 = vadd.f32 %v438, %v453
      %v482 = vadd.f32 %v439, %v453
      %v483 = vadd.f32 %v440, %v453
      %v484 = vadd.f32 %v441, %v453
      %v485 = vadd.f32 %v442, %v453
      %v486 = vadd.f32 %v443, %v453
      %v487 = vadd.f32 %v444, %v453
      %v488 = vadd.f32 %v445, %v453
      %v489 = vadd.f32 %v446, %v453
      %v490 = vadd.f32 %v447, %v453
      %v491 = vmax.f32 %v455, 0.0
      %v492 = vmax.f32 %v456, 0.0
      %v493 = vmax.f32 %v457, 0.0
      %v494 = vmax.f32 %v458, 0.0
      %v495 = vmax.f32 %v459, 0.0
      %v496 = vmax.f32 %v460, 0.0
      %v497 = vmax.f32 %v461, 0.0
      %v498 = vmax.f32 %v462, 0.0
      %v499 = vmax.f32 %v463, 0.0
      %v500 = vmax.f32 %v464, 0.0
      %v501 = vmax.f32 %v465, 0.0
      %v502 = vmax.f32 %v466, 0.0
      %v503 = vmax.f32 %v467, 0.0
      %v504 = vmax.f32 %v468, 0.0
      %v505 = vmax.f32 %v469, 0.0
      %v506 = vmax.f32 %v470, 0.0
      %v507 = vmax.f32 %v471, 0.0
      %v508 = vmax.f32 %v472, 0.0
      %v509 = vmax.f32 %v473, 0.0
      %v510 = vmax.f32 %v474, 0.0
      %v511 = vmax.f32 %v475, 0.0
      %v512 = vmax.f32 %v476, 0.0
      %v513 = vmax.f32 %v477, 0.0
      %v514 = vmax.f32 %v478, 0.0
      %v515 = vmax.f32 %v479, 0.0
      %v516 = vmax.f32 %v480, 0.0
      %v517 = vmax.f32 %v481, 0.0
      %v518 = vmax.f32 %v482, 0.0
      %v519 = vmax.f32 %v483, 0.0
      %v520 = vmax.f32 %v484, 0.0
      %v521 = vmax.f32 %v485, 0.0
      %v522 = vmax.f32 %v486, 0.0
      %v523 = vmax.f32 %v487, 0.0
      %v524 = vmax.f32 %v488, 0.0
      %v525 = vmax.f32 %v489, 0.0
      %v526 = vmax.f32 %v490, 0.0
      %528 = vset.pattern.permute.xlu0 0
      %529 = vperm.xlu0 %528, %v297
      %v530 = vpop.permute.xlu0 %529
      %533 = vset.pattern.permute.xlu0 0
      %534 = vperm.xlu0 %533, %v298
      %v535 = vpop.permute.xlu0 %534
      %538 = vset.pattern.permute.xlu0 0
      %539 = vperm.xlu0 %538, %v299
      %v540 = vpop.permute.xlu0 %539
      %543 = vset.pattern.permute.xlu0 0
      %544 = vperm.xlu0 %543, %v300
      %v545 = vpop.permute.xlu0 %544
      %548 = vset.pattern.permute.xlu0 0
      %549 = vperm.xlu0 %548, %v301
      %v550 = vpop.permute.xlu0 %549
      %553 = vset.pattern.permute.xlu0 0
      %554 = vperm.xlu0 %553, %v302
      %v555 = vpop.permute.xlu0 %554
      %558 = vset.pattern.permute.xlu0 0
      %559 = vperm.xlu0 %558, %v303
      %v560 = vpop.permute.xlu0 %559
      %563 = vset.pattern.permute.xlu0 0
      %564 = vperm.xlu0 %563, %v304
      %v565 = vpop.permute.xlu0 %564
      %568 = vset.pattern.permute.xlu0 0
      %569 = vperm.xlu0 %568, %v305
      %v570 = vpop.permute.xlu0 %569
      %573 = vset.pattern.permute.xlu0 0
      %574 = vperm.xlu0 %573, %v306
      %v575 = vpop.permute.xlu0 %574
      %578 = vset.pattern.permute.xlu0 0
      %579 = vperm.xlu0 %578, %v307
      %v580 = vpop.permute.xlu0 %579
      %583 = vset.pattern.permute.xlu0 0
      %584 = vperm.xlu0 %583, %v308
      %v585 = vpop.permute.xlu0 %584
      %588 = vset.pattern.permute.xlu0 0
      %589 = vperm.xlu0 %588, %v309
      %v590 = vpop.permute.xlu0 %589
      %593 = vset.pattern.permute.xlu0 0
      %594 = vperm.xlu0 %593, %v310
      %v595 = vpop.permute.xlu0 %594
      %598 = vset.pattern.permute.xlu0 0
      %599 = vperm.xlu0 %598, %v311
      %v600 = vpop.permute.xlu0 %599
      %603 = vset.pattern.permute.xlu0 0
      %604 = vperm.xlu0 %603, %v312
      %v605 = vpop.permute.xlu0 %604
      %608 = vset.pattern.permute.xlu0 0
      %609 = vperm.xlu0 %608, %v313
      %v610 = vpop.permute.xlu0 %609
      %613 = vset.pattern.permute.xlu0 0
      %614 = vperm.xlu0 %613, %v314
      %v615 = vpop.permute.xlu0 %614
      %618 = vset.pattern.permute.xlu0 0
      %619 = vperm.xlu0 %618, %v315
      %v620 = vpop.permute.xlu0 %619
      %623 = vset.pattern.permute.xlu0 0
      %624 = vperm.xlu0 %623, %v316
      %v625 = vpop.permute.xlu0 %624
      %628 = vset.pattern.permute.xlu0 0
      %629 = vperm.xlu0 %628, %v317
      %v630 = vpop.permute.xlu0 %629
      %633 = vset.pattern.permute.xlu0 0
      %634 = vperm.xlu0 %633, %v318
      %v635 = vpop.permute.xlu0 %634
      %638 = vset.pattern.permute.xlu0 0
      %639 = vperm.xlu0 %638, %v319
      %v640 = vpop.permute.xlu0 %639
      %643 = vset.pattern.permute.xlu0 0
      %644 = vperm.xlu0 %643, %v320
      %v645 = vpop.permute.xlu0 %644
      %648 = vset.pattern.permute.xlu0 0
      %649 = vperm.xlu0 %648, %v321
      %v650 = vpop.permute.xlu0 %649
      %653 = vset.pattern.permute.xlu0 0
      %654 = vperm.xlu0 %653, %v322
      %v655 = vpop.permute.xlu0 %654
      %658 = vset.pattern.permute.xlu0 0
      %659 = vperm.xlu0 %658, %v323
      %v660 = vpop.permute.xlu0 %659
      %663 = vset.pattern.permute.xlu0 0
      %664 = vperm.xlu0 %663, %v324
      %v665 = vpop.permute.xlu0 %664
      %668 = vset.pattern.permute.xlu0 0
      %669 = vperm.xlu0 %668, %v325
      %v670 = vpop.permute.xlu0 %669
      %673 = vset.pattern.permute.xlu0 0
      %674 = vperm.xlu0 %673, %v326
      %v675 = vpop.permute.xlu0 %674
      %678 = vset.pattern.permute.xlu0 0
      %679 = vperm.xlu0 %678, %v327
      %v680 = vpop.permute.xlu0 %679
      %683 = vset.pattern.permute.xlu0 0
      %684 = vperm.xlu0 %683, %v328
      %v685 = vpop.permute.xlu0 %684
      %688 = vset.pattern.permute.xlu0 0
      %689 = vperm.xlu0 %688, %v329
      %v690 = vpop.permute.xlu0 %689
      %693 = vset.pattern.permute.xlu0 0
      %694 = vperm.xlu0 %693, %v330
      %v695 = vpop.permute.xlu0 %694
      %698 = vset.pattern.permute.xlu0 0
      %699 = vperm.xlu0 %698, %v331
      %v700 = vpop.permute.xlu0 %699
      %703 = vset.pattern.permute.xlu0 0
      %704 = vperm.xlu0 %703, %v332
      %v705 = vpop.permute.xlu0 %704
      %v707 = vmul.f32 %v491, %v530
      %v708 = vmul.f32 %v492, %v535
      %v709 = vmul.f32 %v493, %v540
      %v710 = vmul.f32 %v494, %v545
      %v711 = vmul.f32 %v495, %v550
      %v712 = vmul.f32 %v496, %v555
      %v713 = vmul.f32 %v497, %v560
      %v714 = vmul.f32 %v498, %v565
      %v715 = vmul.f32 %v499, %v570
      %v716 = vmul.f32 %v500, %v575
      %v717 = vmul.f32 %v501, %v580
      %v718 = vmul.f32 %v502, %v585
      %v719 = vmul.f32 %v503, %v590
      %v720 = vmul.f32 %v504, %v595
      %v721 = vmul.f32 %v505, %v600
      %v722 = vmul.f32 %v506, %v605
      %v723 = vmul.f32 %v507, %v610
      %v724 = vmul.f32 %v508, %v615
      %v725 = vmul.f32 %v509, %v620
      %v726 = vmul.f32 %v510, %v625
      %v727 = vmul.f32 %v511, %v630
      %v728 = vmul.f32 %v512, %v635
      %v729 = vmul.f32 %v513, %v640
      %v730 = vmul.f32 %v514, %v645
      %v731 = vmul.f32 %v515, %v650
      %v732 = vmul.f32 %v516, %v655
      %v733 = vmul.f32 %v517, %v660
      %v734 = vmul.f32 %v518, %v665
      %v735 = vmul.f32 %v519, %v670
      %v736 = vmul.f32 %v520, %v675
      %v737 = vmul.f32 %v521, %v680
      %v738 = vmul.f32 %v522, %v685
      %v739 = vmul.f32 %v523, %v690
      %v740 = vmul.f32 %v524, %v695
      %v741 = vmul.f32 %v525, %v700
      %v742 = vmul.f32 %v526, %v705
      %743 = vst [vmem:[#allocation2] sm:$0xff] 0.0
      %744 = vst [vmem:[#allocation2 + $0x8] sm:$0xff] 0.0
      %745 = vst [vmem:[#allocation2 + $0x10] sm:$0xff] 0.0
      %746 = vst [vmem:[#allocation2 + $0x18] sm:$0xff] 0.0
      %747 = vst [vmem:[#allocation2 + $0x140] sm:$0xff] 0.0
      %748 = vst [vmem:[#allocation2 + $0x148] sm:$0xff] 0.0
      %749 = vst [vmem:[#allocation2 + $0x150] sm:$0xff] 0.0
      %750 = vst [vmem:[#allocation2 + $0x158] sm:$0xff] 0.0
      %751 = vst [vmem:[#allocation2 + $0x20] sm:$0xff] %v707
      %752 = vst [vmem:[#allocation2 + $0x28] sm:$0xff] %v708
      %753 = vst [vmem:[#allocation2 + $0x30] sm:$0xff] %v709
      %754 = vst [vmem:[#allocation2 + $0x38] sm:$0xff] %v710
      %755 = vst [vmem:[#allocation2 + $0x40] sm:$0xff] %v711
      %756 = vst [vmem:[#allocation2 + $0x48] sm:$0xff] %v712
      %757 = vst [vmem:[#allocation2 + $0x50] sm:$0xff] %v713
      %758 = vst [vmem:[#allocation2 + $0x58] sm:$0xff] %v714
      %759 = vst [vmem:[#allocation2 + $0x60] sm:$0xff] %v715
      %760 = vst [vmem:[#allocation2 + $0x68] sm:$0xff] %v716
      %761 = vst [vmem:[#allocation2 + $0x70] sm:$0xff] %v717
      %762 = vst [vmem:[#allocation2 + $0x78] sm:$0xff] %v718
      %763 = vst [vmem:[#allocation2 + $0x80] sm:$0xff] %v719
      %764 = vst [vmem:[#allocation2 + $0x88] sm:$0xff] %v720
      %765 = vst [vmem:[#allocation2 + $0x90] sm:$0xff] %v721
      %766 = vst [vmem:[#allocation2 + $0x98] sm:$0xff] %v722
      %767 = vst [vmem:[#allocation2 + $0xa0] sm:$0xff] %v723
      %768 = vst [vmem:[#allocation2 + $0xa8] sm:$0xff] %v724
      %769 = vst [vmem:[#allocation2 + $0xb0] sm:$0xff] %v725
      %770 = vst [vmem:[#allocation2 + $0xb8] sm:$0xff] %v726
      %771 = vst [vmem:[#allocation2 + $0xc0] sm:$0xff] %v727
      %772 = vst [vmem:[#allocation2 + $0xc8] sm:$0xff] %v728
      %773 = vst [vmem:[#allocation2 + $0xd0] sm:$0xff] %v729
      %774 = vst [vmem:[#allocation2 + $0xd8] sm:$0xff] %v730
      %775 = vst [vmem:[#allocation2 + $0xe0] sm:$0xff] %v731
      %776 = vst [vmem:[#allocation2 + $0xe8] sm:$0xff] %v732
      %777 = vst [vmem:[#allocation2 + $0xf0] sm:$0xff] %v733
      %778 = vst [vmem:[#allocation2 + $0xf8] sm:$0xff] %v734
      %779 = vst [vmem:[#allocation2 + $0x100] sm:$0xff] %v735
      %780 = vst [vmem:[#allocation2 + $0x108] sm:$0xff] %v736
      %781 = vst [vmem:[#allocation2 + $0x110] sm:$0xff] %v737
      %782 = vst [vmem:[#allocation2 + $0x118] sm:$0xff] %v738
      %783 = vst [vmem:[#allocation2 + $0x120] sm:$0xff] %v739
      %784 = vst [vmem:[#allocation2 + $0x128] sm:$0xff] %v740
      %785 = vst [vmem:[#allocation2 + $0x130] sm:$0xff] %v741
      %786 = vst [vmem:[#allocation2 + $0x138] sm:$0xff] %v742
      %v787 = vld [vmem:[#allocation2 + $0xd] sm:$0xff]
      %v788 = vld [vmem:[#allocation2 + $0x15] sm:$0xff]
      %v789 = vld [vmem:[#allocation2 + $0x1d] sm:$0xff]
      %v790 = vld [vmem:[#allocation2 + $0x25] sm:$0xff]
      %v791 = vld [vmem:[#allocation2 + $0x2d] sm:$0xff]
      %v792 = vld [vmem:[#allocation2 + $0x35] sm:$0xff]
      %v793 = vld [vmem:[#allocation2 + $0x3d] sm:$0xff]
      %v794 = vld [vmem:[#allocation2 + $0x45] sm:$0xff]
      %v795 = vld [vmem:[#allocation2 + $0x4d] sm:$0xff]
      %v796 = vld [vmem:[#allocation2 + $0x55] sm:$0xff]
      %v797 = vld [vmem:[#allocation2 + $0x5d] sm:$0xff]
      %v798 = vld [vmem:[#allocation2 + $0x65] sm:$0xff]
      %v799 = vld [vmem:[#allocation2 + $0x6d] sm:$0xff]
      %v800 = vld [vmem:[#allocation2 + $0x75] sm:$0xff]
      %v801 = vld [vmem:[#allocation2 + $0x7d] sm:$0xff]
      %v802 = vld [vmem:[#allocation2 + $0x85] sm:$0xff]
      %v803 = vld [vmem:[#allocation2 + $0x8d] sm:$0xff]
      %v804 = vld [vmem:[#allocation2 + $0x95] sm:$0xff]
      %v805 = vld [vmem:[#allocation2 + $0x9d] sm:$0xff]
      %v806 = vld [vmem:[#allocation2 + $0xa5] sm:$0xff]
      %v807 = vld [vmem:[#allocation2 + $0xad] sm:$0xff]
      %v808 = vld [vmem:[#allocation2 + $0xb5] sm:$0xff]
      %v809 = vld [vmem:[#allocation2 + $0xbd] sm:$0xff]
      %v810 = vld [vmem:[#allocation2 + $0xc5] sm:$0xff]
      %v811 = vld [vmem:[#allocation2 + $0xcd] sm:$0xff]
      %v812 = vld [vmem:[#allocation2 + $0xd5] sm:$0xff]
      %v813 = vld [vmem:[#allocation2 + $0xdd] sm:$0xff]
      %v814 = vld [vmem:[#allocation2 + $0xe5] sm:$0xff]
      %v815 = vld [vmem:[#allocation2 + $0xed] sm:$0xff]
      %v816 = vld [vmem:[#allocation2 + $0xf5] sm:$0xff]
      %v817 = vld [vmem:[#allocation2 + $0xfd] sm:$0xff]
      %v818 = vld [vmem:[#allocation2 + $0x105] sm:$0xff]
      %v819 = vld [vmem:[#allocation2 + $0x10d] sm:$0xff]
      %v820 = vld [vmem:[#allocation2 + $0x115] sm:$0xff]
      %v821 = vld [vmem:[#allocation2 + $0x11d] sm:$0xff]
      %v822 = vld [vmem:[#allocation2 + $0x125] sm:$0xff]
      %v823 = vpack.c.bf16 %v788, %v787
      %v824 = vpack.c.bf16 %v790, %v789
      %v825 = vpack.c.bf16 %v792, %v791
      %v826 = vpack.c.bf16 %v794, %v793
      %v827 = vpack.c.bf16 %v796, %v795
      %v828 = vpack.c.bf16 %v798, %v797
      %v829 = vpack.c.bf16 %v800, %v799
      %v830 = vpack.c.bf16 %v802, %v801
      %v831 = vpack.c.bf16 %v804, %v803
      %v832 = vpack.c.bf16 %v806, %v805
      %v833 = vpack.c.bf16 %v808, %v807
      %v834 = vpack.c.bf16 %v810, %v809
      %v835 = vpack.c.bf16 %v812, %v811
      %v836 = vpack.c.bf16 %v814, %v813
      %v837 = vpack.c.bf16 %v816, %v815
      %v838 = vpack.c.bf16 %v818, %v817
      %v839 = vpack.c.bf16 %v820, %v819
      %v840 = vpack.c.bf16 %v822, %v821
      %v841 = vld [vmem:[%s3] sm:$0xf]
      %v842 = vld [vmem:[%s3 + $0x4] sm:$0xf]
      %v843 = vld [vmem:[%s3 + $0x8] sm:$0xf]
      %v844 = vld [vmem:[%s3 + $0xc] sm:$0xf]
      %v845 = vld [vmem:[%s3 + $0x10] sm:$0xf]
      %v846 = vld [vmem:[%s3 + $0x14] sm:$0xf]
      %v847 = vld [vmem:[%s3 + $0x18] sm:$0xf]
      %v848 = vld [vmem:[%s3 + $0x1c] sm:$0xf]
      %v849 = vld [vmem:[%s3 + $0x20] sm:$0xf]
      %v850 = vld [vmem:[%s3 + $0x24] sm:$0xf]
      %v851 = vld [vmem:[%s3 + $0x28] sm:$0xf]
      %v852 = vld [vmem:[%s3 + $0x2c] sm:$0xf]
      %v853 = vld [vmem:[%s3 + $0x30] sm:$0xf]
      %v854 = vld [vmem:[%s3 + $0x34] sm:$0xf]
      %v855 = vld [vmem:[%s3 + $0x38] sm:$0xf]
      %v856 = vld [vmem:[%s3 + $0x3c] sm:$0xf]
      %v857 = vld [vmem:[#allocation2 + $0xe] sm:$0xff]
      %v858 = vld [vmem:[#allocation2 + $0x16] sm:$0xff]
      %v859 = vld [vmem:[#allocation2 + $0x1e] sm:$0xff]
      %v860 = vld [vmem:[#allocation2 + $0x26] sm:$0xff]
      %v861 = vld [vmem:[#allocation2 + $0x2e] sm:$0xff]
      %v862 = vld [vmem:[#allocation2 + $0x36] sm:$0xff]
      %v863 = vld [vmem:[#allocation2 + $0x3e] sm:$0xff]
      %v864 = vld [vmem:[#allocation2 + $0x46] sm:$0xff]
      %v865 = vld [vmem:[#allocation2 + $0x4e] sm:$0xff]
      %v866 = vld [vmem:[#allocation2 + $0x56] sm:$0xff]
      %v867 = vld [vmem:[#allocation2 + $0x5e] sm:$0xff]
      %v868 = vld [vmem:[#allocation2 + $0x66] sm:$0xff]
      %v869 = vld [vmem:[#allocation2 + $0x6e] sm:$0xff]
      %v870 = vld [vmem:[#allocation2 + $0x76] sm:$0xff]
      %v871 = vld [vmem:[#allocation2 + $0x7e] sm:$0xff]
      %v872 = vld [vmem:[#allocation2 + $0x86] sm:$0xff]
      %v873 = vld [vmem:[#allocation2 + $0x8e] sm:$0xff]
      %v874 = vld [vmem:[#allocation2 + $0x96] sm:$0xff]
      %v875 = vld [vmem:[#allocation2 + $0x9e] sm:$0xff]
      %v876 = vld [vmem:[#allocation2 + $0xa6] sm:$0xff]
      %v877 = vld [vmem:[#allocation2 + $0xae] sm:$0xff]
      %v878 = vld [vmem:[#allocation2 + $0xb6] sm:$0xff]
      %v879 = vld [vmem:[#allocation2 + $0xbe] sm:$0xff]
      %v880 = vld [vmem:[#allocation2 + $0xc6] sm:$0xff]
      %v881 = vld [vmem:[#allocation2 + $0xce] sm:$0xff]
      %v882 = vld [vmem:[#allocation2 + $0xd6] sm:$0xff]
      %v883 = vld [vmem:[#allocation2 + $0xde] sm:$0xff]
      %v884 = vld [vmem:[#allocation2 + $0xe6] sm:$0xff]
      %v885 = vld [vmem:[#allocation2 + $0xee] sm:$0xff]
      %v886 = vld [vmem:[#allocation2 + $0xf6] sm:$0xff]
      %v887 = vld [vmem:[#allocation2 + $0xfe] sm:$0xff]
      %v888 = vld [vmem:[#allocation2 + $0x106] sm:$0xff]
      %v889 = vld [vmem:[#allocation2 + $0x10e] sm:$0xff]
      %v890 = vld [vmem:[#allocation2 + $0x116] sm:$0xff]
      %v891 = vld [vmem:[#allocation2 + $0x11e] sm:$0xff]
      %v892 = vld [vmem:[#allocation2 + $0x126] sm:$0xff]
      %v893 = vpack.c.bf16 %v858, %v857
      %v894 = vpack.c.bf16 %v860, %v859
      %v895 = vpack.c.bf16 %v862, %v861
      %v896 = vpack.c.bf16 %v864, %v863
      %v897 = vpack.c.bf16 %v866, %v865
      %v898 = vpack.c.bf16 %v868, %v867
      %v899 = vpack.c.bf16 %v870, %v869
      %v900 = vpack.c.bf16 %v872, %v871
      %v901 = vpack.c.bf16 %v874, %v873
      %v902 = vpack.c.bf16 %v876, %v875
      %v903 = vpack.c.bf16 %v878, %v877
      %v904 = vpack.c.bf16 %v880, %v879
      %v905 = vpack.c.bf16 %v882, %v881
      %v906 = vpack.c.bf16 %v884, %v883
      %v907 = vpack.c.bf16 %v886, %v885
      %v908 = vpack.c.bf16 %v888, %v887
      %v909 = vpack.c.bf16 %v890, %v889
      %v910 = vpack.c.bf16 %v892, %v891
      %s911 = scalar_lea.vmem %s3, 64
      %v912 = vld [vmem:[%s911] sm:$0xf]
      %v913 = vld [vmem:[%s911 + $0x4] sm:$0xf]
      %v914 = vld [vmem:[%s911 + $0x8] sm:$0xf]
      %v915 = vld [vmem:[%s911 + $0xc] sm:$0xf]
      %v916 = vld [vmem:[%s911 + $0x10] sm:$0xf]
      %v917 = vld [vmem:[%s911 + $0x14] sm:$0xf]
      %v918 = vld [vmem:[%s911 + $0x18] sm:$0xf]
      %v919 = vld [vmem:[%s911 + $0x1c] sm:$0xf]
      %v920 = vld [vmem:[%s911 + $0x20] sm:$0xf]
      %v921 = vld [vmem:[%s911 + $0x24] sm:$0xf]
      %v922 = vld [vmem:[%s911 + $0x28] sm:$0xf]
      %v923 = vld [vmem:[%s911 + $0x2c] sm:$0xf]
      %v924 = vld [vmem:[%s911 + $0x30] sm:$0xf]
      %v925 = vld [vmem:[%s911 + $0x34] sm:$0xf]
      %v926 = vld [vmem:[%s911 + $0x38] sm:$0xf]
      %v927 = vld [vmem:[%s911 + $0x3c] sm:$0xf]
      %v944 = vunpack.c.l.b16 %v912
      %v945 = vunpack.c.l.b16 %v913
      %v946 = vunpack.c.l.b16 %v914
      %v947 = vunpack.c.l.b16 %v915
      %v948 = vunpack.c.l.b16 %v916
      %v949 = vunpack.c.l.b16 %v917
      %v950 = vunpack.c.l.b16 %v918
      %v951 = vunpack.c.l.b16 %v919
      %v952 = vunpack.c.l.b16 %v920
      %v953 = vunpack.c.l.b16 %v921
      %v954 = vunpack.c.l.b16 %v922
      %v955 = vunpack.c.l.b16 %v923
      %v956 = vunpack.c.l.b16 %v924
      %v957 = vunpack.c.l.b16 %v925
      %v958 = vunpack.c.l.b16 %v926
      %v959 = vunpack.c.l.b16 %v927
      %v960 = vpack.c.b16 %v945, %v944
      %v961 = vpack.c.b16 %v947, %v946
      %v962 = vpack.c.b16 %v949, %v948
      %v963 = vpack.c.b16 %v951, %v950
      %v964 = vpack.c.b16 %v953, %v952
      %v965 = vpack.c.b16 %v955, %v954
      %v966 = vpack.c.b16 %v957, %v956
      %v967 = vpack.c.b16 %v959, %v958
      %976 = vmatprep.subr.bf16.mxu0 0
      %977 = vmatpush1.bf16.msra.mxu0 %v967
      %978 = vmatprep.subr.bf16.mxu0 0
      %979 = vmatpush1.bf16.msra.mxu0 %v966
      %980 = vmatprep.subr.bf16.mxu0 0
      %981 = vmatpush1.bf16.msra.mxu0 %v965
      %982 = vmatprep.subr.bf16.mxu0 0
      %983 = vmatpush1.bf16.msra.mxu0 %v964
      %984 = vmatprep.subr.bf16.mxu0 0
      %985 = vmatpush1.bf16.msra.mxu0 %v963
      %986 = vmatprep.subr.bf16.mxu0 0
      %987 = vmatpush1.bf16.msra.mxu0 %v962
      %988 = vmatprep.subr.bf16.mxu0 0
      %989 = vmatpush1.bf16.msra.mxu0 %v961
      %990 = vmatprep.subr.bf16.mxu0 0
      %991 = vmatpush1.bf16.msra.mxu0 %v960
      %992 = vmatprep.subr.bf16.mxu0 0
      %993 = vmatpush2.bf16.msra.mxu0 0
      %994 = vmatprep.subr.bf16.mxu0 0
      %995 = vmatpush2.bf16.msra.mxu0 0
      %996 = vmatprep.subr.bf16.mxu0 0
      %997 = vmatpush2.bf16.msra.mxu0 0
      %998 = vmatprep.subr.bf16.mxu0 0
      %999 = vmatpush2.bf16.msra.mxu0 0
      %1000 = vmatprep.subr.bf16.mxu0 0
      %1001 = vmatpush2.bf16.msra.mxu0 0
      %1002 = vmatprep.subr.bf16.mxu0 0
      %1003 = vmatpush2.bf16.msra.mxu0 0
      %1004 = vmatprep.subr.bf16.mxu0 0
      %1005 = vmatpush2.bf16.msra.mxu0 0
      %1006 = vmatprep.subr.bf16.mxu0 0
      %1007 = vmatpush2.bf16.msra.mxu0 0
      %1008 = vmatprep.mubr.bf16.mxu0 0
      %1009 = vmatmul.mubr.bf16.gmra.mxu0 %v893
      %v1010 = vpop.f32.mrf.mxu0
      %v1011 = vadd.f32 0.0, %v1010
      %v1012 = vpop.f32.mrf.mxu0
      %v1013 = vpop.f32.mrf.mxu0
      %v1014 = vadd.f32 0.0, %v1013
      %v1015 = vpop.f32.mrf.mxu0
      %1016 = vmatprep.mubr.bf16.mxu0 0
      %1017 = vmatmul.mubr.bf16.gmra.mxu0 %v894
      %v1018 = vpop.f32.mrf.mxu0
      %v1019 = vadd.f32 0.0, %v1018
      %v1020 = vpop.f32.mrf.mxu0
      %v1021 = vpop.f32.mrf.mxu0
      %v1022 = vadd.f32 0.0, %v1021
      %v1023 = vpop.f32.mrf.mxu0
      %1024 = vmatprep.mubr.bf16.mxu0 0
      %1025 = vmatmul.mubr.bf16.gmra.mxu0 %v895
      %v1026 = vpop.f32.mrf.mxu0
      %v1027 = vadd.f32 0.0, %v1026
      %v1028 = vpop.f32.mrf.mxu0
      %v1029 = vpop.f32.mrf.mxu0
      %v1030 = vadd.f32 0.0, %v1029
      %v1031 = vpop.f32.mrf.mxu0
      %1032 = vmatprep.mubr.bf16.mxu0 0
      %1033 = vmatmul.mubr.bf16.gmra.mxu0 %v896
      %v1034 = vpop.f32.mrf.mxu0
      %v1035 = vadd.f32 0.0, %v1034
      %v1036 = vpop.f32.mrf.mxu0
      %v1037 = vpop.f32.mrf.mxu0
      %v1038 = vadd.f32 0.0, %v1037
      %v1039 = vpop.f32.mrf.mxu0
      %1040 = vmatprep.mubr.bf16.mxu0 0
      %1041 = vmatmul.mubr.bf16.gmra.mxu0 %v897
      %v1042 = vpop.f32.mrf.mxu0
      %v1043 = vadd.f32 0.0, %v1042
      %v1044 = vpop.f32.mrf.mxu0
      %v1045 = vpop.f32.mrf.mxu0
      %v1046 = vadd.f32 0.0, %v1045
      %v1047 = vpop.f32.mrf.mxu0
      %1048 = vmatprep.mubr.bf16.mxu0 0
      %1049 = vmatmul.mubr.bf16.gmra.mxu0 %v898
      %v1050 = vpop.f32.mrf.mxu0
      %v1051 = vadd.f32 0.0, %v1050
      %v1052 = vpop.f32.mrf.mxu0
      %v1053 = vpop.f32.mrf.mxu0
      %v1054 = vadd.f32 0.0, %v1053
      %v1055 = vpop.f32.mrf.mxu0
      %1056 = vmatprep.mubr.bf16.mxu0 0
      %1057 = vmatmul.mubr.bf16.gmra.mxu0 %v899
      %v1058 = vpop.f32.mrf.mxu0
      %v1059 = vadd.f32 0.0, %v1058
      %v1060 = vpop.f32.mrf.mxu0
      %v1061 = vpop.f32.mrf.mxu0
      %v1062 = vadd.f32 0.0, %v1061
      %v1063 = vpop.f32.mrf.mxu0
      %1064 = vmatprep.mubr.bf16.mxu0 0
      %1065 = vmatmul.mubr.bf16.gmra.mxu0 %v900
      %v1066 = vpop.f32.mrf.mxu0
      %v1067 = vadd.f32 0.0, %v1066
      %v1068 = vpop.f32.mrf.mxu0
      %v1069 = vpop.f32.mrf.mxu0
      %v1070 = vadd.f32 0.0, %v1069
      %v1071 = vpop.f32.mrf.mxu0
      %1072 = vmatprep.mubr.bf16.mxu0 0
      %1073 = vmatmul.mubr.bf16.gmra.mxu0 %v901
      %v1074 = vpop.f32.mrf.mxu0
      %v1075 = vadd.f32 0.0, %v1074
      %v1076 = vpop.f32.mrf.mxu0
      %v1077 = vpop.f32.mrf.mxu0
      %v1078 = vadd.f32 0.0, %v1077
      %v1079 = vpop.f32.mrf.mxu0
      %1080 = vmatprep.mubr.bf16.mxu0 0
      %1081 = vmatmul.mubr.bf16.gmra.mxu0 %v902
      %v1082 = vpop.f32.mrf.mxu0
      %v1083 = vadd.f32 0.0, %v1082
      %v1084 = vpop.f32.mrf.mxu0
      %v1085 = vpop.f32.mrf.mxu0
      %v1086 = vadd.f32 0.0, %v1085
      %v1087 = vpop.f32.mrf.mxu0
      %1088 = vmatprep.mubr.bf16.mxu0 0
      %1089 = vmatmul.mubr.bf16.gmra.mxu0 %v903
      %v1090 = vpop.f32.mrf.mxu0
      %v1091 = vadd.f32 0.0, %v1090
      %v1092 = vpop.f32.mrf.mxu0
      %v1093 = vpop.f32.mrf.mxu0
      %v1094 = vadd.f32 0.0, %v1093
      %v1095 = vpop.f32.mrf.mxu0
      %1096 = vmatprep.mubr.bf16.mxu0 0
      %1097 = vmatmul.mubr.bf16.gmra.mxu0 %v904
      %v1098 = vpop.f32.mrf.mxu0
      %v1099 = vadd.f32 0.0, %v1098
      %v1100 = vpop.f32.mrf.mxu0
      %v1101 = vpop.f32.mrf.mxu0
      %v1102 = vadd.f32 0.0, %v1101
      %v1103 = vpop.f32.mrf.mxu0
      %1104 = vmatprep.mubr.bf16.mxu0 0
      %1105 = vmatmul.mubr.bf16.gmra.mxu0 %v905
      %v1106 = vpop.f32.mrf.mxu0
      %v1107 = vadd.f32 0.0, %v1106
      %v1108 = vpop.f32.mrf.mxu0
      %v1109 = vpop.f32.mrf.mxu0
      %v1110 = vadd.f32 0.0, %v1109
      %v1111 = vpop.f32.mrf.mxu0
      %1112 = vmatprep.mubr.bf16.mxu0 0
      %1113 = vmatmul.mubr.bf16.gmra.mxu0 %v906
      %v1114 = vpop.f32.mrf.mxu0
      %v1115 = vadd.f32 0.0, %v1114
      %v1116 = vpop.f32.mrf.mxu0
      %v1117 = vpop.f32.mrf.mxu0
      %v1118 = vadd.f32 0.0, %v1117
      %v1119 = vpop.f32.mrf.mxu0
      %1120 = vmatprep.mubr.bf16.mxu0 0
      %1121 = vmatmul.mubr.bf16.gmra.mxu0 %v907
      %v1122 = vpop.f32.mrf.mxu0
      %v1123 = vadd.f32 0.0, %v1122
      %v1124 = vpop.f32.mrf.mxu0
      %v1125 = vpop.f32.mrf.mxu0
      %v1126 = vadd.f32 0.0, %v1125
      %v1127 = vpop.f32.mrf.mxu0
      %1128 = vmatprep.mubr.bf16.mxu0 0
      %1129 = vmatmul.mubr.bf16.gmra.mxu0 %v908
      %v1130 = vpop.f32.mrf.mxu0
      %v1131 = vadd.f32 0.0, %v1130
      %v1132 = vpop.f32.mrf.mxu0
      %v1133 = vpop.f32.mrf.mxu0
      %v1134 = vadd.f32 0.0, %v1133
      %v1135 = vpop.f32.mrf.mxu0
      %1136 = vmatprep.mubr.bf16.mxu0 0
      %1137 = vmatmul.mubr.bf16.gmra.mxu0 %v909
      %v1138 = vpop.f32.mrf.mxu0
      %v1139 = vadd.f32 0.0, %v1138
      %v1140 = vpop.f32.mrf.mxu0
      %v1141 = vpop.f32.mrf.mxu0
      %v1142 = vadd.f32 0.0, %v1141
      %v1143 = vpop.f32.mrf.mxu0
      %1144 = vmatprep.mubr.bf16.mxu0 0
      %1145 = vmatmul.mubr.bf16.gmra.mxu0 %v910
      %v1146 = vpop.f32.mrf.mxu0
      %v1147 = vadd.f32 0.0, %v1146
      %v1148 = vpop.f32.mrf.mxu0
      %v1149 = vpop.f32.mrf.mxu0
      %v1150 = vadd.f32 0.0, %v1149
      %v1151 = vpop.f32.mrf.mxu0
      %1152 = vdwg.mxu0
      %v1169 = vunpack.c.l.b16 %v841
      %v1170 = vunpack.c.l.b16 %v842
      %v1171 = vunpack.c.l.b16 %v843
      %v1172 = vunpack.c.l.b16 %v844
      %v1173 = vunpack.c.l.b16 %v845
      %v1174 = vunpack.c.l.b16 %v846
      %v1175 = vunpack.c.l.b16 %v847
      %v1176 = vunpack.c.l.b16 %v848
      %v1177 = vunpack.c.l.b16 %v849
      %v1178 = vunpack.c.l.b16 %v850
      %v1179 = vunpack.c.l.b16 %v851
      %v1180 = vunpack.c.l.b16 %v852
      %v1181 = vunpack.c.l.b16 %v853
      %v1182 = vunpack.c.l.b16 %v854
      %v1183 = vunpack.c.l.b16 %v855
      %v1184 = vunpack.c.l.b16 %v856
      %v1185 = vpack.c.b16 %v1170, %v1169
      %v1186 = vpack.c.b16 %v1172, %v1171
      %v1187 = vpack.c.b16 %v1174, %v1173
      %v1188 = vpack.c.b16 %v1176, %v1175
      %v1189 = vpack.c.b16 %v1178, %v1177
      %v1190 = vpack.c.b16 %v1180, %v1179
      %v1191 = vpack.c.b16 %v1182, %v1181
      %v1192 = vpack.c.b16 %v1184, %v1183
      %1201 = vmatprep.subr.bf16.mxu0 0
      %1202 = vmatpush1.bf16.msra.mxu0 %v1192
      %1203 = vmatprep.subr.bf16.mxu0 0
      %1204 = vmatpush1.bf16.msra.mxu0 %v1191
      %1205 = vmatprep.subr.bf16.mxu0 0
      %1206 = vmatpush1.bf16.msra.mxu0 %v1190
      %1207 = vmatprep.subr.bf16.mxu0 0
      %1208 = vmatpush1.bf16.msra.mxu0 %v1189
      %1209 = vmatprep.subr.bf16.mxu0 0
      %1210 = vmatpush1.bf16.msra.mxu0 %v1188
      %1211 = vmatprep.subr.bf16.mxu0 0
      %1212 = vmatpush1.bf16.msra.mxu0 %v1187
      %1213 = vmatprep.subr.bf16.mxu0 0
      %1214 = vmatpush1.bf16.msra.mxu0 %v1186
      %1215 = vmatprep.subr.bf16.mxu0 0
      %1216 = vmatpush1.bf16.msra.mxu0 %v1185
      %1217 = vmatprep.subr.bf16.mxu0 0
      %1218 = vmatpush2.bf16.msra.mxu0 0
      %1219 = vmatprep.subr.bf16.mxu0 0
      %1220 = vmatpush2.bf16.msra.mxu0 0
      %1221 = vmatprep.subr.bf16.mxu0 0
      %1222 = vmatpush2.bf16.msra.mxu0 0
      %1223 = vmatprep.subr.bf16.mxu0 0
      %1224 = vmatpush2.bf16.msra.mxu0 0
      %1225 = vmatprep.subr.bf16.mxu0 0
      %1226 = vmatpush2.bf16.msra.mxu0 0
      %1227 = vmatprep.subr.bf16.mxu0 0
      %1228 = vmatpush2.bf16.msra.mxu0 0
      %1229 = vmatprep.subr.bf16.mxu0 0
      %1230 = vmatpush2.bf16.msra.mxu0 0
      %1231 = vmatprep.subr.bf16.mxu0 0
      %1232 = vmatpush2.bf16.msra.mxu0 0
      %1233 = vmatprep.mubr.bf16.mxu0 0
      %1234 = vmatmul.mubr.bf16.gmra.mxu0 %v823
      %v1235 = vpop.f32.mrf.mxu0
      %v1236 = vadd.f32 %v1011, %v1235
      %v1237 = vpop.f32.mrf.mxu0
      %v1238 = vpop.f32.mrf.mxu0
      %v1239 = vadd.f32 %v1014, %v1238
      %v1240 = vpop.f32.mrf.mxu0
      %1241 = vmatprep.mubr.bf16.mxu0 0
      %1242 = vmatmul.mubr.bf16.gmra.mxu0 %v824
      %v1243 = vpop.f32.mrf.mxu0
      %v1244 = vadd.f32 %v1019, %v1243
      %v1245 = vpop.f32.mrf.mxu0
      %v1246 = vpop.f32.mrf.mxu0
      %v1247 = vadd.f32 %v1022, %v1246
      %v1248 = vpop.f32.mrf.mxu0
      %1249 = vmatprep.mubr.bf16.mxu0 0
      %1250 = vmatmul.mubr.bf16.gmra.mxu0 %v825
      %v1251 = vpop.f32.mrf.mxu0
      %v1252 = vadd.f32 %v1027, %v1251
      %v1253 = vpop.f32.mrf.mxu0
      %v1254 = vpop.f32.mrf.mxu0
      %v1255 = vadd.f32 %v1030, %v1254
      %v1256 = vpop.f32.mrf.mxu0
      %1257 = vmatprep.mubr.bf16.mxu0 0
      %1258 = vmatmul.mubr.bf16.gmra.mxu0 %v826
      %v1259 = vpop.f32.mrf.mxu0
      %v1260 = vadd.f32 %v1035, %v1259
      %v1261 = vpop.f32.mrf.mxu0
      %v1262 = vpop.f32.mrf.mxu0
      %v1263 = vadd.f32 %v1038, %v1262
      %v1264 = vpop.f32.mrf.mxu0
      %1265 = vmatprep.mubr.bf16.mxu0 0
      %1266 = vmatmul.mubr.bf16.gmra.mxu0 %v827
      %v1267 = vpop.f32.mrf.mxu0
      %v1268 = vadd.f32 %v1043, %v1267
      %v1269 = vpop.f32.mrf.mxu0
      %v1270 = vpop.f32.mrf.mxu0
      %v1271 = vadd.f32 %v1046, %v1270
      %v1272 = vpop.f32.mrf.mxu0
      %1273 = vmatprep.mubr.bf16.mxu0 0
      %1274 = vmatmul.mubr.bf16.gmra.mxu0 %v828
      %v1275 = vpop.f32.mrf.mxu0
      %v1276 = vadd.f32 %v1051, %v1275
      %v1277 = vpop.f32.mrf.mxu0
      %v1278 = vpop.f32.mrf.mxu0
      %v1279 = vadd.f32 %v1054, %v1278
      %v1280 = vpop.f32.mrf.mxu0
      %1281 = vmatprep.mubr.bf16.mxu0 0
      %1282 = vmatmul.mubr.bf16.gmra.mxu0 %v829
      %v1283 = vpop.f32.mrf.mxu0
      %v1284 = vadd.f32 %v1059, %v1283
      %v1285 = vpop.f32.mrf.mxu0
      %v1286 = vpop.f32.mrf.mxu0
      %v1287 = vadd.f32 %v1062, %v1286
      %v1288 = vpop.f32.mrf.mxu0
      %1289 = vmatprep.mubr.bf16.mxu0 0
      %1290 = vmatmul.mubr.bf16.gmra.mxu0 %v830
      %v1291 = vpop.f32.mrf.mxu0
      %v1292 = vadd.f32 %v1067, %v1291
      %v1293 = vpop.f32.mrf.mxu0
      %v1294 = vpop.f32.mrf.mxu0
      %v1295 = vadd.f32 %v1070, %v1294
      %v1296 = vpop.f32.mrf.mxu0
      %1297 = vmatprep.mubr.bf16.mxu0 0
      %1298 = vmatmul.mubr.bf16.gmra.mxu0 %v831
      %v1299 = vpop.f32.mrf.mxu0
      %v1300 = vadd.f32 %v1075, %v1299
      %v1301 = vpop.f32.mrf.mxu0
      %v1302 = vpop.f32.mrf.mxu0
      %v1303 = vadd.f32 %v1078, %v1302
      %v1304 = vpop.f32.mrf.mxu0
      %1305 = vmatprep.mubr.bf16.mxu0 0
      %1306 = vmatmul.mubr.bf16.gmra.mxu0 %v832
      %v1307 = vpop.f32.mrf.mxu0
      %v1308 = vadd.f32 %v1083, %v1307
      %v1309 = vpop.f32.mrf.mxu0
      %v1310 = vpop.f32.mrf.mxu0
      %v1311 = vadd.f32 %v1086, %v1310
      %v1312 = vpop.f32.mrf.mxu0
      %1313 = vmatprep.mubr.bf16.mxu0 0
      %1314 = vmatmul.mubr.bf16.gmra.mxu0 %v833
      %v1315 = vpop.f32.mrf.mxu0
      %v1316 = vadd.f32 %v1091, %v1315
      %v1317 = vpop.f32.mrf.mxu0
      %v1318 = vpop.f32.mrf.mxu0
      %v1319 = vadd.f32 %v1094, %v1318
      %v1320 = vpop.f32.mrf.mxu0
      %1321 = vmatprep.mubr.bf16.mxu0 0
      %1322 = vmatmul.mubr.bf16.gmra.mxu0 %v834
      %v1323 = vpop.f32.mrf.mxu0
      %v1324 = vadd.f32 %v1099, %v1323
      %v1325 = vpop.f32.mrf.mxu0
      %v1326 = vpop.f32.mrf.mxu0
      %v1327 = vadd.f32 %v1102, %v1326
      %v1328 = vpop.f32.mrf.mxu0
      %1329 = vmatprep.mubr.bf16.mxu0 0
      %1330 = vmatmul.mubr.bf16.gmra.mxu0 %v835
      %v1331 = vpop.f32.mrf.mxu0
      %v1332 = vadd.f32 %v1107, %v1331
      %v1333 = vpop.f32.mrf.mxu0
      %v1334 = vpop.f32.mrf.mxu0
      %v1335 = vadd.f32 %v1110, %v1334
      %v1336 = vpop.f32.mrf.mxu0
      %1337 = vmatprep.mubr.bf16.mxu0 0
      %1338 = vmatmul.mubr.bf16.gmra.mxu0 %v836
      %v1339 = vpop.f32.mrf.mxu0
      %v1340 = vadd.f32 %v1115, %v1339
      %v1341 = vpop.f32.mrf.mxu0
      %v1342 = vpop.f32.mrf.mxu0
      %v1343 = vadd.f32 %v1118, %v1342
      %v1344 = vpop.f32.mrf.mxu0
      %1345 = vmatprep.mubr.bf16.mxu0 0
      %1346 = vmatmul.mubr.bf16.gmra.mxu0 %v837
      %v1347 = vpop.f32.mrf.mxu0
      %v1348 = vadd.f32 %v1123, %v1347
      %v1349 = vpop.f32.mrf.mxu0
      %v1350 = vpop.f32.mrf.mxu0
      %v1351 = vadd.f32 %v1126, %v1350
      %v1352 = vpop.f32.mrf.mxu0
      %1353 = vmatprep.mubr.bf16.mxu0 0
      %1354 = vmatmul.mubr.bf16.gmra.mxu0 %v838
      %v1355 = vpop.f32.mrf.mxu0
      %v1356 = vadd.f32 %v1131, %v1355
      %v1357 = vpop.f32.mrf.mxu0
      %v1358 = vpop.f32.mrf.mxu0
      %v1359 = vadd.f32 %v1134, %v1358
      %v1360 = vpop.f32.mrf.mxu0
      %1361 = vmatprep.mubr.bf16.mxu0 0
      %1362 = vmatmul.mubr.bf16.gmra.mxu0 %v839
      %v1363 = vpop.f32.mrf.mxu0
      %v1364 = vadd.f32 %v1139, %v1363
      %v1365 = vpop.f32.mrf.mxu0
      %v1366 = vpop.f32.mrf.mxu0
      %v1367 = vadd.f32 %v1142, %v1366
      %v1368 = vpop.f32.mrf.mxu0
      %1369 = vmatprep.mubr.bf16.mxu0 0
      %1370 = vmatmul.mubr.bf16.gmra.mxu0 %v840
      %v1371 = vpop.f32.mrf.mxu0
      %v1372 = vadd.f32 %v1147, %v1371
      %v1373 = vpop.f32.mrf.mxu0
      %v1374 = vpop.f32.mrf.mxu0
      %v1375 = vadd.f32 %v1150, %v1374
      %v1376 = vpop.f32.mrf.mxu0
      %1377 = vdwg.mxu0
      %v1378 = vld [vmem:[#allocation2 + $0xf] sm:$0xff]
      %v1379 = vld [vmem:[#allocation2 + $0x17] sm:$0xff]
      %v1380 = vld [vmem:[#allocation2 + $0x1f] sm:$0xff]
      %v1381 = vld [vmem:[#allocation2 + $0x27] sm:$0xff]
      %v1382 = vld [vmem:[#allocation2 + $0x2f] sm:$0xff]
      %v1383 = vld [vmem:[#allocation2 + $0x37] sm:$0xff]
      %v1384 = vld [vmem:[#allocation2 + $0x3f] sm:$0xff]
      %v1385 = vld [vmem:[#allocation2 + $0x47] sm:$0xff]
      %v1386 = vld [vmem:[#allocation2 + $0x4f] sm:$0xff]
      %v1387 = vld [vmem:[#allocation2 + $0x57] sm:$0xff]
      %v1388 = vld [vmem:[#allocation2 + $0x5f] sm:$0xff]
      %v1389 = vld [vmem:[#allocation2 + $0x67] sm:$0xff]
      %v1390 = vld [vmem:[#allocation2 + $0x6f] sm:$0xff]
      %v1391 = vld [vmem:[#allocation2 + $0x77] sm:$0xff]
      %v1392 = vld [vmem:[#allocation2 + $0x7f] sm:$0xff]
      %v1393 = vld [vmem:[#allocation2 + $0x87] sm:$0xff]
      %v1394 = vld [vmem:[#allocation2 + $0x8f] sm:$0xff]
      %v1395 = vld [vmem:[#allocation2 + $0x97] sm:$0xff]
      %v1396 = vld [vmem:[#allocation2 + $0x9f] sm:$0xff]
      %v1397 = vld [vmem:[#allocation2 + $0xa7] sm:$0xff]
      %v1398 = vld [vmem:[#allocation2 + $0xaf] sm:$0xff]
      %v1399 = vld [vmem:[#allocation2 + $0xb7] sm:$0xff]
      %v1400 = vld [vmem:[#allocation2 + $0xbf] sm:$0xff]
      %v1401 = vld [vmem:[#allocation2 + $0xc7] sm:$0xff]
      %v1402 = vld [vmem:[#allocation2 + $0xcf] sm:$0xff]
      %v1403 = vld [vmem:[#allocation2 + $0xd7] sm:$0xff]
      %v1404 = vld [vmem:[#allocation2 + $0xdf] sm:$0xff]
      %v1405 = vld [vmem:[#allocation2 + $0xe7] sm:$0xff]
      %v1406 = vld [vmem:[#allocation2 + $0xef] sm:$0xff]
      %v1407 = vld [vmem:[#allocation2 + $0xf7] sm:$0xff]
      %v1408 = vld [vmem:[#allocation2 + $0xff] sm:$0xff]
      %v1409 = vld [vmem:[#allocation2 + $0x107] sm:$0xff]
      %v1410 = vld [vmem:[#allocation2 + $0x10f] sm:$0xff]
      %v1411 = vld [vmem:[#allocation2 + $0x117] sm:$0xff]
      %v1412 = vld [vmem:[#allocation2 + $0x11f] sm:$0xff]
      %v1413 = vld [vmem:[#allocation2 + $0x127] sm:$0xff]
      %v1414 = vpack.c.bf16 %v1379, %v1378
      %v1415 = vpack.c.bf16 %v1381, %v1380
      %v1416 = vpack.c.bf16 %v1383, %v1382
      %v1417 = vpack.c.bf16 %v1385, %v1384
      %v1418 = vpack.c.bf16 %v1387, %v1386
      %v1419 = vpack.c.bf16 %v1389, %v1388
      %v1420 = vpack.c.bf16 %v1391, %v1390
      %v1421 = vpack.c.bf16 %v1393, %v1392
      %v1422 = vpack.c.bf16 %v1395, %v1394
      %v1423 = vpack.c.bf16 %v1397, %v1396
      %v1424 = vpack.c.bf16 %v1399, %v1398
      %v1425 = vpack.c.bf16 %v1401, %v1400
      %v1426 = vpack.c.bf16 %v1403, %v1402
      %v1427 = vpack.c.bf16 %v1405, %v1404
      %v1428 = vpack.c.bf16 %v1407, %v1406
      %v1429 = vpack.c.bf16 %v1409, %v1408
      %v1430 = vpack.c.bf16 %v1411, %v1410
      %v1431 = vpack.c.bf16 %v1413, %v1412
      %s1432 = scalar_lea.vmem %s3, 128
      %v1433 = vld [vmem:[%s1432] sm:$0xf]
      %v1434 = vld [vmem:[%s1432 + $0x4] sm:$0xf]
      %v1435 = vld [vmem:[%s1432 + $0x8] sm:$0xf]
      %v1436 = vld [vmem:[%s1432 + $0xc] sm:$0xf]
      %v1437 = vld [vmem:[%s1432 + $0x10] sm:$0xf]
      %v1438 = vld [vmem:[%s1432 + $0x14] sm:$0xf]
      %v1439 = vld [vmem:[%s1432 + $0x18] sm:$0xf]
      %v1440 = vld [vmem:[%s1432 + $0x1c] sm:$0xf]
      %v1441 = vld [vmem:[%s1432 + $0x20] sm:$0xf]
      %v1442 = vld [vmem:[%s1432 + $0x24] sm:$0xf]
      %v1443 = vld [vmem:[%s1432 + $0x28] sm:$0xf]
      %v1444 = vld [vmem:[%s1432 + $0x2c] sm:$0xf]
      %v1445 = vld [vmem:[%s1432 + $0x30] sm:$0xf]
      %v1446 = vld [vmem:[%s1432 + $0x34] sm:$0xf]
      %v1447 = vld [vmem:[%s1432 + $0x38] sm:$0xf]
      %v1448 = vld [vmem:[%s1432 + $0x3c] sm:$0xf]
      %v1465 = vunpack.c.l.b16 %v1433
      %v1466 = vunpack.c.l.b16 %v1434
      %v1467 = vunpack.c.l.b16 %v1435
      %v1468 = vunpack.c.l.b16 %v1436
      %v1469 = vunpack.c.l.b16 %v1437
      %v1470 = vunpack.c.l.b16 %v1438
      %v1471 = vunpack.c.l.b16 %v1439
      %v1472 = vunpack.c.l.b16 %v1440
      %v1473 = vunpack.c.l.b16 %v1441
      %v1474 = vunpack.c.l.b16 %v1442
      %v1475 = vunpack.c.l.b16 %v1443
      %v1476 = vunpack.c.l.b16 %v1444
      %v1477 = vunpack.c.l.b16 %v1445
      %v1478 = vunpack.c.l.b16 %v1446
      %v1479 = vunpack.c.l.b16 %v1447
      %v1480 = vunpack.c.l.b16 %v1448
      %v1481 = vpack.c.b16 %v1466, %v1465
      %v1482 = vpack.c.b16 %v1468, %v1467
      %v1483 = vpack.c.b16 %v1470, %v1469
      %v1484 = vpack.c.b16 %v1472, %v1471
      %v1485 = vpack.c.b16 %v1474, %v1473
      %v1486 = vpack.c.b16 %v1476, %v1475
      %v1487 = vpack.c.b16 %v1478, %v1477
      %v1488 = vpack.c.b16 %v1480, %v1479
      %1497 = vmatprep.subr.bf16.mxu0 0
      %1498 = vmatpush1.bf16.msra.mxu0 %v1488
      %1499 = vmatprep.subr.bf16.mxu0 0
      %1500 = vmatpush1.bf16.msra.mxu0 %v1487
      %1501 = vmatprep.subr.bf16.mxu0 0
      %1502 = vmatpush1.bf16.msra.mxu0 %v1486
      %1503 = vmatprep.subr.bf16.mxu0 0
      %1504 = vmatpush1.bf16.msra.mxu0 %v1485
      %1505 = vmatprep.subr.bf16.mxu0 0
      %1506 = vmatpush1.bf16.msra.mxu0 %v1484
      %1507 = vmatprep.subr.bf16.mxu0 0
      %1508 = vmatpush1.bf16.msra.mxu0 %v1483
      %1509 = vmatprep.subr.bf16.mxu0 0
      %1510 = vmatpush1.bf16.msra.mxu0 %v1482
      %1511 = vmatprep.subr.bf16.mxu0 0
      %1512 = vmatpush1.bf16.msra.mxu0 %v1481
      %1513 = vmatprep.subr.bf16.mxu0 0
      %1514 = vmatpush2.bf16.msra.mxu0 0
      %1515 = vmatprep.subr.bf16.mxu0 0
      %1516 = vmatpush2.bf16.msra.mxu0 0
      %1517 = vmatprep.subr.bf16.mxu0 0
      %1518 = vmatpush2.bf16.msra.mxu0 0
      %1519 = vmatprep.subr.bf16.mxu0 0
      %1520 = vmatpush2.bf16.msra.mxu0 0
      %1521 = vmatprep.subr.bf16.mxu0 0
      %1522 = vmatpush2.bf16.msra.mxu0 0
      %1523 = vmatprep.subr.bf16.mxu0 0
      %1524 = vmatpush2.bf16.msra.mxu0 0
      %1525 = vmatprep.subr.bf16.mxu0 0
      %1526 = vmatpush2.bf16.msra.mxu0 0
      %1527 = vmatprep.subr.bf16.mxu0 0
      %1528 = vmatpush2.bf16.msra.mxu0 0
      %1529 = vmatprep.mubr.bf16.mxu0 0
      %1530 = vmatmul.mubr.bf16.gmra.mxu0 %v1414
      %v1531 = vpop.f32.mrf.mxu0
      %v1532 = vadd.f32 0.0, %v1531
      %v1533 = vpop.f32.mrf.mxu0
      %v1534 = vpop.f32.mrf.mxu0
      %v1535 = vadd.f32 0.0, %v1534
      %v1536 = vpop.f32.mrf.mxu0
      %1537 = vmatprep.mubr.bf16.mxu0 0
      %1538 = vmatmul.mubr.bf16.gmra.mxu0 %v1415
      %v1539 = vpop.f32.mrf.mxu0
      %v1540 = vadd.f32 0.0, %v1539
      %v1541 = vpop.f32.mrf.mxu0
      %v1542 = vpop.f32.mrf.mxu0
      %v1543 = vadd.f32 0.0, %v1542
      %v1544 = vpop.f32.mrf.mxu0
      %1545 = vmatprep.mubr.bf16.mxu0 0
      %1546 = vmatmul.mubr.bf16.gmra.mxu0 %v1416
      %v1547 = vpop.f32.mrf.mxu0
      %v1548 = vadd.f32 0.0, %v1547
      %v1549 = vpop.f32.mrf.mxu0
      %v1550 = vpop.f32.mrf.mxu0
      %v1551 = vadd.f32 0.0, %v1550
      %v1552 = vpop.f32.mrf.mxu0
      %1553 = vmatprep.mubr.bf16.mxu0 0
      %1554 = vmatmul.mubr.bf16.gmra.mxu0 %v1417
      %v1555 = vpop.f32.mrf.mxu0
      %v1556 = vadd.f32 0.0, %v1555
      %v1557 = vpop.f32.mrf.mxu0
      %v1558 = vpop.f32.mrf.mxu0
      %v1559 = vadd.f32 0.0, %v1558
      %v1560 = vpop.f32.mrf.mxu0
      %1561 = vmatprep.mubr.bf16.mxu0 0
      %1562 = vmatmul.mubr.bf16.gmra.mxu0 %v1418
      %v1563 = vpop.f32.mrf.mxu0
      %v1564 = vadd.f32 0.0, %v1563
      %v1565 = vpop.f32.mrf.mxu0
      %v1566 = vpop.f32.mrf.mxu0
      %v1567 = vadd.f32 0.0, %v1566
      %v1568 = vpop.f32.mrf.mxu0
      %1569 = vmatprep.mubr.bf16.mxu0 0
      %1570 = vmatmul.mubr.bf16.gmra.mxu0 %v1419
      %v1571 = vpop.f32.mrf.mxu0
      %v1572 = vadd.f32 0.0, %v1571
      %v1573 = vpop.f32.mrf.mxu0
      %v1574 = vpop.f32.mrf.mxu0
      %v1575 = vadd.f32 0.0, %v1574
      %v1576 = vpop.f32.mrf.mxu0
      %1577 = vmatprep.mubr.bf16.mxu0 0
      %1578 = vmatmul.mubr.bf16.gmra.mxu0 %v1420
      %v1579 = vpop.f32.mrf.mxu0
      %v1580 = vadd.f32 0.0, %v1579
      %v1581 = vpop.f32.mrf.mxu0
      %v1582 = vpop.f32.mrf.mxu0
      %v1583 = vadd.f32 0.0, %v1582
      %v1584 = vpop.f32.mrf.mxu0
      %1585 = vmatprep.mubr.bf16.mxu0 0
      %1586 = vmatmul.mubr.bf16.gmra.mxu0 %v1421
      %v1587 = vpop.f32.mrf.mxu0
      %v1588 = vadd.f32 0.0, %v1587
      %v1589 = vpop.f32.mrf.mxu0
      %v1590 = vpop.f32.mrf.mxu0
      %v1591 = vadd.f32 0.0, %v1590
      %v1592 = vpop.f32.mrf.mxu0
      %1593 = vmatprep.mubr.bf16.mxu0 0
      %1594 = vmatmul.mubr.bf16.gmra.mxu0 %v1422
      %v1595 = vpop.f32.mrf.mxu0
      %v1596 = vadd.f32 0.0, %v1595
      %v1597 = vpop.f32.mrf.mxu0
      %v1598 = vpop.f32.mrf.mxu0
      %v1599 = vadd.f32 0.0, %v1598
      %v1600 = vpop.f32.mrf.mxu0
      %1601 = vmatprep.mubr.bf16.mxu0 0
      %1602 = vmatmul.mubr.bf16.gmra.mxu0 %v1423
      %v1603 = vpop.f32.mrf.mxu0
      %v1604 = vadd.f32 0.0, %v1603
      %v1605 = vpop.f32.mrf.mxu0
      %v1606 = vpop.f32.mrf.mxu0
      %v1607 = vadd.f32 0.0, %v1606
      %v1608 = vpop.f32.mrf.mxu0
      %1609 = vmatprep.mubr.bf16.mxu0 0
      %1610 = vmatmul.mubr.bf16.gmra.mxu0 %v1424
      %v1611 = vpop.f32.mrf.mxu0
      %v1612 = vadd.f32 0.0, %v1611
      %v1613 = vpop.f32.mrf.mxu0
      %v1614 = vpop.f32.mrf.mxu0
      %v1615 = vadd.f32 0.0, %v1614
      %v1616 = vpop.f32.mrf.mxu0
      %1617 = vmatprep.mubr.bf16.mxu0 0
      %1618 = vmatmul.mubr.bf16.gmra.mxu0 %v1425
      %v1619 = vpop.f32.mrf.mxu0
      %v1620 = vadd.f32 0.0, %v1619
      %v1621 = vpop.f32.mrf.mxu0
      %v1622 = vpop.f32.mrf.mxu0
      %v1623 = vadd.f32 0.0, %v1622
      %v1624 = vpop.f32.mrf.mxu0
      %1625 = vmatprep.mubr.bf16.mxu0 0
      %1626 = vmatmul.mubr.bf16.gmra.mxu0 %v1426
      %v1627 = vpop.f32.mrf.mxu0
      %v1628 = vadd.f32 0.0, %v1627
      %v1629 = vpop.f32.mrf.mxu0
      %v1630 = vpop.f32.mrf.mxu0
      %v1631 = vadd.f32 0.0, %v1630
      %v1632 = vpop.f32.mrf.mxu0
      %1633 = vmatprep.mubr.bf16.mxu0 0
      %1634 = vmatmul.mubr.bf16.gmra.mxu0 %v1427
      %v1635 = vpop.f32.mrf.mxu0
      %v1636 = vadd.f32 0.0, %v1635
      %v1637 = vpop.f32.mrf.mxu0
      %v1638 = vpop.f32.mrf.mxu0
      %v1639 = vadd.f32 0.0, %v1638
      %v1640 = vpop.f32.mrf.mxu0
      %1641 = vmatprep.mubr.bf16.mxu0 0
      %1642 = vmatmul.mubr.bf16.gmra.mxu0 %v1428
      %v1643 = vpop.f32.mrf.mxu0
      %v1644 = vadd.f32 0.0, %v1643
      %v1645 = vpop.f32.mrf.mxu0
      %v1646 = vpop.f32.mrf.mxu0
      %v1647 = vadd.f32 0.0, %v1646
      %v1648 = vpop.f32.mrf.mxu0
      %1649 = vmatprep.mubr.bf16.mxu0 0
      %1650 = vmatmul.mubr.bf16.gmra.mxu0 %v1429
      %v1651 = vpop.f32.mrf.mxu0
      %v1652 = vadd.f32 0.0, %v1651
      %v1653 = vpop.f32.mrf.mxu0
      %v1654 = vpop.f32.mrf.mxu0
      %v1655 = vadd.f32 0.0, %v1654
      %v1656 = vpop.f32.mrf.mxu0
      %1657 = vmatprep.mubr.bf16.mxu0 0
      %1658 = vmatmul.mubr.bf16.gmra.mxu0 %v1430
      %v1659 = vpop.f32.mrf.mxu0
      %v1660 = vadd.f32 0.0, %v1659
      %v1661 = vpop.f32.mrf.mxu0
      %v1662 = vpop.f32.mrf.mxu0
      %v1663 = vadd.f32 0.0, %v1662
      %v1664 = vpop.f32.mrf.mxu0
      %1665 = vmatprep.mubr.bf16.mxu0 0
      %1666 = vmatmul.mubr.bf16.gmra.mxu0 %v1431
      %v1667 = vpop.f32.mrf.mxu0
      %v1668 = vadd.f32 0.0, %v1667
      %v1669 = vpop.f32.mrf.mxu0
      %v1670 = vpop.f32.mrf.mxu0
      %v1671 = vadd.f32 0.0, %v1670
      %v1672 = vpop.f32.mrf.mxu0
      %1673 = vdwg.mxu0
      %v1674 = vadd.f32 %v1236, %v1532
      %v1675 = vadd.f32 %v1239, %v1535
      %v1676 = vadd.f32 %v1244, %v1540
      %v1677 = vadd.f32 %v1247, %v1543
      %v1678 = vadd.f32 %v1252, %v1548
      %v1679 = vadd.f32 %v1255, %v1551
      %v1680 = vadd.f32 %v1260, %v1556
      %v1681 = vadd.f32 %v1263, %v1559
      %v1682 = vadd.f32 %v1268, %v1564
      %v1683 = vadd.f32 %v1271, %v1567
      %v1684 = vadd.f32 %v1276, %v1572
      %v1685 = vadd.f32 %v1279, %v1575
      %v1686 = vadd.f32 %v1284, %v1580
      %v1687 = vadd.f32 %v1287, %v1583
      %v1688 = vadd.f32 %v1292, %v1588
      %v1689 = vadd.f32 %v1295, %v1591
      %v1690 = vadd.f32 %v1300, %v1596
      %v1691 = vadd.f32 %v1303, %v1599
      %v1692 = vadd.f32 %v1308, %v1604
      %v1693 = vadd.f32 %v1311, %v1607
      %v1694 = vadd.f32 %v1316, %v1612
      %v1695 = vadd.f32 %v1319, %v1615
      %v1696 = vadd.f32 %v1324, %v1620
      %v1697 = vadd.f32 %v1327, %v1623
      %v1698 = vadd.f32 %v1332, %v1628
      %v1699 = vadd.f32 %v1335, %v1631
      %v1700 = vadd.f32 %v1340, %v1636
      %v1701 = vadd.f32 %v1343, %v1639
      %v1702 = vadd.f32 %v1348, %v1644
      %v1703 = vadd.f32 %v1351, %v1647
      %v1704 = vadd.f32 %v1356, %v1652
      %v1705 = vadd.f32 %v1359, %v1655
      %v1706 = vadd.f32 %v1364, %v1660
      %v1707 = vadd.f32 %v1367, %v1663
      %v1708 = vadd.f32 %v1372, %v1668
      %v1709 = vadd.f32 %v1375, %v1671
      %v1710 = vld [vmem:[#allocation2 + $0x1f] sm:$0xff]
      %v1711 = vld [vmem:[#allocation2 + $0x27] sm:$0xff]
      %v1712 = vld [vmem:[#allocation2 + $0x2f] sm:$0xff]
      %v1713 = vld [vmem:[#allocation2 + $0x37] sm:$0xff]
      %v1714 = vld [vmem:[#allocation2 + $0x3f] sm:$0xff]
      %v1715 = vld [vmem:[#allocation2 + $0x47] sm:$0xff]
      %v1716 = vld [vmem:[#allocation2 + $0x4f] sm:$0xff]
      %v1717 = vld [vmem:[#allocation2 + $0x57] sm:$0xff]
      %v1718 = vld [vmem:[#allocation2 + $0x5f] sm:$0xff]
      %v1719 = vld [vmem:[#allocation2 + $0x67] sm:$0xff]
      %v1720 = vld [vmem:[#allocation2 + $0x6f] sm:$0xff]
      %v1721 = vld [vmem:[#allocation2 + $0x77] sm:$0xff]
      %v1722 = vld [vmem:[#allocation2 + $0x7f] sm:$0xff]
      %v1723 = vld [vmem:[#allocation2 + $0x87] sm:$0xff]
      %v1724 = vld [vmem:[#allocation2 + $0x8f] sm:$0xff]
      %v1725 = vld [vmem:[#allocation2 + $0x97] sm:$0xff]
      %v1726 = vld [vmem:[#allocation2 + $0x9f] sm:$0xff]
      %v1727 = vld [vmem:[#allocation2 + $0xa7] sm:$0xff]
      %v1728 = vld [vmem:[#allocation2 + $0xaf] sm:$0xff]
      %v1729 = vld [vmem:[#allocation2 + $0xb7] sm:$0xff]
      %v1730 = vld [vmem:[#allocation2 + $0xbf] sm:$0xff]
      %v1731 = vld [vmem:[#allocation2 + $0xc7] sm:$0xff]
      %v1732 = vld [vmem:[#allocation2 + $0xcf] sm:$0xff]
      %v1733 = vld [vmem:[#allocation2 + $0xd7] sm:$0xff]
      %v1734 = vld [vmem:[#allocation2 + $0xdf] sm:$0xff]
      %v1735 = vld [vmem:[#allocation2 + $0xe7] sm:$0xff]
      %v1736 = vld [vmem:[#allocation2 + $0xef] sm:$0xff]
      %v1737 = vld [vmem:[#allocation2 + $0xf7] sm:$0xff]
      %v1738 = vld [vmem:[#allocation2 + $0xff] sm:$0xff]
      %v1739 = vld [vmem:[#allocation2 + $0x107] sm:$0xff]
      %v1740 = vld [vmem:[#allocation2 + $0x10f] sm:$0xff]
      %v1741 = vld [vmem:[#allocation2 + $0x117] sm:$0xff]
      %v1742 = vld [vmem:[#allocation2 + $0x11f] sm:$0xff]
      %v1743 = vld [vmem:[#allocation2 + $0x127] sm:$0xff]
      %v1744 = vld [vmem:[#allocation2 + $0x12f] sm:$0xff]
      %v1745 = vld [vmem:[#allocation2 + $0x137] sm:$0xff]
      %v1746 = vpack.c.bf16 %v1711, %v1710
      %v1747 = vpack.c.bf16 %v1713, %v1712
      %v1748 = vpack.c.bf16 %v1715, %v1714
      %v1749 = vpack.c.bf16 %v1717, %v1716
      %v1750 = vpack.c.bf16 %v1719, %v1718
      %v1751 = vpack.c.bf16 %v1721, %v1720
      %v1752 = vpack.c.bf16 %v1723, %v1722
      %v1753 = vpack.c.bf16 %v1725, %v1724
      %v1754 = vpack.c.bf16 %v1727, %v1726
      %v1755 = vpack.c.bf16 %v1729, %v1728
      %v1756 = vpack.c.bf16 %v1731, %v1730
      %v1757 = vpack.c.bf16 %v1733, %v1732
      %v1758 = vpack.c.bf16 %v1735, %v1734
      %v1759 = vpack.c.bf16 %v1737, %v1736
      %v1760 = vpack.c.bf16 %v1739, %v1738
      %v1761 = vpack.c.bf16 %v1741, %v1740
      %v1762 = vpack.c.bf16 %v1743, %v1742
      %v1763 = vpack.c.bf16 %v1745, %v1744
      %s1764 = scalar_lea.vmem %s3, 192
      %v1765 = vld [vmem:[%s1764] sm:$0xf]
      %v1766 = vld [vmem:[%s1764 + $0x4] sm:$0xf]
      %v1767 = vld [vmem:[%s1764 + $0x8] sm:$0xf]
      %v1768 = vld [vmem:[%s1764 + $0xc] sm:$0xf]
      %v1769 = vld [vmem:[%s1764 + $0x10] sm:$0xf]
      %v1770 = vld [vmem:[%s1764 + $0x14] sm:$0xf]
      %v1771 = vld [vmem:[%s1764 + $0x18] sm:$0xf]
      %v1772 = vld [vmem:[%s1764 + $0x1c] sm:$0xf]
      %v1773 = vld [vmem:[%s1764 + $0x20] sm:$0xf]
      %v1774 = vld [vmem:[%s1764 + $0x24] sm:$0xf]
      %v1775 = vld [vmem:[%s1764 + $0x28] sm:$0xf]
      %v1776 = vld [vmem:[%s1764 + $0x2c] sm:$0xf]
      %v1777 = vld [vmem:[%s1764 + $0x30] sm:$0xf]
      %v1778 = vld [vmem:[%s1764 + $0x34] sm:$0xf]
      %v1779 = vld [vmem:[%s1764 + $0x38] sm:$0xf]
      %v1780 = vld [vmem:[%s1764 + $0x3c] sm:$0xf]
      %v1797 = vunpack.c.l.b16 %v1765
      %v1798 = vunpack.c.l.b16 %v1766
      %v1799 = vunpack.c.l.b16 %v1767
      %v1800 = vunpack.c.l.b16 %v1768
      %v1801 = vunpack.c.l.b16 %v1769
      %v1802 = vunpack.c.l.b16 %v1770
      %v1803 = vunpack.c.l.b16 %v1771
      %v1804 = vunpack.c.l.b16 %v1772
      %v1805 = vunpack.c.l.b16 %v1773
      %v1806 = vunpack.c.l.b16 %v1774
      %v1807 = vunpack.c.l.b16 %v1775
      %v1808 = vunpack.c.l.b16 %v1776
      %v1809 = vunpack.c.l.b16 %v1777
      %v1810 = vunpack.c.l.b16 %v1778
      %v1811 = vunpack.c.l.b16 %v1779
      %v1812 = vunpack.c.l.b16 %v1780
      %v1813 = vpack.c.b16 %v1798, %v1797
      %v1814 = vpack.c.b16 %v1800, %v1799
      %v1815 = vpack.c.b16 %v1802, %v1801
      %v1816 = vpack.c.b16 %v1804, %v1803
      %v1817 = vpack.c.b16 %v1806, %v1805
      %v1818 = vpack.c.b16 %v1808, %v1807
      %v1819 = vpack.c.b16 %v1810, %v1809
      %v1820 = vpack.c.b16 %v1812, %v1811
      %1829 = vmatprep.subr.bf16.mxu0 0
      %1830 = vmatpush1.bf16.msra.mxu0 %v1820
      %1831 = vmatprep.subr.bf16.mxu0 0
      %1832 = vmatpush1.bf16.msra.mxu0 %v1819
      %1833 = vmatprep.subr.bf16.mxu0 0
      %1834 = vmatpush1.bf16.msra.mxu0 %v1818
      %1835 = vmatprep.subr.bf16.mxu0 0
      %1836 = vmatpush1.bf16.msra.mxu0 %v1817
      %1837 = vmatprep.subr.bf16.mxu0 0
      %1838 = vmatpush1.bf16.msra.mxu0 %v1816
      %1839 = vmatprep.subr.bf16.mxu0 0
      %1840 = vmatpush1.bf16.msra.mxu0 %v1815
      %1841 = vmatprep.subr.bf16.mxu0 0
      %1842 = vmatpush1.bf16.msra.mxu0 %v1814
      %1843 = vmatprep.subr.bf16.mxu0 0
      %1844 = vmatpush1.bf16.msra.mxu0 %v1813
      %1845 = vmatprep.subr.bf16.mxu0 0
      %1846 = vmatpush2.bf16.msra.mxu0 0
      %1847 = vmatprep.subr.bf16.mxu0 0
      %1848 = vmatpush2.bf16.msra.mxu0 0
      %1849 = vmatprep.subr.bf16.mxu0 0
      %1850 = vmatpush2.bf16.msra.mxu0 0
      %1851 = vmatprep.subr.bf16.mxu0 0
      %1852 = vmatpush2.bf16.msra.mxu0 0
      %1853 = vmatprep.subr.bf16.mxu0 0
      %1854 = vmatpush2.bf16.msra.mxu0 0
      %1855 = vmatprep.subr.bf16.mxu0 0
      %1856 = vmatpush2.bf16.msra.mxu0 0
      %1857 = vmatprep.subr.bf16.mxu0 0
      %1858 = vmatpush2.bf16.msra.mxu0 0
      %1859 = vmatprep.subr.bf16.mxu0 0
      %1860 = vmatpush2.bf16.msra.mxu0 0
      %1861 = vmatprep.mubr.bf16.mxu0 0
      %1862 = vmatmul.mubr.bf16.gmra.mxu0 %v1746
      %v1863 = vpop.f32.mrf.mxu0
      %v1864 = vadd.f32 0.0, %v1863
      %v1865 = vpop.f32.mrf.mxu0
      %v1866 = vpop.f32.mrf.mxu0
      %v1867 = vadd.f32 0.0, %v1866
      %v1868 = vpop.f32.mrf.mxu0
      %1869 = vmatprep.mubr.bf16.mxu0 0
      %1870 = vmatmul.mubr.bf16.gmra.mxu0 %v1747
      %v1871 = vpop.f32.mrf.mxu0
      %v1872 = vadd.f32 0.0, %v1871
      %v1873 = vpop.f32.mrf.mxu0
      %v1874 = vpop.f32.mrf.mxu0
      %v1875 = vadd.f32 0.0, %v1874
      %v1876 = vpop.f32.mrf.mxu0
      %1877 = vmatprep.mubr.bf16.mxu0 0
      %1878 = vmatmul.mubr.bf16.gmra.mxu0 %v1748
      %v1879 = vpop.f32.mrf.mxu0
      %v1880 = vadd.f32 0.0, %v1879
      %v1881 = vpop.f32.mrf.mxu0
      %v1882 = vpop.f32.mrf.mxu0
      %v1883 = vadd.f32 0.0, %v1882
      %v1884 = vpop.f32.mrf.mxu0
      %1885 = vmatprep.mubr.bf16.mxu0 0
      %1886 = vmatmul.mubr.bf16.gmra.mxu0 %v1749
      %v1887 = vpop.f32.mrf.mxu0
      %v1888 = vadd.f32 0.0, %v1887
      %v1889 = vpop.f32.mrf.mxu0
      %v1890 = vpop.f32.mrf.mxu0
      %v1891 = vadd.f32 0.0, %v1890
      %v1892 = vpop.f32.mrf.mxu0
      %1893 = vmatprep.mubr.bf16.mxu0 0
      %1894 = vmatmul.mubr.bf16.gmra.mxu0 %v1750
      %v1895 = vpop.f32.mrf.mxu0
      %v1896 = vadd.f32 0.0, %v1895
      %v1897 = vpop.f32.mrf.mxu0
      %v1898 = vpop.f32.mrf.mxu0
      %v1899 = vadd.f32 0.0, %v1898
      %v1900 = vpop.f32.mrf.mxu0
      %1901 = vmatprep.mubr.bf16.mxu0 0
      %1902 = vmatmul.mubr.bf16.gmra.mxu0 %v1751
      %v1903 = vpop.f32.mrf.mxu0
      %v1904 = vadd.f32 0.0, %v1903
      %v1905 = vpop.f32.mrf.mxu0
      %v1906 = vpop.f32.mrf.mxu0
      %v1907 = vadd.f32 0.0, %v1906
      %v1908 = vpop.f32.mrf.mxu0
      %1909 = vmatprep.mubr.bf16.mxu0 0
      %1910 = vmatmul.mubr.bf16.gmra.mxu0 %v1752
      %v1911 = vpop.f32.mrf.mxu0
      %v1912 = vadd.f32 0.0, %v1911
      %v1913 = vpop.f32.mrf.mxu0
      %v1914 = vpop.f32.mrf.mxu0
      %v1915 = vadd.f32 0.0, %v1914
      %v1916 = vpop.f32.mrf.mxu0
      %1917 = vmatprep.mubr.bf16.mxu0 0
      %1918 = vmatmul.mubr.bf16.gmra.mxu0 %v1753
      %v1919 = vpop.f32.mrf.mxu0
      %v1920 = vadd.f32 0.0, %v1919
      %v1921 = vpop.f32.mrf.mxu0
      %v1922 = vpop.f32.mrf.mxu0
      %v1923 = vadd.f32 0.0, %v1922
      %v1924 = vpop.f32.mrf.mxu0
      %1925 = vmatprep.mubr.bf16.mxu0 0
      %1926 = vmatmul.mubr.bf16.gmra.mxu0 %v1754
      %v1927 = vpop.f32.mrf.mxu0
      %v1928 = vadd.f32 0.0, %v1927
      %v1929 = vpop.f32.mrf.mxu0
      %v1930 = vpop.f32.mrf.mxu0
      %v1931 = vadd.f32 0.0, %v1930
      %v1932 = vpop.f32.mrf.mxu0
      %1933 = vmatprep.mubr.bf16.mxu0 0
      %1934 = vmatmul.mubr.bf16.gmra.mxu0 %v1755
      %v1935 = vpop.f32.mrf.mxu0
      %v1936 = vadd.f32 0.0, %v1935
      %v1937 = vpop.f32.mrf.mxu0
      %v1938 = vpop.f32.mrf.mxu0
      %v1939 = vadd.f32 0.0, %v1938
      %v1940 = vpop.f32.mrf.mxu0
      %1941 = vmatprep.mubr.bf16.mxu0 0
      %1942 = vmatmul.mubr.bf16.gmra.mxu0 %v1756
      %v1943 = vpop.f32.mrf.mxu0
      %v1944 = vadd.f32 0.0, %v1943
      %v1945 = vpop.f32.mrf.mxu0
      %v1946 = vpop.f32.mrf.mxu0
      %v1947 = vadd.f32 0.0, %v1946
      %v1948 = vpop.f32.mrf.mxu0
      %1949 = vmatprep.mubr.bf16.mxu0 0
      %1950 = vmatmul.mubr.bf16.gmra.mxu0 %v1757
      %v1951 = vpop.f32.mrf.mxu0
      %v1952 = vadd.f32 0.0, %v1951
      %v1953 = vpop.f32.mrf.mxu0
      %v1954 = vpop.f32.mrf.mxu0
      %v1955 = vadd.f32 0.0, %v1954
      %v1956 = vpop.f32.mrf.mxu0
      %1957 = vmatprep.mubr.bf16.mxu0 0
      %1958 = vmatmul.mubr.bf16.gmra.mxu0 %v1758
      %v1959 = vpop.f32.mrf.mxu0
      %v1960 = vadd.f32 0.0, %v1959
      %v1961 = vpop.f32.mrf.mxu0
      %v1962 = vpop.f32.mrf.mxu0
      %v1963 = vadd.f32 0.0, %v1962
      %v1964 = vpop.f32.mrf.mxu0
      %1965 = vmatprep.mubr.bf16.mxu0 0
      %1966 = vmatmul.mubr.bf16.gmra.mxu0 %v1759
      %v1967 = vpop.f32.mrf.mxu0
      %v1968 = vadd.f32 0.0, %v1967
      %v1969 = vpop.f32.mrf.mxu0
      %v1970 = vpop.f32.mrf.mxu0
      %v1971 = vadd.f32 0.0, %v1970
      %v1972 = vpop.f32.mrf.mxu0
      %1973 = vmatprep.mubr.bf16.mxu0 0
      %1974 = vmatmul.mubr.bf16.gmra.mxu0 %v1760
      %v1975 = vpop.f32.mrf.mxu0
      %v1976 = vadd.f32 0.0, %v1975
      %v1977 = vpop.f32.mrf.mxu0
      %v1978 = vpop.f32.mrf.mxu0
      %v1979 = vadd.f32 0.0, %v1978
      %v1980 = vpop.f32.mrf.mxu0
      %1981 = vmatprep.mubr.bf16.mxu0 0
      %1982 = vmatmul.mubr.bf16.gmra.mxu0 %v1761
      %v1983 = vpop.f32.mrf.mxu0
      %v1984 = vadd.f32 0.0, %v1983
      %v1985 = vpop.f32.mrf.mxu0
      %v1986 = vpop.f32.mrf.mxu0
      %v1987 = vadd.f32 0.0, %v1986
      %v1988 = vpop.f32.mrf.mxu0
      %1989 = vmatprep.mubr.bf16.mxu0 0
      %1990 = vmatmul.mubr.bf16.gmra.mxu0 %v1762
      %v1991 = vpop.f32.mrf.mxu0
      %v1992 = vadd.f32 0.0, %v1991
      %v1993 = vpop.f32.mrf.mxu0
      %v1994 = vpop.f32.mrf.mxu0
      %v1995 = vadd.f32 0.0, %v1994
      %v1996 = vpop.f32.mrf.mxu0
      %1997 = vmatprep.mubr.bf16.mxu0 0
      %1998 = vmatmul.mubr.bf16.gmra.mxu0 %v1763
      %v1999 = vpop.f32.mrf.mxu0
      %v2000 = vadd.f32 0.0, %v1999
      %v2001 = vpop.f32.mrf.mxu0
      %v2002 = vpop.f32.mrf.mxu0
      %v2003 = vadd.f32 0.0, %v2002
      %v2004 = vpop.f32.mrf.mxu0
      %2005 = vdwg.mxu0
      %v2006 = vadd.f32 %v1674, %v1864
      %v2007 = vadd.f32 %v1675, %v1867
      %v2008 = vadd.f32 %v1676, %v1872
      %v2009 = vadd.f32 %v1677, %v1875
      %v2010 = vadd.f32 %v1678, %v1880
      %v2011 = vadd.f32 %v1679, %v1883
      %v2012 = vadd.f32 %v1680, %v1888
      %v2013 = vadd.f32 %v1681, %v1891
      %v2014 = vadd.f32 %v1682, %v1896
      %v2015 = vadd.f32 %v1683, %v1899
      %v2016 = vadd.f32 %v1684, %v1904
      %v2017 = vadd.f32 %v1685, %v1907
      %v2018 = vadd.f32 %v1686, %v1912
      %v2019 = vadd.f32 %v1687, %v1915
      %v2020 = vadd.f32 %v1688, %v1920
      %v2021 = vadd.f32 %v1689, %v1923
      %v2022 = vadd.f32 %v1690, %v1928
      %v2023 = vadd.f32 %v1691, %v1931
      %v2024 = vadd.f32 %v1692, %v1936
      %v2025 = vadd.f32 %v1693, %v1939
      %v2026 = vadd.f32 %v1694, %v1944
      %v2027 = vadd.f32 %v1695, %v1947
      %v2028 = vadd.f32 %v1696, %v1952
      %v2029 = vadd.f32 %v1697, %v1955
      %v2030 = vadd.f32 %v1698, %v1960
      %v2031 = vadd.f32 %v1699, %v1963
      %v2032 = vadd.f32 %v1700, %v1968
      %v2033 = vadd.f32 %v1701, %v1971
      %v2034 = vadd.f32 %v1702, %v1976
      %v2035 = vadd.f32 %v1703, %v1979
      %v2036 = vadd.f32 %v1704, %v1984
      %v2037 = vadd.f32 %v1705, %v1987
      %v2038 = vadd.f32 %v1706, %v1992
      %v2039 = vadd.f32 %v1707, %v1995
      %v2040 = vadd.f32 %v1708, %v2000
      %v2041 = vadd.f32 %v1709, %v2003
      %v2042 = vld [vmem:[#allocation2 + $0x20] sm:$0xff]
      %v2043 = vld [vmem:[#allocation2 + $0x28] sm:$0xff]
      %v2044 = vld [vmem:[#allocation2 + $0x30] sm:$0xff]
      %v2045 = vld [vmem:[#allocation2 + $0x38] sm:$0xff]
      %v2046 = vld [vmem:[#allocation2 + $0x40] sm:$0xff]
      %v2047 = vld [vmem:[#allocation2 + $0x48] sm:$0xff]
      %v2048 = vld [vmem:[#allocation2 + $0x50] sm:$0xff]
      %v2049 = vld [vmem:[#allocation2 + $0x58] sm:$0xff]
      %v2050 = vld [vmem:[#allocation2 + $0x60] sm:$0xff]
      %v2051 = vld [vmem:[#allocation2 + $0x68] sm:$0xff]
      %v2052 = vld [vmem:[#allocation2 + $0x70] sm:$0xff]
      %v2053 = vld [vmem:[#allocation2 + $0x78] sm:$0xff]
      %v2054 = vld [vmem:[#allocation2 + $0x80] sm:$0xff]
      %v2055 = vld [vmem:[#allocation2 + $0x88] sm:$0xff]
      %v2056 = vld [vmem:[#allocation2 + $0x90] sm:$0xff]
      %v2057 = vld [vmem:[#allocation2 + $0x98] sm:$0xff]
      %v2058 = vld [vmem:[#allocation2 + $0xa0] sm:$0xff]
      %v2059 = vld [vmem:[#allocation2 + $0xa8] sm:$0xff]
      %v2060 = vld [vmem:[#allocation2 + $0xb0] sm:$0xff]
      %v2061 = vld [vmem:[#allocation2 + $0xb8] sm:$0xff]
      %v2062 = vld [vmem:[#allocation2 + $0xc0] sm:$0xff]
      %v2063 = vld [vmem:[#allocation2 + $0xc8] sm:$0xff]
      %v2064 = vld [vmem:[#allocation2 + $0xd0] sm:$0xff]
      %v2065 = vld [vmem:[#allocation2 + $0xd8] sm:$0xff]
      %v2066 = vld [vmem:[#allocation2 + $0xe0] sm:$0xff]
      %v2067 = vld [vmem:[#allocation2 + $0xe8] sm:$0xff]
      %v2068 = vld [vmem:[#allocation2 + $0xf0] sm:$0xff]
      %v2069 = vld [vmem:[#allocation2 + $0xf8] sm:$0xff]
      %v2070 = vld [vmem:[#allocation2 + $0x100] sm:$0xff]
      %v2071 = vld [vmem:[#allocation2 + $0x108] sm:$0xff]
      %v2072 = vld [vmem:[#allocation2 + $0x110] sm:$0xff]
      %v2073 = vld [vmem:[#allocation2 + $0x118] sm:$0xff]
      %v2074 = vld [vmem:[#allocation2 + $0x120] sm:$0xff]
      %v2075 = vld [vmem:[#allocation2 + $0x128] sm:$0xff]
      %v2076 = vld [vmem:[#allocation2 + $0x130] sm:$0xff]
      %v2077 = vld [vmem:[#allocation2 + $0x138] sm:$0xff]
      %v2078 = vpack.c.bf16 %v2043, %v2042
      %v2079 = vpack.c.bf16 %v2045, %v2044
      %v2080 = vpack.c.bf16 %v2047, %v2046
      %v2081 = vpack.c.bf16 %v2049, %v2048
      %v2082 = vpack.c.bf16 %v2051, %v2050
      %v2083 = vpack.c.bf16 %v2053, %v2052
      %v2084 = vpack.c.bf16 %v2055, %v2054
      %v2085 = vpack.c.bf16 %v2057, %v2056
      %v2086 = vpack.c.bf16 %v2059, %v2058
      %v2087 = vpack.c.bf16 %v2061, %v2060
      %v2088 = vpack.c.bf16 %v2063, %v2062
      %v2089 = vpack.c.bf16 %v2065, %v2064
      %v2090 = vpack.c.bf16 %v2067, %v2066
      %v2091 = vpack.c.bf16 %v2069, %v2068
      %v2092 = vpack.c.bf16 %v2071, %v2070
      %v2093 = vpack.c.bf16 %v2073, %v2072
      %v2094 = vpack.c.bf16 %v2075, %v2074
      %v2095 = vpack.c.bf16 %v2077, %v2076
      %s2096 = scalar_lea.vmem %s3, 256
      %v2097 = vld [vmem:[%s2096] sm:$0xf]
      %v2098 = vld [vmem:[%s2096 + $0x4] sm:$0xf]
      %v2099 = vld [vmem:[%s2096 + $0x8] sm:$0xf]
      %v2100 = vld [vmem:[%s2096 + $0xc] sm:$0xf]
      %v2101 = vld [vmem:[%s2096 + $0x10] sm:$0xf]
      %v2102 = vld [vmem:[%s2096 + $0x14] sm:$0xf]
      %v2103 = vld [vmem:[%s2096 + $0x18] sm:$0xf]
      %v2104 = vld [vmem:[%s2096 + $0x1c] sm:$0xf]
      %v2105 = vld [vmem:[%s2096 + $0x20] sm:$0xf]
      %v2106 = vld [vmem:[%s2096 + $0x24] sm:$0xf]
      %v2107 = vld [vmem:[%s2096 + $0x28] sm:$0xf]
      %v2108 = vld [vmem:[%s2096 + $0x2c] sm:$0xf]
      %v2109 = vld [vmem:[%s2096 + $0x30] sm:$0xf]
      %v2110 = vld [vmem:[%s2096 + $0x34] sm:$0xf]
      %v2111 = vld [vmem:[%s2096 + $0x38] sm:$0xf]
      %v2112 = vld [vmem:[%s2096 + $0x3c] sm:$0xf]
      %v2129 = vunpack.c.l.b16 %v2097
      %v2130 = vunpack.c.l.b16 %v2098
      %v2131 = vunpack.c.l.b16 %v2099
      %v2132 = vunpack.c.l.b16 %v2100
      %v2133 = vunpack.c.l.b16 %v2101
      %v2134 = vunpack.c.l.b16 %v2102
      %v2135 = vunpack.c.l.b16 %v2103
      %v2136 = vunpack.c.l.b16 %v2104
      %v2137 = vunpack.c.l.b16 %v2105
      %v2138 = vunpack.c.l.b16 %v2106
      %v2139 = vunpack.c.l.b16 %v2107
      %v2140 = vunpack.c.l.b16 %v2108
      %v2141 = vunpack.c.l.b16 %v2109
      %v2142 = vunpack.c.l.b16 %v2110
      %v2143 = vunpack.c.l.b16 %v2111
      %v2144 = vunpack.c.l.b16 %v2112
      %v2145 = vpack.c.b16 %v2130, %v2129
      %v2146 = vpack.c.b16 %v2132, %v2131
      %v2147 = vpack.c.b16 %v2134, %v2133
      %v2148 = vpack.c.b16 %v2136, %v2135
      %v2149 = vpack.c.b16 %v2138, %v2137
      %v2150 = vpack.c.b16 %v2140, %v2139
      %v2151 = vpack.c.b16 %v2142, %v2141
      %v2152 = vpack.c.b16 %v2144, %v2143
      %2161 = vmatprep.subr.bf16.mxu0 0
      %2162 = vmatpush1.bf16.msra.mxu0 %v2152
      %2163 = vmatprep.subr.bf16.mxu0 0
      %2164 = vmatpush1.bf16.msra.mxu0 %v2151
      %2165 = vmatprep.subr.bf16.mxu0 0
      %2166 = vmatpush1.bf16.msra.mxu0 %v2150
      %2167 = vmatprep.subr.bf16.mxu0 0
      %2168 = vmatpush1.bf16.msra.mxu0 %v2149
      %2169 = vmatprep.subr.bf16.mxu0 0
      %2170 = vmatpush1.bf16.msra.mxu0 %v2148
      %2171 = vmatprep.subr.bf16.mxu0 0
      %2172 = vmatpush1.bf16.msra.mxu0 %v2147
      %2173 = vmatprep.subr.bf16.mxu0 0
      %2174 = vmatpush1.bf16.msra.mxu0 %v2146
      %2175 = vmatprep.subr.bf16.mxu0 0
      %2176 = vmatpush1.bf16.msra.mxu0 %v2145
      %2177 = vmatprep.subr.bf16.mxu0 0
      %2178 = vmatpush2.bf16.msra.mxu0 0
      %2179 = vmatprep.subr.bf16.mxu0 0
      %2180 = vmatpush2.bf16.msra.mxu0 0
      %2181 = vmatprep.subr.bf16.mxu0 0
      %2182 = vmatpush2.bf16.msra.mxu0 0
      %2183 = vmatprep.subr.bf16.mxu0 0
      %2184 = vmatpush2.bf16.msra.mxu0 0
      %2185 = vmatprep.subr.bf16.mxu0 0
      %2186 = vmatpush2.bf16.msra.mxu0 0
      %2187 = vmatprep.subr.bf16.mxu0 0
      %2188 = vmatpush2.bf16.msra.mxu0 0
      %2189 = vmatprep.subr.bf16.mxu0 0
      %2190 = vmatpush2.bf16.msra.mxu0 0
      %2191 = vmatprep.subr.bf16.mxu0 0
      %2192 = vmatpush2.bf16.msra.mxu0 0
      %2193 = vmatprep.mubr.bf16.mxu0 0
      %2194 = vmatmul.mubr.bf16.gmra.mxu0 %v2078
      %v2195 = vpop.f32.mrf.mxu0
      %v2196 = vadd.f32 0.0, %v2195
      %v2197 = vpop.f32.mrf.mxu0
      %v2198 = vpop.f32.mrf.mxu0
      %v2199 = vadd.f32 0.0, %v2198
      %v2200 = vpop.f32.mrf.mxu0
      %2201 = vmatprep.mubr.bf16.mxu0 0
      %2202 = vmatmul.mubr.bf16.gmra.mxu0 %v2079
      %v2203 = vpop.f32.mrf.mxu0
      %v2204 = vadd.f32 0.0, %v2203
      %v2205 = vpop.f32.mrf.mxu0
      %v2206 = vpop.f32.mrf.mxu0
      %v2207 = vadd.f32 0.0, %v2206
      %v2208 = vpop.f32.mrf.mxu0
      %2209 = vmatprep.mubr.bf16.mxu0 0
      %2210 = vmatmul.mubr.bf16.gmra.mxu0 %v2080
      %v2211 = vpop.f32.mrf.mxu0
      %v2212 = vadd.f32 0.0, %v2211
      %v2213 = vpop.f32.mrf.mxu0
      %v2214 = vpop.f32.mrf.mxu0
      %v2215 = vadd.f32 0.0, %v2214
      %v2216 = vpop.f32.mrf.mxu0
      %2217 = vmatprep.mubr.bf16.mxu0 0
      %2218 = vmatmul.mubr.bf16.gmra.mxu0 %v2081
      %v2219 = vpop.f32.mrf.mxu0
      %v2220 = vadd.f32 0.0, %v2219
      %v2221 = vpop.f32.mrf.mxu0
      %v2222 = vpop.f32.mrf.mxu0
      %v2223 = vadd.f32 0.0, %v2222
      %v2224 = vpop.f32.mrf.mxu0
      %2225 = vmatprep.mubr.bf16.mxu0 0
      %2226 = vmatmul.mubr.bf16.gmra.mxu0 %v2082
      %v2227 = vpop.f32.mrf.mxu0
      %v2228 = vadd.f32 0.0, %v2227
      %v2229 = vpop.f32.mrf.mxu0
      %v2230 = vpop.f32.mrf.mxu0
      %v2231 = vadd.f32 0.0, %v2230
      %v2232 = vpop.f32.mrf.mxu0
      %2233 = vmatprep.mubr.bf16.mxu0 0
      %2234 = vmatmul.mubr.bf16.gmra.mxu0 %v2083
      %v2235 = vpop.f32.mrf.mxu0
      %v2236 = vadd.f32 0.0, %v2235
      %v2237 = vpop.f32.mrf.mxu0
      %v2238 = vpop.f32.mrf.mxu0
      %v2239 = vadd.f32 0.0, %v2238
      %v2240 = vpop.f32.mrf.mxu0
      %2241 = vmatprep.mubr.bf16.mxu0 0
      %2242 = vmatmul.mubr.bf16.gmra.mxu0 %v2084
      %v2243 = vpop.f32.mrf.mxu0
      %v2244 = vadd.f32 0.0, %v2243
      %v2245 = vpop.f32.mrf.mxu0
      %v2246 = vpop.f32.mrf.mxu0
      %v2247 = vadd.f32 0.0, %v2246
      %v2248 = vpop.f32.mrf.mxu0
      %2249 = vmatprep.mubr.bf16.mxu0 0
      %2250 = vmatmul.mubr.bf16.gmra.mxu0 %v2085
      %v2251 = vpop.f32.mrf.mxu0
      %v2252 = vadd.f32 0.0, %v2251
      %v2253 = vpop.f32.mrf.mxu0
      %v2254 = vpop.f32.mrf.mxu0
      %v2255 = vadd.f32 0.0, %v2254
      %v2256 = vpop.f32.mrf.mxu0
      %2257 = vmatprep.mubr.bf16.mxu0 0
      %2258 = vmatmul.mubr.bf16.gmra.mxu0 %v2086
      %v2259 = vpop.f32.mrf.mxu0
      %v2260 = vadd.f32 0.0, %v2259
      %v2261 = vpop.f32.mrf.mxu0
      %v2262 = vpop.f32.mrf.mxu0
      %v2263 = vadd.f32 0.0, %v2262
      %v2264 = vpop.f32.mrf.mxu0
      %2265 = vmatprep.mubr.bf16.mxu0 0
      %2266 = vmatmul.mubr.bf16.gmra.mxu0 %v2087
      %v2267 = vpop.f32.mrf.mxu0
      %v2268 = vadd.f32 0.0, %v2267
      %v2269 = vpop.f32.mrf.mxu0
      %v2270 = vpop.f32.mrf.mxu0
      %v2271 = vadd.f32 0.0, %v2270
      %v2272 = vpop.f32.mrf.mxu0
      %2273 = vmatprep.mubr.bf16.mxu0 0
      %2274 = vmatmul.mubr.bf16.gmra.mxu0 %v2088
      %v2275 = vpop.f32.mrf.mxu0
      %v2276 = vadd.f32 0.0, %v2275
      %v2277 = vpop.f32.mrf.mxu0
      %v2278 = vpop.f32.mrf.mxu0
      %v2279 = vadd.f32 0.0, %v2278
      %v2280 = vpop.f32.mrf.mxu0
      %2281 = vmatprep.mubr.bf16.mxu0 0
      %2282 = vmatmul.mubr.bf16.gmra.mxu0 %v2089
      %v2283 = vpop.f32.mrf.mxu0
      %v2284 = vadd.f32 0.0, %v2283
      %v2285 = vpop.f32.mrf.mxu0
      %v2286 = vpop.f32.mrf.mxu0
      %v2287 = vadd.f32 0.0, %v2286
      %v2288 = vpop.f32.mrf.mxu0
      %2289 = vmatprep.mubr.bf16.mxu0 0
      %2290 = vmatmul.mubr.bf16.gmra.mxu0 %v2090
      %v2291 = vpop.f32.mrf.mxu0
      %v2292 = vadd.f32 0.0, %v2291
      %v2293 = vpop.f32.mrf.mxu0
      %v2294 = vpop.f32.mrf.mxu0
      %v2295 = vadd.f32 0.0, %v2294
      %v2296 = vpop.f32.mrf.mxu0
      %2297 = vmatprep.mubr.bf16.mxu0 0
      %2298 = vmatmul.mubr.bf16.gmra.mxu0 %v2091
      %v2299 = vpop.f32.mrf.mxu0
      %v2300 = vadd.f32 0.0, %v2299
      %v2301 = vpop.f32.mrf.mxu0
      %v2302 = vpop.f32.mrf.mxu0
      %v2303 = vadd.f32 0.0, %v2302
      %v2304 = vpop.f32.mrf.mxu0
      %2305 = vmatprep.mubr.bf16.mxu0 0
      %2306 = vmatmul.mubr.bf16.gmra.mxu0 %v2092
      %v2307 = vpop.f32.mrf.mxu0
      %v2308 = vadd.f32 0.0, %v2307
      %v2309 = vpop.f32.mrf.mxu0
      %v2310 = vpop.f32.mrf.mxu0
      %v2311 = vadd.f32 0.0, %v2310
      %v2312 = vpop.f32.mrf.mxu0
      %2313 = vmatprep.mubr.bf16.mxu0 0
      %2314 = vmatmul.mubr.bf16.gmra.mxu0 %v2093
      %v2315 = vpop.f32.mrf.mxu0
      %v2316 = vadd.f32 0.0, %v2315
      %v2317 = vpop.f32.mrf.mxu0
      %v2318 = vpop.f32.mrf.mxu0
      %v2319 = vadd.f32 0.0, %v2318
      %v2320 = vpop.f32.mrf.mxu0
      %2321 = vmatprep.mubr.bf16.mxu0 0
      %2322 = vmatmul.mubr.bf16.gmra.mxu0 %v2094
      %v2323 = vpop.f32.mrf.mxu0
      %v2324 = vadd.f32 0.0, %v2323
      %v2325 = vpop.f32.mrf.mxu0
      %v2326 = vpop.f32.mrf.mxu0
      %v2327 = vadd.f32 0.0, %v2326
      %v2328 = vpop.f32.mrf.mxu0
      %2329 = vmatprep.mubr.bf16.mxu0 0
      %2330 = vmatmul.mubr.bf16.gmra.mxu0 %v2095
      %v2331 = vpop.f32.mrf.mxu0
      %v2332 = vadd.f32 0.0, %v2331
      %v2333 = vpop.f32.mrf.mxu0
      %v2334 = vpop.f32.mrf.mxu0
      %v2335 = vadd.f32 0.0, %v2334
      %v2336 = vpop.f32.mrf.mxu0
      %2337 = vdwg.mxu0
      %v2338 = vadd.f32 %v2006, %v2196
      %v2339 = vadd.f32 %v2007, %v2199
      %v2340 = vadd.f32 %v2008, %v2204
      %v2341 = vadd.f32 %v2009, %v2207
      %v2342 = vadd.f32 %v2010, %v2212
      %v2343 = vadd.f32 %v2011, %v2215
      %v2344 = vadd.f32 %v2012, %v2220
      %v2345 = vadd.f32 %v2013, %v2223
      %v2346 = vadd.f32 %v2014, %v2228
      %v2347 = vadd.f32 %v2015, %v2231
      %v2348 = vadd.f32 %v2016, %v2236
      %v2349 = vadd.f32 %v2017, %v2239
      %v2350 = vadd.f32 %v2018, %v2244
      %v2351 = vadd.f32 %v2019, %v2247
      %v2352 = vadd.f32 %v2020, %v2252
      %v2353 = vadd.f32 %v2021, %v2255
      %v2354 = vadd.f32 %v2022, %v2260
      %v2355 = vadd.f32 %v2023, %v2263
      %v2356 = vadd.f32 %v2024, %v2268
      %v2357 = vadd.f32 %v2025, %v2271
      %v2358 = vadd.f32 %v2026, %v2276
      %v2359 = vadd.f32 %v2027, %v2279
      %v2360 = vadd.f32 %v2028, %v2284
      %v2361 = vadd.f32 %v2029, %v2287
      %v2362 = vadd.f32 %v2030, %v2292
      %v2363 = vadd.f32 %v2031, %v2295
      %v2364 = vadd.f32 %v2032, %v2300
      %v2365 = vadd.f32 %v2033, %v2303
      %v2366 = vadd.f32 %v2034, %v2308
      %v2367 = vadd.f32 %v2035, %v2311
      %v2368 = vadd.f32 %v2036, %v2316
      %v2369 = vadd.f32 %v2037, %v2319
      %v2370 = vadd.f32 %v2038, %v2324
      %v2371 = vadd.f32 %v2039, %v2327
      %v2372 = vadd.f32 %v2040, %v2332
      %v2373 = vadd.f32 %v2041, %v2335
      %v2374 = vld [vmem:[#allocation2 + $0x21] sm:$0xff]
      %v2375 = vld [vmem:[#allocation2 + $0x29] sm:$0xff]
      %v2376 = vld [vmem:[#allocation2 + $0x31] sm:$0xff]
      %v2377 = vld [vmem:[#allocation2 + $0x39] sm:$0xff]
      %v2378 = vld [vmem:[#allocation2 + $0x41] sm:$0xff]
      %v2379 = vld [vmem:[#allocation2 + $0x49] sm:$0xff]
      %v2380 = vld [vmem:[#allocation2 + $0x51] sm:$0xff]
      %v2381 = vld [vmem:[#allocation2 + $0x59] sm:$0xff]
      %v2382 = vld [vmem:[#allocation2 + $0x61] sm:$0xff]
      %v2383 = vld [vmem:[#allocation2 + $0x69] sm:$0xff]
      %v2384 = vld [vmem:[#allocation2 + $0x71] sm:$0xff]
      %v2385 = vld [vmem:[#allocation2 + $0x79] sm:$0xff]
      %v2386 = vld [vmem:[#allocation2 + $0x81] sm:$0xff]
      %v2387 = vld [vmem:[#allocation2 + $0x89] sm:$0xff]
      %v2388 = vld [vmem:[#allocation2 + $0x91] sm:$0xff]
      %v2389 = vld [vmem:[#allocation2 + $0x99] sm:$0xff]
      %v2390 = vld [vmem:[#allocation2 + $0xa1] sm:$0xff]
      %v2391 = vld [vmem:[#allocation2 + $0xa9] sm:$0xff]
      %v2392 = vld [vmem:[#allocation2 + $0xb1] sm:$0xff]
      %v2393 = vld [vmem:[#allocation2 + $0xb9] sm:$0xff]
      %v2394 = vld [vmem:[#allocation2 + $0xc1] sm:$0xff]
      %v2395 = vld [vmem:[#allocation2 + $0xc9] sm:$0xff]
      %v2396 = vld [vmem:[#allocation2 + $0xd1] sm:$0xff]
      %v2397 = vld [vmem:[#allocation2 + $0xd9] sm:$0xff]
      %v2398 = vld [vmem:[#allocation2 + $0xe1] sm:$0xff]
      %v2399 = vld [vmem:[#allocation2 + $0xe9] sm:$0xff]
      %v2400 = vld [vmem:[#allocation2 + $0xf1] sm:$0xff]
      %v2401 = vld [vmem:[#allocation2 + $0xf9] sm:$0xff]
      %v2402 = vld [vmem:[#allocation2 + $0x101] sm:$0xff]
      %v2403 = vld [vmem:[#allocation2 + $0x109] sm:$0xff]
      %v2404 = vld [vmem:[#allocation2 + $0x111] sm:$0xff]
      %v2405 = vld [vmem:[#allocation2 + $0x119] sm:$0xff]
      %v2406 = vld [vmem:[#allocation2 + $0x121] sm:$0xff]
      %v2407 = vld [vmem:[#allocation2 + $0x129] sm:$0xff]
      %v2408 = vld [vmem:[#allocation2 + $0x131] sm:$0xff]
      %v2409 = vld [vmem:[#allocation2 + $0x139] sm:$0xff]
      %v2410 = vpack.c.bf16 %v2375, %v2374
      %v2411 = vpack.c.bf16 %v2377, %v2376
      %v2412 = vpack.c.bf16 %v2379, %v2378
      %v2413 = vpack.c.bf16 %v2381, %v2380
      %v2414 = vpack.c.bf16 %v2383, %v2382
      %v2415 = vpack.c.bf16 %v2385, %v2384
      %v2416 = vpack.c.bf16 %v2387, %v2386
      %v2417 = vpack.c.bf16 %v2389, %v2388
      %v2418 = vpack.c.bf16 %v2391, %v2390
      %v2419 = vpack.c.bf16 %v2393, %v2392
      %v2420 = vpack.c.bf16 %v2395, %v2394
      %v2421 = vpack.c.bf16 %v2397, %v2396
      %v2422 = vpack.c.bf16 %v2399, %v2398
      %v2423 = vpack.c.bf16 %v2401, %v2400
      %v2424 = vpack.c.bf16 %v2403, %v2402
      %v2425 = vpack.c.bf16 %v2405, %v2404
      %v2426 = vpack.c.bf16 %v2407, %v2406
      %v2427 = vpack.c.bf16 %v2409, %v2408
      %s2428 = scalar_lea.vmem %s3, 320
      %v2429 = vld [vmem:[%s2428] sm:$0xf]
      %v2430 = vld [vmem:[%s2428 + $0x4] sm:$0xf]
      %v2431 = vld [vmem:[%s2428 + $0x8] sm:$0xf]
      %v2432 = vld [vmem:[%s2428 + $0xc] sm:$0xf]
      %v2433 = vld [vmem:[%s2428 + $0x10] sm:$0xf]
      %v2434 = vld [vmem:[%s2428 + $0x14] sm:$0xf]
      %v2435 = vld [vmem:[%s2428 + $0x18] sm:$0xf]
      %v2436 = vld [vmem:[%s2428 + $0x1c] sm:$0xf]
      %v2437 = vld [vmem:[%s2428 + $0x20] sm:$0xf]
      %v2438 = vld [vmem:[%s2428 + $0x24] sm:$0xf]
      %v2439 = vld [vmem:[%s2428 + $0x28] sm:$0xf]
      %v2440 = vld [vmem:[%s2428 + $0x2c] sm:$0xf]
      %v2441 = vld [vmem:[%s2428 + $0x30] sm:$0xf]
      %v2442 = vld [vmem:[%s2428 + $0x34] sm:$0xf]
      %v2443 = vld [vmem:[%s2428 + $0x38] sm:$0xf]
      %v2444 = vld [vmem:[%s2428 + $0x3c] sm:$0xf]
      %v2461 = vunpack.c.l.b16 %v2429
      %v2462 = vunpack.c.l.b16 %v2430
      %v2463 = vunpack.c.l.b16 %v2431
      %v2464 = vunpack.c.l.b16 %v2432
      %v2465 = vunpack.c.l.b16 %v2433
      %v2466 = vunpack.c.l.b16 %v2434
      %v2467 = vunpack.c.l.b16 %v2435
      %v2468 = vunpack.c.l.b16 %v2436
      %v2469 = vunpack.c.l.b16 %v2437
      %v2470 = vunpack.c.l.b16 %v2438
      %v2471 = vunpack.c.l.b16 %v2439
      %v2472 = vunpack.c.l.b16 %v2440
      %v2473 = vunpack.c.l.b16 %v2441
      %v2474 = vunpack.c.l.b16 %v2442
      %v2475 = vunpack.c.l.b16 %v2443
      %v2476 = vunpack.c.l.b16 %v2444
      %v2477 = vpack.c.b16 %v2462, %v2461
      %v2478 = vpack.c.b16 %v2464, %v2463
      %v2479 = vpack.c.b16 %v2466, %v2465
      %v2480 = vpack.c.b16 %v2468, %v2467
      %v2481 = vpack.c.b16 %v2470, %v2469
      %v2482 = vpack.c.b16 %v2472, %v2471
      %v2483 = vpack.c.b16 %v2474, %v2473
      %v2484 = vpack.c.b16 %v2476, %v2475
      %2493 = vmatprep.subr.bf16.mxu0 0
      %2494 = vmatpush1.bf16.msra.mxu0 %v2484
      %2495 = vmatprep.subr.bf16.mxu0 0
      %2496 = vmatpush1.bf16.msra.mxu0 %v2483
      %2497 = vmatprep.subr.bf16.mxu0 0
      %2498 = vmatpush1.bf16.msra.mxu0 %v2482
      %2499 = vmatprep.subr.bf16.mxu0 0
      %2500 = vmatpush1.bf16.msra.mxu0 %v2481
      %2501 = vmatprep.subr.bf16.mxu0 0
      %2502 = vmatpush1.bf16.msra.mxu0 %v2480
      %2503 = vmatprep.subr.bf16.mxu0 0
      %2504 = vmatpush1.bf16.msra.mxu0 %v2479
      %2505 = vmatprep.subr.bf16.mxu0 0
      %2506 = vmatpush1.bf16.msra.mxu0 %v2478
      %2507 = vmatprep.subr.bf16.mxu0 0
      %2508 = vmatpush1.bf16.msra.mxu0 %v2477
      %2509 = vmatprep.subr.bf16.mxu0 0
      %2510 = vmatpush2.bf16.msra.mxu0 0
      %2511 = vmatprep.subr.bf16.mxu0 0
      %2512 = vmatpush2.bf16.msra.mxu0 0
      %2513 = vmatprep.subr.bf16.mxu0 0
      %2514 = vmatpush2.bf16.msra.mxu0 0
      %2515 = vmatprep.subr.bf16.mxu0 0
      %2516 = vmatpush2.bf16.msra.mxu0 0
      %2517 = vmatprep.subr.bf16.mxu0 0
      %2518 = vmatpush2.bf16.msra.mxu0 0
      %2519 = vmatprep.subr.bf16.mxu0 0
      %2520 = vmatpush2.bf16.msra.mxu0 0
      %2521 = vmatprep.subr.bf16.mxu0 0
      %2522 = vmatpush2.bf16.msra.mxu0 0
      %2523 = vmatprep.subr.bf16.mxu0 0
      %2524 = vmatpush2.bf16.msra.mxu0 0
      %2525 = vmatprep.mubr.bf16.mxu0 0
      %2526 = vmatmul.mubr.bf16.gmra.mxu0 %v2410
      %v2527 = vpop.f32.mrf.mxu0
      %v2528 = vadd.f32 0.0, %v2527
      %v2529 = vpop.f32.mrf.mxu0
      %v2530 = vpop.f32.mrf.mxu0
      %v2531 = vadd.f32 0.0, %v2530
      %v2532 = vpop.f32.mrf.mxu0
      %2533 = vmatprep.mubr.bf16.mxu0 0
      %2534 = vmatmul.mubr.bf16.gmra.mxu0 %v2411
      %v2535 = vpop.f32.mrf.mxu0
      %v2536 = vadd.f32 0.0, %v2535
      %v2537 = vpop.f32.mrf.mxu0
      %v2538 = vpop.f32.mrf.mxu0
      %v2539 = vadd.f32 0.0, %v2538
      %v2540 = vpop.f32.mrf.mxu0
      %2541 = vmatprep.mubr.bf16.mxu0 0
      %2542 = vmatmul.mubr.bf16.gmra.mxu0 %v2412
      %v2543 = vpop.f32.mrf.mxu0
      %v2544 = vadd.f32 0.0, %v2543
      %v2545 = vpop.f32.mrf.mxu0
      %v2546 = vpop.f32.mrf.mxu0
      %v2547 = vadd.f32 0.0, %v2546
      %v2548 = vpop.f32.mrf.mxu0
      %2549 = vmatprep.mubr.bf16.mxu0 0
      %2550 = vmatmul.mubr.bf16.gmra.mxu0 %v2413
      %v2551 = vpop.f32.mrf.mxu0
      %v2552 = vadd.f32 0.0, %v2551
      %v2553 = vpop.f32.mrf.mxu0
      %v2554 = vpop.f32.mrf.mxu0
      %v2555 = vadd.f32 0.0, %v2554
      %v2556 = vpop.f32.mrf.mxu0
      %2557 = vmatprep.mubr.bf16.mxu0 0
      %2558 = vmatmul.mubr.bf16.gmra.mxu0 %v2414
      %v2559 = vpop.f32.mrf.mxu0
      %v2560 = vadd.f32 0.0, %v2559
      %v2561 = vpop.f32.mrf.mxu0
      %v2562 = vpop.f32.mrf.mxu0
      %v2563 = vadd.f32 0.0, %v2562
      %v2564 = vpop.f32.mrf.mxu0
      %2565 = vmatprep.mubr.bf16.mxu0 0
      %2566 = vmatmul.mubr.bf16.gmra.mxu0 %v2415
      %v2567 = vpop.f32.mrf.mxu0
      %v2568 = vadd.f32 0.0, %v2567
      %v2569 = vpop.f32.mrf.mxu0
      %v2570 = vpop.f32.mrf.mxu0
      %v2571 = vadd.f32 0.0, %v2570
      %v2572 = vpop.f32.mrf.mxu0
      %2573 = vmatprep.mubr.bf16.mxu0 0
      %2574 = vmatmul.mubr.bf16.gmra.mxu0 %v2416
      %v2575 = vpop.f32.mrf.mxu0
      %v2576 = vadd.f32 0.0, %v2575
      %v2577 = vpop.f32.mrf.mxu0
      %v2578 = vpop.f32.mrf.mxu0
      %v2579 = vadd.f32 0.0, %v2578
      %v2580 = vpop.f32.mrf.mxu0
      %2581 = vmatprep.mubr.bf16.mxu0 0
      %2582 = vmatmul.mubr.bf16.gmra.mxu0 %v2417
      %v2583 = vpop.f32.mrf.mxu0
      %v2584 = vadd.f32 0.0, %v2583
      %v2585 = vpop.f32.mrf.mxu0
      %v2586 = vpop.f32.mrf.mxu0
      %v2587 = vadd.f32 0.0, %v2586
      %v2588 = vpop.f32.mrf.mxu0
      %2589 = vmatprep.mubr.bf16.mxu0 0
      %2590 = vmatmul.mubr.bf16.gmra.mxu0 %v2418
      %v2591 = vpop.f32.mrf.mxu0
      %v2592 = vadd.f32 0.0, %v2591
      %v2593 = vpop.f32.mrf.mxu0
      %v2594 = vpop.f32.mrf.mxu0
      %v2595 = vadd.f32 0.0, %v2594
      %v2596 = vpop.f32.mrf.mxu0
      %2597 = vmatprep.mubr.bf16.mxu0 0
      %2598 = vmatmul.mubr.bf16.gmra.mxu0 %v2419
      %v2599 = vpop.f32.mrf.mxu0
      %v2600 = vadd.f32 0.0, %v2599
      %v2601 = vpop.f32.mrf.mxu0
      %v2602 = vpop.f32.mrf.mxu0
      %v2603 = vadd.f32 0.0, %v2602
      %v2604 = vpop.f32.mrf.mxu0
      %2605 = vmatprep.mubr.bf16.mxu0 0
      %2606 = vmatmul.mubr.bf16.gmra.mxu0 %v2420
      %v2607 = vpop.f32.mrf.mxu0
      %v2608 = vadd.f32 0.0, %v2607
      %v2609 = vpop.f32.mrf.mxu0
      %v2610 = vpop.f32.mrf.mxu0
      %v2611 = vadd.f32 0.0, %v2610
      %v2612 = vpop.f32.mrf.mxu0
      %2613 = vmatprep.mubr.bf16.mxu0 0
      %2614 = vmatmul.mubr.bf16.gmra.mxu0 %v2421
      %v2615 = vpop.f32.mrf.mxu0
      %v2616 = vadd.f32 0.0, %v2615
      %v2617 = vpop.f32.mrf.mxu0
      %v2618 = vpop.f32.mrf.mxu0
      %v2619 = vadd.f32 0.0, %v2618
      %v2620 = vpop.f32.mrf.mxu0
      %2621 = vmatprep.mubr.bf16.mxu0 0
      %2622 = vmatmul.mubr.bf16.gmra.mxu0 %v2422
      %v2623 = vpop.f32.mrf.mxu0
      %v2624 = vadd.f32 0.0, %v2623
      %v2625 = vpop.f32.mrf.mxu0
      %v2626 = vpop.f32.mrf.mxu0
      %v2627 = vadd.f32 0.0, %v2626
      %v2628 = vpop.f32.mrf.mxu0
      %2629 = vmatprep.mubr.bf16.mxu0 0
      %2630 = vmatmul.mubr.bf16.gmra.mxu0 %v2423
      %v2631 = vpop.f32.mrf.mxu0
      %v2632 = vadd.f32 0.0, %v2631
      %v2633 = vpop.f32.mrf.mxu0
      %v2634 = vpop.f32.mrf.mxu0
      %v2635 = vadd.f32 0.0, %v2634
      %v2636 = vpop.f32.mrf.mxu0
      %2637 = vmatprep.mubr.bf16.mxu0 0
      %2638 = vmatmul.mubr.bf16.gmra.mxu0 %v2424
      %v2639 = vpop.f32.mrf.mxu0
      %v2640 = vadd.f32 0.0, %v2639
      %v2641 = vpop.f32.mrf.mxu0
      %v2642 = vpop.f32.mrf.mxu0
      %v2643 = vadd.f32 0.0, %v2642
      %v2644 = vpop.f32.mrf.mxu0
      %2645 = vmatprep.mubr.bf16.mxu0 0
      %2646 = vmatmul.mubr.bf16.gmra.mxu0 %v2425
      %v2647 = vpop.f32.mrf.mxu0
      %v2648 = vadd.f32 0.0, %v2647
      %v2649 = vpop.f32.mrf.mxu0
      %v2650 = vpop.f32.mrf.mxu0
      %v2651 = vadd.f32 0.0, %v2650
      %v2652 = vpop.f32.mrf.mxu0
      %2653 = vmatprep.mubr.bf16.mxu0 0
      %2654 = vmatmul.mubr.bf16.gmra.mxu0 %v2426
      %v2655 = vpop.f32.mrf.mxu0
      %v2656 = vadd.f32 0.0, %v2655
      %v2657 = vpop.f32.mrf.mxu0
      %v2658 = vpop.f32.mrf.mxu0
      %v2659 = vadd.f32 0.0, %v2658
      %v2660 = vpop.f32.mrf.mxu0
      %2661 = vmatprep.mubr.bf16.mxu0 0
      %2662 = vmatmul.mubr.bf16.gmra.mxu0 %v2427
      %v2663 = vpop.f32.mrf.mxu0
      %v2664 = vadd.f32 0.0, %v2663
      %v2665 = vpop.f32.mrf.mxu0
      %v2666 = vpop.f32.mrf.mxu0
      %v2667 = vadd.f32 0.0, %v2666
      %v2668 = vpop.f32.mrf.mxu0
      %2669 = vdwg.mxu0
      %v2670 = vadd.f32 %v2338, %v2528
      %v2671 = vadd.f32 %v2339, %v2531
      %v2672 = vadd.f32 %v2340, %v2536
      %v2673 = vadd.f32 %v2341, %v2539
      %v2674 = vadd.f32 %v2342, %v2544
      %v2675 = vadd.f32 %v2343, %v2547
      %v2676 = vadd.f32 %v2344, %v2552
      %v2677 = vadd.f32 %v2345, %v2555
      %v2678 = vadd.f32 %v2346, %v2560
      %v2679 = vadd.f32 %v2347, %v2563
      %v2680 = vadd.f32 %v2348, %v2568
      %v2681 = vadd.f32 %v2349, %v2571
      %v2682 = vadd.f32 %v2350, %v2576
      %v2683 = vadd.f32 %v2351, %v2579
      %v2684 = vadd.f32 %v2352, %v2584
      %v2685 = vadd.f32 %v2353, %v2587
      %v2686 = vadd.f32 %v2354, %v2592
      %v2687 = vadd.f32 %v2355, %v2595
      %v2688 = vadd.f32 %v2356, %v2600
      %v2689 = vadd.f32 %v2357, %v2603
      %v2690 = vadd.f32 %v2358, %v2608
      %v2691 = vadd.f32 %v2359, %v2611
      %v2692 = vadd.f32 %v2360, %v2616
      %v2693 = vadd.f32 %v2361, %v2619
      %v2694 = vadd.f32 %v2362, %v2624
      %v2695 = vadd.f32 %v2363, %v2627
      %v2696 = vadd.f32 %v2364, %v2632
      %v2697 = vadd.f32 %v2365, %v2635
      %v2698 = vadd.f32 %v2366, %v2640
      %v2699 = vadd.f32 %v2367, %v2643
      %v2700 = vadd.f32 %v2368, %v2648
      %v2701 = vadd.f32 %v2369, %v2651
      %v2702 = vadd.f32 %v2370, %v2656
      %v2703 = vadd.f32 %v2371, %v2659
      %v2704 = vadd.f32 %v2372, %v2664
      %v2705 = vadd.f32 %v2373, %v2667
      %v2706 = vld [vmem:[#allocation2 + $0x31] sm:$0xff]
      %v2707 = vld [vmem:[#allocation2 + $0x39] sm:$0xff]
      %v2708 = vld [vmem:[#allocation2 + $0x41] sm:$0xff]
      %v2709 = vld [vmem:[#allocation2 + $0x49] sm:$0xff]
      %v2710 = vld [vmem:[#allocation2 + $0x51] sm:$0xff]
      %v2711 = vld [vmem:[#allocation2 + $0x59] sm:$0xff]
      %v2712 = vld [vmem:[#allocation2 + $0x61] sm:$0xff]
      %v2713 = vld [vmem:[#allocation2 + $0x69] sm:$0xff]
      %v2714 = vld [vmem:[#allocation2 + $0x71] sm:$0xff]
      %v2715 = vld [vmem:[#allocation2 + $0x79] sm:$0xff]
      %v2716 = vld [vmem:[#allocation2 + $0x81] sm:$0xff]
      %v2717 = vld [vmem:[#allocation2 + $0x89] sm:$0xff]
      %v2718 = vld [vmem:[#allocation2 + $0x91] sm:$0xff]
      %v2719 = vld [vmem:[#allocation2 + $0x99] sm:$0xff]
      %v2720 = vld [vmem:[#allocation2 + $0xa1] sm:$0xff]
      %v2721 = vld [vmem:[#allocation2 + $0xa9] sm:$0xff]
      %v2722 = vld [vmem:[#allocation2 + $0xb1] sm:$0xff]
      %v2723 = vld [vmem:[#allocation2 + $0xb9] sm:$0xff]
      %v2724 = vld [vmem:[#allocation2 + $0xc1] sm:$0xff]
      %v2725 = vld [vmem:[#allocation2 + $0xc9] sm:$0xff]
      %v2726 = vld [vmem:[#allocation2 + $0xd1] sm:$0xff]
      %v2727 = vld [vmem:[#allocation2 + $0xd9] sm:$0xff]
      %v2728 = vld [vmem:[#allocation2 + $0xe1] sm:$0xff]
      %v2729 = vld [vmem:[#allocation2 + $0xe9] sm:$0xff]
      %v2730 = vld [vmem:[#allocation2 + $0xf1] sm:$0xff]
      %v2731 = vld [vmem:[#allocation2 + $0xf9] sm:$0xff]
      %v2732 = vld [vmem:[#allocation2 + $0x101] sm:$0xff]
      %v2733 = vld [vmem:[#allocation2 + $0x109] sm:$0xff]
      %v2734 = vld [vmem:[#allocation2 + $0x111] sm:$0xff]
      %v2735 = vld [vmem:[#allocation2 + $0x119] sm:$0xff]
      %v2736 = vld [vmem:[#allocation2 + $0x121] sm:$0xff]
      %v2737 = vld [vmem:[#allocation2 + $0x129] sm:$0xff]
      %v2738 = vld [vmem:[#allocation2 + $0x131] sm:$0xff]
      %v2739 = vld [vmem:[#allocation2 + $0x139] sm:$0xff]
      %v2740 = vld [vmem:[#allocation2 + $0x141] sm:$0xff]
      %v2741 = vld [vmem:[#allocation2 + $0x149] sm:$0xff]
      %v2742 = vpack.c.bf16 %v2707, %v2706
      %v2743 = vpack.c.bf16 %v2709, %v2708
      %v2744 = vpack.c.bf16 %v2711, %v2710
      %v2745 = vpack.c.bf16 %v2713, %v2712
      %v2746 = vpack.c.bf16 %v2715, %v2714
      %v2747 = vpack.c.bf16 %v2717, %v2716
      %v2748 = vpack.c.bf16 %v2719, %v2718
      %v2749 = vpack.c.bf16 %v2721, %v2720
      %v2750 = vpack.c.bf16 %v2723, %v2722
      %v2751 = vpack.c.bf16 %v2725, %v2724
      %v2752 = vpack.c.bf16 %v2727, %v2726
      %v2753 = vpack.c.bf16 %v2729, %v2728
      %v2754 = vpack.c.bf16 %v2731, %v2730
      %v2755 = vpack.c.bf16 %v2733, %v2732
      %v2756 = vpack.c.bf16 %v2735, %v2734
      %v2757 = vpack.c.bf16 %v2737, %v2736
      %v2758 = vpack.c.bf16 %v2739, %v2738
      %v2759 = vpack.c.bf16 %v2741, %v2740
      %s2760 = scalar_lea.vmem %s3, 384
      %v2761 = vld [vmem:[%s2760] sm:$0xf]
      %v2762 = vld [vmem:[%s2760 + $0x4] sm:$0xf]
      %v2763 = vld [vmem:[%s2760 + $0x8] sm:$0xf]
      %v2764 = vld [vmem:[%s2760 + $0xc] sm:$0xf]
      %v2765 = vld [vmem:[%s2760 + $0x10] sm:$0xf]
      %v2766 = vld [vmem:[%s2760 + $0x14] sm:$0xf]
      %v2767 = vld [vmem:[%s2760 + $0x18] sm:$0xf]
      %v2768 = vld [vmem:[%s2760 + $0x1c] sm:$0xf]
      %v2769 = vld [vmem:[%s2760 + $0x20] sm:$0xf]
      %v2770 = vld [vmem:[%s2760 + $0x24] sm:$0xf]
      %v2771 = vld [vmem:[%s2760 + $0x28] sm:$0xf]
      %v2772 = vld [vmem:[%s2760 + $0x2c] sm:$0xf]
      %v2773 = vld [vmem:[%s2760 + $0x30] sm:$0xf]
      %v2774 = vld [vmem:[%s2760 + $0x34] sm:$0xf]
      %v2775 = vld [vmem:[%s2760 + $0x38] sm:$0xf]
      %v2776 = vld [vmem:[%s2760 + $0x3c] sm:$0xf]
      %v2793 = vunpack.c.l.b16 %v2761
      %v2794 = vunpack.c.l.b16 %v2762
      %v2795 = vunpack.c.l.b16 %v2763
      %v2796 = vunpack.c.l.b16 %v2764
      %v2797 = vunpack.c.l.b16 %v2765
      %v2798 = vunpack.c.l.b16 %v2766
      %v2799 = vunpack.c.l.b16 %v2767
      %v2800 = vunpack.c.l.b16 %v2768
      %v2801 = vunpack.c.l.b16 %v2769
      %v2802 = vunpack.c.l.b16 %v2770
      %v2803 = vunpack.c.l.b16 %v2771
      %v2804 = vunpack.c.l.b16 %v2772
      %v2805 = vunpack.c.l.b16 %v2773
      %v2806 = vunpack.c.l.b16 %v2774
      %v2807 = vunpack.c.l.b16 %v2775
      %v2808 = vunpack.c.l.b16 %v2776
      %v2809 = vpack.c.b16 %v2794, %v2793
      %v2810 = vpack.c.b16 %v2796, %v2795
      %v2811 = vpack.c.b16 %v2798, %v2797
      %v2812 = vpack.c.b16 %v2800, %v2799
      %v2813 = vpack.c.b16 %v2802, %v2801
      %v2814 = vpack.c.b16 %v2804, %v2803
      %v2815 = vpack.c.b16 %v2806, %v2805
      %v2816 = vpack.c.b16 %v2808, %v2807
      %2825 = vmatprep.subr.bf16.mxu0 0
      %2826 = vmatpush1.bf16.msra.mxu0 %v2816
      %2827 = vmatprep.subr.bf16.mxu0 0
      %2828 = vmatpush1.bf16.msra.mxu0 %v2815
      %2829 = vmatprep.subr.bf16.mxu0 0
      %2830 = vmatpush1.bf16.msra.mxu0 %v2814
      %2831 = vmatprep.subr.bf16.mxu0 0
      %2832 = vmatpush1.bf16.msra.mxu0 %v2813
      %2833 = vmatprep.subr.bf16.mxu0 0
      %2834 = vmatpush1.bf16.msra.mxu0 %v2812
      %2835 = vmatprep.subr.bf16.mxu0 0
      %2836 = vmatpush1.bf16.msra.mxu0 %v2811
      %2837 = vmatprep.subr.bf16.mxu0 0
      %2838 = vmatpush1.bf16.msra.mxu0 %v2810
      %2839 = vmatprep.subr.bf16.mxu0 0
      %2840 = vmatpush1.bf16.msra.mxu0 %v2809
      %2841 = vmatprep.subr.bf16.mxu0 0
      %2842 = vmatpush2.bf16.msra.mxu0 0
      %2843 = vmatprep.subr.bf16.mxu0 0
      %2844 = vmatpush2.bf16.msra.mxu0 0
      %2845 = vmatprep.subr.bf16.mxu0 0
      %2846 = vmatpush2.bf16.msra.mxu0 0
      %2847 = vmatprep.subr.bf16.mxu0 0
      %2848 = vmatpush2.bf16.msra.mxu0 0
      %2849 = vmatprep.subr.bf16.mxu0 0
      %2850 = vmatpush2.bf16.msra.mxu0 0
      %2851 = vmatprep.subr.bf16.mxu0 0
      %2852 = vmatpush2.bf16.msra.mxu0 0
      %2853 = vmatprep.subr.bf16.mxu0 0
      %2854 = vmatpush2.bf16.msra.mxu0 0
      %2855 = vmatprep.subr.bf16.mxu0 0
      %2856 = vmatpush2.bf16.msra.mxu0 0
      %2857 = vmatprep.mubr.bf16.mxu0 0
      %2858 = vmatmul.mubr.bf16.gmra.mxu0 %v2742
      %v2859 = vpop.f32.mrf.mxu0
      %v2860 = vadd.f32 0.0, %v2859
      %v2861 = vpop.f32.mrf.mxu0
      %v2862 = vpop.f32.mrf.mxu0
      %v2863 = vadd.f32 0.0, %v2862
      %v2864 = vpop.f32.mrf.mxu0
      %2865 = vmatprep.mubr.bf16.mxu0 0
      %2866 = vmatmul.mubr.bf16.gmra.mxu0 %v2743
      %v2867 = vpop.f32.mrf.mxu0
      %v2868 = vadd.f32 0.0, %v2867
      %v2869 = vpop.f32.mrf.mxu0
      %v2870 = vpop.f32.mrf.mxu0
      %v2871 = vadd.f32 0.0, %v2870
      %v2872 = vpop.f32.mrf.mxu0
      %2873 = vmatprep.mubr.bf16.mxu0 0
      %2874 = vmatmul.mubr.bf16.gmra.mxu0 %v2744
      %v2875 = vpop.f32.mrf.mxu0
      %v2876 = vadd.f32 0.0, %v2875
      %v2877 = vpop.f32.mrf.mxu0
      %v2878 = vpop.f32.mrf.mxu0
      %v2879 = vadd.f32 0.0, %v2878
      %v2880 = vpop.f32.mrf.mxu0
      %2881 = vmatprep.mubr.bf16.mxu0 0
      %2882 = vmatmul.mubr.bf16.gmra.mxu0 %v2745
      %v2883 = vpop.f32.mrf.mxu0
      %v2884 = vadd.f32 0.0, %v2883
      %v2885 = vpop.f32.mrf.mxu0
      %v2886 = vpop.f32.mrf.mxu0
      %v2887 = vadd.f32 0.0, %v2886
      %v2888 = vpop.f32.mrf.mxu0
      %2889 = vmatprep.mubr.bf16.mxu0 0
      %2890 = vmatmul.mubr.bf16.gmra.mxu0 %v2746
      %v2891 = vpop.f32.mrf.mxu0
      %v2892 = vadd.f32 0.0, %v2891
      %v2893 = vpop.f32.mrf.mxu0
      %v2894 = vpop.f32.mrf.mxu0
      %v2895 = vadd.f32 0.0, %v2894
      %v2896 = vpop.f32.mrf.mxu0
      %2897 = vmatprep.mubr.bf16.mxu0 0
      %2898 = vmatmul.mubr.bf16.gmra.mxu0 %v2747
      %v2899 = vpop.f32.mrf.mxu0
      %v2900 = vadd.f32 0.0, %v2899
      %v2901 = vpop.f32.mrf.mxu0
      %v2902 = vpop.f32.mrf.mxu0
      %v2903 = vadd.f32 0.0, %v2902
      %v2904 = vpop.f32.mrf.mxu0
      %2905 = vmatprep.mubr.bf16.mxu0 0
      %2906 = vmatmul.mubr.bf16.gmra.mxu0 %v2748
      %v2907 = vpop.f32.mrf.mxu0
      %v2908 = vadd.f32 0.0, %v2907
      %v2909 = vpop.f32.mrf.mxu0
      %v2910 = vpop.f32.mrf.mxu0
      %v2911 = vadd.f32 0.0, %v2910
      %v2912 = vpop.f32.mrf.mxu0
      %2913 = vmatprep.mubr.bf16.mxu0 0
      %2914 = vmatmul.mubr.bf16.gmra.mxu0 %v2749
      %v2915 = vpop.f32.mrf.mxu0
      %v2916 = vadd.f32 0.0, %v2915
      %v2917 = vpop.f32.mrf.mxu0
      %v2918 = vpop.f32.mrf.mxu0
      %v2919 = vadd.f32 0.0, %v2918
      %v2920 = vpop.f32.mrf.mxu0
      %2921 = vmatprep.mubr.bf16.mxu0 0
      %2922 = vmatmul.mubr.bf16.gmra.mxu0 %v2750
      %v2923 = vpop.f32.mrf.mxu0
      %v2924 = vadd.f32 0.0, %v2923
      %v2925 = vpop.f32.mrf.mxu0
      %v2926 = vpop.f32.mrf.mxu0
      %v2927 = vadd.f32 0.0, %v2926
      %v2928 = vpop.f32.mrf.mxu0
      %2929 = vmatprep.mubr.bf16.mxu0 0
      %2930 = vmatmul.mubr.bf16.gmra.mxu0 %v2751
      %v2931 = vpop.f32.mrf.mxu0
      %v2932 = vadd.f32 0.0, %v2931
      %v2933 = vpop.f32.mrf.mxu0
      %v2934 = vpop.f32.mrf.mxu0
      %v2935 = vadd.f32 0.0, %v2934
      %v2936 = vpop.f32.mrf.mxu0
      %2937 = vmatprep.mubr.bf16.mxu0 0
      %2938 = vmatmul.mubr.bf16.gmra.mxu0 %v2752
      %v2939 = vpop.f32.mrf.mxu0
      %v2940 = vadd.f32 0.0, %v2939
      %v2941 = vpop.f32.mrf.mxu0
      %v2942 = vpop.f32.mrf.mxu0
      %v2943 = vadd.f32 0.0, %v2942
      %v2944 = vpop.f32.mrf.mxu0
      %2945 = vmatprep.mubr.bf16.mxu0 0
      %2946 = vmatmul.mubr.bf16.gmra.mxu0 %v2753
      %v2947 = vpop.f32.mrf.mxu0
      %v2948 = vadd.f32 0.0, %v2947
      %v2949 = vpop.f32.mrf.mxu0
      %v2950 = vpop.f32.mrf.mxu0
      %v2951 = vadd.f32 0.0, %v2950
      %v2952 = vpop.f32.mrf.mxu0
      %2953 = vmatprep.mubr.bf16.mxu0 0
      %2954 = vmatmul.mubr.bf16.gmra.mxu0 %v2754
      %v2955 = vpop.f32.mrf.mxu0
      %v2956 = vadd.f32 0.0, %v2955
      %v2957 = vpop.f32.mrf.mxu0
      %v2958 = vpop.f32.mrf.mxu0
      %v2959 = vadd.f32 0.0, %v2958
      %v2960 = vpop.f32.mrf.mxu0
      %2961 = vmatprep.mubr.bf16.mxu0 0
      %2962 = vmatmul.mubr.bf16.gmra.mxu0 %v2755
      %v2963 = vpop.f32.mrf.mxu0
      %v2964 = vadd.f32 0.0, %v2963
      %v2965 = vpop.f32.mrf.mxu0
      %v2966 = vpop.f32.mrf.mxu0
      %v2967 = vadd.f32 0.0, %v2966
      %v2968 = vpop.f32.mrf.mxu0
      %2969 = vmatprep.mubr.bf16.mxu0 0
      %2970 = vmatmul.mubr.bf16.gmra.mxu0 %v2756
      %v2971 = vpop.f32.mrf.mxu0
      %v2972 = vadd.f32 0.0, %v2971
      %v2973 = vpop.f32.mrf.mxu0
      %v2974 = vpop.f32.mrf.mxu0
      %v2975 = vadd.f32 0.0, %v2974
      %v2976 = vpop.f32.mrf.mxu0
      %2977 = vmatprep.mubr.bf16.mxu0 0
      %2978 = vmatmul.mubr.bf16.gmra.mxu0 %v2757
      %v2979 = vpop.f32.mrf.mxu0
      %v2980 = vadd.f32 0.0, %v2979
      %v2981 = vpop.f32.mrf.mxu0
      %v2982 = vpop.f32.mrf.mxu0
      %v2983 = vadd.f32 0.0, %v2982
      %v2984 = vpop.f32.mrf.mxu0
      %2985 = vmatprep.mubr.bf16.mxu0 0
      %2986 = vmatmul.mubr.bf16.gmra.mxu0 %v2758
      %v2987 = vpop.f32.mrf.mxu0
      %v2988 = vadd.f32 0.0, %v2987
      %v2989 = vpop.f32.mrf.mxu0
      %v2990 = vpop.f32.mrf.mxu0
      %v2991 = vadd.f32 0.0, %v2990
      %v2992 = vpop.f32.mrf.mxu0
      %2993 = vmatprep.mubr.bf16.mxu0 0
      %2994 = vmatmul.mubr.bf16.gmra.mxu0 %v2759
      %v2995 = vpop.f32.mrf.mxu0
      %v2996 = vadd.f32 0.0, %v2995
      %v2997 = vpop.f32.mrf.mxu0
      %v2998 = vpop.f32.mrf.mxu0
      %v2999 = vadd.f32 0.0, %v2998
      %v3000 = vpop.f32.mrf.mxu0
      %3001 = vdwg.mxu0
      %v3002 = vadd.f32 %v2670, %v2860
      %v3003 = vadd.f32 %v2671, %v2863
      %v3004 = vadd.f32 %v2672, %v2868
      %v3005 = vadd.f32 %v2673, %v2871
      %v3006 = vadd.f32 %v2674, %v2876
      %v3007 = vadd.f32 %v2675, %v2879
      %v3008 = vadd.f32 %v2676, %v2884
      %v3009 = vadd.f32 %v2677, %v2887
      %v3010 = vadd.f32 %v2678, %v2892
      %v3011 = vadd.f32 %v2679, %v2895
      %v3012 = vadd.f32 %v2680, %v2900
      %v3013 = vadd.f32 %v2681, %v2903
      %v3014 = vadd.f32 %v2682, %v2908
      %v3015 = vadd.f32 %v2683, %v2911
      %v3016 = vadd.f32 %v2684, %v2916
      %v3017 = vadd.f32 %v2685, %v2919
      %v3018 = vadd.f32 %v2686, %v2924
      %v3019 = vadd.f32 %v2687, %v2927
      %v3020 = vadd.f32 %v2688, %v2932
      %v3021 = vadd.f32 %v2689, %v2935
      %v3022 = vadd.f32 %v2690, %v2940
      %v3023 = vadd.f32 %v2691, %v2943
      %v3024 = vadd.f32 %v2692, %v2948
      %v3025 = vadd.f32 %v2693, %v2951
      %v3026 = vadd.f32 %v2694, %v2956
      %v3027 = vadd.f32 %v2695, %v2959
      %v3028 = vadd.f32 %v2696, %v2964
      %v3029 = vadd.f32 %v2697, %v2967
      %v3030 = vadd.f32 %v2698, %v2972
      %v3031 = vadd.f32 %v2699, %v2975
      %v3032 = vadd.f32 %v2700, %v2980
      %v3033 = vadd.f32 %v2701, %v2983
      %v3034 = vadd.f32 %v2702, %v2988
      %v3035 = vadd.f32 %v2703, %v2991
      %v3036 = vadd.f32 %v2704, %v2996
      %v3037 = vadd.f32 %v2705, %v2999
      %v3038 = vld [vmem:[#allocation2 + $0x32] sm:$0xff]
      %v3039 = vld [vmem:[#allocation2 + $0x3a] sm:$0xff]
      %v3040 = vld [vmem:[#allocation2 + $0x42] sm:$0xff]
      %v3041 = vld [vmem:[#allocation2 + $0x4a] sm:$0xff]
      %v3042 = vld [vmem:[#allocation2 + $0x52] sm:$0xff]
      %v3043 = vld [vmem:[#allocation2 + $0x5a] sm:$0xff]
      %v3044 = vld [vmem:[#allocation2 + $0x62] sm:$0xff]
      %v3045 = vld [vmem:[#allocation2 + $0x6a] sm:$0xff]
      %v3046 = vld [vmem:[#allocation2 + $0x72] sm:$0xff]
      %v3047 = vld [vmem:[#allocation2 + $0x7a] sm:$0xff]
      %v3048 = vld [vmem:[#allocation2 + $0x82] sm:$0xff]
      %v3049 = vld [vmem:[#allocation2 + $0x8a] sm:$0xff]
      %v3050 = vld [vmem:[#allocation2 + $0x92] sm:$0xff]
      %v3051 = vld [vmem:[#allocation2 + $0x9a] sm:$0xff]
      %v3052 = vld [vmem:[#allocation2 + $0xa2] sm:$0xff]
      %v3053 = vld [vmem:[#allocation2 + $0xaa] sm:$0xff]
      %v3054 = vld [vmem:[#allocation2 + $0xb2] sm:$0xff]
      %v3055 = vld [vmem:[#allocation2 + $0xba] sm:$0xff]
      %v3056 = vld [vmem:[#allocation2 + $0xc2] sm:$0xff]
      %v3057 = vld [vmem:[#allocation2 + $0xca] sm:$0xff]
      %v3058 = vld [vmem:[#allocation2 + $0xd2] sm:$0xff]
      %v3059 = vld [vmem:[#allocation2 + $0xda] sm:$0xff]
      %v3060 = vld [vmem:[#allocation2 + $0xe2] sm:$0xff]
      %v3061 = vld [vmem:[#allocation2 + $0xea] sm:$0xff]
      %v3062 = vld [vmem:[#allocation2 + $0xf2] sm:$0xff]
      %v3063 = vld [vmem:[#allocation2 + $0xfa] sm:$0xff]
      %v3064 = vld [vmem:[#allocation2 + $0x102] sm:$0xff]
      %v3065 = vld [vmem:[#allocation2 + $0x10a] sm:$0xff]
      %v3066 = vld [vmem:[#allocation2 + $0x112] sm:$0xff]
      %v3067 = vld [vmem:[#allocation2 + $0x11a] sm:$0xff]
      %v3068 = vld [vmem:[#allocation2 + $0x122] sm:$0xff]
      %v3069 = vld [vmem:[#allocation2 + $0x12a] sm:$0xff]
      %v3070 = vld [vmem:[#allocation2 + $0x132] sm:$0xff]
      %v3071 = vld [vmem:[#allocation2 + $0x13a] sm:$0xff]
      %v3072 = vld [vmem:[#allocation2 + $0x142] sm:$0xff]
      %v3073 = vld [vmem:[#allocation2 + $0x14a] sm:$0xff]
      %v3074 = vpack.c.bf16 %v3039, %v3038
      %v3075 = vpack.c.bf16 %v3041, %v3040
      %v3076 = vpack.c.bf16 %v3043, %v3042
      %v3077 = vpack.c.bf16 %v3045, %v3044
      %v3078 = vpack.c.bf16 %v3047, %v3046
      %v3079 = vpack.c.bf16 %v3049, %v3048
      %v3080 = vpack.c.bf16 %v3051, %v3050
      %v3081 = vpack.c.bf16 %v3053, %v3052
      %v3082 = vpack.c.bf16 %v3055, %v3054
      %v3083 = vpack.c.bf16 %v3057, %v3056
      %v3084 = vpack.c.bf16 %v3059, %v3058
      %v3085 = vpack.c.bf16 %v3061, %v3060
      %v3086 = vpack.c.bf16 %v3063, %v3062
      %v3087 = vpack.c.bf16 %v3065, %v3064
      %v3088 = vpack.c.bf16 %v3067, %v3066
      %v3089 = vpack.c.bf16 %v3069, %v3068
      %v3090 = vpack.c.bf16 %v3071, %v3070
      %v3091 = vpack.c.bf16 %v3073, %v3072
      %s3092 = scalar_lea.vmem %s3, 448
      %v3093 = vld [vmem:[%s3092] sm:$0xf]
      %v3094 = vld [vmem:[%s3092 + $0x4] sm:$0xf]
      %v3095 = vld [vmem:[%s3092 + $0x8] sm:$0xf]
      %v3096 = vld [vmem:[%s3092 + $0xc] sm:$0xf]
      %v3097 = vld [vmem:[%s3092 + $0x10] sm:$0xf]
      %v3098 = vld [vmem:[%s3092 + $0x14] sm:$0xf]
      %v3099 = vld [vmem:[%s3092 + $0x18] sm:$0xf]
      %v3100 = vld [vmem:[%s3092 + $0x1c] sm:$0xf]
      %v3101 = vld [vmem:[%s3092 + $0x20] sm:$0xf]
      %v3102 = vld [vmem:[%s3092 + $0x24] sm:$0xf]
      %v3103 = vld [vmem:[%s3092 + $0x28] sm:$0xf]
      %v3104 = vld [vmem:[%s3092 + $0x2c] sm:$0xf]
      %v3105 = vld [vmem:[%s3092 + $0x30] sm:$0xf]
      %v3106 = vld [vmem:[%s3092 + $0x34] sm:$0xf]
      %v3107 = vld [vmem:[%s3092 + $0x38] sm:$0xf]
      %v3108 = vld [vmem:[%s3092 + $0x3c] sm:$0xf]
      %v3125 = vunpack.c.l.b16 %v3093
      %v3126 = vunpack.c.l.b16 %v3094
      %v3127 = vunpack.c.l.b16 %v3095
      %v3128 = vunpack.c.l.b16 %v3096
      %v3129 = vunpack.c.l.b16 %v3097
      %v3130 = vunpack.c.l.b16 %v3098
      %v3131 = vunpack.c.l.b16 %v3099
      %v3132 = vunpack.c.l.b16 %v3100
      %v3133 = vunpack.c.l.b16 %v3101
      %v3134 = vunpack.c.l.b16 %v3102
      %v3135 = vunpack.c.l.b16 %v3103
      %v3136 = vunpack.c.l.b16 %v3104
      %v3137 = vunpack.c.l.b16 %v3105
      %v3138 = vunpack.c.l.b16 %v3106
      %v3139 = vunpack.c.l.b16 %v3107
      %v3140 = vunpack.c.l.b16 %v3108
      %v3141 = vpack.c.b16 %v3126, %v3125
      %v3142 = vpack.c.b16 %v3128, %v3127
      %v3143 = vpack.c.b16 %v3130, %v3129
      %v3144 = vpack.c.b16 %v3132, %v3131
      %v3145 = vpack.c.b16 %v3134, %v3133
      %v3146 = vpack.c.b16 %v3136, %v3135
      %v3147 = vpack.c.b16 %v3138, %v3137
      %v3148 = vpack.c.b16 %v3140, %v3139
      %3157 = vmatprep.subr.bf16.mxu0 0
      %3158 = vmatpush1.bf16.msra.mxu0 %v3148
      %3159 = vmatprep.subr.bf16.mxu0 0
      %3160 = vmatpush1.bf16.msra.mxu0 %v3147
      %3161 = vmatprep.subr.bf16.mxu0 0
      %3162 = vmatpush1.bf16.msra.mxu0 %v3146
      %3163 = vmatprep.subr.bf16.mxu0 0
      %3164 = vmatpush1.bf16.msra.mxu0 %v3145
      %3165 = vmatprep.subr.bf16.mxu0 0
      %3166 = vmatpush1.bf16.msra.mxu0 %v3144
      %3167 = vmatprep.subr.bf16.mxu0 0
      %3168 = vmatpush1.bf16.msra.mxu0 %v3143
      %3169 = vmatprep.subr.bf16.mxu0 0
      %3170 = vmatpush1.bf16.msra.mxu0 %v3142
      %3171 = vmatprep.subr.bf16.mxu0 0
      %3172 = vmatpush1.bf16.msra.mxu0 %v3141
      %3173 = vmatprep.subr.bf16.mxu0 0
      %3174 = vmatpush2.bf16.msra.mxu0 0
      %3175 = vmatprep.subr.bf16.mxu0 0
      %3176 = vmatpush2.bf16.msra.mxu0 0
      %3177 = vmatprep.subr.bf16.mxu0 0
      %3178 = vmatpush2.bf16.msra.mxu0 0
      %3179 = vmatprep.subr.bf16.mxu0 0
      %3180 = vmatpush2.bf16.msra.mxu0 0
      %3181 = vmatprep.subr.bf16.mxu0 0
      %3182 = vmatpush2.bf16.msra.mxu0 0
      %3183 = vmatprep.subr.bf16.mxu0 0
      %3184 = vmatpush2.bf16.msra.mxu0 0
      %3185 = vmatprep.subr.bf16.mxu0 0
      %3186 = vmatpush2.bf16.msra.mxu0 0
      %3187 = vmatprep.subr.bf16.mxu0 0
      %3188 = vmatpush2.bf16.msra.mxu0 0
      %3189 = vmatprep.mubr.bf16.mxu0 0
      %3190 = vmatmul.mubr.bf16.gmra.mxu0 %v3074
      %v3191 = vpop.f32.mrf.mxu0
      %v3192 = vadd.f32 0.0, %v3191
      %v3193 = vpop.f32.mrf.mxu0
      %v3194 = vpop.f32.mrf.mxu0
      %v3195 = vadd.f32 0.0, %v3194
      %v3196 = vpop.f32.mrf.mxu0
      %3197 = vmatprep.mubr.bf16.mxu0 0
      %3198 = vmatmul.mubr.bf16.gmra.mxu0 %v3075
      %v3199 = vpop.f32.mrf.mxu0
      %v3200 = vadd.f32 0.0, %v3199
      %v3201 = vpop.f32.mrf.mxu0
      %v3202 = vpop.f32.mrf.mxu0
      %v3203 = vadd.f32 0.0, %v3202
      %v3204 = vpop.f32.mrf.mxu0
      %3205 = vmatprep.mubr.bf16.mxu0 0
      %3206 = vmatmul.mubr.bf16.gmra.mxu0 %v3076
      %v3207 = vpop.f32.mrf.mxu0
      %v3208 = vadd.f32 0.0, %v3207
      %v3209 = vpop.f32.mrf.mxu0
      %v3210 = vpop.f32.mrf.mxu0
      %v3211 = vadd.f32 0.0, %v3210
      %v3212 = vpop.f32.mrf.mxu0
      %3213 = vmatprep.mubr.bf16.mxu0 0
      %3214 = vmatmul.mubr.bf16.gmra.mxu0 %v3077
      %v3215 = vpop.f32.mrf.mxu0
      %v3216 = vadd.f32 0.0, %v3215
      %v3217 = vpop.f32.mrf.mxu0
      %v3218 = vpop.f32.mrf.mxu0
      %v3219 = vadd.f32 0.0, %v3218
      %v3220 = vpop.f32.mrf.mxu0
      %3221 = vmatprep.mubr.bf16.mxu0 0
      %3222 = vmatmul.mubr.bf16.gmra.mxu0 %v3078
      %v3223 = vpop.f32.mrf.mxu0
      %v3224 = vadd.f32 0.0, %v3223
      %v3225 = vpop.f32.mrf.mxu0
      %v3226 = vpop.f32.mrf.mxu0
      %v3227 = vadd.f32 0.0, %v3226
      %v3228 = vpop.f32.mrf.mxu0
      %3229 = vmatprep.mubr.bf16.mxu0 0
      %3230 = vmatmul.mubr.bf16.gmra.mxu0 %v3079
      %v3231 = vpop.f32.mrf.mxu0
      %v3232 = vadd.f32 0.0, %v3231
      %v3233 = vpop.f32.mrf.mxu0
      %v3234 = vpop.f32.mrf.mxu0
      %v3235 = vadd.f32 0.0, %v3234
      %v3236 = vpop.f32.mrf.mxu0
      %3237 = vmatprep.mubr.bf16.mxu0 0
      %3238 = vmatmul.mubr.bf16.gmra.mxu0 %v3080
      %v3239 = vpop.f32.mrf.mxu0
      %v3240 = vadd.f32 0.0, %v3239
      %v3241 = vpop.f32.mrf.mxu0
      %v3242 = vpop.f32.mrf.mxu0
      %v3243 = vadd.f32 0.0, %v3242
      %v3244 = vpop.f32.mrf.mxu0
      %3245 = vmatprep.mubr.bf16.mxu0 0
      %3246 = vmatmul.mubr.bf16.gmra.mxu0 %v3081
      %v3247 = vpop.f32.mrf.mxu0
      %v3248 = vadd.f32 0.0, %v3247
      %v3249 = vpop.f32.mrf.mxu0
      %v3250 = vpop.f32.mrf.mxu0
      %v3251 = vadd.f32 0.0, %v3250
      %v3252 = vpop.f32.mrf.mxu0
      %3253 = vmatprep.mubr.bf16.mxu0 0
      %3254 = vmatmul.mubr.bf16.gmra.mxu0 %v3082
      %v3255 = vpop.f32.mrf.mxu0
      %v3256 = vadd.f32 0.0, %v3255
      %v3257 = vpop.f32.mrf.mxu0
      %v3258 = vpop.f32.mrf.mxu0
      %v3259 = vadd.f32 0.0, %v3258
      %v3260 = vpop.f32.mrf.mxu0
      %3261 = vmatprep.mubr.bf16.mxu0 0
      %3262 = vmatmul.mubr.bf16.gmra.mxu0 %v3083
      %v3263 = vpop.f32.mrf.mxu0
      %v3264 = vadd.f32 0.0, %v3263
      %v3265 = vpop.f32.mrf.mxu0
      %v3266 = vpop.f32.mrf.mxu0
      %v3267 = vadd.f32 0.0, %v3266
      %v3268 = vpop.f32.mrf.mxu0
      %3269 = vmatprep.mubr.bf16.mxu0 0
      %3270 = vmatmul.mubr.bf16.gmra.mxu0 %v3084
      %v3271 = vpop.f32.mrf.mxu0
      %v3272 = vadd.f32 0.0, %v3271
      %v3273 = vpop.f32.mrf.mxu0
      %v3274 = vpop.f32.mrf.mxu0
      %v3275 = vadd.f32 0.0, %v3274
      %v3276 = vpop.f32.mrf.mxu0
      %3277 = vmatprep.mubr.bf16.mxu0 0
      %3278 = vmatmul.mubr.bf16.gmra.mxu0 %v3085
      %v3279 = vpop.f32.mrf.mxu0
      %v3280 = vadd.f32 0.0, %v3279
      %v3281 = vpop.f32.mrf.mxu0
      %v3282 = vpop.f32.mrf.mxu0
      %v3283 = vadd.f32 0.0, %v3282
      %v3284 = vpop.f32.mrf.mxu0
      %3285 = vmatprep.mubr.bf16.mxu0 0
      %3286 = vmatmul.mubr.bf16.gmra.mxu0 %v3086
      %v3287 = vpop.f32.mrf.mxu0
      %v3288 = vadd.f32 0.0, %v3287
      %v3289 = vpop.f32.mrf.mxu0
      %v3290 = vpop.f32.mrf.mxu0
      %v3291 = vadd.f32 0.0, %v3290
      %v3292 = vpop.f32.mrf.mxu0
      %3293 = vmatprep.mubr.bf16.mxu0 0
      %3294 = vmatmul.mubr.bf16.gmra.mxu0 %v3087
      %v3295 = vpop.f32.mrf.mxu0
      %v3296 = vadd.f32 0.0, %v3295
      %v3297 = vpop.f32.mrf.mxu0
      %v3298 = vpop.f32.mrf.mxu0
      %v3299 = vadd.f32 0.0, %v3298
      %v3300 = vpop.f32.mrf.mxu0
      %3301 = vmatprep.mubr.bf16.mxu0 0
      %3302 = vmatmul.mubr.bf16.gmra.mxu0 %v3088
      %v3303 = vpop.f32.mrf.mxu0
      %v3304 = vadd.f32 0.0, %v3303
      %v3305 = vpop.f32.mrf.mxu0
      %v3306 = vpop.f32.mrf.mxu0
      %v3307 = vadd.f32 0.0, %v3306
      %v3308 = vpop.f32.mrf.mxu0
      %3309 = vmatprep.mubr.bf16.mxu0 0
      %3310 = vmatmul.mubr.bf16.gmra.mxu0 %v3089
      %v3311 = vpop.f32.mrf.mxu0
      %v3312 = vadd.f32 0.0, %v3311
      %v3313 = vpop.f32.mrf.mxu0
      %v3314 = vpop.f32.mrf.mxu0
      %v3315 = vadd.f32 0.0, %v3314
      %v3316 = vpop.f32.mrf.mxu0
      %3317 = vmatprep.mubr.bf16.mxu0 0
      %3318 = vmatmul.mubr.bf16.gmra.mxu0 %v3090
      %v3319 = vpop.f32.mrf.mxu0
      %v3320 = vadd.f32 0.0, %v3319
      %v3321 = vpop.f32.mrf.mxu0
      %v3322 = vpop.f32.mrf.mxu0
      %v3323 = vadd.f32 0.0, %v3322
      %v3324 = vpop.f32.mrf.mxu0
      %3325 = vmatprep.mubr.bf16.mxu0 0
      %3326 = vmatmul.mubr.bf16.gmra.mxu0 %v3091
      %v3327 = vpop.f32.mrf.mxu0
      %v3328 = vadd.f32 0.0, %v3327
      %v3329 = vpop.f32.mrf.mxu0
      %v3330 = vpop.f32.mrf.mxu0
      %v3331 = vadd.f32 0.0, %v3330
      %v3332 = vpop.f32.mrf.mxu0
      %3333 = vdwg.mxu0
      %v3334 = vadd.f32 %v3002, %v3192
      %v3335 = vadd.f32 %v3003, %v3195
      %v3336 = vadd.f32 %v3004, %v3200
      %v3337 = vadd.f32 %v3005, %v3203
      %v3338 = vadd.f32 %v3006, %v3208
      %v3339 = vadd.f32 %v3007, %v3211
      %v3340 = vadd.f32 %v3008, %v3216
      %v3341 = vadd.f32 %v3009, %v3219
      %v3342 = vadd.f32 %v3010, %v3224
      %v3343 = vadd.f32 %v3011, %v3227
      %v3344 = vadd.f32 %v3012, %v3232
      %v3345 = vadd.f32 %v3013, %v3235
      %v3346 = vadd.f32 %v3014, %v3240
      %v3347 = vadd.f32 %v3015, %v3243
      %v3348 = vadd.f32 %v3016, %v3248
      %v3349 = vadd.f32 %v3017, %v3251
      %v3350 = vadd.f32 %v3018, %v3256
      %v3351 = vadd.f32 %v3019, %v3259
      %v3352 = vadd.f32 %v3020, %v3264
      %v3353 = vadd.f32 %v3021, %v3267
      %v3354 = vadd.f32 %v3022, %v3272
      %v3355 = vadd.f32 %v3023, %v3275
      %v3356 = vadd.f32 %v3024, %v3280
      %v3357 = vadd.f32 %v3025, %v3283
      %v3358 = vadd.f32 %v3026, %v3288
      %v3359 = vadd.f32 %v3027, %v3291
      %v3360 = vadd.f32 %v3028, %v3296
      %v3361 = vadd.f32 %v3029, %v3299
      %v3362 = vadd.f32 %v3030, %v3304
      %v3363 = vadd.f32 %v3031, %v3307
      %v3364 = vadd.f32 %v3032, %v3312
      %v3365 = vadd.f32 %v3033, %v3315
      %v3366 = vadd.f32 %v3034, %v3320
      %v3367 = vadd.f32 %v3035, %v3323
      %v3368 = vadd.f32 %v3036, %v3328
      %v3369 = vadd.f32 %v3037, %v3331
      %v3370 = vld [vmem:[#allocation2 + $0x33] sm:$0xff]
      %v3371 = vld [vmem:[#allocation2 + $0x3b] sm:$0xff]
      %v3372 = vld [vmem:[#allocation2 + $0x43] sm:$0xff]
      %v3373 = vld [vmem:[#allocation2 + $0x4b] sm:$0xff]
      %v3374 = vld [vmem:[#allocation2 + $0x53] sm:$0xff]
      %v3375 = vld [vmem:[#allocation2 + $0x5b] sm:$0xff]
      %v3376 = vld [vmem:[#allocation2 + $0x63] sm:$0xff]
      %v3377 = vld [vmem:[#allocation2 + $0x6b] sm:$0xff]
      %v3378 = vld [vmem:[#allocation2 + $0x73] sm:$0xff]
      %v3379 = vld [vmem:[#allocation2 + $0x7b] sm:$0xff]
      %v3380 = vld [vmem:[#allocation2 + $0x83] sm:$0xff]
      %v3381 = vld [vmem:[#allocation2 + $0x8b] sm:$0xff]
      %v3382 = vld [vmem:[#allocation2 + $0x93] sm:$0xff]
      %v3383 = vld [vmem:[#allocation2 + $0x9b] sm:$0xff]
      %v3384 = vld [vmem:[#allocation2 + $0xa3] sm:$0xff]
      %v3385 = vld [vmem:[#allocation2 + $0xab] sm:$0xff]
      %v3386 = vld [vmem:[#allocation2 + $0xb3] sm:$0xff]
      %v3387 = vld [vmem:[#allocation2 + $0xbb] sm:$0xff]
      %v3388 = vld [vmem:[#allocation2 + $0xc3] sm:$0xff]
      %v3389 = vld [vmem:[#allocation2 + $0xcb] sm:$0xff]
      %v3390 = vld [vmem:[#allocation2 + $0xd3] sm:$0xff]
      %v3391 = vld [vmem:[#allocation2 + $0xdb] sm:$0xff]
      %v3392 = vld [vmem:[#allocation2 + $0xe3] sm:$0xff]
      %v3393 = vld [vmem:[#allocation2 + $0xeb] sm:$0xff]
      %v3394 = vld [vmem:[#allocation2 + $0xf3] sm:$0xff]
      %v3395 = vld [vmem:[#allocation2 + $0xfb] sm:$0xff]
      %v3396 = vld [vmem:[#allocation2 + $0x103] sm:$0xff]
      %v3397 = vld [vmem:[#allocation2 + $0x10b] sm:$0xff]
      %v3398 = vld [vmem:[#allocation2 + $0x113] sm:$0xff]
      %v3399 = vld [vmem:[#allocation2 + $0x11b] sm:$0xff]
      %v3400 = vld [vmem:[#allocation2 + $0x123] sm:$0xff]
      %v3401 = vld [vmem:[#allocation2 + $0x12b] sm:$0xff]
      %v3402 = vld [vmem:[#allocation2 + $0x133] sm:$0xff]
      %v3403 = vld [vmem:[#allocation2 + $0x13b] sm:$0xff]
      %v3404 = vld [vmem:[#allocation2 + $0x143] sm:$0xff]
      %v3405 = vld [vmem:[#allocation2 + $0x14b] sm:$0xff]
      %v3406 = vpack.c.bf16 %v3371, %v3370
      %v3407 = vpack.c.bf16 %v3373, %v3372
      %v3408 = vpack.c.bf16 %v3375, %v3374
      %v3409 = vpack.c.bf16 %v3377, %v3376
      %v3410 = vpack.c.bf16 %v3379, %v3378
      %v3411 = vpack.c.bf16 %v3381, %v3380
      %v3412 = vpack.c.bf16 %v3383, %v3382
      %v3413 = vpack.c.bf16 %v3385, %v3384
      %v3414 = vpack.c.bf16 %v3387, %v3386
      %v3415 = vpack.c.bf16 %v3389, %v3388
      %v3416 = vpack.c.bf16 %v3391, %v3390
      %v3417 = vpack.c.bf16 %v3393, %v3392
      %v3418 = vpack.c.bf16 %v3395, %v3394
      %v3419 = vpack.c.bf16 %v3397, %v3396
      %v3420 = vpack.c.bf16 %v3399, %v3398
      %v3421 = vpack.c.bf16 %v3401, %v3400
      %v3422 = vpack.c.bf16 %v3403, %v3402
      %v3423 = vpack.c.bf16 %v3405, %v3404
      %s3424 = scalar_lea.vmem %s3, 512
      %v3425 = vld [vmem:[%s3424] sm:$0xf]
      %v3426 = vld [vmem:[%s3424 + $0x4] sm:$0xf]
      %v3427 = vld [vmem:[%s3424 + $0x8] sm:$0xf]
      %v3428 = vld [vmem:[%s3424 + $0xc] sm:$0xf]
      %v3429 = vld [vmem:[%s3424 + $0x10] sm:$0xf]
      %v3430 = vld [vmem:[%s3424 + $0x14] sm:$0xf]
      %v3431 = vld [vmem:[%s3424 + $0x18] sm:$0xf]
      %v3432 = vld [vmem:[%s3424 + $0x1c] sm:$0xf]
      %v3433 = vld [vmem:[%s3424 + $0x20] sm:$0xf]
      %v3434 = vld [vmem:[%s3424 + $0x24] sm:$0xf]
      %v3435 = vld [vmem:[%s3424 + $0x28] sm:$0xf]
      %v3436 = vld [vmem:[%s3424 + $0x2c] sm:$0xf]
      %v3437 = vld [vmem:[%s3424 + $0x30] sm:$0xf]
      %v3438 = vld [vmem:[%s3424 + $0x34] sm:$0xf]
      %v3439 = vld [vmem:[%s3424 + $0x38] sm:$0xf]
      %v3440 = vld [vmem:[%s3424 + $0x3c] sm:$0xf]
      %v3457 = vunpack.c.l.b16 %v3425
      %v3458 = vunpack.c.l.b16 %v3426
      %v3459 = vunpack.c.l.b16 %v3427
      %v3460 = vunpack.c.l.b16 %v3428
      %v3461 = vunpack.c.l.b16 %v3429
      %v3462 = vunpack.c.l.b16 %v3430
      %v3463 = vunpack.c.l.b16 %v3431
      %v3464 = vunpack.c.l.b16 %v3432
      %v3465 = vunpack.c.l.b16 %v3433
      %v3466 = vunpack.c.l.b16 %v3434
      %v3467 = vunpack.c.l.b16 %v3435
      %v3468 = vunpack.c.l.b16 %v3436
      %v3469 = vunpack.c.l.b16 %v3437
      %v3470 = vunpack.c.l.b16 %v3438
      %v3471 = vunpack.c.l.b16 %v3439
      %v3472 = vunpack.c.l.b16 %v3440
      %v3473 = vpack.c.b16 %v3458, %v3457
      %v3474 = vpack.c.b16 %v3460, %v3459
      %v3475 = vpack.c.b16 %v3462, %v3461
      %v3476 = vpack.c.b16 %v3464, %v3463
      %v3477 = vpack.c.b16 %v3466, %v3465
      %v3478 = vpack.c.b16 %v3468, %v3467
      %v3479 = vpack.c.b16 %v3470, %v3469
      %v3480 = vpack.c.b16 %v3472, %v3471
      %3489 = vmatprep.subr.bf16.mxu0 0
      %3490 = vmatpush1.bf16.msra.mxu0 %v3480
      %3491 = vmatprep.subr.bf16.mxu0 0
      %3492 = vmatpush1.bf16.msra.mxu0 %v3479
      %3493 = vmatprep.subr.bf16.mxu0 0
      %3494 = vmatpush1.bf16.msra.mxu0 %v3478
      %3495 = vmatprep.subr.bf16.mxu0 0
      %3496 = vmatpush1.bf16.msra.mxu0 %v3477
      %3497 = vmatprep.subr.bf16.mxu0 0
      %3498 = vmatpush1.bf16.msra.mxu0 %v3476
      %3499 = vmatprep.subr.bf16.mxu0 0
      %3500 = vmatpush1.bf16.msra.mxu0 %v3475
      %3501 = vmatprep.subr.bf16.mxu0 0
      %3502 = vmatpush1.bf16.msra.mxu0 %v3474
      %3503 = vmatprep.subr.bf16.mxu0 0
      %3504 = vmatpush1.bf16.msra.mxu0 %v3473
      %3505 = vmatprep.subr.bf16.mxu0 0
      %3506 = vmatpush2.bf16.msra.mxu0 0
      %3507 = vmatprep.subr.bf16.mxu0 0
      %3508 = vmatpush2.bf16.msra.mxu0 0
      %3509 = vmatprep.subr.bf16.mxu0 0
      %3510 = vmatpush2.bf16.msra.mxu0 0
      %3511 = vmatprep.subr.bf16.mxu0 0
      %3512 = vmatpush2.bf16.msra.mxu0 0
      %3513 = vmatprep.subr.bf16.mxu0 0
      %3514 = vmatpush2.bf16.msra.mxu0 0
      %3515 = vmatprep.subr.bf16.mxu0 0
      %3516 = vmatpush2.bf16.msra.mxu0 0
      %3517 = vmatprep.subr.bf16.mxu0 0
      %3518 = vmatpush2.bf16.msra.mxu0 0
      %3519 = vmatprep.subr.bf16.mxu0 0
      %3520 = vmatpush2.bf16.msra.mxu0 0
      %3521 = vmatprep.mubr.bf16.mxu0 0
      %3522 = vmatmul.mubr.bf16.gmra.mxu0 %v3406
      %v3523 = vpop.f32.mrf.mxu0
      %v3524 = vadd.f32 0.0, %v3523
      %v3525 = vpop.f32.mrf.mxu0
      %v3526 = vpop.f32.mrf.mxu0
      %v3527 = vadd.f32 0.0, %v3526
      %v3528 = vpop.f32.mrf.mxu0
      %3529 = vmatprep.mubr.bf16.mxu0 0
      %3530 = vmatmul.mubr.bf16.gmra.mxu0 %v3407
      %v3531 = vpop.f32.mrf.mxu0
      %v3532 = vadd.f32 0.0, %v3531
      %v3533 = vpop.f32.mrf.mxu0
      %v3534 = vpop.f32.mrf.mxu0
      %v3535 = vadd.f32 0.0, %v3534
      %v3536 = vpop.f32.mrf.mxu0
      %3537 = vmatprep.mubr.bf16.mxu0 0
      %3538 = vmatmul.mubr.bf16.gmra.mxu0 %v3408
      %v3539 = vpop.f32.mrf.mxu0
      %v3540 = vadd.f32 0.0, %v3539
      %v3541 = vpop.f32.mrf.mxu0
      %v3542 = vpop.f32.mrf.mxu0
      %v3543 = vadd.f32 0.0, %v3542
      %v3544 = vpop.f32.mrf.mxu0
      %3545 = vmatprep.mubr.bf16.mxu0 0
      %3546 = vmatmul.mubr.bf16.gmra.mxu0 %v3409
      %v3547 = vpop.f32.mrf.mxu0
      %v3548 = vadd.f32 0.0, %v3547
      %v3549 = vpop.f32.mrf.mxu0
      %v3550 = vpop.f32.mrf.mxu0
      %v3551 = vadd.f32 0.0, %v3550
      %v3552 = vpop.f32.mrf.mxu0
      %3553 = vmatprep.mubr.bf16.mxu0 0
      %3554 = vmatmul.mubr.bf16.gmra.mxu0 %v3410
      %v3555 = vpop.f32.mrf.mxu0
      %v3556 = vadd.f32 0.0, %v3555
      %v3557 = vpop.f32.mrf.mxu0
      %v3558 = vpop.f32.mrf.mxu0
      %v3559 = vadd.f32 0.0, %v3558
      %v3560 = vpop.f32.mrf.mxu0
      %3561 = vmatprep.mubr.bf16.mxu0 0
      %3562 = vmatmul.mubr.bf16.gmra.mxu0 %v3411
      %v3563 = vpop.f32.mrf.mxu0
      %v3564 = vadd.f32 0.0, %v3563
      %v3565 = vpop.f32.mrf.mxu0
      %v3566 = vpop.f32.mrf.mxu0
      %v3567 = vadd.f32 0.0, %v3566
      %v3568 = vpop.f32.mrf.mxu0
      %3569 = vmatprep.mubr.bf16.mxu0 0
      %3570 = vmatmul.mubr.bf16.gmra.mxu0 %v3412
      %v3571 = vpop.f32.mrf.mxu0
      %v3572 = vadd.f32 0.0, %v3571
      %v3573 = vpop.f32.mrf.mxu0
      %v3574 = vpop.f32.mrf.mxu0
      %v3575 = vadd.f32 0.0, %v3574
      %v3576 = vpop.f32.mrf.mxu0
      %3577 = vmatprep.mubr.bf16.mxu0 0
      %3578 = vmatmul.mubr.bf16.gmra.mxu0 %v3413
      %v3579 = vpop.f32.mrf.mxu0
      %v3580 = vadd.f32 0.0, %v3579
      %v3581 = vpop.f32.mrf.mxu0
      %v3582 = vpop.f32.mrf.mxu0
      %v3583 = vadd.f32 0.0, %v3582
      %v3584 = vpop.f32.mrf.mxu0
      %3585 = vmatprep.mubr.bf16.mxu0 0
      %3586 = vmatmul.mubr.bf16.gmra.mxu0 %v3414
      %v3587 = vpop.f32.mrf.mxu0
      %v3588 = vadd.f32 0.0, %v3587
      %v3589 = vpop.f32.mrf.mxu0
      %v3590 = vpop.f32.mrf.mxu0
      %v3591 = vadd.f32 0.0, %v3590
      %v3592 = vpop.f32.mrf.mxu0
      %3593 = vmatprep.mubr.bf16.mxu0 0
      %3594 = vmatmul.mubr.bf16.gmra.mxu0 %v3415
      %v3595 = vpop.f32.mrf.mxu0
      %v3596 = vadd.f32 0.0, %v3595
      %v3597 = vpop.f32.mrf.mxu0
      %v3598 = vpop.f32.mrf.mxu0
      %v3599 = vadd.f32 0.0, %v3598
      %v3600 = vpop.f32.mrf.mxu0
      %3601 = vmatprep.mubr.bf16.mxu0 0
      %3602 = vmatmul.mubr.bf16.gmra.mxu0 %v3416
      %v3603 = vpop.f32.mrf.mxu0
      %v3604 = vadd.f32 0.0, %v3603
      %v3605 = vpop.f32.mrf.mxu0
      %v3606 = vpop.f32.mrf.mxu0
      %v3607 = vadd.f32 0.0, %v3606
      %v3608 = vpop.f32.mrf.mxu0
      %3609 = vmatprep.mubr.bf16.mxu0 0
      %3610 = vmatmul.mubr.bf16.gmra.mxu0 %v3417
      %v3611 = vpop.f32.mrf.mxu0
      %v3612 = vadd.f32 0.0, %v3611
      %v3613 = vpop.f32.mrf.mxu0
      %v3614 = vpop.f32.mrf.mxu0
      %v3615 = vadd.f32 0.0, %v3614
      %v3616 = vpop.f32.mrf.mxu0
      %3617 = vmatprep.mubr.bf16.mxu0 0
      %3618 = vmatmul.mubr.bf16.gmra.mxu0 %v3418
      %v3619 = vpop.f32.mrf.mxu0
      %v3620 = vadd.f32 0.0, %v3619
      %v3621 = vpop.f32.mrf.mxu0
      %v3622 = vpop.f32.mrf.mxu0
      %v3623 = vadd.f32 0.0, %v3622
      %v3624 = vpop.f32.mrf.mxu0
      %3625 = vmatprep.mubr.bf16.mxu0 0
      %3626 = vmatmul.mubr.bf16.gmra.mxu0 %v3419
      %v3627 = vpop.f32.mrf.mxu0
      %v3628 = vadd.f32 0.0, %v3627
      %v3629 = vpop.f32.mrf.mxu0
      %v3630 = vpop.f32.mrf.mxu0
      %v3631 = vadd.f32 0.0, %v3630
      %v3632 = vpop.f32.mrf.mxu0
      %3633 = vmatprep.mubr.bf16.mxu0 0
      %3634 = vmatmul.mubr.bf16.gmra.mxu0 %v3420
      %v3635 = vpop.f32.mrf.mxu0
      %v3636 = vadd.f32 0.0, %v3635
      %v3637 = vpop.f32.mrf.mxu0
      %v3638 = vpop.f32.mrf.mxu0
      %v3639 = vadd.f32 0.0, %v3638
      %v3640 = vpop.f32.mrf.mxu0
      %3641 = vmatprep.mubr.bf16.mxu0 0
      %3642 = vmatmul.mubr.bf16.gmra.mxu0 %v3421
      %v3643 = vpop.f32.mrf.mxu0
      %v3644 = vadd.f32 0.0, %v3643
      %v3645 = vpop.f32.mrf.mxu0
      %v3646 = vpop.f32.mrf.mxu0
      %v3647 = vadd.f32 0.0, %v3646
      %v3648 = vpop.f32.mrf.mxu0
      %3649 = vmatprep.mubr.bf16.mxu0 0
      %3650 = vmatmul.mubr.bf16.gmra.mxu0 %v3422
      %v3651 = vpop.f32.mrf.mxu0
      %v3652 = vadd.f32 0.0, %v3651
      %v3653 = vpop.f32.mrf.mxu0
      %v3654 = vpop.f32.mrf.mxu0
      %v3655 = vadd.f32 0.0, %v3654
      %v3656 = vpop.f32.mrf.mxu0
      %3657 = vmatprep.mubr.bf16.mxu0 0
      %3658 = vmatmul.mubr.bf16.gmra.mxu0 %v3423
      %v3659 = vpop.f32.mrf.mxu0
      %v3660 = vadd.f32 0.0, %v3659
      %v3661 = vpop.f32.mrf.mxu0
      %v3662 = vpop.f32.mrf.mxu0
      %v3663 = vadd.f32 0.0, %v3662
      %v3664 = vpop.f32.mrf.mxu0
      %3665 = vdwg.mxu0
      %v3666 = vadd.f32 %v3334, %v3524
      %v3667 = vadd.f32 %v3335, %v3527
      %v3668 = vadd.f32 %v3336, %v3532
      %v3669 = vadd.f32 %v3337, %v3535
      %v3670 = vadd.f32 %v3338, %v3540
      %v3671 = vadd.f32 %v3339, %v3543
      %v3672 = vadd.f32 %v3340, %v3548
      %v3673 = vadd.f32 %v3341, %v3551
      %v3674 = vadd.f32 %v3342, %v3556
      %v3675 = vadd.f32 %v3343, %v3559
      %v3676 = vadd.f32 %v3344, %v3564
      %v3677 = vadd.f32 %v3345, %v3567
      %v3678 = vadd.f32 %v3346, %v3572
      %v3679 = vadd.f32 %v3347, %v3575
      %v3680 = vadd.f32 %v3348, %v3580
      %v3681 = vadd.f32 %v3349, %v3583
      %v3682 = vadd.f32 %v3350, %v3588
      %v3683 = vadd.f32 %v3351, %v3591
      %v3684 = vadd.f32 %v3352, %v3596
      %v3685 = vadd.f32 %v3353, %v3599
      %v3686 = vadd.f32 %v3354, %v3604
      %v3687 = vadd.f32 %v3355, %v3607
      %v3688 = vadd.f32 %v3356, %v3612
      %v3689 = vadd.f32 %v3357, %v3615
      %v3690 = vadd.f32 %v3358, %v3620
      %v3691 = vadd.f32 %v3359, %v3623
      %v3692 = vadd.f32 %v3360, %v3628
      %v3693 = vadd.f32 %v3361, %v3631
      %v3694 = vadd.f32 %v3362, %v3636
      %v3695 = vadd.f32 %v3363, %v3639
      %v3696 = vadd.f32 %v3364, %v3644
      %v3697 = vadd.f32 %v3365, %v3647
      %v3698 = vadd.f32 %v3366, %v3652
      %v3699 = vadd.f32 %v3367, %v3655
      %v3700 = vadd.f32 %v3368, %v3660
      %v3701 = vadd.f32 %v3369, %v3663
      %v3702 = vpack.c.bf16 %v3667, %v3666
      %v3703 = vpack.c.bf16 %v3669, %v3668
      %v3704 = vpack.c.bf16 %v3671, %v3670
      %v3705 = vpack.c.bf16 %v3673, %v3672
      %v3706 = vpack.c.bf16 %v3675, %v3674
      %v3707 = vpack.c.bf16 %v3677, %v3676
      %v3708 = vpack.c.bf16 %v3679, %v3678
      %v3709 = vpack.c.bf16 %v3681, %v3680
      %v3710 = vpack.c.bf16 %v3683, %v3682
      %v3711 = vpack.c.bf16 %v3685, %v3684
      %v3712 = vpack.c.bf16 %v3687, %v3686
      %v3713 = vpack.c.bf16 %v3689, %v3688
      %v3714 = vpack.c.bf16 %v3691, %v3690
      %v3715 = vpack.c.bf16 %v3693, %v3692
      %v3716 = vpack.c.bf16 %v3695, %v3694
      %v3717 = vpack.c.bf16 %v3697, %v3696
      %v3718 = vpack.c.bf16 %v3699, %v3698
      %v3719 = vpack.c.bf16 %v3701, %v3700
      %v3738 = vunpack.c.l.b16 %v3702
      %v3739 = vunpack.c.h.b16 %v3702
      %v3740 = vunpack.c.l.b16 %v3703
      %v3741 = vunpack.c.h.b16 %v3703
      %v3742 = vunpack.c.l.b16 %v3704
      %v3743 = vunpack.c.h.b16 %v3704
      %v3744 = vunpack.c.l.b16 %v3705
      %v3745 = vunpack.c.h.b16 %v3705
      %v3746 = vunpack.c.l.b16 %v3706
      %v3747 = vunpack.c.h.b16 %v3706
      %v3748 = vunpack.c.l.b16 %v3707
      %v3749 = vunpack.c.h.b16 %v3707
      %v3750 = vunpack.c.l.b16 %v3708
      %v3751 = vunpack.c.h.b16 %v3708
      %v3752 = vunpack.c.l.b16 %v3709
      %v3753 = vunpack.c.h.b16 %v3709
      %v3754 = vunpack.c.l.b16 %v3710
      %v3755 = vunpack.c.h.b16 %v3710
      %v3756 = vunpack.c.l.b16 %v3711
      %v3757 = vunpack.c.h.b16 %v3711
      %v3758 = vunpack.c.l.b16 %v3712
      %v3759 = vunpack.c.h.b16 %v3712
      %v3760 = vunpack.c.l.b16 %v3713
      %v3761 = vunpack.c.h.b16 %v3713
      %v3762 = vunpack.c.l.b16 %v3714
      %v3763 = vunpack.c.h.b16 %v3714
      %v3764 = vunpack.c.l.b16 %v3715
      %v3765 = vunpack.c.h.b16 %v3715
      %v3766 = vunpack.c.l.b16 %v3716
      %v3767 = vunpack.c.h.b16 %v3716
      %v3768 = vunpack.c.l.b16 %v3717
      %v3769 = vunpack.c.h.b16 %v3717
      %v3770 = vunpack.c.l.b16 %v3718
      %v3771 = vunpack.c.h.b16 %v3718
      %v3772 = vunpack.c.l.b16 %v3719
      %v3773 = vunpack.c.h.b16 %v3719
      %v3774 = vpack.c.b16 %v3738, %v3738
      %v3775 = vpack.c.b16 %v3739, %v3739
      %v3776 = vpack.c.b16 %v3740, %v3740
      %v3777 = vpack.c.b16 %v3741, %v3741
      %v3778 = vpack.c.b16 %v3742, %v3742
      %v3779 = vpack.c.b16 %v3743, %v3743
      %v3780 = vpack.c.b16 %v3744, %v3744
      %v3781 = vpack.c.b16 %v3745, %v3745
      %v3782 = vpack.c.b16 %v3746, %v3746
      %v3783 = vpack.c.b16 %v3747, %v3747
      %v3784 = vpack.c.b16 %v3748, %v3748
      %v3785 = vpack.c.b16 %v3749, %v3749
      %v3786 = vpack.c.b16 %v3750, %v3750
      %v3787 = vpack.c.b16 %v3751, %v3751
      %v3788 = vpack.c.b16 %v3752, %v3752
      %v3789 = vpack.c.b16 %v3753, %v3753
      %v3790 = vpack.c.b16 %v3754, %v3754
      %v3791 = vpack.c.b16 %v3755, %v3755
      %v3792 = vpack.c.b16 %v3756, %v3756
      %v3793 = vpack.c.b16 %v3757, %v3757
      %v3794 = vpack.c.b16 %v3758, %v3758
      %v3795 = vpack.c.b16 %v3759, %v3759
      %v3796 = vpack.c.b16 %v3760, %v3760
      %v3797 = vpack.c.b16 %v3761, %v3761
      %v3798 = vpack.c.b16 %v3762, %v3762
      %v3799 = vpack.c.b16 %v3763, %v3763
      %v3800 = vpack.c.b16 %v3764, %v3764
      %v3801 = vpack.c.b16 %v3765, %v3765
      %v3802 = vpack.c.b16 %v3766, %v3766
      %v3803 = vpack.c.b16 %v3767, %v3767
      %v3804 = vpack.c.b16 %v3768, %v3768
      %v3805 = vpack.c.b16 %v3769, %v3769
      %v3806 = vpack.c.b16 %v3770, %v3770
      %v3807 = vpack.c.b16 %v3771, %v3771
      %v3808 = vpack.c.b16 %v3772, %v3772
      %v3809 = vpack.c.b16 %v3773, %v3773
      %3846 = vst [vmem:[%s289] sm:$0xf] %v3774
      %3847 = vst [vmem:[%s289 + $0x4] sm:$0xf] %v3775
      %3848 = vst [vmem:[%s289 + $0x8] sm:$0xf] %v3776
      %3849 = vst [vmem:[%s289 + $0xc] sm:$0xf] %v3777
      %3850 = vst [vmem:[%s289 + $0x10] sm:$0xf] %v3778
      %3851 = vst [vmem:[%s289 + $0x14] sm:$0xf] %v3779
      %3852 = vst [vmem:[%s289 + $0x18] sm:$0xf] %v3780
      %3853 = vst [vmem:[%s289 + $0x1c] sm:$0xf] %v3781
      %3854 = vst [vmem:[%s289 + $0x20] sm:$0xf] %v3782
      %3855 = vst [vmem:[%s289 + $0x24] sm:$0xf] %v3783
      %3856 = vst [vmem:[%s289 + $0x28] sm:$0xf] %v3784
      %3857 = vst [vmem:[%s289 + $0x2c] sm:$0xf] %v3785
      %3858 = vst [vmem:[%s289 + $0x30] sm:$0xf] %v3786
      %3859 = vst [vmem:[%s289 + $0x34] sm:$0xf] %v3787
      %3860 = vst [vmem:[%s289 + $0x38] sm:$0xf] %v3788
      %3861 = vst [vmem:[%s289 + $0x3c] sm:$0xf] %v3789
      %3862 = vst [vmem:[%s289 + $0x40] sm:$0xf] %v3790
      %3863 = vst [vmem:[%s289 + $0x44] sm:$0xf] %v3791
      %3864 = vst [vmem:[%s289 + $0x48] sm:$0xf] %v3792
      %3865 = vst [vmem:[%s289 + $0x4c] sm:$0xf] %v3793
      %3866 = vst [vmem:[%s289 + $0x50] sm:$0xf] %v3794
      %3867 = vst [vmem:[%s289 + $0x54] sm:$0xf] %v3795
      %3868 = vst [vmem:[%s289 + $0x58] sm:$0xf] %v3796
      %3869 = vst [vmem:[%s289 + $0x5c] sm:$0xf] %v3797
      %3870 = vst [vmem:[%s289 + $0x60] sm:$0xf] %v3798
      %3871 = vst [vmem:[%s289 + $0x64] sm:$0xf] %v3799
      %3872 = vst [vmem:[%s289 + $0x68] sm:$0xf] %v3800
      %3873 = vst [vmem:[%s289 + $0x6c] sm:$0xf] %v3801
      %3874 = vst [vmem:[%s289 + $0x70] sm:$0xf] %v3802
      %3875 = vst [vmem:[%s289 + $0x74] sm:$0xf] %v3803
      %3876 = vst [vmem:[%s289 + $0x78] sm:$0xf] %v3804
      %3877 = vst [vmem:[%s289 + $0x7c] sm:$0xf] %v3805
      %3878 = vst [vmem:[%s289 + $0x80] sm:$0xf] %v3806
      %3879 = vst [vmem:[%s289 + $0x84] sm:$0xf] %v3807
      %3880 = vst [vmem:[%s289 + $0x88] sm:$0xf] %v3808
      %3881 = vst [vmem:[%s289 + $0x8c] sm:$0xf] %v3809
      %v3882 = vmul.f32 %v3666, %v530
      %v3883 = vmul.f32 %v3667, %v535
      %v3884 = vmul.f32 %v3668, %v540
      %v3885 = vmul.f32 %v3669, %v545
      %v3886 = vmul.f32 %v3670, %v550
      %v3887 = vmul.f32 %v3671, %v555
      %v3888 = vmul.f32 %v3672, %v560
      %v3889 = vmul.f32 %v3673, %v565
      %v3890 = vmul.f32 %v3674, %v570
      %v3891 = vmul.f32 %v3675, %v575
      %v3892 = vmul.f32 %v3676, %v580
      %v3893 = vmul.f32 %v3677, %v585
      %v3894 = vmul.f32 %v3678, %v590
      %v3895 = vmul.f32 %v3679, %v595
      %v3896 = vmul.f32 %v3680, %v600
      %v3897 = vmul.f32 %v3681, %v605
      %v3898 = vmul.f32 %v3682, %v610
      %v3899 = vmul.f32 %v3683, %v615
      %v3900 = vmul.f32 %v3684, %v620
      %v3901 = vmul.f32 %v3685, %v625
      %v3902 = vmul.f32 %v3686, %v630
      %v3903 = vmul.f32 %v3687, %v635
      %v3904 = vmul.f32 %v3688, %v640
      %v3905 = vmul.f32 %v3689, %v645
      %v3906 = vmul.f32 %v3690, %v650
      %v3907 = vmul.f32 %v3691, %v655
      %v3908 = vmul.f32 %v3692, %v660
      %v3909 = vmul.f32 %v3693, %v665
      %v3910 = vmul.f32 %v3694, %v670
      %v3911 = vmul.f32 %v3695, %v675
      %v3912 = vmul.f32 %v3696, %v680
      %v3913 = vmul.f32 %v3697, %v685
      %v3914 = vmul.f32 %v3698, %v690
      %v3915 = vmul.f32 %v3699, %v695
      %v3916 = vmul.f32 %v3700, %v700
      %v3917 = vmul.f32 %v3701, %v705
      %v3918 = vadd.f32 %v3882, %v3883
      %v3919 = vadd.f32 %v3918, %v3884
      %v3920 = vadd.f32 %v3919, %v3885
      %v3921 = vadd.f32 %v3920, %v3886
      %v3922 = vadd.f32 %v3921, %v3887
      %v3923 = vadd.f32 %v3922, %v3888
      %v3924 = vadd.f32 %v3923, %v3889
      %v3925 = vadd.f32 %v3924, %v3890
      %v3926 = vadd.f32 %v3925, %v3891
      %v3927 = vadd.f32 %v3926, %v3892
      %v3928 = vadd.f32 %v3927, %v3893
      %v3929 = vadd.f32 %v3928, %v3894
      %v3930 = vadd.f32 %v3929, %v3895
      %v3931 = vadd.f32 %v3930, %v3896
      %v3932 = vadd.f32 %v3931, %v3897
      %v3933 = vadd.f32 %v3932, %v3898
      %v3934 = vadd.f32 %v3933, %v3899
      %v3935 = vadd.f32 %v3934, %v3900
      %v3936 = vadd.f32 %v3935, %v3901
      %v3937 = vadd.f32 %v3936, %v3902
      %v3938 = vadd.f32 %v3937, %v3903
      %v3939 = vadd.f32 %v3938, %v3904
      %v3940 = vadd.f32 %v3939, %v3905
      %v3941 = vadd.f32 %v3940, %v3906
      %v3942 = vadd.f32 %v3941, %v3907
      %v3943 = vadd.f32 %v3942, %v3908
      %v3944 = vadd.f32 %v3943, %v3909
      %v3945 = vadd.f32 %v3944, %v3910
      %v3946 = vadd.f32 %v3945, %v3911
      %v3947 = vadd.f32 %v3946, %v3912
      %v3948 = vadd.f32 %v3947, %v3913
      %v3949 = vadd.f32 %v3948, %v3914
      %v3950 = vadd.f32 %v3949, %v3915
      %v3951 = vadd.f32 %v3950, %v3916
      %v3952 = vadd.f32 %v3951, %v3917
      %v3953 = vrot.slane %v3952, 4
      %v3954 = vadd.f32 %v3952, %v3953
      %v3955 = vrot.slane %v3954, 2
      %v3956 = vadd.f32 %v3954, %v3955
      %v3957 = vrot.slane %v3956, 1
      %v3958 = vadd.f32 %v3956, %v3957
      %3959 = vst [vmem:[%s292] sm:$0x1] %v3958
      %v3960 = vmul.f32 %v3882, %v3666
      %v3961 = vmul.f32 %v3883, %v3667
      %v3962 = vmul.f32 %v3884, %v3668
      %v3963 = vmul.f32 %v3885, %v3669
      %v3964 = vmul.f32 %v3886, %v3670
      %v3965 = vmul.f32 %v3887, %v3671
      %v3966 = vmul.f32 %v3888, %v3672
      %v3967 = vmul.f32 %v3889, %v3673
      %v3968 = vmul.f32 %v3890, %v3674
      %v3969 = vmul.f32 %v3891, %v3675
      %v3970 = vmul.f32 %v3892, %v3676
      %v3971 = vmul.f32 %v3893, %v3677
      %v3972 = vmul.f32 %v3894, %v3678
      %v3973 = vmul.f32 %v3895, %v3679
      %v3974 = vmul.f32 %v3896, %v3680
      %v3975 = vmul.f32 %v3897, %v3681
      %v3976 = vmul.f32 %v3898, %v3682
      %v3977 = vmul.f32 %v3899, %v3683
      %v3978 = vmul.f32 %v3900, %v3684
      %v3979 = vmul.f32 %v3901, %v3685
      %v3980 = vmul.f32 %v3902, %v3686
      %v3981 = vmul.f32 %v3903, %v3687
      %v3982 = vmul.f32 %v3904, %v3688
      %v3983 = vmul.f32 %v3905, %v3689
      %v3984 = vmul.f32 %v3906, %v3690
      %v3985 = vmul.f32 %v3907, %v3691
      %v3986 = vmul.f32 %v3908, %v3692
      %v3987 = vmul.f32 %v3909, %v3693
      %v3988 = vmul.f32 %v3910, %v3694
      %v3989 = vmul.f32 %v3911, %v3695
      %v3990 = vmul.f32 %v3912, %v3696
      %v3991 = vmul.f32 %v3913, %v3697
      %v3992 = vmul.f32 %v3914, %v3698
      %v3993 = vmul.f32 %v3915, %v3699
      %v3994 = vmul.f32 %v3916, %v3700
      %v3995 = vmul.f32 %v3917, %v3701
      %v3996 = vadd.f32 %v3960, %v3961
      %v3997 = vadd.f32 %v3996, %v3962
      %v3998 = vadd.f32 %v3997, %v3963
      %v3999 = vadd.f32 %v3998, %v3964
      %v4000 = vadd.f32 %v3999, %v3965
      %v4001 = vadd.f32 %v4000, %v3966
      %v4002 = vadd.f32 %v4001, %v3967
      %v4003 = vadd.f32 %v4002, %v3968
      %v4004 = vadd.f32 %v4003, %v3969
      %v4005 = vadd.f32 %v4004, %v3970
      %v4006 = vadd.f32 %v4005, %v3971
      %v4007 = vadd.f32 %v4006, %v3972
      %v4008 = vadd.f32 %v4007, %v3973
      %v4009 = vadd.f32 %v4008, %v3974
      %v4010 = vadd.f32 %v4009, %v3975
      %v4011 = vadd.f32 %v4010, %v3976
      %v4012 = vadd.f32 %v4011, %v3977
      %v4013 = vadd.f32 %v4012, %v3978
      %v4014 = vadd.f32 %v4013, %v3979
      %v4015 = vadd.f32 %v4014, %v3980
      %v4016 = vadd.f32 %v4015, %v3981
      %v4017 = vadd.f32 %v4016, %v3982
      %v4018 = vadd.f32 %v4017, %v3983
      %v4019 = vadd.f32 %v4018, %v3984
      %v4020 = vadd.f32 %v4019, %v3985
      %v4021 = vadd.f32 %v4020, %v3986
      %v4022 = vadd.f32 %v4021, %v3987
      %v4023 = vadd.f32 %v4022, %v3988
      %v4024 = vadd.f32 %v4023, %v3989
      %v4025 = vadd.f32 %v4024, %v3990
      %v4026 = vadd.f32 %v4025, %v3991
      %v4027 = vadd.f32 %v4026, %v3992
      %v4028 = vadd.f32 %v4027, %v3993
      %v4029 = vadd.f32 %v4028, %v3994
      %v4030 = vadd.f32 %v4029, %v3995
      %v4031 = vrot.slane %v4030, 4
      %v4032 = vadd.f32 %v4030, %v4031
      %v4033 = vrot.slane %v4032, 2
      %v4034 = vadd.f32 %v4032, %v4033
      %v4035 = vrot.slane %v4034, 1
      %v4036 = vadd.f32 %v4034, %v4035
      %4037 = vst [vmem:[%s295] sm:$0x1] %v4036
      %p4038 = scmp.lt.s32.totalorder %s19, 1
      %s4039 = scalar_select %p4038, %s19, 1
      %s4040 = smul.addr %s4039, 36
      %s4041 = smul.addr %s4040, 4
      %s4042 = scalar_lea.vmem %s5, %s4041
      %p4043 = scmp.lt.s32.totalorder %s19, 1
      %s4044 = scalar_select %p4043, %s19, 1
      %s4045 = scalar_lea.vmem %s6, %s4044
      %p4046 = scmp.lt.s32.totalorder %s19, 1
      %s4047 = scalar_select %p4046, %s19, 1
      %s4048 = scalar_lea.vmem %s7, %s4047
      // Predicated region
      $region41: #{double_conv.4} parent=39 // pred_check
        %p4049 = pneg %p147
      $region42: #{double_conv.4} parent=39 // pred_check_branch
        %4051 = sbr.rel (%p4049) target = $region44
      $region43: #{double_conv.4} parent=39 // pred_region
        _
      $region44: #{double_conv.4} parent=39 // pred_fallthru
        _
      // Predicated region
      $region45: #{double_conv.4} parent=39 // pred_check
        %p4052 = pneg %p173
      $region46: #{double_conv.4} parent=39 // pred_check_branch
        %4054 = sbr.rel (%p4052) target = $region48
      $region47: #{double_conv.4} parent=39 // pred_region
        _
      $region48: #{double_conv.4} parent=39 // pred_fallthru
        _
      // Predicated region
      $region49: #{double_conv.4} parent=39 // pred_check
        %p4055 = pneg %p199
      $region50: #{double_conv.4} parent=39 // pred_check_branch
        %4057 = sbr.rel (%p4055) target = $region52
      $region51: #{double_conv.4} parent=39 // pred_region
        _
      $region52: #{double_conv.4} parent=39 // pred_fallthru
        _
    $region40: #{double_conv.4} parent=5 // pred_fallthru
      _
    %p4058 = scmp.le.s32.totalorder 2, %s14
    // Predicated region
    $region53: #{double_conv.4} parent=5 // pred_check
      %p4059 = pneg %p4058
    $region54: #{double_conv.4} parent=5 // pred_check_branch
      %4061 = sbr.rel (%p4059) target = $region56
    $region55: #{double_conv.4} parent=5 // pred_region
      %s4062 = ssub.s32 %s14, 2
      // Predicated region
      $region57: #{double_conv.4} parent=55 // pred_check
        %p4063 = pneg %p153
      $region58: #{double_conv.4} parent=55 // pred_check_branch
        %4065 = sbr.rel (%p4063) target = $region60
      $region59: #{double_conv.4} parent=55 // pred_region
        %p4066 = scmp.lt.s32.totalorder %s20, 1
        %s4067 = scalar_select %p4066, %s20, 1
        %s4068 = smul.addr %s4067, 36
        %s4069 = smul.addr %s4068, 4
        %s4070 = scalar_lea.vmem %s5, %s4069
      $region60: #{double_conv.4} parent=55 // pred_fallthru
        _
      // Predicated region
      $region61: #{double_conv.4} parent=55 // pred_check
        %p4071 = pneg %p179
      $region62: #{double_conv.4} parent=55 // pred_check_branch
        %4073 = sbr.rel (%p4071) target = $region64
      $region63: #{double_conv.4} parent=55 // pred_region
        %p4074 = scmp.lt.s32.totalorder %s20, 1
        %s4075 = scalar_select %p4074, %s20, 1
        %s4076 = scalar_lea.vmem %s6, %s4075
      $region64: #{double_conv.4} parent=55 // pred_fallthru
        _
      // Predicated region
      $region65: #{double_conv.4} parent=55 // pred_check
        %p4077 = pneg %p205
      $region66: #{double_conv.4} parent=55 // pred_check_branch
        %4079 = sbr.rel (%p4077) target = $region68
      $region67: #{double_conv.4} parent=55 // pred_region
        %p4080 = scmp.lt.s32.totalorder %s20, 1
        %s4081 = scalar_select %p4080, %s20, 1
        %s4082 = scalar_lea.vmem %s7, %s4081
      $region68: #{double_conv.4} parent=55 // pred_fallthru
        _
    $region56: #{double_conv.4} parent=5 // pred_fallthru
      _
  $region6: #{double_conv.4} parent=0 // loop_footer
    %s18 = sadd.s32 1, %s14
  $region7: #{double_conv.4} parent=0 // loop_footer_branch
    %13 = sbr.rel target = $region3
  $region8: #{double_conv.4} parent=0 // loop_exit
    _

</llo_original>
